<compile_context>
chip_gen: v6e
topology: v6e:2x2x1
jax: 0.10.0
libtpu: 0.0.40
codegen_flags: <defaults>
</compile_context>

<pallas_src>
import jax
import jax.numpy as jnp
from jax.experimental import pallas as pl
from jax.experimental.pallas import tpu as pltpu

LEAKY_SLOPE = 0.2
_VMEM_LIMIT_BYTES = 32 * 1024 * 1024   # explicit scoped-VMEM budget, safe on v5e/v6e/v7x
_BLOCK_M = 1024                         # rows per grid step (tiles stay far below budget)
_LINEAR_OUT_PAD = 8                     # lane padding for the final Linear(4096, 1)


def _round_up(x, m):
    return (x + m - 1) // m * m


# ----------------------------- Pallas kernels ------------------------------ #
def _mm_bias_lrelu_kernel(x_ref, w_ref, b_ref, o_ref):
    # x: [TM, K] bf16, w: [K, TN] bf16 (VMEM-resident), b: [1, TN] f32
    acc = jnp.dot(x_ref[...], w_ref[...], preferred_element_type=jnp.float32)
    acc = acc + b_ref[...]
    # LeakyReLU(0.2) == max(x, 0.2*x) for 0 < slope < 1  -> mul + max only.
    o_ref[...] = jnp.maximum(acc, LEAKY_SLOPE * acc).astype(o_ref.dtype)


def _mm_bias_sigmoid_kernel(x_ref, w_ref, b_ref, o_ref):
    acc = jnp.dot(x_ref[...], w_ref[...], preferred_element_type=jnp.float32)
    acc = acc + b_ref[...]
    # Sigmoid: exp on the EUP, divide as an EUP approx reciprocal; clamp guards
    # approx-reciprocal rounding so the output stays in [0, 1].
    sig = pl.reciprocal(1.0 + jnp.exp(-acc), approx=True)
    o_ref[...] = jnp.clip(sig, 0.0, 1.0).astype(o_ref.dtype)


def _fused_matmul(kernel, x, w, b, out_dtype, block_m=_BLOCK_M):
    """Tiled (over M, optionally Cout) fused matmul + epilogue.

    Weights and bias stay VMEM-resident across the M grid; activations are
    streamed in TM-row blocks, both grid axes are 'parallel' (megacore / v7x).
    """
    m, k = x.shape
    k2, n_out = w.shape
    assert k == k2, (k, k2)

    # Adaptive M tiling: never pad M up by more than ~15 rows.
    grid_m = pl.cdiv(m, block_m)
    tm = _round_up(pl.cdiv(m, grid_m), 16)        # 16-row multiple (bf16 sublane packing)
    m_pad = tm * grid_m
    if m_pad != m:
        x = jnp.pad(x, ((0, m_pad - m), (0, 0)))

    # v7x: if there is only one M block, split Cout into two 128-wide parallel
    # blocks so the second TensorCore gets work (no-op on single-core v5e/v6e).
    grid_n = 2 if (grid_m == 1 and n_out % 256 == 0) else 1
    tn = n_out // grid_n

    out = pl.pallas_call(
        kernel,
        out_shape=jax.ShapeDtypeStruct((m_pad, n_out), out_dtype),
        grid=(grid_m, grid_n),
        in_specs=[
            pl.BlockSpec((tm, k), lambda i, j: (i, 0)),    # activations: streamed over M
            pl.BlockSpec((k, tn), lambda i, j: (0, j)),    # weights: VMEM-resident
            pl.BlockSpec((1, tn), lambda i, j: (0, j)),    # bias: VMEM-resident
        ],
        out_specs=pl.BlockSpec((tm, tn), lambda i, j: (i, j)),
        compiler_params=pltpu.CompilerParams(
            dimension_semantics=("parallel", "parallel"),
            vmem_limit_bytes=_VMEM_LIMIT_BYTES,
        ),
    )(x, w, b.reshape(1, n_out))

    if m_pad != m:
        out = out[:m]
    return out


# ------------------------------- JAX glue ---------------------------------- #
def _im2col(x_nhwc, ksize, stride, pad):
    """[N,H,W,C] -> ([N*Ho*Wo, ksize*ksize*C], Ho, Wo) in x's dtype (bf16)."""
    n, h, w, c = x_nhwc.shape
    xp = jnp.pad(x_nhwc, ((0, 0), (pad, pad), (pad, pad), (0, 0)))
    ho = (h + 2 * pad - ksize) // stride + 1
    wo = (w + 2 * pad - ksize) // stride + 1
    cols = []
    for kh in range(ksize):
        for kw in range(ksize):
            cols.append(
                xp[:, kh:kh + stride * ho:stride, kw:kw + stride * wo:stride, :]
            )
    patches = jnp.stack(cols, axis=3)                      # [N, Ho, Wo, 9, C]
    return patches.reshape(n * ho * wo, ksize * ksize * c), ho, wo


def conv2d_lrelu(x_nhwc, wmat, b, stride):
    """3x3 conv (pad=1) + LeakyReLU(0.2). wmat is the prepared [Kpad, CoutPad] bf16 matrix."""
    n = x_nhwc.shape[0]
    cin = x_nhwc.shape[-1]
    k_pad, cout = wmat.shape
    p2, ho, wo = _im2col(x_nhwc, 3, stride, pad=1)         # [N*Ho*Wo, 9*cin] bf16
    k = 9 * cin
    if k_pad != k:
        p2 = jnp.pad(p2, ((0, 0), (0, k_pad - k)))         # align layer-1 K=27 -> 32
    out = _fused_matmul(_mm_bias_lrelu_kernel, p2, wmat, b, jnp.bfloat16)
    return out.reshape(n, ho, wo, cout)


# ------------------------------- parameters -------------------------------- #
def init_params(key, in_channels=3):
    """PyTorch-convention parameters (fp32; linear weight rows in (C,H,W) flatten order)."""
    ks = jax.random.split(key, 10)

    def conv_w(k, cin, cout):
        return 0.05 * jax.random.normal(k, (3, 3, cin, cout), jnp.float32)

    return {
        "w1": conv_w(ks[0], in_channels, 64),
        "b1": 0.01 * jax.random.normal(ks[1], (64,), jnp.float32),
        "w2": conv_w(ks[2], 64, 128),
        "b2": 0.01 * jax.random.normal(ks[3], (128,), jnp.float32),
        "w3": conv_w(ks[4], 128, 128),
        "b3": 0.01 * jax.random.normal(ks[5], (128,), jnp.float32),
        "w4": conv_w(ks[6], 128, 256),
        "b4": 0.01 * jax.random.normal(ks[7], (256,), jnp.float32),
        "wl": 0.05 * jax.random.normal(ks[8], (4096, 1), jnp.float32),  # rows in (C,H,W) order
        "bl": 0.01 * jax.random.normal(ks[9], (1,), jnp.float32),
    }


def prepare_params(params):
    """One-time conversion to kernel layout: bf16 MXU operands, K padding to 32,
    lane-dense layer-1 output (Cout 64->128), flatten order folded into the
    linear weight, 8-wide lane padding on the linear output."""
    prep = {}
    cout_pad = {1: 128, 2: 128, 3: 128, 4: 256}            # layer-1 stores lane-dense
    for i in (1, 2, 3, 4):
        w = params[f"w{i}"]
        kh, kw, cin, cout = w.shape
        k = kh * kw * cin
        k_pad = _round_up(k, 32)
        c_pad = cout_pad[i]
        wm = w.reshape(k, cout)
        wm = jnp.pad(wm, ((0, k_pad - k), (0, c_pad - cout)))
        prep[f"w{i}"] = wm.astype(jnp.bfloat16)
        prep[f"b{i}"] = jnp.pad(params[f"b{i}"], (0, c_pad - cout)).astype(jnp.float32)

    # Fold nn.Flatten's (C, H, W) ordering into the linear weight so the NHWC
    # activations can be flattened directly (no runtime transpose).
    c_dim, h_dim, w_dim = 256, 4, 4
    hh, ww, cc = jnp.meshgrid(jnp.arange(h_dim), jnp.arange(w_dim), jnp.arange(c_dim),
                              indexing="ij")
    torch_rows = (cc * (h_dim * w_dim) + hh * w_dim + ww).reshape(-1)   # [4096]
    wl = params["wl"][torch_rows]                                       # NHWC-flat row order
    wl = jnp.pad(wl, ((0, 0), (0, _LINEAR_OUT_PAD - 1)))
    prep["wl"] = wl.astype(jnp.bfloat16)
    prep["bl"] = jnp.pad(params["bl"], (0, _LINEAR_OUT_PAD - 1)).astype(jnp.float32)
    return prep


# -------------------------------- forward ---------------------------------- #
def discriminator_forward(prep, x_nchw):
    # NCHW fp32 -> NHWC bf16 (MXU operand dtype); epilogues stay fp32 in-kernel.
    x = jnp.transpose(x_nchw, (0, 2, 3, 1)).astype(jnp.bfloat16)
    x = conv2d_lrelu(x, prep["w1"], prep["b1"], stride=1)   # [N, 32, 32, 128] (64 real ch)
    x = x[..., :64]                                         # drop lane-padding channels
    x = conv2d_lrelu(x, prep["w2"], prep["b2"], stride=2)   # [N, 16, 16, 128]
    x = conv2d_lrelu(x, prep["w3"], prep["b3"], stride=2)   # [N,  8,  8, 128]
    x = conv2d_lrelu(x, prep["w4"], prep["b4"], stride=2)   # [N,  4,  4, 256]
    n = x.shape[0]
    feat = x.reshape(n, 4 * 4 * 256)                        # NHWC flatten (order folded into wl)
    out = _fused_matmul(_mm_bias_sigmoid_kernel, feat, prep["wl"], prep["bl"], jnp.float32)
    return out[:, :1]                                       # real logit column -> [N, 1]


# ------------------------- pure-JAX reference check ------------------------- #
def _reference_forward(params, x_nchw):
    """fp32 XLA reference mirroring the PyTorch module (Dropout = eval identity)."""
    x = x_nchw
    strides = {1: 1, 2: 2, 3: 2, 4: 2}
    for i in (1, 2, 3, 4):
        w = params[f"w{i}"]                                  # [3,3,cin,cout] (HWIO)
        x = jax.lax.conv_general_dilated(
            x, w, window_strides=(strides[i], strides[i]), padding=((1, 1), (1, 1)),
            dimension_numbers=("NCHW", "HWIO", "NCHW"))
        x = x + params[f"b{i}"][None, :, None, None]
        x = jnp.where(x >= 0, x, LEAKY_SLOPE * x)
    n = x.shape[0]
    feat = x.reshape(n, -1)                                  # (C,H,W) flatten, as nn.Flatten
    logit = feat @ params["wl"] + params["bl"]
    return jax.nn.sigmoid(logit)


if __name__ == "__main__":
    key = jax.random.PRNGKey(0)
    k_p, k_x = jax.random.split(key)
    params = init_params(k_p, in_channels=3)
    prep = prepare_params(params)
    # 32x32 input is required so the flattened features equal 4096 (= 256*4*4),
    # matching nn.Linear(4096, 1) in the reference module.
    x = jax.random.normal(k_x, (2, 3, 32, 32), jnp.float32)

    y = jax.jit(discriminator_forward)(prep, x)
    jax.block_until_ready(y)

    assert y.shape == (2, 1)
    assert bool(jnp.all((y >= 0.0) & (y <= 1.0)))
    y_ref = _reference_forward(params, x)
    assert bool(jnp.max(jnp.abs(y - y_ref)) < 5e-2), "mismatch vs fp32 reference"
    print("KERNEL_OK")
</pallas_src>

<mosaic_0001>
module attributes {stable_mosaic.version = 11 : i64} {
  func.func @_mm_bias_lrelu_kernel(%arg0: i32, %arg1: i32, %arg2: memref<1024x32xbf16, #tpu.memory_space<vmem>>, %arg3: memref<32x128xbf16, #tpu.memory_space<vmem>>, %arg4: memref<1x128xf32, #tpu.memory_space<vmem>>, %arg5: memref<1024x128xbf16, #tpu.memory_space<vmem>>) attributes {dimension_semantics = [#tpu.dimension_semantics<parallel>, #tpu.dimension_semantics<parallel>], iteration_bounds = array<i64: 2, 1>, scalar_prefetch = 0 : i64, scratch_operands = 0 : i64, tpu.core_type = #tpu.core_type<tc>, window_params = [{transform_indices = @transform_0, window_bounds = array<i64: 1024, 32>}, {transform_indices = @transform_1, window_bounds = array<i64: 32, 128>}, {transform_indices = @transform_2, window_bounds = array<i64: 1, 128>}, {transform_indices = @transform_3, window_bounds = array<i64: 1024, 128>}]} {
    %c0 = arith.constant 0 : index
    %c0_0 = arith.constant 0 : index
    %0 = vector.load %arg2[%c0, %c0_0] : memref<1024x32xbf16, #tpu.memory_space<vmem>>, vector<1024x32xbf16>
    %c0_1 = arith.constant 0 : index
    %c0_2 = arith.constant 0 : index
    %1 = vector.load %arg3[%c0_1, %c0_2] : memref<32x128xbf16, #tpu.memory_space<vmem>>, vector<32x128xbf16>
    %cst = arith.constant dense<0.000000e+00> : vector<1024x128xf32>
    %2 = tpu.matmul %0, %1, %cst {dimension_numbers = #tpu.dot_dimension_numbers<[1], [0], [0], [1], [0, 0, 1, 1], [], []>} : vector<1024x32xbf16>, vector<32x128xbf16>, vector<1024x128xf32> -> vector<1024x128xf32>
    %c0_3 = arith.constant 0 : index
    %c0_4 = arith.constant 0 : index
    %3 = vector.load %arg4[%c0_3, %c0_4] : memref<1x128xf32, #tpu.memory_space<vmem>>, vector<1x128xf32>
    %4 = vector.broadcast %3 : vector<1x128xf32> to vector<1024x128xf32>
    %5 = arith.addf %2, %4 : vector<1024x128xf32>
    %cst_5 = arith.constant 2.000000e-01 : f32
    %6 = vector.broadcast %cst_5 : f32 to vector<1024x128xf32>
    %7 = arith.mulf %6, %5 : vector<1024x128xf32>
    %8 = arith.maximumf %5, %7 : vector<1024x128xf32>
    %9 = arith.truncf %8 : vector<1024x128xf32> to vector<1024x128xbf16>
    %c0_6 = arith.constant 0 : index
    %c0_7 = arith.constant 0 : index
    %10 = vector.load %arg5[%c0_6, %c0_7] : memref<1024x128xbf16, #tpu.memory_space<vmem>>, vector<1024x128xbf16>
    tpu.vector_store %arg5[%c0_6, %c0_7], %9 {strides = array<i32>} : memref<1024x128xbf16, #tpu.memory_space<vmem>>, vector<1024x128xbf16>,
    return
  }
  func.func @transform_0(%arg0: i32, %arg1: i32) -> (i32, i32) {
    %c0_i32 = arith.constant 0 : i32
    %c0_i32_0 = arith.constant 0 : i32
    return %arg0, %c0_i32 : i32, i32
  }
  func.func @transform_1(%arg0: i32, %arg1: i32) -> (i32, i32) {
    %c0_i32 = arith.constant 0 : i32
    %c0_i32_0 = arith.constant 0 : i32
    return %c0_i32, %arg1 : i32, i32
  }
  func.func @transform_2(%arg0: i32, %arg1: i32) -> (i32, i32) {
    %c0_i32 = arith.constant 0 : i32
    %c0_i32_0 = arith.constant 0 : i32
    return %c0_i32, %arg1 : i32, i32
  }
  func.func @transform_3(%arg0: i32, %arg1: i32) -> (i32, i32) {
    %c0_i32 = arith.constant 0 : i32
    return %arg0, %arg1 : i32, i32
  }
}

module attributes {stable_mosaic.version = 11 : i64} {
  func.func @_mm_bias_lrelu_kernel(%arg0: i32, %arg1: i32, %arg2: memref<512x576xbf16, #tpu.memory_space<vmem>>, %arg3: memref<576x128xbf16, #tpu.memory_space<vmem>>, %arg4: memref<1x128xf32, #tpu.memory_space<vmem>>, %arg5: memref<512x128xbf16, #tpu.memory_space<vmem>>) attributes {dimension_semantics = [#tpu.dimension_semantics<parallel>, #tpu.dimension_semantics<parallel>], iteration_bounds = array<i64: 1, 1>, scalar_prefetch = 0 : i64, scratch_operands = 0 : i64, tpu.core_type = #tpu.core_type<tc>, window_params = [{transform_indices = @transform_0, window_bounds = array<i64: 512, 576>}, {transform_indices = @transform_1, window_bounds = array<i64: 576, 128>}, {transform_indices = @transform_2, window_bounds = array<i64: 1, 128>}, {transform_indices = @transform_3, window_bounds = array<i64: 512, 128>}]} {
    %c0 = arith.constant 0 : index
    %c0_0 = arith.constant 0 : index
    %0 = vector.load %arg2[%c0, %c0_0] : memref<512x576xbf16, #tpu.memory_space<vmem>>, vector<512x576xbf16>
    %c0_1 = arith.constant 0 : index
    %c0_2 = arith.constant 0 : index
    %1 = vector.load %arg3[%c0_1, %c0_2] : memref<576x128xbf16, #tpu.memory_space<vmem>>, vector<576x128xbf16>
    %cst = arith.constant dense<0.000000e+00> : vector<512x128xf32>
    %2 = tpu.matmul %0, %1, %cst {dimension_numbers = #tpu.dot_dimension_numbers<[1], [0], [0], [1], [0, 0, 1, 1], [], []>} : vector<512x576xbf16>, vector<576x128xbf16>, vector<512x128xf32> -> vector<512x128xf32>
    %c0_3 = arith.constant 0 : index
    %c0_4 = arith.constant 0 : index
    %3 = vector.load %arg4[%c0_3, %c0_4] : memref<1x128xf32, #tpu.memory_space<vmem>>, vector<1x128xf32>
    %4 = vector.broadcast %3 : vector<1x128xf32> to vector<512x128xf32>
    %5 = arith.addf %2, %4 : vector<512x128xf32>
    %cst_5 = arith.constant 2.000000e-01 : f32
    %6 = vector.broadcast %cst_5 : f32 to vector<512x128xf32>
    %7 = arith.mulf %6, %5 : vector<512x128xf32>
    %8 = arith.maximumf %5, %7 : vector<512x128xf32>
    %9 = arith.truncf %8 : vector<512x128xf32> to vector<512x128xbf16>
    %c0_6 = arith.constant 0 : index
    %c0_7 = arith.constant 0 : index
    %10 = vector.load %arg5[%c0_6, %c0_7] : memref<512x128xbf16, #tpu.memory_space<vmem>>, vector<512x128xbf16>
    tpu.vector_store %arg5[%c0_6, %c0_7], %9 {strides = array<i32>} : memref<512x128xbf16, #tpu.memory_space<vmem>>, vector<512x128xbf16>,
    return
  }
  func.func @transform_0(%arg0: i32, %arg1: i32) -> (i32, i32) {
    %c0_i32 = arith.constant 0 : i32
    %c0_i32_0 = arith.constant 0 : i32
    return %arg0, %c0_i32 : i32, i32
  }
  func.func @transform_1(%arg0: i32, %arg1: i32) -> (i32, i32) {
    %c0_i32 = arith.constant 0 : i32
    %c0_i32_0 = arith.constant 0 : i32
    return %c0_i32, %arg1 : i32, i32
  }
  func.func @transform_2(%arg0: i32, %arg1: i32) -> (i32, i32) {
    %c0_i32 = arith.constant 0 : i32
    %c0_i32_0 = arith.constant 0 : i32
    return %c0_i32, %arg1 : i32, i32
  }
  func.func @transform_3(%arg0: i32, %arg1: i32) -> (i32, i32) {
    %c0_i32 = arith.constant 0 : i32
    return %arg0, %arg1 : i32, i32
  }
}

module attributes {stable_mosaic.version = 11 : i64} {
  func.func @_mm_bias_lrelu_kernel(%arg0: i32, %arg1: i32, %arg2: memref<128x1152xbf16, #tpu.memory_space<vmem>>, %arg3: memref<1152x128xbf16, #tpu.memory_space<vmem>>, %arg4: memref<1x128xf32, #tpu.memory_space<vmem>>, %arg5: memref<128x128xbf16, #tpu.memory_space<vmem>>) attributes {dimension_semantics = [#tpu.dimension_semantics<parallel>, #tpu.dimension_semantics<parallel>], iteration_bounds = array<i64: 1, 1>, scalar_prefetch = 0 : i64, scratch_operands = 0 : i64, tpu.core_type = #tpu.core_type<tc>, window_params = [{transform_indices = @transform_0, window_bounds = array<i64: 128, 1152>}, {transform_indices = @transform_1, window_bounds = array<i64: 1152, 128>}, {transform_indices = @transform_2, window_bounds = array<i64: 1, 128>}, {transform_indices = @transform_3, window_bounds = array<i64: 128, 128>}]} {
    %c0 = arith.constant 0 : index
    %c0_0 = arith.constant 0 : index
    %0 = vector.load %arg2[%c0, %c0_0] : memref<128x1152xbf16, #tpu.memory_space<vmem>>, vector<128x1152xbf16>
    %c0_1 = arith.constant 0 : index
    %c0_2 = arith.constant 0 : index
    %1 = vector.load %arg3[%c0_1, %c0_2] : memref<1152x128xbf16, #tpu.memory_space<vmem>>, vector<1152x128xbf16>
    %cst = arith.constant dense<0.000000e+00> : vector<128x128xf32>
    %2 = tpu.matmul %0, %1, %cst {dimension_numbers = #tpu.dot_dimension_numbers<[1], [0], [0], [1], [0, 0, 1, 1], [], []>} : vector<128x1152xbf16>, vector<1152x128xbf16>, vector<128x128xf32> -> vector<128x128xf32>
    %c0_3 = arith.constant 0 : index
    %c0_4 = arith.constant 0 : index
    %3 = vector.load %arg4[%c0_3, %c0_4] : memref<1x128xf32, #tpu.memory_space<vmem>>, vector<1x128xf32>
    %4 = vector.broadcast %3 : vector<1x128xf32> to vector<128x128xf32>
    %5 = arith.addf %2, %4 : vector<128x128xf32>
    %cst_5 = arith.constant 2.000000e-01 : f32
    %6 = vector.broadcast %cst_5 : f32 to vector<128x128xf32>
    %7 = arith.mulf %6, %5 : vector<128x128xf32>
    %8 = arith.maximumf %5, %7 : vector<128x128xf32>
    %9 = arith.truncf %8 : vector<128x128xf32> to vector<128x128xbf16>
    %c0_6 = arith.constant 0 : index
    %c0_7 = arith.constant 0 : index
    %10 = vector.load %arg5[%c0_6, %c0_7] : memref<128x128xbf16, #tpu.memory_space<vmem>>, vector<128x128xbf16>
    tpu.vector_store %arg5[%c0_6, %c0_7], %9 {strides = array<i32>} : memref<128x128xbf16, #tpu.memory_space<vmem>>, vector<128x128xbf16>,
    return
  }
  func.func @transform_0(%arg0: i32, %arg1: i32) -> (i32, i32) {
    %c0_i32 = arith.constant 0 : i32
    %c0_i32_0 = arith.constant 0 : i32
    return %arg0, %c0_i32 : i32, i32
  }
  func.func @transform_1(%arg0: i32, %arg1: i32) -> (i32, i32) {
    %c0_i32 = arith.constant 0 : i32
    %c0_i32_0 = arith.constant 0 : i32
    return %c0_i32, %arg1 : i32, i32
  }
  func.func @transform_2(%arg0: i32, %arg1: i32) -> (i32, i32) {
    %c0_i32 = arith.constant 0 : i32
    %c0_i32_0 = arith.constant 0 : i32
    return %c0_i32, %arg1 : i32, i32
  }
  func.func @transform_3(%arg0: i32, %arg1: i32) -> (i32, i32) {
    %c0_i32 = arith.constant 0 : i32
    return %arg0, %arg1 : i32, i32
  }
}

module attributes {stable_mosaic.version = 11 : i64} {
  func.func @_mm_bias_lrelu_kernel(%arg0: i32, %arg1: i32, %arg2: memref<32x1152xbf16, #tpu.memory_space<vmem>>, %arg3: memref<1152x128xbf16, #tpu.memory_space<vmem>>, %arg4: memref<1x128xf32, #tpu.memory_space<vmem>>, %arg5: memref<32x128xbf16, #tpu.memory_space<vmem>>) attributes {dimension_semantics = [#tpu.dimension_semantics<parallel>, #tpu.dimension_semantics<parallel>], iteration_bounds = array<i64: 1, 2>, scalar_prefetch = 0 : i64, scratch_operands = 0 : i64, tpu.core_type = #tpu.core_type<tc>, window_params = [{transform_indices = @transform_0, window_bounds = array<i64: 32, 1152>}, {transform_indices = @transform_1, window_bounds = array<i64: 1152, 128>}, {transform_indices = @transform_2, window_bounds = array<i64: 1, 128>}, {transform_indices = @transform_3, window_bounds = array<i64: 32, 128>}]} {
    %c0 = arith.constant 0 : index
    %c0_0 = arith.constant 0 : index
    %0 = vector.load %arg2[%c0, %c0_0] : memref<32x1152xbf16, #tpu.memory_space<vmem>>, vector<32x1152xbf16>
    %c0_1 = arith.constant 0 : index
    %c0_2 = arith.constant 0 : index
    %1 = vector.load %arg3[%c0_1, %c0_2] : memref<1152x128xbf16, #tpu.memory_space<vmem>>, vector<1152x128xbf16>
    %cst = arith.constant dense<0.000000e+00> : vector<32x128xf32>
    %2 = tpu.matmul %0, %1, %cst {dimension_numbers = #tpu.dot_dimension_numbers<[1], [0], [0], [1], [0, 0, 1, 1], [], []>} : vector<32x1152xbf16>, vector<1152x128xbf16>, vector<32x128xf32> -> vector<32x128xf32>
    %c0_3 = arith.constant 0 : index
    %c0_4 = arith.constant 0 : index
    %3 = vector.load %arg4[%c0_3, %c0_4] : memref<1x128xf32, #tpu.memory_space<vmem>>, vector<1x128xf32>
    %4 = vector.broadcast %3 : vector<1x128xf32> to vector<32x128xf32>
    %5 = arith.addf %2, %4 : vector<32x128xf32>
    %cst_5 = arith.constant 2.000000e-01 : f32
    %6 = vector.broadcast %cst_5 : f32 to vector<32x128xf32>
    %7 = arith.mulf %6, %5 : vector<32x128xf32>
    %8 = arith.maximumf %5, %7 : vector<32x128xf32>
    %9 = arith.truncf %8 : vector<32x128xf32> to vector<32x128xbf16>
    %c0_6 = arith.constant 0 : index
    %c0_7 = arith.constant 0 : index
    %10 = vector.load %arg5[%c0_6, %c0_7] : memref<32x128xbf16, #tpu.memory_space<vmem>>, vector<32x128xbf16>
    tpu.vector_store %arg5[%c0_6, %c0_7], %9 {strides = array<i32>} : memref<32x128xbf16, #tpu.memory_space<vmem>>, vector<32x128xbf16>,
    return
  }
  func.func @transform_0(%arg0: i32, %arg1: i32) -> (i32, i32) {
    %c0_i32 = arith.constant 0 : i32
    %c0_i32_0 = arith.constant 0 : i32
    return %arg0, %c0_i32 : i32, i32
  }
  func.func @transform_1(%arg0: i32, %arg1: i32) -> (i32, i32) {
    %c0_i32 = arith.constant 0 : i32
    %c0_i32_0 = arith.constant 0 : i32
    return %c0_i32, %arg1 : i32, i32
  }
  func.func @transform_2(%arg0: i32, %arg1: i32) -> (i32, i32) {
    %c0_i32 = arith.constant 0 : i32
    %c0_i32_0 = arith.constant 0 : i32
    return %c0_i32, %arg1 : i32, i32
  }
  func.func @transform_3(%arg0: i32, %arg1: i32) -> (i32, i32) {
    %c0_i32 = arith.constant 0 : i32
    return %arg0, %arg1 : i32, i32
  }
}

module attributes {stable_mosaic.version = 11 : i64} {
  func.func @_mm_bias_sigmoid_kernel(%arg0: i32, %arg1: i32, %arg2: memref<16x4096xbf16, #tpu.memory_space<vmem>>, %arg3: memref<4096x8xbf16, #tpu.memory_space<vmem>>, %arg4: memref<1x8xf32, #tpu.memory_space<vmem>>, %arg5: memref<16x8xf32, #tpu.memory_space<vmem>>) attributes {dimension_semantics = [#tpu.dimension_semantics<parallel>, #tpu.dimension_semantics<parallel>], iteration_bounds = array<i64: 1, 1>, scalar_prefetch = 0 : i64, scratch_operands = 0 : i64, tpu.core_type = #tpu.core_type<tc>, window_params = [{transform_indices = @transform_0, window_bounds = array<i64: 16, 4096>}, {transform_indices = @transform_1, window_bounds = array<i64: 4096, 8>}, {transform_indices = @transform_2, window_bounds = array<i64: 1, 8>}, {transform_indices = @transform_3, window_bounds = array<i64: 16, 8>}]} {
    %c0 = arith.constant 0 : index
    %c0_0 = arith.constant 0 : index
    %0 = vector.load %arg2[%c0, %c0_0] : memref<16x4096xbf16, #tpu.memory_space<vmem>>, vector<16x4096xbf16>
    %c0_1 = arith.constant 0 : index
    %c0_2 = arith.constant 0 : index
    %1 = vector.load %arg3[%c0_1, %c0_2] : memref<4096x8xbf16, #tpu.memory_space<vmem>>, vector<4096x8xbf16>
    %cst = arith.constant dense<0.000000e+00> : vector<16x8xf32>
    %2 = tpu.matmul %0, %1, %cst {dimension_numbers = #tpu.dot_dimension_numbers<[1], [0], [0], [1], [0, 0, 1, 1], [], []>} : vector<16x4096xbf16>, vector<4096x8xbf16>, vector<16x8xf32> -> vector<16x8xf32>
    %c0_3 = arith.constant 0 : index
    %c0_4 = arith.constant 0 : index
    %3 = vector.load %arg4[%c0_3, %c0_4] : memref<1x8xf32, #tpu.memory_space<vmem>>, vector<1x8xf32>
    %4 = vector.broadcast %3 : vector<1x8xf32> to vector<16x8xf32>
    %5 = arith.addf %2, %4 : vector<16x8xf32>
    %cst_5 = arith.constant 0.000000e+00 : f32
    %6 = vector.broadcast %cst_5 : f32 to vector<16x8xf32>
    %7 = arith.subf %6, %5 : vector<16x8xf32>
    %8 = math.exp %7 : vector<16x8xf32>
    %cst_6 = arith.constant 1.000000e+00 : f32
    %9 = vector.broadcast %cst_6 : f32 to vector<16x8xf32>
    %10 = arith.addf %9, %8 : vector<16x8xf32>
    %11 = tpu.reciprocal %10 {approx = true} : vector<16x8xf32> -> vector<16x8xf32>
    %cst_7 = arith.constant 0.000000e+00 : f32
    %cst_8 = arith.constant 1.000000e+00 : f32
    %12 = vector.broadcast %cst_7 : f32 to vector<16x8xf32>
    %13 = arith.maximumf %12, %11 : vector<16x8xf32>
    %14 = vector.broadcast %cst_8 : f32 to vector<16x8xf32>
    %15 = arith.minimumf %14, %13 : vector<16x8xf32>
    %c0_9 = arith.constant 0 : index
    %c0_10 = arith.constant 0 : index
    %16 = vector.load %arg5[%c0_9, %c0_10] : memref<16x8xf32, #tpu.memory_space<vmem>>, vector<16x8xf32>
    tpu.vector_store %arg5[%c0_9, %c0_10], %15 {strides = array<i32>} : memref<16x8xf32, #tpu.memory_space<vmem>>, vector<16x8xf32>,
    return
  }
  func.func @transform_0(%arg0: i32, %arg1: i32) -> (i32, i32) {
    %c0_i32 = arith.constant 0 : i32
    %c0_i32_0 = arith.constant 0 : i32
    return %arg0, %c0_i32 : i32, i32
  }
  func.func @transform_1(%arg0: i32, %arg1: i32) -> (i32, i32) {
    %c0_i32 = arith.constant 0 : i32
    %c0_i32_0 = arith.constant 0 : i32
    return %c0_i32, %arg1 : i32, i32
  }
  func.func @transform_2(%arg0: i32, %arg1: i32) -> (i32, i32) {
    %c0_i32 = arith.constant 0 : i32
    %c0_i32_0 = arith.constant 0 : i32
    return %c0_i32, %arg1 : i32, i32
  }
  func.func @transform_3(%arg0: i32, %arg1: i32) -> (i32, i32) {
    %c0_i32 = arith.constant 0 : i32
    return %arg0, %arg1 : i32, i32
  }
}

</mosaic_0001>

<llo_original>
// kernel: discriminator_forward.5
$region0: #{discriminator_forward.5}
  #allocation0 [shape = 'u32[]', space=smem, size = 0x4, offset = 0x4, fixed_abs, tag = 'smem constant byte address 0x4 - core index']
  #allocation1 [shape = 'u32[144,128]{1,0:T(1,128)}', space=vmem, size = 0x12000, scoped, tag = 'internal scratch']
  %s0 = inlined_call_operand.vmem [shape: bf16[2048,32], index: 0, kind: input, shape index: {}]
  %s1 = inlined_call_operand.vmem [shape: bf16[32,128], index: 1, kind: input, shape index: {}]
  %s2 = inlined_call_operand.vmem [shape: f32[1,128], index: 2, kind: input, shape index: {}]
  %s3 = inlined_call_operand.vmem [shape: bf16[2048,128], index: 3, kind: output, shape index: {}]
  %s4 = sld [smem:[#allocation0]]
  $region45: #{discriminator_forward.5} parent=0
    _
  %s6 = ssub.s32 1, %s4
  %s7 = scalar_select 0, %s6, %s4
  loop: start=0, step=1, limit=4
  $region2: #{discriminator_forward.5} parent=0 // loop_pre_header
    _
  $region3: #{discriminator_forward.5} parent=0 // loop_header
    %s9 = sphi 0, %s13
    %p10 = scmp.ge.s32.totalorder %s9, 4
    %s16 = sphi 0, %s28
    %s17 = sphi 0, %s24
    %s18 = sphi 0, %s16
    %s19 = sphi 0, %s17
    %s20 = sphi 0, %s18
    %s21 = sphi 0, %s19
    %s31 = sphi 0, %s33
    %s34 = sphi 0, %s31
    %s35 = sphi 0, %s34
    %s51 = sphi 0, %s35
    %s57 = sphi 0, %s59
    %s60 = sphi 0, %s57
    %s61 = sphi 0, %s60
    %s77 = sphi 0, %s61
    %s83 = sphi 0, %s85
    %s86 = sphi 0, %s83
    %s87 = sphi 0, %s86
    %s103 = sphi 0, %s87
    %s111 = sphi 0, %s113
    %s114 = sphi 0, %s111
    %s115 = sphi 0, %s114
    %s131 = sphi 0, %s115
  $region4: #{discriminator_forward.5} parent=0 // loop_header_branch
    %12 = sbr.rel (%p10) target = $region8
  $region5: #{discriminator_forward.5} parent=0 // loop_body
    %s14 = ssub.s32 %s9, 1
    %s15 = ssub.s32 %s9, 2
    %s22 = sadd.s32 1, %s17
    %p23 = scmp.ge.s32.totalorder %s22, 1
    %s24 = scalar_select %p23, 0, %s22
    %s25 = sadd.s32 1, %s16
    %s26 = scalar_select %p23, %s25, %s16
    %p27 = scmp.ge.s32.totalorder %s26, 2
    %s28 = scalar_select %p27, 0, %s26
    %s29 = ssub.s32 %s16, %s28
    %p30 = scmp.eq.s32.totalorder %s29, 0
    %s32 = sadd.s32 %s31, 1
    %s33 = scalar_select %p30, %s31, %s32
    %p36 = pneg %p30
    %p37 = scmp.eq.s32.totalorder %s9, 1
    %p38 = por %p36, %p37
    %p39 = scmp.ne.s32.totalorder %s31, %s34
    %p40 = scmp.eq.s32.totalorder %s9, 0
    %p41 = por %p39, %p40
    %p42 = scmp.ne.s32.totalorder %s31, %s34
    %p43 = scmp.eq.s32.totalorder %s14, 1
    %p44 = por %p42, %p43
    %p45 = scmp.ne.s32.totalorder %s34, %s35
    %p46 = scmp.eq.s32.totalorder %s14, 0
    %p47 = por %p45, %p46
    %p48 = scmp.ne.s32.totalorder %s34, %s35
    %p49 = scmp.eq.s32.totalorder %s15, 1
    %p50 = por %p48, %p49
    %p52 = scmp.ne.s32.totalorder %s35, %s51
    %p53 = scmp.eq.s32.totalorder %s15, 0
    %p54 = por %p52, %p53
    %s55 = ssub.s32 %s17, %s24
    %p56 = scmp.eq.s32.totalorder %s55, 0
    %s58 = sadd.s32 %s57, 1
    %s59 = scalar_select %p56, %s57, %s58
    %p62 = pneg %p56
    %p63 = scmp.eq.s32.totalorder %s9, 1
    %p64 = por %p62, %p63
    %p65 = scmp.ne.s32.totalorder %s57, %s60
    %p66 = scmp.eq.s32.totalorder %s9, 0
    %p67 = por %p65, %p66
    %p68 = scmp.ne.s32.totalorder %s57, %s60
    %p69 = scmp.eq.s32.totalorder %s14, 1
    %p70 = por %p68, %p69
    %p71 = scmp.ne.s32.totalorder %s60, %s61
    %p72 = scmp.eq.s32.totalorder %s14, 0
    %p73 = por %p71, %p72
    %p74 = scmp.ne.s32.totalorder %s60, %s61
    %p75 = scmp.eq.s32.totalorder %s15, 1
    %p76 = por %p74, %p75
    %p78 = scmp.ne.s32.totalorder %s61, %s77
    %p79 = scmp.eq.s32.totalorder %s15, 0
    %p80 = por %p78, %p79
    %s81 = ssub.s32 %s17, %s24
    %p82 = scmp.eq.s32.totalorder %s81, 0
    %s84 = sadd.s32 %s83, 1
    %s85 = scalar_select %p82, %s83, %s84
    %p88 = pneg %p82
    %p89 = scmp.eq.s32.totalorder %s9, 1
    %p90 = por %p88, %p89
    %p91 = scmp.ne.s32.totalorder %s83, %s86
    %p92 = scmp.eq.s32.totalorder %s9, 0
    %p93 = por %p91, %p92
    %p94 = scmp.ne.s32.totalorder %s83, %s86
    %p95 = scmp.eq.s32.totalorder %s14, 1
    %p96 = por %p94, %p95
    %p97 = scmp.ne.s32.totalorder %s86, %s87
    %p98 = scmp.eq.s32.totalorder %s14, 0
    %p99 = por %p97, %p98
    %p100 = scmp.ne.s32.totalorder %s86, %s87
    %p101 = scmp.eq.s32.totalorder %s15, 1
    %p102 = por %p100, %p101
    %p104 = scmp.ne.s32.totalorder %s87, %s103
    %p105 = scmp.eq.s32.totalorder %s15, 0
    %p106 = por %p104, %p105
    %s107 = ssub.s32 %s16, %s28
    %s108 = ssub.s32 %s17, %s24
    %s109 = sor.u32 %s107, %s108
    %p110 = scmp.eq.s32.totalorder %s109, 0
    %s112 = sadd.s32 %s111, 1
    %s113 = scalar_select %p110, %s111, %s112
    %p116 = pneg %p110
    %p117 = scmp.eq.s32.totalorder %s9, 1
    %p118 = por %p116, %p117
    %p119 = scmp.ne.s32.totalorder %s111, %s114
    %p120 = scmp.eq.s32.totalorder %s9, 0
    %p121 = por %p119, %p120
    %p122 = scmp.ne.s32.totalorder %s111, %s114
    %p123 = scmp.eq.s32.totalorder %s14, 1
    %p124 = por %p122, %p123
    %p125 = scmp.ne.s32.totalorder %s114, %s115
    %p126 = scmp.eq.s32.totalorder %s14, 0
    %p127 = por %p125, %p126
    %p128 = scmp.ne.s32.totalorder %s114, %s115
    %p129 = scmp.eq.s32.totalorder %s15, 1
    %p130 = por %p128, %p129
    %p132 = scmp.ne.s32.totalorder %s115, %s131
    %p133 = scmp.eq.s32.totalorder %s15, 0
    %p134 = por %p132, %p133
    %p135 = scmp.le.s32.totalorder 1, %s9
    %p136 = scmp.lt.s32.totalorder %s9, 3
    %p137 = pnand %p135, %p136
    %p138 = pneg %p137
    // Predicated region
    $region9: #{discriminator_forward.5} parent=5 // pred_check
      _
    $region10: #{discriminator_forward.5} parent=5 // pred_check_branch
      %140 = sbr.rel (%p137) target = $region12
    $region11: #{discriminator_forward.5} parent=5 // pred_region
      %s141 = ssub.s32 %s9, 1
      // Predicated region
      $region13: #{discriminator_forward.5} parent=11 // pred_check
        %p142 = pneg %p73
      $region14: #{discriminator_forward.5} parent=11 // pred_check_branch
        %144 = sbr.rel (%p142) target = $region16
      $region15: #{discriminator_forward.5} parent=11 // pred_region
        %p145 = scmp.lt.s32.totalorder %s19, 0
        %s146 = scalar_select %p145, %s19, 0
        %s147 = smul.addr %s146, 4
        %s148 = scalar_lea.vmem %s1, %s147
      $region16: #{discriminator_forward.5} parent=11 // pred_fallthru
        _
      // Predicated region
      $region17: #{discriminator_forward.5} parent=11 // pred_check
        %p149 = pneg %p99
      $region18: #{discriminator_forward.5} parent=11 // pred_check_branch
        %151 = sbr.rel (%p149) target = $region20
      $region19: #{discriminator_forward.5} parent=11 // pred_region
        %p152 = scmp.lt.s32.totalorder %s19, 0
        %s153 = scalar_select %p152, %s19, 0
        %s154 = scalar_lea.vmem %s2, %s153
      $region20: #{discriminator_forward.5} parent=11 // pred_fallthru
        _
    $region12: #{discriminator_forward.5} parent=5 // pred_fallthru
      _
    %p155 = scmp.lt.s32.totalorder %s9, 2
    // Predicated region
    $region21: #{discriminator_forward.5} parent=5 // pred_check
      %p156 = pneg %p155
    $region22: #{discriminator_forward.5} parent=5 // pred_check_branch
      %158 = sbr.rel (%p156) target = $region24
    $region23: #{discriminator_forward.5} parent=5 // pred_region
      // Predicated region
      $region25: #{discriminator_forward.5} parent=23 // pred_check
        %p159 = pneg %p41
      $region26: #{discriminator_forward.5} parent=23 // pred_check_branch
        %161 = sbr.rel (%p159) target = $region28
      $region27: #{discriminator_forward.5} parent=23 // pred_region
        %s162 = smul.u32 128, %s16
        %p163 = scmp.lt.s32.totalorder %s162, 255
        %s164 = scalar_select %p163, %s162, 255
        %s165 = smul.addr %s164, 4
        %s166 = scalar_lea.vmem %s0, %s165
        %s167 = smul.u32 128, %s16
      $region28: #{discriminator_forward.5} parent=23 // pred_fallthru
        _
    $region24: #{discriminator_forward.5} parent=5 // pred_fallthru
      _
    %p168 = scmp.le.s32.totalorder 1, %s9
    %p169 = scmp.lt.s32.totalorder %s9, 3
    %p170 = pnand %p168, %p169
    %p171 = pneg %p170
    // Predicated region
    $region29: #{discriminator_forward.5} parent=5 // pred_check
      _
    $region30: #{discriminator_forward.5} parent=5 // pred_check_branch
      %173 = sbr.rel (%p170) target = $region32
    $region31: #{discriminator_forward.5} parent=5 // pred_region
      %s174 = ssub.s32 %s9, 1
      %s175 = smul.u32 128, %s18
      %p176 = scmp.lt.s32.totalorder %s175, 255
      %s177 = scalar_select %p176, %s175, 255
      %s178 = smul.addr %s177, 4
      %s179 = scalar_lea.vmem %s0, %s178
      %p180 = pneg %p47
      %p181 = pneg %p44
      %p182 = scmp.lt.s32.totalorder %s19, 0
      %s183 = scalar_select %p182, %s19, 0
      %s184 = smul.addr %s183, 4
      %s185 = scalar_lea.vmem %s1, %s184
      %p186 = pneg %p73
      %p187 = pneg %p70
      %p188 = scmp.lt.s32.totalorder %s19, 0
      %s189 = scalar_select %p188, %s19, 0
      %s190 = scalar_lea.vmem %s2, %s189
      %p191 = pneg %p99
      %p192 = pneg %p96
      %p193 = pneg %p127
      %p194 = pneg %p124
      %s195 = smul.u32 128, %s18
      %p196 = scmp.lt.s32.totalorder %s195, 255
      %s197 = scalar_select %p196, %s195, 255
      %p198 = scmp.lt.s32.totalorder %s19, 0
      %s199 = scalar_select %p198, %s19, 0
      %s200 = sadd.s32 %s199, %s197
      %s201 = smul.addr %s200, 4
      %s202 = scalar_lea.vmem %s3, %s201
      %s203 = smul.u32 128, %s18
      %p204 = scmp.lt.s32.totalorder %s203, 255
      %s205 = scalar_select %p204, %s203, 255
      %s206 = smul.addr %s205, 4
      %s207 = scalar_lea.vmem %s0, %s206
      %s208 = smul.u32 128, %s18
      %p209 = scmp.lt.s32.totalorder %s19, 0
      %s210 = scalar_select %p209, %s19, 0
      %s211 = smul.addr %s210, 4
      %s212 = scalar_lea.vmem %s1, %s211
      %p213 = scmp.lt.s32.totalorder %s19, 0
      %s214 = scalar_select %p213, %s19, 0
      %s215 = scalar_lea.vmem %s2, %s214
      %s216 = smul.u32 128, %s18
      %p217 = scmp.lt.s32.totalorder %s216, 255
      %s218 = scalar_select %p217, %s216, 255
      %p219 = scmp.lt.s32.totalorder %s19, 0
      %s220 = scalar_select %p219, %s19, 0
      %s221 = sadd.s32 %s220, %s218
      %s222 = smul.addr %s221, 4
      %s223 = scalar_lea.vmem %s3, %s222
      %s224 = smul.u32 128, %s18
      %v226 = vld [vmem:[%s207] sm:$0xf]
      %v227 = vld [vmem:[%s207 + $0x4] sm:$0xf]
      %v228 = vld [vmem:[%s207 + $0x8] sm:$0xf]
      %v229 = vld [vmem:[%s207 + $0xc] sm:$0xf]
      %v230 = vld [vmem:[%s207 + $0x10] sm:$0xf]
      %v231 = vld [vmem:[%s207 + $0x14] sm:$0xf]
      %v232 = vld [vmem:[%s207 + $0x18] sm:$0xf]
      %v233 = vld [vmem:[%s207 + $0x1c] sm:$0xf]
      %v234 = vld [vmem:[%s207 + $0x20] sm:$0xf]
      %v235 = vld [vmem:[%s207 + $0x24] sm:$0xf]
      %v236 = vld [vmem:[%s207 + $0x28] sm:$0xf]
      %v237 = vld [vmem:[%s207 + $0x2c] sm:$0xf]
      %v238 = vld [vmem:[%s207 + $0x30] sm:$0xf]
      %v239 = vld [vmem:[%s207 + $0x34] sm:$0xf]
      %v240 = vld [vmem:[%s207 + $0x38] sm:$0xf]
      %v241 = vld [vmem:[%s207 + $0x3c] sm:$0xf]
      %v242 = vld [vmem:[%s207 + $0x40] sm:$0xf]
      %v243 = vld [vmem:[%s207 + $0x44] sm:$0xf]
      %v244 = vld [vmem:[%s207 + $0x48] sm:$0xf]
      %v245 = vld [vmem:[%s207 + $0x4c] sm:$0xf]
      %v246 = vld [vmem:[%s207 + $0x50] sm:$0xf]
      %v247 = vld [vmem:[%s207 + $0x54] sm:$0xf]
      %v248 = vld [vmem:[%s207 + $0x58] sm:$0xf]
      %v249 = vld [vmem:[%s207 + $0x5c] sm:$0xf]
      %v250 = vld [vmem:[%s207 + $0x60] sm:$0xf]
      %v251 = vld [vmem:[%s207 + $0x64] sm:$0xf]
      %v252 = vld [vmem:[%s207 + $0x68] sm:$0xf]
      %v253 = vld [vmem:[%s207 + $0x6c] sm:$0xf]
      %v254 = vld [vmem:[%s207 + $0x70] sm:$0xf]
      %v255 = vld [vmem:[%s207 + $0x74] sm:$0xf]
      %v256 = vld [vmem:[%s207 + $0x78] sm:$0xf]
      %v257 = vld [vmem:[%s207 + $0x7c] sm:$0xf]
      %v258 = vld [vmem:[%s207 + $0x80] sm:$0xf]
      %v259 = vld [vmem:[%s207 + $0x84] sm:$0xf]
      %v260 = vld [vmem:[%s207 + $0x88] sm:$0xf]
      %v261 = vld [vmem:[%s207 + $0x8c] sm:$0xf]
      %v262 = vld [vmem:[%s207 + $0x90] sm:$0xf]
      %v263 = vld [vmem:[%s207 + $0x94] sm:$0xf]
      %v264 = vld [vmem:[%s207 + $0x98] sm:$0xf]
      %v265 = vld [vmem:[%s207 + $0x9c] sm:$0xf]
      %v266 = vld [vmem:[%s207 + $0xa0] sm:$0xf]
      %v267 = vld [vmem:[%s207 + $0xa4] sm:$0xf]
      %v268 = vld [vmem:[%s207 + $0xa8] sm:$0xf]
      %v269 = vld [vmem:[%s207 + $0xac] sm:$0xf]
      %v270 = vld [vmem:[%s207 + $0xb0] sm:$0xf]
      %v271 = vld [vmem:[%s207 + $0xb4] sm:$0xf]
      %v272 = vld [vmem:[%s207 + $0xb8] sm:$0xf]
      %v273 = vld [vmem:[%s207 + $0xbc] sm:$0xf]
      %v274 = vld [vmem:[%s207 + $0xc0] sm:$0xf]
      %v275 = vld [vmem:[%s207 + $0xc4] sm:$0xf]
      %v276 = vld [vmem:[%s207 + $0xc8] sm:$0xf]
      %v277 = vld [vmem:[%s207 + $0xcc] sm:$0xf]
      %v278 = vld [vmem:[%s207 + $0xd0] sm:$0xf]
      %v279 = vld [vmem:[%s207 + $0xd4] sm:$0xf]
      %v280 = vld [vmem:[%s207 + $0xd8] sm:$0xf]
      %v281 = vld [vmem:[%s207 + $0xdc] sm:$0xf]
      %v282 = vld [vmem:[%s207 + $0xe0] sm:$0xf]
      %v283 = vld [vmem:[%s207 + $0xe4] sm:$0xf]
      %v284 = vld [vmem:[%s207 + $0xe8] sm:$0xf]
      %v285 = vld [vmem:[%s207 + $0xec] sm:$0xf]
      %v286 = vld [vmem:[%s207 + $0xf0] sm:$0xf]
      %v287 = vld [vmem:[%s207 + $0xf4] sm:$0xf]
      %v288 = vld [vmem:[%s207 + $0xf8] sm:$0xf]
      %v289 = vld [vmem:[%s207 + $0xfc] sm:$0xf]
      %v290 = vld [vmem:[%s207 + $0x100] sm:$0xf]
      %v291 = vld [vmem:[%s207 + $0x104] sm:$0xf]
      %v292 = vld [vmem:[%s207 + $0x108] sm:$0xf]
      %v293 = vld [vmem:[%s207 + $0x10c] sm:$0xf]
      %v294 = vld [vmem:[%s207 + $0x110] sm:$0xf]
      %v295 = vld [vmem:[%s207 + $0x114] sm:$0xf]
      %v296 = vld [vmem:[%s207 + $0x118] sm:$0xf]
      %v297 = vld [vmem:[%s207 + $0x11c] sm:$0xf]
      %v298 = vld [vmem:[%s207 + $0x120] sm:$0xf]
      %v299 = vld [vmem:[%s207 + $0x124] sm:$0xf]
      %v300 = vld [vmem:[%s207 + $0x128] sm:$0xf]
      %v301 = vld [vmem:[%s207 + $0x12c] sm:$0xf]
      %v302 = vld [vmem:[%s207 + $0x130] sm:$0xf]
      %v303 = vld [vmem:[%s207 + $0x134] sm:$0xf]
      %v304 = vld [vmem:[%s207 + $0x138] sm:$0xf]
      %v305 = vld [vmem:[%s207 + $0x13c] sm:$0xf]
      %v306 = vld [vmem:[%s207 + $0x140] sm:$0xf]
      %v307 = vld [vmem:[%s207 + $0x144] sm:$0xf]
      %v308 = vld [vmem:[%s207 + $0x148] sm:$0xf]
      %v309 = vld [vmem:[%s207 + $0x14c] sm:$0xf]
      %v310 = vld [vmem:[%s207 + $0x150] sm:$0xf]
      %v311 = vld [vmem:[%s207 + $0x154] sm:$0xf]
      %v312 = vld [vmem:[%s207 + $0x158] sm:$0xf]
      %v313 = vld [vmem:[%s207 + $0x15c] sm:$0xf]
      %v314 = vld [vmem:[%s207 + $0x160] sm:$0xf]
      %v315 = vld [vmem:[%s207 + $0x164] sm:$0xf]
      %v316 = vld [vmem:[%s207 + $0x168] sm:$0xf]
      %v317 = vld [vmem:[%s207 + $0x16c] sm:$0xf]
      %v318 = vld [vmem:[%s207 + $0x170] sm:$0xf]
      %v319 = vld [vmem:[%s207 + $0x174] sm:$0xf]
      %v320 = vld [vmem:[%s207 + $0x178] sm:$0xf]
      %v321 = vld [vmem:[%s207 + $0x17c] sm:$0xf]
      %v322 = vld [vmem:[%s207 + $0x180] sm:$0xf]
      %v323 = vld [vmem:[%s207 + $0x184] sm:$0xf]
      %v324 = vld [vmem:[%s207 + $0x188] sm:$0xf]
      %v325 = vld [vmem:[%s207 + $0x18c] sm:$0xf]
      %v326 = vld [vmem:[%s207 + $0x190] sm:$0xf]
      %v327 = vld [vmem:[%s207 + $0x194] sm:$0xf]
      %v328 = vld [vmem:[%s207 + $0x198] sm:$0xf]
      %v329 = vld [vmem:[%s207 + $0x19c] sm:$0xf]
      %v330 = vld [vmem:[%s207 + $0x1a0] sm:$0xf]
      %v331 = vld [vmem:[%s207 + $0x1a4] sm:$0xf]
      %v332 = vld [vmem:[%s207 + $0x1a8] sm:$0xf]
      %v333 = vld [vmem:[%s207 + $0x1ac] sm:$0xf]
      %v334 = vld [vmem:[%s207 + $0x1b0] sm:$0xf]
      %v335 = vld [vmem:[%s207 + $0x1b4] sm:$0xf]
      %v336 = vld [vmem:[%s207 + $0x1b8] sm:$0xf]
      %v337 = vld [vmem:[%s207 + $0x1bc] sm:$0xf]
      %v338 = vld [vmem:[%s207 + $0x1c0] sm:$0xf]
      %v339 = vld [vmem:[%s207 + $0x1c4] sm:$0xf]
      %v340 = vld [vmem:[%s207 + $0x1c8] sm:$0xf]
      %v341 = vld [vmem:[%s207 + $0x1cc] sm:$0xf]
      %v342 = vld [vmem:[%s207 + $0x1d0] sm:$0xf]
      %v343 = vld [vmem:[%s207 + $0x1d4] sm:$0xf]
      %v344 = vld [vmem:[%s207 + $0x1d8] sm:$0xf]
      %v345 = vld [vmem:[%s207 + $0x1dc] sm:$0xf]
      %v346 = vld [vmem:[%s207 + $0x1e0] sm:$0xf]
      %v347 = vld [vmem:[%s207 + $0x1e4] sm:$0xf]
      %v348 = vld [vmem:[%s207 + $0x1e8] sm:$0xf]
      %v349 = vld [vmem:[%s207 + $0x1ec] sm:$0xf]
      %v350 = vld [vmem:[%s207 + $0x1f0] sm:$0xf]
      %v351 = vld [vmem:[%s207 + $0x1f4] sm:$0xf]
      %v352 = vld [vmem:[%s207 + $0x1f8] sm:$0xf]
      %v353 = vld [vmem:[%s207 + $0x1fc] sm:$0xf]
      %v354 = vld [vmem:[%s212] sm:$0xf]
      %v355 = vld [vmem:[%s212 + $0x4] sm:$0xf]
      %v356 = vld [vmem:[%s212 + $0x8] sm:$0xf]
      %v357 = vld [vmem:[%s212 + $0xc] sm:$0xf]
      %v358 = vld [vmem:[%s215] sm:$0x1]
      %v360 = vlaneseq
      %v361 = vshrl.u32 %v360, 7
      %v362 = vsub.s32 0, %v361
      %v363 = vrot.slane %v358, %v362
      %v493 = vunpack.c.l.b16 %v226
      %v494 = vunpack.c.l.b16 %v227
      %v495 = vunpack.c.l.b16 %v228
      %v496 = vunpack.c.l.b16 %v229
      %v497 = vunpack.c.l.b16 %v230
      %v498 = vunpack.c.l.b16 %v231
      %v499 = vunpack.c.l.b16 %v232
      %v500 = vunpack.c.l.b16 %v233
      %v501 = vunpack.c.l.b16 %v234
      %v502 = vunpack.c.l.b16 %v235
      %v503 = vunpack.c.l.b16 %v236
      %v504 = vunpack.c.l.b16 %v237
      %v505 = vunpack.c.l.b16 %v238
      %v506 = vunpack.c.l.b16 %v239
      %v507 = vunpack.c.l.b16 %v240
      %v508 = vunpack.c.l.b16 %v241
      %v509 = vunpack.c.l.b16 %v242
      %v510 = vunpack.c.l.b16 %v243
      %v511 = vunpack.c.l.b16 %v244
      %v512 = vunpack.c.l.b16 %v245
      %v513 = vunpack.c.l.b16 %v246
      %v514 = vunpack.c.l.b16 %v247
      %v515 = vunpack.c.l.b16 %v248
      %v516 = vunpack.c.l.b16 %v249
      %v517 = vunpack.c.l.b16 %v250
      %v518 = vunpack.c.l.b16 %v251
      %v519 = vunpack.c.l.b16 %v252
      %v520 = vunpack.c.l.b16 %v253
      %v521 = vunpack.c.l.b16 %v254
      %v522 = vunpack.c.l.b16 %v255
      %v523 = vunpack.c.l.b16 %v256
      %v524 = vunpack.c.l.b16 %v257
      %v525 = vunpack.c.l.b16 %v258
      %v526 = vunpack.c.l.b16 %v259
      %v527 = vunpack.c.l.b16 %v260
      %v528 = vunpack.c.l.b16 %v261
      %v529 = vunpack.c.l.b16 %v262
      %v530 = vunpack.c.l.b16 %v263
      %v531 = vunpack.c.l.b16 %v264
      %v532 = vunpack.c.l.b16 %v265
      %v533 = vunpack.c.l.b16 %v266
      %v534 = vunpack.c.l.b16 %v267
      %v535 = vunpack.c.l.b16 %v268
      %v536 = vunpack.c.l.b16 %v269
      %v537 = vunpack.c.l.b16 %v270
      %v538 = vunpack.c.l.b16 %v271
      %v539 = vunpack.c.l.b16 %v272
      %v540 = vunpack.c.l.b16 %v273
      %v541 = vunpack.c.l.b16 %v274
      %v542 = vunpack.c.l.b16 %v275
      %v543 = vunpack.c.l.b16 %v276
      %v544 = vunpack.c.l.b16 %v277
      %v545 = vunpack.c.l.b16 %v278
      %v546 = vunpack.c.l.b16 %v279
      %v547 = vunpack.c.l.b16 %v280
      %v548 = vunpack.c.l.b16 %v281
      %v549 = vunpack.c.l.b16 %v282
      %v550 = vunpack.c.l.b16 %v283
      %v551 = vunpack.c.l.b16 %v284
      %v552 = vunpack.c.l.b16 %v285
      %v553 = vunpack.c.l.b16 %v286
      %v554 = vunpack.c.l.b16 %v287
      %v555 = vunpack.c.l.b16 %v288
      %v556 = vunpack.c.l.b16 %v289
      %v557 = vunpack.c.l.b16 %v290
      %v558 = vunpack.c.l.b16 %v291
      %v559 = vunpack.c.l.b16 %v292
      %v560 = vunpack.c.l.b16 %v293
      %v561 = vunpack.c.l.b16 %v294
      %v562 = vunpack.c.l.b16 %v295
      %v563 = vunpack.c.l.b16 %v296
      %v564 = vunpack.c.l.b16 %v297
      %v565 = vunpack.c.l.b16 %v298
      %v566 = vunpack.c.l.b16 %v299
      %v567 = vunpack.c.l.b16 %v300
      %v568 = vunpack.c.l.b16 %v301
      %v569 = vunpack.c.l.b16 %v302
      %v570 = vunpack.c.l.b16 %v303
      %v571 = vunpack.c.l.b16 %v304
      %v572 = vunpack.c.l.b16 %v305
      %v573 = vunpack.c.l.b16 %v306
      %v574 = vunpack.c.l.b16 %v307
      %v575 = vunpack.c.l.b16 %v308
      %v576 = vunpack.c.l.b16 %v309
      %v577 = vunpack.c.l.b16 %v310
      %v578 = vunpack.c.l.b16 %v311
      %v579 = vunpack.c.l.b16 %v312
      %v580 = vunpack.c.l.b16 %v313
      %v581 = vunpack.c.l.b16 %v314
      %v582 = vunpack.c.l.b16 %v315
      %v583 = vunpack.c.l.b16 %v316
      %v584 = vunpack.c.l.b16 %v317
      %v585 = vunpack.c.l.b16 %v318
      %v586 = vunpack.c.l.b16 %v319
      %v587 = vunpack.c.l.b16 %v320
      %v588 = vunpack.c.l.b16 %v321
      %v589 = vunpack.c.l.b16 %v322
      %v590 = vunpack.c.l.b16 %v323
      %v591 = vunpack.c.l.b16 %v324
      %v592 = vunpack.c.l.b16 %v325
      %v593 = vunpack.c.l.b16 %v326
      %v594 = vunpack.c.l.b16 %v327
      %v595 = vunpack.c.l.b16 %v328
      %v596 = vunpack.c.l.b16 %v329
      %v597 = vunpack.c.l.b16 %v330
      %v598 = vunpack.c.l.b16 %v331
      %v599 = vunpack.c.l.b16 %v332
      %v600 = vunpack.c.l.b16 %v333
      %v601 = vunpack.c.l.b16 %v334
      %v602 = vunpack.c.l.b16 %v335
      %v603 = vunpack.c.l.b16 %v336
      %v604 = vunpack.c.l.b16 %v337
      %v605 = vunpack.c.l.b16 %v338
      %v606 = vunpack.c.l.b16 %v339
      %v607 = vunpack.c.l.b16 %v340
      %v608 = vunpack.c.l.b16 %v341
      %v609 = vunpack.c.l.b16 %v342
      %v610 = vunpack.c.l.b16 %v343
      %v611 = vunpack.c.l.b16 %v344
      %v612 = vunpack.c.l.b16 %v345
      %v613 = vunpack.c.l.b16 %v346
      %v614 = vunpack.c.l.b16 %v347
      %v615 = vunpack.c.l.b16 %v348
      %v616 = vunpack.c.l.b16 %v349
      %v617 = vunpack.c.l.b16 %v350
      %v618 = vunpack.c.l.b16 %v351
      %v619 = vunpack.c.l.b16 %v352
      %v620 = vunpack.c.l.b16 %v353
      %v621 = vpack.c.b16 %v494, %v493
      %v622 = vpack.c.b16 %v496, %v495
      %v623 = vpack.c.b16 %v498, %v497
      %v624 = vpack.c.b16 %v500, %v499
      %v625 = vpack.c.b16 %v502, %v501
      %v626 = vpack.c.b16 %v504, %v503
      %v627 = vpack.c.b16 %v506, %v505
      %v628 = vpack.c.b16 %v508, %v507
      %v629 = vpack.c.b16 %v510, %v509
      %v630 = vpack.c.b16 %v512, %v511
      %v631 = vpack.c.b16 %v514, %v513
      %v632 = vpack.c.b16 %v516, %v515
      %v633 = vpack.c.b16 %v518, %v517
      %v634 = vpack.c.b16 %v520, %v519
      %v635 = vpack.c.b16 %v522, %v521
      %v636 = vpack.c.b16 %v524, %v523
      %v637 = vpack.c.b16 %v526, %v525
      %v638 = vpack.c.b16 %v528, %v527
      %v639 = vpack.c.b16 %v530, %v529
      %v640 = vpack.c.b16 %v532, %v531
      %v641 = vpack.c.b16 %v534, %v533
      %v642 = vpack.c.b16 %v536, %v535
      %v643 = vpack.c.b16 %v538, %v537
      %v644 = vpack.c.b16 %v540, %v539
      %v645 = vpack.c.b16 %v542, %v541
      %v646 = vpack.c.b16 %v544, %v543
      %v647 = vpack.c.b16 %v546, %v545
      %v648 = vpack.c.b16 %v548, %v547
      %v649 = vpack.c.b16 %v550, %v549
      %v650 = vpack.c.b16 %v552, %v551
      %v651 = vpack.c.b16 %v554, %v553
      %v652 = vpack.c.b16 %v556, %v555
      %v653 = vpack.c.b16 %v558, %v557
      %v654 = vpack.c.b16 %v560, %v559
      %v655 = vpack.c.b16 %v562, %v561
      %v656 = vpack.c.b16 %v564, %v563
      %v657 = vpack.c.b16 %v566, %v565
      %v658 = vpack.c.b16 %v568, %v567
      %v659 = vpack.c.b16 %v570, %v569
      %v660 = vpack.c.b16 %v572, %v571
      %v661 = vpack.c.b16 %v574, %v573
      %v662 = vpack.c.b16 %v576, %v575
      %v663 = vpack.c.b16 %v578, %v577
      %v664 = vpack.c.b16 %v580, %v579
      %v665 = vpack.c.b16 %v582, %v581
      %v666 = vpack.c.b16 %v584, %v583
      %v667 = vpack.c.b16 %v586, %v585
      %v668 = vpack.c.b16 %v588, %v587
      %v669 = vpack.c.b16 %v590, %v589
      %v670 = vpack.c.b16 %v592, %v591
      %v671 = vpack.c.b16 %v594, %v593
      %v672 = vpack.c.b16 %v596, %v595
      %v673 = vpack.c.b16 %v598, %v597
      %v674 = vpack.c.b16 %v600, %v599
      %v675 = vpack.c.b16 %v602, %v601
      %v676 = vpack.c.b16 %v604, %v603
      %v677 = vpack.c.b16 %v606, %v605
      %v678 = vpack.c.b16 %v608, %v607
      %v679 = vpack.c.b16 %v610, %v609
      %v680 = vpack.c.b16 %v612, %v611
      %v681 = vpack.c.b16 %v614, %v613
      %v682 = vpack.c.b16 %v616, %v615
      %v683 = vpack.c.b16 %v618, %v617
      %v684 = vpack.c.b16 %v620, %v619
      %v689 = vunpack.c.l.b16 %v354
      %v690 = vunpack.c.l.b16 %v355
      %v691 = vunpack.c.l.b16 %v356
      %v692 = vunpack.c.l.b16 %v357
      %v693 = vpack.c.b16 %v690, %v689
      %v694 = vpack.c.b16 %v692, %v691
      %vm697 = vcmask 261120
      %v699 = vsel %vm697, %v621, 0
      %v702 = vsel %vm697, %v622, 0
      %v705 = vsel %vm697, %v623, 0
      %v708 = vsel %vm697, %v624, 0
      %v711 = vsel %vm697, %v625, 0
      %v714 = vsel %vm697, %v626, 0
      %v717 = vsel %vm697, %v627, 0
      %v720 = vsel %vm697, %v628, 0
      %v723 = vsel %vm697, %v629, 0
      %v726 = vsel %vm697, %v630, 0
      %v729 = vsel %vm697, %v631, 0
      %v732 = vsel %vm697, %v632, 0
      %v735 = vsel %vm697, %v633, 0
      %v738 = vsel %vm697, %v634, 0
      %v741 = vsel %vm697, %v635, 0
      %v744 = vsel %vm697, %v636, 0
      %v747 = vsel %vm697, %v637, 0
      %v750 = vsel %vm697, %v638, 0
      %v753 = vsel %vm697, %v639, 0
      %v756 = vsel %vm697, %v640, 0
      %v759 = vsel %vm697, %v641, 0
      %v762 = vsel %vm697, %v642, 0
      %v765 = vsel %vm697, %v643, 0
      %v768 = vsel %vm697, %v644, 0
      %v771 = vsel %vm697, %v645, 0
      %v774 = vsel %vm697, %v646, 0
      %v777 = vsel %vm697, %v647, 0
      %v780 = vsel %vm697, %v648, 0
      %v783 = vsel %vm697, %v649, 0
      %v786 = vsel %vm697, %v650, 0
      %v789 = vsel %vm697, %v651, 0
      %v792 = vsel %vm697, %v652, 0
      %v795 = vsel %vm697, %v653, 0
      %v798 = vsel %vm697, %v654, 0
      %v801 = vsel %vm697, %v655, 0
      %v804 = vsel %vm697, %v656, 0
      %v807 = vsel %vm697, %v657, 0
      %v810 = vsel %vm697, %v658, 0
      %v813 = vsel %vm697, %v659, 0
      %v816 = vsel %vm697, %v660, 0
      %v819 = vsel %vm697, %v661, 0
      %v822 = vsel %vm697, %v662, 0
      %v825 = vsel %vm697, %v663, 0
      %v828 = vsel %vm697, %v664, 0
      %v831 = vsel %vm697, %v665, 0
      %v834 = vsel %vm697, %v666, 0
      %v837 = vsel %vm697, %v667, 0
      %v840 = vsel %vm697, %v668, 0
      %v843 = vsel %vm697, %v669, 0
      %v846 = vsel %vm697, %v670, 0
      %v849 = vsel %vm697, %v671, 0
      %v852 = vsel %vm697, %v672, 0
      %v855 = vsel %vm697, %v673, 0
      %v858 = vsel %vm697, %v674, 0
      %v861 = vsel %vm697, %v675, 0
      %v864 = vsel %vm697, %v676, 0
      %v867 = vsel %vm697, %v677, 0
      %v870 = vsel %vm697, %v678, 0
      %v873 = vsel %vm697, %v679, 0
      %v876 = vsel %vm697, %v680, 0
      %v879 = vsel %vm697, %v681, 0
      %v882 = vsel %vm697, %v682, 0
      %v885 = vsel %vm697, %v683, 0
      %v888 = vsel %vm697, %v684, 0
      %890 = vmatprep.subr.bf16.mxu0 0
      %891 = vmatpush1.bf16.msra.mxu0 0
      %892 = vmatprep.subr.bf16.mxu0 0
      %893 = vmatpush1.bf16.msra.mxu0 0
      %894 = vmatprep.subr.bf16.mxu0 0
      %895 = vmatpush1.bf16.msra.mxu0 0
      %896 = vmatprep.subr.bf16.mxu0 0
      %897 = vmatpush1.bf16.msra.mxu0 0
      %898 = vmatprep.subr.bf16.mxu0 0
      %899 = vmatpush1.bf16.msra.mxu0 0
      %900 = vmatprep.subr.bf16.mxu0 0
      %901 = vmatpush1.bf16.msra.mxu0 0
      %902 = vmatprep.subr.bf16.mxu0 0
      %903 = vmatpush1.bf16.msra.mxu0 %v694
      %904 = vmatprep.subr.bf16.mxu0 0
      %905 = vmatpush1.bf16.msra.mxu0 %v693
      %906 = vmatprep.subr.bf16.mxu0 0
      %907 = vmatpush2.bf16.msra.mxu0 0
      %908 = vmatprep.subr.bf16.mxu0 0
      %909 = vmatpush2.bf16.msra.mxu0 0
      %910 = vmatprep.subr.bf16.mxu0 0
      %911 = vmatpush2.bf16.msra.mxu0 0
      %912 = vmatprep.subr.bf16.mxu0 0
      %913 = vmatpush2.bf16.msra.mxu0 0
      %914 = vmatprep.subr.bf16.mxu0 0
      %915 = vmatpush2.bf16.msra.mxu0 0
      %916 = vmatprep.subr.bf16.mxu0 0
      %917 = vmatpush2.bf16.msra.mxu0 0
      %918 = vmatprep.subr.bf16.mxu0 0
      %919 = vmatpush2.bf16.msra.mxu0 0
      %920 = vmatprep.subr.bf16.mxu0 0
      %921 = vmatpush2.bf16.msra.mxu0 0
      %922 = vmatprep.mubr.bf16.mxu0 0
      %923 = vmatmul.mubr.bf16.gmra.mxu0 %v699
      %v924 = vpop.f32.mrf.mxu0
      %v925 = vadd.f32 %v363, %v924
      %v926 = vpop.f32.mrf.mxu0
      %v927 = vpop.f32.mrf.mxu0
      %v928 = vadd.f32 %v363, %v927
      %v929 = vpop.f32.mrf.mxu0
      %930 = vmatprep.mubr.bf16.mxu0 0
      %931 = vmatmul.mubr.bf16.gmra.mxu0 %v702
      %v932 = vpop.f32.mrf.mxu0
      %v933 = vadd.f32 %v363, %v932
      %v934 = vpop.f32.mrf.mxu0
      %v935 = vpop.f32.mrf.mxu0
      %v936 = vadd.f32 %v363, %v935
      %v937 = vpop.f32.mrf.mxu0
      %938 = vmatprep.mubr.bf16.mxu0 0
      %939 = vmatmul.mubr.bf16.gmra.mxu0 %v705
      %v940 = vpop.f32.mrf.mxu0
      %v941 = vadd.f32 %v363, %v940
      %v942 = vpop.f32.mrf.mxu0
      %v943 = vpop.f32.mrf.mxu0
      %v944 = vadd.f32 %v363, %v943
      %v945 = vpop.f32.mrf.mxu0
      %946 = vmatprep.mubr.bf16.mxu0 0
      %947 = vmatmul.mubr.bf16.gmra.mxu0 %v708
      %v948 = vpop.f32.mrf.mxu0
      %v949 = vadd.f32 %v363, %v948
      %v950 = vpop.f32.mrf.mxu0
      %v951 = vpop.f32.mrf.mxu0
      %v952 = vadd.f32 %v363, %v951
      %v953 = vpop.f32.mrf.mxu0
      %954 = vmatprep.mubr.bf16.mxu0 0
      %955 = vmatmul.mubr.bf16.gmra.mxu0 %v711
      %v956 = vpop.f32.mrf.mxu0
      %v957 = vadd.f32 %v363, %v956
      %v958 = vpop.f32.mrf.mxu0
      %v959 = vpop.f32.mrf.mxu0
      %v960 = vadd.f32 %v363, %v959
      %v961 = vpop.f32.mrf.mxu0
      %962 = vmatprep.mubr.bf16.mxu0 0
      %963 = vmatmul.mubr.bf16.gmra.mxu0 %v714
      %v964 = vpop.f32.mrf.mxu0
      %v965 = vadd.f32 %v363, %v964
      %v966 = vpop.f32.mrf.mxu0
      %v967 = vpop.f32.mrf.mxu0
      %v968 = vadd.f32 %v363, %v967
      %v969 = vpop.f32.mrf.mxu0
      %970 = vmatprep.mubr.bf16.mxu0 0
      %971 = vmatmul.mubr.bf16.gmra.mxu0 %v717
      %v972 = vpop.f32.mrf.mxu0
      %v973 = vadd.f32 %v363, %v972
      %v974 = vpop.f32.mrf.mxu0
      %v975 = vpop.f32.mrf.mxu0
      %v976 = vadd.f32 %v363, %v975
      %v977 = vpop.f32.mrf.mxu0
      %978 = vmatprep.mubr.bf16.mxu0 0
      %979 = vmatmul.mubr.bf16.gmra.mxu0 %v720
      %v980 = vpop.f32.mrf.mxu0
      %v981 = vadd.f32 %v363, %v980
      %v982 = vpop.f32.mrf.mxu0
      %v983 = vpop.f32.mrf.mxu0
      %v984 = vadd.f32 %v363, %v983
      %v985 = vpop.f32.mrf.mxu0
      %986 = vmatprep.mubr.bf16.mxu0 0
      %987 = vmatmul.mubr.bf16.gmra.mxu0 %v723
      %v988 = vpop.f32.mrf.mxu0
      %v989 = vadd.f32 %v363, %v988
      %v990 = vpop.f32.mrf.mxu0
      %v991 = vpop.f32.mrf.mxu0
      %v992 = vadd.f32 %v363, %v991
      %v993 = vpop.f32.mrf.mxu0
      %994 = vmatprep.mubr.bf16.mxu0 0
      %995 = vmatmul.mubr.bf16.gmra.mxu0 %v726
      %v996 = vpop.f32.mrf.mxu0
      %v997 = vadd.f32 %v363, %v996
      %v998 = vpop.f32.mrf.mxu0
      %v999 = vpop.f32.mrf.mxu0
      %v1000 = vadd.f32 %v363, %v999
      %v1001 = vpop.f32.mrf.mxu0
      %1002 = vmatprep.mubr.bf16.mxu0 0
      %1003 = vmatmul.mubr.bf16.gmra.mxu0 %v729
      %v1004 = vpop.f32.mrf.mxu0
      %v1005 = vadd.f32 %v363, %v1004
      %v1006 = vpop.f32.mrf.mxu0
      %v1007 = vpop.f32.mrf.mxu0
      %v1008 = vadd.f32 %v363, %v1007
      %v1009 = vpop.f32.mrf.mxu0
      %1010 = vmatprep.mubr.bf16.mxu0 0
      %1011 = vmatmul.mubr.bf16.gmra.mxu0 %v732
      %v1012 = vpop.f32.mrf.mxu0
      %v1013 = vadd.f32 %v363, %v1012
      %v1014 = vpop.f32.mrf.mxu0
      %v1015 = vpop.f32.mrf.mxu0
      %v1016 = vadd.f32 %v363, %v1015
      %v1017 = vpop.f32.mrf.mxu0
      %1018 = vmatprep.mubr.bf16.mxu0 0
      %1019 = vmatmul.mubr.bf16.gmra.mxu0 %v735
      %v1020 = vpop.f32.mrf.mxu0
      %v1021 = vadd.f32 %v363, %v1020
      %v1022 = vpop.f32.mrf.mxu0
      %v1023 = vpop.f32.mrf.mxu0
      %v1024 = vadd.f32 %v363, %v1023
      %v1025 = vpop.f32.mrf.mxu0
      %1026 = vmatprep.mubr.bf16.mxu0 0
      %1027 = vmatmul.mubr.bf16.gmra.mxu0 %v738
      %v1028 = vpop.f32.mrf.mxu0
      %v1029 = vadd.f32 %v363, %v1028
      %v1030 = vpop.f32.mrf.mxu0
      %v1031 = vpop.f32.mrf.mxu0
      %v1032 = vadd.f32 %v363, %v1031
      %v1033 = vpop.f32.mrf.mxu0
      %1034 = vmatprep.mubr.bf16.mxu0 0
      %1035 = vmatmul.mubr.bf16.gmra.mxu0 %v741
      %v1036 = vpop.f32.mrf.mxu0
      %v1037 = vadd.f32 %v363, %v1036
      %v1038 = vpop.f32.mrf.mxu0
      %v1039 = vpop.f32.mrf.mxu0
      %v1040 = vadd.f32 %v363, %v1039
      %v1041 = vpop.f32.mrf.mxu0
      %1042 = vmatprep.mubr.bf16.mxu0 0
      %1043 = vmatmul.mubr.bf16.gmra.mxu0 %v744
      %v1044 = vpop.f32.mrf.mxu0
      %v1045 = vadd.f32 %v363, %v1044
      %v1046 = vpop.f32.mrf.mxu0
      %v1047 = vpop.f32.mrf.mxu0
      %v1048 = vadd.f32 %v363, %v1047
      %v1049 = vpop.f32.mrf.mxu0
      %1050 = vmatprep.mubr.bf16.mxu0 0
      %1051 = vmatmul.mubr.bf16.gmra.mxu0 %v747
      %v1052 = vpop.f32.mrf.mxu0
      %v1053 = vadd.f32 %v363, %v1052
      %v1054 = vpop.f32.mrf.mxu0
      %v1055 = vpop.f32.mrf.mxu0
      %v1056 = vadd.f32 %v363, %v1055
      %v1057 = vpop.f32.mrf.mxu0
      %1058 = vmatprep.mubr.bf16.mxu0 0
      %1059 = vmatmul.mubr.bf16.gmra.mxu0 %v750
      %v1060 = vpop.f32.mrf.mxu0
      %v1061 = vadd.f32 %v363, %v1060
      %v1062 = vpop.f32.mrf.mxu0
      %v1063 = vpop.f32.mrf.mxu0
      %v1064 = vadd.f32 %v363, %v1063
      %v1065 = vpop.f32.mrf.mxu0
      %1066 = vmatprep.mubr.bf16.mxu0 0
      %1067 = vmatmul.mubr.bf16.gmra.mxu0 %v753
      %v1068 = vpop.f32.mrf.mxu0
      %v1069 = vadd.f32 %v363, %v1068
      %v1070 = vpop.f32.mrf.mxu0
      %v1071 = vpop.f32.mrf.mxu0
      %v1072 = vadd.f32 %v363, %v1071
      %v1073 = vpop.f32.mrf.mxu0
      %1074 = vmatprep.mubr.bf16.mxu0 0
      %1075 = vmatmul.mubr.bf16.gmra.mxu0 %v756
      %v1076 = vpop.f32.mrf.mxu0
      %v1077 = vadd.f32 %v363, %v1076
      %v1078 = vpop.f32.mrf.mxu0
      %v1079 = vpop.f32.mrf.mxu0
      %v1080 = vadd.f32 %v363, %v1079
      %v1081 = vpop.f32.mrf.mxu0
      %1082 = vmatprep.mubr.bf16.mxu0 0
      %1083 = vmatmul.mubr.bf16.gmra.mxu0 %v759
      %v1084 = vpop.f32.mrf.mxu0
      %v1085 = vadd.f32 %v363, %v1084
      %v1086 = vpop.f32.mrf.mxu0
      %v1087 = vpop.f32.mrf.mxu0
      %v1088 = vadd.f32 %v363, %v1087
      %v1089 = vpop.f32.mrf.mxu0
      %1090 = vmatprep.mubr.bf16.mxu0 0
      %1091 = vmatmul.mubr.bf16.gmra.mxu0 %v762
      %v1092 = vpop.f32.mrf.mxu0
      %v1093 = vadd.f32 %v363, %v1092
      %v1094 = vpop.f32.mrf.mxu0
      %v1095 = vpop.f32.mrf.mxu0
      %v1096 = vadd.f32 %v363, %v1095
      %v1097 = vpop.f32.mrf.mxu0
      %1098 = vmatprep.mubr.bf16.mxu0 0
      %1099 = vmatmul.mubr.bf16.gmra.mxu0 %v765
      %v1100 = vpop.f32.mrf.mxu0
      %v1101 = vadd.f32 %v363, %v1100
      %v1102 = vpop.f32.mrf.mxu0
      %v1103 = vpop.f32.mrf.mxu0
      %v1104 = vadd.f32 %v363, %v1103
      %v1105 = vpop.f32.mrf.mxu0
      %1106 = vmatprep.mubr.bf16.mxu0 0
      %1107 = vmatmul.mubr.bf16.gmra.mxu0 %v768
      %v1108 = vpop.f32.mrf.mxu0
      %v1109 = vadd.f32 %v363, %v1108
      %v1110 = vpop.f32.mrf.mxu0
      %v1111 = vpop.f32.mrf.mxu0
      %v1112 = vadd.f32 %v363, %v1111
      %v1113 = vpop.f32.mrf.mxu0
      %1114 = vmatprep.mubr.bf16.mxu0 0
      %1115 = vmatmul.mubr.bf16.gmra.mxu0 %v771
      %v1116 = vpop.f32.mrf.mxu0
      %v1117 = vadd.f32 %v363, %v1116
      %v1118 = vpop.f32.mrf.mxu0
      %v1119 = vpop.f32.mrf.mxu0
      %v1120 = vadd.f32 %v363, %v1119
      %v1121 = vpop.f32.mrf.mxu0
      %1122 = vmatprep.mubr.bf16.mxu0 0
      %1123 = vmatmul.mubr.bf16.gmra.mxu0 %v774
      %v1124 = vpop.f32.mrf.mxu0
      %v1125 = vadd.f32 %v363, %v1124
      %v1126 = vpop.f32.mrf.mxu0
      %v1127 = vpop.f32.mrf.mxu0
      %v1128 = vadd.f32 %v363, %v1127
      %v1129 = vpop.f32.mrf.mxu0
      %1130 = vmatprep.mubr.bf16.mxu0 0
      %1131 = vmatmul.mubr.bf16.gmra.mxu0 %v777
      %v1132 = vpop.f32.mrf.mxu0
      %v1133 = vadd.f32 %v363, %v1132
      %v1134 = vpop.f32.mrf.mxu0
      %v1135 = vpop.f32.mrf.mxu0
      %v1136 = vadd.f32 %v363, %v1135
      %v1137 = vpop.f32.mrf.mxu0
      %1138 = vmatprep.mubr.bf16.mxu0 0
      %1139 = vmatmul.mubr.bf16.gmra.mxu0 %v780
      %v1140 = vpop.f32.mrf.mxu0
      %v1141 = vadd.f32 %v363, %v1140
      %v1142 = vpop.f32.mrf.mxu0
      %v1143 = vpop.f32.mrf.mxu0
      %v1144 = vadd.f32 %v363, %v1143
      %v1145 = vpop.f32.mrf.mxu0
      %1146 = vmatprep.mubr.bf16.mxu0 0
      %1147 = vmatmul.mubr.bf16.gmra.mxu0 %v783
      %v1148 = vpop.f32.mrf.mxu0
      %v1149 = vadd.f32 %v363, %v1148
      %v1150 = vpop.f32.mrf.mxu0
      %v1151 = vpop.f32.mrf.mxu0
      %v1152 = vadd.f32 %v363, %v1151
      %v1153 = vpop.f32.mrf.mxu0
      %1154 = vmatprep.mubr.bf16.mxu0 0
      %1155 = vmatmul.mubr.bf16.gmra.mxu0 %v786
      %v1156 = vpop.f32.mrf.mxu0
      %v1157 = vadd.f32 %v363, %v1156
      %v1158 = vpop.f32.mrf.mxu0
      %v1159 = vpop.f32.mrf.mxu0
      %v1160 = vadd.f32 %v363, %v1159
      %v1161 = vpop.f32.mrf.mxu0
      %1162 = vmatprep.mubr.bf16.mxu0 0
      %1163 = vmatmul.mubr.bf16.gmra.mxu0 %v789
      %v1164 = vpop.f32.mrf.mxu0
      %v1165 = vadd.f32 %v363, %v1164
      %v1166 = vpop.f32.mrf.mxu0
      %v1167 = vpop.f32.mrf.mxu0
      %v1168 = vadd.f32 %v363, %v1167
      %v1169 = vpop.f32.mrf.mxu0
      %1170 = vmatprep.mubr.bf16.mxu0 0
      %1171 = vmatmul.mubr.bf16.gmra.mxu0 %v792
      %v1172 = vpop.f32.mrf.mxu0
      %v1173 = vadd.f32 %v363, %v1172
      %v1174 = vpop.f32.mrf.mxu0
      %v1175 = vpop.f32.mrf.mxu0
      %v1176 = vadd.f32 %v363, %v1175
      %v1177 = vpop.f32.mrf.mxu0
      %1178 = vmatprep.mubr.bf16.mxu0 0
      %1179 = vmatmul.mubr.bf16.gmra.mxu0 %v795
      %v1180 = vpop.f32.mrf.mxu0
      %v1181 = vadd.f32 %v363, %v1180
      %v1182 = vpop.f32.mrf.mxu0
      %v1183 = vpop.f32.mrf.mxu0
      %v1184 = vadd.f32 %v363, %v1183
      %v1185 = vpop.f32.mrf.mxu0
      %1186 = vmatprep.mubr.bf16.mxu0 0
      %1187 = vmatmul.mubr.bf16.gmra.mxu0 %v798
      %v1188 = vpop.f32.mrf.mxu0
      %v1189 = vadd.f32 %v363, %v1188
      %v1190 = vpop.f32.mrf.mxu0
      %v1191 = vpop.f32.mrf.mxu0
      %v1192 = vadd.f32 %v363, %v1191
      %v1193 = vpop.f32.mrf.mxu0
      %1194 = vmatprep.mubr.bf16.mxu0 0
      %1195 = vmatmul.mubr.bf16.gmra.mxu0 %v801
      %v1196 = vpop.f32.mrf.mxu0
      %v1197 = vadd.f32 %v363, %v1196
      %v1198 = vpop.f32.mrf.mxu0
      %v1199 = vpop.f32.mrf.mxu0
      %v1200 = vadd.f32 %v363, %v1199
      %v1201 = vpop.f32.mrf.mxu0
      %1202 = vmatprep.mubr.bf16.mxu0 0
      %1203 = vmatmul.mubr.bf16.gmra.mxu0 %v804
      %v1204 = vpop.f32.mrf.mxu0
      %v1205 = vadd.f32 %v363, %v1204
      %v1206 = vpop.f32.mrf.mxu0
      %v1207 = vpop.f32.mrf.mxu0
      %v1208 = vadd.f32 %v363, %v1207
      %v1209 = vpop.f32.mrf.mxu0
      %1210 = vmatprep.mubr.bf16.mxu0 0
      %1211 = vmatmul.mubr.bf16.gmra.mxu0 %v807
      %v1212 = vpop.f32.mrf.mxu0
      %v1213 = vadd.f32 %v363, %v1212
      %v1214 = vpop.f32.mrf.mxu0
      %v1215 = vpop.f32.mrf.mxu0
      %v1216 = vadd.f32 %v363, %v1215
      %v1217 = vpop.f32.mrf.mxu0
      %1218 = vmatprep.mubr.bf16.mxu0 0
      %1219 = vmatmul.mubr.bf16.gmra.mxu0 %v810
      %v1220 = vpop.f32.mrf.mxu0
      %v1221 = vadd.f32 %v363, %v1220
      %v1222 = vpop.f32.mrf.mxu0
      %v1223 = vpop.f32.mrf.mxu0
      %v1224 = vadd.f32 %v363, %v1223
      %v1225 = vpop.f32.mrf.mxu0
      %1226 = vmatprep.mubr.bf16.mxu0 0
      %1227 = vmatmul.mubr.bf16.gmra.mxu0 %v813
      %v1228 = vpop.f32.mrf.mxu0
      %v1229 = vadd.f32 %v363, %v1228
      %v1230 = vpop.f32.mrf.mxu0
      %v1231 = vpop.f32.mrf.mxu0
      %v1232 = vadd.f32 %v363, %v1231
      %v1233 = vpop.f32.mrf.mxu0
      %1234 = vmatprep.mubr.bf16.mxu0 0
      %1235 = vmatmul.mubr.bf16.gmra.mxu0 %v816
      %v1236 = vpop.f32.mrf.mxu0
      %v1237 = vadd.f32 %v363, %v1236
      %v1238 = vpop.f32.mrf.mxu0
      %v1239 = vpop.f32.mrf.mxu0
      %v1240 = vadd.f32 %v363, %v1239
      %v1241 = vpop.f32.mrf.mxu0
      %1242 = vmatprep.mubr.bf16.mxu0 0
      %1243 = vmatmul.mubr.bf16.gmra.mxu0 %v819
      %v1244 = vpop.f32.mrf.mxu0
      %v1245 = vadd.f32 %v363, %v1244
      %v1246 = vpop.f32.mrf.mxu0
      %v1247 = vpop.f32.mrf.mxu0
      %v1248 = vadd.f32 %v363, %v1247
      %v1249 = vpop.f32.mrf.mxu0
      %1250 = vmatprep.mubr.bf16.mxu0 0
      %1251 = vmatmul.mubr.bf16.gmra.mxu0 %v822
      %v1252 = vpop.f32.mrf.mxu0
      %v1253 = vadd.f32 %v363, %v1252
      %v1254 = vpop.f32.mrf.mxu0
      %v1255 = vpop.f32.mrf.mxu0
      %v1256 = vadd.f32 %v363, %v1255
      %v1257 = vpop.f32.mrf.mxu0
      %1258 = vmatprep.mubr.bf16.mxu0 0
      %1259 = vmatmul.mubr.bf16.gmra.mxu0 %v825
      %v1260 = vpop.f32.mrf.mxu0
      %v1261 = vadd.f32 %v363, %v1260
      %v1262 = vpop.f32.mrf.mxu0
      %v1263 = vpop.f32.mrf.mxu0
      %v1264 = vadd.f32 %v363, %v1263
      %v1265 = vpop.f32.mrf.mxu0
      %1266 = vmatprep.mubr.bf16.mxu0 0
      %1267 = vmatmul.mubr.bf16.gmra.mxu0 %v828
      %v1268 = vpop.f32.mrf.mxu0
      %v1269 = vadd.f32 %v363, %v1268
      %v1270 = vpop.f32.mrf.mxu0
      %v1271 = vpop.f32.mrf.mxu0
      %v1272 = vadd.f32 %v363, %v1271
      %v1273 = vpop.f32.mrf.mxu0
      %1274 = vmatprep.mubr.bf16.mxu0 0
      %1275 = vmatmul.mubr.bf16.gmra.mxu0 %v831
      %v1276 = vpop.f32.mrf.mxu0
      %v1277 = vadd.f32 %v363, %v1276
      %v1278 = vpop.f32.mrf.mxu0
      %v1279 = vpop.f32.mrf.mxu0
      %v1280 = vadd.f32 %v363, %v1279
      %v1281 = vpop.f32.mrf.mxu0
      %1282 = vmatprep.mubr.bf16.mxu0 0
      %1283 = vmatmul.mubr.bf16.gmra.mxu0 %v834
      %v1284 = vpop.f32.mrf.mxu0
      %v1285 = vadd.f32 %v363, %v1284
      %v1286 = vpop.f32.mrf.mxu0
      %v1287 = vpop.f32.mrf.mxu0
      %v1288 = vadd.f32 %v363, %v1287
      %v1289 = vpop.f32.mrf.mxu0
      %1290 = vmatprep.mubr.bf16.mxu0 0
      %1291 = vmatmul.mubr.bf16.gmra.mxu0 %v837
      %v1292 = vpop.f32.mrf.mxu0
      %v1293 = vadd.f32 %v363, %v1292
      %v1294 = vpop.f32.mrf.mxu0
      %v1295 = vpop.f32.mrf.mxu0
      %v1296 = vadd.f32 %v363, %v1295
      %v1297 = vpop.f32.mrf.mxu0
      %1298 = vmatprep.mubr.bf16.mxu0 0
      %1299 = vmatmul.mubr.bf16.gmra.mxu0 %v840
      %v1300 = vpop.f32.mrf.mxu0
      %v1301 = vadd.f32 %v363, %v1300
      %v1302 = vpop.f32.mrf.mxu0
      %v1303 = vpop.f32.mrf.mxu0
      %v1304 = vadd.f32 %v363, %v1303
      %v1305 = vpop.f32.mrf.mxu0
      %1306 = vmatprep.mubr.bf16.mxu0 0
      %1307 = vmatmul.mubr.bf16.gmra.mxu0 %v843
      %v1308 = vpop.f32.mrf.mxu0
      %v1309 = vadd.f32 %v363, %v1308
      %v1310 = vpop.f32.mrf.mxu0
      %v1311 = vpop.f32.mrf.mxu0
      %v1312 = vadd.f32 %v363, %v1311
      %v1313 = vpop.f32.mrf.mxu0
      %1314 = vmatprep.mubr.bf16.mxu0 0
      %1315 = vmatmul.mubr.bf16.gmra.mxu0 %v846
      %v1316 = vpop.f32.mrf.mxu0
      %v1317 = vadd.f32 %v363, %v1316
      %v1318 = vpop.f32.mrf.mxu0
      %v1319 = vpop.f32.mrf.mxu0
      %v1320 = vadd.f32 %v363, %v1319
      %v1321 = vpop.f32.mrf.mxu0
      %1322 = vmatprep.mubr.bf16.mxu0 0
      %1323 = vmatmul.mubr.bf16.gmra.mxu0 %v849
      %v1324 = vpop.f32.mrf.mxu0
      %v1325 = vadd.f32 %v363, %v1324
      %v1326 = vpop.f32.mrf.mxu0
      %v1327 = vpop.f32.mrf.mxu0
      %v1328 = vadd.f32 %v363, %v1327
      %v1329 = vpop.f32.mrf.mxu0
      %1330 = vmatprep.mubr.bf16.mxu0 0
      %1331 = vmatmul.mubr.bf16.gmra.mxu0 %v852
      %v1332 = vpop.f32.mrf.mxu0
      %v1333 = vadd.f32 %v363, %v1332
      %v1334 = vpop.f32.mrf.mxu0
      %v1335 = vpop.f32.mrf.mxu0
      %v1336 = vadd.f32 %v363, %v1335
      %v1337 = vpop.f32.mrf.mxu0
      %1338 = vmatprep.mubr.bf16.mxu0 0
      %1339 = vmatmul.mubr.bf16.gmra.mxu0 %v855
      %v1340 = vpop.f32.mrf.mxu0
      %v1341 = vadd.f32 %v363, %v1340
      %v1342 = vpop.f32.mrf.mxu0
      %v1343 = vpop.f32.mrf.mxu0
      %v1344 = vadd.f32 %v363, %v1343
      %v1345 = vpop.f32.mrf.mxu0
      %1346 = vmatprep.mubr.bf16.mxu0 0
      %1347 = vmatmul.mubr.bf16.gmra.mxu0 %v858
      %v1348 = vpop.f32.mrf.mxu0
      %v1349 = vadd.f32 %v363, %v1348
      %v1350 = vpop.f32.mrf.mxu0
      %v1351 = vpop.f32.mrf.mxu0
      %v1352 = vadd.f32 %v363, %v1351
      %v1353 = vpop.f32.mrf.mxu0
      %1354 = vmatprep.mubr.bf16.mxu0 0
      %1355 = vmatmul.mubr.bf16.gmra.mxu0 %v861
      %v1356 = vpop.f32.mrf.mxu0
      %v1357 = vadd.f32 %v363, %v1356
      %v1358 = vpop.f32.mrf.mxu0
      %v1359 = vpop.f32.mrf.mxu0
      %v1360 = vadd.f32 %v363, %v1359
      %v1361 = vpop.f32.mrf.mxu0
      %1362 = vmatprep.mubr.bf16.mxu0 0
      %1363 = vmatmul.mubr.bf16.gmra.mxu0 %v864
      %v1364 = vpop.f32.mrf.mxu0
      %v1365 = vadd.f32 %v363, %v1364
      %v1366 = vpop.f32.mrf.mxu0
      %v1367 = vpop.f32.mrf.mxu0
      %v1368 = vadd.f32 %v363, %v1367
      %v1369 = vpop.f32.mrf.mxu0
      %1370 = vmatprep.mubr.bf16.mxu0 0
      %1371 = vmatmul.mubr.bf16.gmra.mxu0 %v867
      %v1372 = vpop.f32.mrf.mxu0
      %v1373 = vadd.f32 %v363, %v1372
      %v1374 = vpop.f32.mrf.mxu0
      %v1375 = vpop.f32.mrf.mxu0
      %v1376 = vadd.f32 %v363, %v1375
      %v1377 = vpop.f32.mrf.mxu0
      %1378 = vmatprep.mubr.bf16.mxu0 0
      %1379 = vmatmul.mubr.bf16.gmra.mxu0 %v870
      %v1380 = vpop.f32.mrf.mxu0
      %v1381 = vadd.f32 %v363, %v1380
      %v1382 = vpop.f32.mrf.mxu0
      %v1383 = vpop.f32.mrf.mxu0
      %v1384 = vadd.f32 %v363, %v1383
      %v1385 = vpop.f32.mrf.mxu0
      %1386 = vmatprep.mubr.bf16.mxu0 0
      %1387 = vmatmul.mubr.bf16.gmra.mxu0 %v873
      %v1388 = vpop.f32.mrf.mxu0
      %v1389 = vadd.f32 %v363, %v1388
      %v1390 = vpop.f32.mrf.mxu0
      %v1391 = vpop.f32.mrf.mxu0
      %v1392 = vadd.f32 %v363, %v1391
      %v1393 = vpop.f32.mrf.mxu0
      %1394 = vmatprep.mubr.bf16.mxu0 0
      %1395 = vmatmul.mubr.bf16.gmra.mxu0 %v876
      %v1396 = vpop.f32.mrf.mxu0
      %v1397 = vadd.f32 %v363, %v1396
      %v1398 = vpop.f32.mrf.mxu0
      %v1399 = vpop.f32.mrf.mxu0
      %v1400 = vadd.f32 %v363, %v1399
      %v1401 = vpop.f32.mrf.mxu0
      %1402 = vmatprep.mubr.bf16.mxu0 0
      %1403 = vmatmul.mubr.bf16.gmra.mxu0 %v879
      %v1404 = vpop.f32.mrf.mxu0
      %v1405 = vadd.f32 %v363, %v1404
      %v1406 = vpop.f32.mrf.mxu0
      %v1407 = vpop.f32.mrf.mxu0
      %v1408 = vadd.f32 %v363, %v1407
      %v1409 = vpop.f32.mrf.mxu0
      %1410 = vmatprep.mubr.bf16.mxu0 0
      %1411 = vmatmul.mubr.bf16.gmra.mxu0 %v882
      %v1412 = vpop.f32.mrf.mxu0
      %v1413 = vadd.f32 %v363, %v1412
      %v1414 = vpop.f32.mrf.mxu0
      %v1415 = vpop.f32.mrf.mxu0
      %v1416 = vadd.f32 %v363, %v1415
      %v1417 = vpop.f32.mrf.mxu0
      %1418 = vmatprep.mubr.bf16.mxu0 0
      %1419 = vmatmul.mubr.bf16.gmra.mxu0 %v885
      %v1420 = vpop.f32.mrf.mxu0
      %v1421 = vadd.f32 %v363, %v1420
      %v1422 = vpop.f32.mrf.mxu0
      %v1423 = vpop.f32.mrf.mxu0
      %v1424 = vadd.f32 %v363, %v1423
      %v1425 = vpop.f32.mrf.mxu0
      %1426 = vmatprep.mubr.bf16.mxu0 0
      %1427 = vmatmul.mubr.bf16.gmra.mxu0 %v888
      %v1428 = vpop.f32.mrf.mxu0
      %v1429 = vadd.f32 %v363, %v1428
      %v1430 = vpop.f32.mrf.mxu0
      %v1431 = vpop.f32.mrf.mxu0
      %v1432 = vadd.f32 %v363, %v1431
      %v1433 = vpop.f32.mrf.mxu0
      %1434 = vdwg.mxu0
      %v1435 = vmul.f32 %v925, 0.2
      %v1436 = vmul.f32 %v928, 0.2
      %v1437 = vmul.f32 %v933, 0.2
      %v1438 = vmul.f32 %v936, 0.2
      %v1439 = vmul.f32 %v941, 0.2
      %v1440 = vmul.f32 %v944, 0.2
      %v1441 = vmul.f32 %v949, 0.2
      %v1442 = vmul.f32 %v952, 0.2
      %v1443 = vmul.f32 %v957, 0.2
      %v1444 = vmul.f32 %v960, 0.2
      %v1445 = vmul.f32 %v965, 0.2
      %v1446 = vmul.f32 %v968, 0.2
      %v1447 = vmul.f32 %v973, 0.2
      %v1448 = vmul.f32 %v976, 0.2
      %v1449 = vmul.f32 %v981, 0.2
      %v1450 = vmul.f32 %v984, 0.2
      %v1451 = vmul.f32 %v989, 0.2
      %v1452 = vmul.f32 %v992, 0.2
      %v1453 = vmul.f32 %v997, 0.2
      %v1454 = vmul.f32 %v1000, 0.2
      %v1455 = vmul.f32 %v1005, 0.2
      %v1456 = vmul.f32 %v1008, 0.2
      %v1457 = vmul.f32 %v1013, 0.2
      %v1458 = vmul.f32 %v1016, 0.2
      %v1459 = vmul.f32 %v1021, 0.2
      %v1460 = vmul.f32 %v1024, 0.2
      %v1461 = vmul.f32 %v1029, 0.2
      %v1462 = vmul.f32 %v1032, 0.2
      %v1463 = vmul.f32 %v1037, 0.2
      %v1464 = vmul.f32 %v1040, 0.2
      %v1465 = vmul.f32 %v1045, 0.2
      %v1466 = vmul.f32 %v1048, 0.2
      %v1467 = vmul.f32 %v1053, 0.2
      %v1468 = vmul.f32 %v1056, 0.2
      %v1469 = vmul.f32 %v1061, 0.2
      %v1470 = vmul.f32 %v1064, 0.2
      %v1471 = vmul.f32 %v1069, 0.2
      %v1472 = vmul.f32 %v1072, 0.2
      %v1473 = vmul.f32 %v1077, 0.2
      %v1474 = vmul.f32 %v1080, 0.2
      %v1475 = vmul.f32 %v1085, 0.2
      %v1476 = vmul.f32 %v1088, 0.2
      %v1477 = vmul.f32 %v1093, 0.2
      %v1478 = vmul.f32 %v1096, 0.2
      %v1479 = vmul.f32 %v1101, 0.2
      %v1480 = vmul.f32 %v1104, 0.2
      %v1481 = vmul.f32 %v1109, 0.2
      %v1482 = vmul.f32 %v1112, 0.2
      %v1483 = vmul.f32 %v1117, 0.2
      %v1484 = vmul.f32 %v1120, 0.2
      %v1485 = vmul.f32 %v1125, 0.2
      %v1486 = vmul.f32 %v1128, 0.2
      %v1487 = vmul.f32 %v1133, 0.2
      %v1488 = vmul.f32 %v1136, 0.2
      %v1489 = vmul.f32 %v1141, 0.2
      %v1490 = vmul.f32 %v1144, 0.2
      %v1491 = vmul.f32 %v1149, 0.2
      %v1492 = vmul.f32 %v1152, 0.2
      %v1493 = vmul.f32 %v1157, 0.2
      %v1494 = vmul.f32 %v1160, 0.2
      %v1495 = vmul.f32 %v1165, 0.2
      %v1496 = vmul.f32 %v1168, 0.2
      %v1497 = vmul.f32 %v1173, 0.2
      %v1498 = vmul.f32 %v1176, 0.2
      %v1499 = vmul.f32 %v1181, 0.2
      %v1500 = vmul.f32 %v1184, 0.2
      %v1501 = vmul.f32 %v1189, 0.2
      %v1502 = vmul.f32 %v1192, 0.2
      %v1503 = vmul.f32 %v1197, 0.2
      %v1504 = vmul.f32 %v1200, 0.2
      %v1505 = vmul.f32 %v1205, 0.2
      %v1506 = vmul.f32 %v1208, 0.2
      %v1507 = vmul.f32 %v1213, 0.2
      %v1508 = vmul.f32 %v1216, 0.2
      %v1509 = vmul.f32 %v1221, 0.2
      %v1510 = vmul.f32 %v1224, 0.2
      %v1511 = vmul.f32 %v1229, 0.2
      %v1512 = vmul.f32 %v1232, 0.2
      %v1513 = vmul.f32 %v1237, 0.2
      %v1514 = vmul.f32 %v1240, 0.2
      %v1515 = vmul.f32 %v1245, 0.2
      %v1516 = vmul.f32 %v1248, 0.2
      %v1517 = vmul.f32 %v1253, 0.2
      %v1518 = vmul.f32 %v1256, 0.2
      %v1519 = vmul.f32 %v1261, 0.2
      %v1520 = vmul.f32 %v1264, 0.2
      %v1521 = vmul.f32 %v1269, 0.2
      %v1522 = vmul.f32 %v1272, 0.2
      %v1523 = vmul.f32 %v1277, 0.2
      %v1524 = vmul.f32 %v1280, 0.2
      %v1525 = vmul.f32 %v1285, 0.2
      %v1526 = vmul.f32 %v1288, 0.2
      %v1527 = vmul.f32 %v1293, 0.2
      %v1528 = vmul.f32 %v1296, 0.2
      %v1529 = vmul.f32 %v1301, 0.2
      %v1530 = vmul.f32 %v1304, 0.2
      %v1531 = vmul.f32 %v1309, 0.2
      %v1532 = vmul.f32 %v1312, 0.2
      %v1533 = vmul.f32 %v1317, 0.2
      %v1534 = vmul.f32 %v1320, 0.2
      %v1535 = vmul.f32 %v1325, 0.2
      %v1536 = vmul.f32 %v1328, 0.2
      %v1537 = vmul.f32 %v1333, 0.2
      %v1538 = vmul.f32 %v1336, 0.2
      %v1539 = vmul.f32 %v1341, 0.2
      %v1540 = vmul.f32 %v1344, 0.2
      %v1541 = vmul.f32 %v1349, 0.2
      %v1542 = vmul.f32 %v1352, 0.2
      %v1543 = vmul.f32 %v1357, 0.2
      %v1544 = vmul.f32 %v1360, 0.2
      %v1545 = vmul.f32 %v1365, 0.2
      %v1546 = vmul.f32 %v1368, 0.2
      %v1547 = vmul.f32 %v1373, 0.2
      %v1548 = vmul.f32 %v1376, 0.2
      %v1549 = vmul.f32 %v1381, 0.2
      %v1550 = vmul.f32 %v1384, 0.2
      %v1551 = vmul.f32 %v1389, 0.2
      %v1552 = vmul.f32 %v1392, 0.2
      %v1553 = vmul.f32 %v1397, 0.2
      %v1554 = vmul.f32 %v1400, 0.2
      %v1555 = vmul.f32 %v1405, 0.2
      %v1556 = vmul.f32 %v1408, 0.2
      %v1557 = vmul.f32 %v1413, 0.2
      %v1558 = vmul.f32 %v1416, 0.2
      %v1559 = vmul.f32 %v1421, 0.2
      %v1560 = vmul.f32 %v1424, 0.2
      %v1561 = vmul.f32 %v1429, 0.2
      %v1562 = vmul.f32 %v1432, 0.2
      %v1563 = vmax.f32 %v925, %v1435
      %v1564 = vmax.f32 %v928, %v1436
      %v1565 = vmax.f32 %v933, %v1437
      %v1566 = vmax.f32 %v936, %v1438
      %v1567 = vmax.f32 %v941, %v1439
      %v1568 = vmax.f32 %v944, %v1440
      %v1569 = vmax.f32 %v949, %v1441
      %v1570 = vmax.f32 %v952, %v1442
      %v1571 = vmax.f32 %v957, %v1443
      %v1572 = vmax.f32 %v960, %v1444
      %v1573 = vmax.f32 %v965, %v1445
      %v1574 = vmax.f32 %v968, %v1446
      %v1575 = vmax.f32 %v973, %v1447
      %v1576 = vmax.f32 %v976, %v1448
      %v1577 = vmax.f32 %v981, %v1449
      %v1578 = vmax.f32 %v984, %v1450
      %v1579 = vmax.f32 %v989, %v1451
      %v1580 = vmax.f32 %v992, %v1452
      %v1581 = vmax.f32 %v997, %v1453
      %v1582 = vmax.f32 %v1000, %v1454
      %v1583 = vmax.f32 %v1005, %v1455
      %v1584 = vmax.f32 %v1008, %v1456
      %v1585 = vmax.f32 %v1013, %v1457
      %v1586 = vmax.f32 %v1016, %v1458
      %v1587 = vmax.f32 %v1021, %v1459
      %v1588 = vmax.f32 %v1024, %v1460
      %v1589 = vmax.f32 %v1029, %v1461
      %v1590 = vmax.f32 %v1032, %v1462
      %v1591 = vmax.f32 %v1037, %v1463
      %v1592 = vmax.f32 %v1040, %v1464
      %v1593 = vmax.f32 %v1045, %v1465
      %v1594 = vmax.f32 %v1048, %v1466
      %v1595 = vmax.f32 %v1053, %v1467
      %v1596 = vmax.f32 %v1056, %v1468
      %v1597 = vmax.f32 %v1061, %v1469
      %v1598 = vmax.f32 %v1064, %v1470
      %v1599 = vmax.f32 %v1069, %v1471
      %v1600 = vmax.f32 %v1072, %v1472
      %v1601 = vmax.f32 %v1077, %v1473
      %v1602 = vmax.f32 %v1080, %v1474
      %v1603 = vmax.f32 %v1085, %v1475
      %v1604 = vmax.f32 %v1088, %v1476
      %v1605 = vmax.f32 %v1093, %v1477
      %v1606 = vmax.f32 %v1096, %v1478
      %v1607 = vmax.f32 %v1101, %v1479
      %v1608 = vmax.f32 %v1104, %v1480
      %v1609 = vmax.f32 %v1109, %v1481
      %v1610 = vmax.f32 %v1112, %v1482
      %v1611 = vmax.f32 %v1117, %v1483
      %v1612 = vmax.f32 %v1120, %v1484
      %v1613 = vmax.f32 %v1125, %v1485
      %v1614 = vmax.f32 %v1128, %v1486
      %v1615 = vmax.f32 %v1133, %v1487
      %v1616 = vmax.f32 %v1136, %v1488
      %v1617 = vmax.f32 %v1141, %v1489
      %v1618 = vmax.f32 %v1144, %v1490
      %v1619 = vmax.f32 %v1149, %v1491
      %v1620 = vmax.f32 %v1152, %v1492
      %v1621 = vmax.f32 %v1157, %v1493
      %v1622 = vmax.f32 %v1160, %v1494
      %v1623 = vmax.f32 %v1165, %v1495
      %v1624 = vmax.f32 %v1168, %v1496
      %v1625 = vmax.f32 %v1173, %v1497
      %v1626 = vmax.f32 %v1176, %v1498
      %v1627 = vmax.f32 %v1181, %v1499
      %v1628 = vmax.f32 %v1184, %v1500
      %v1629 = vmax.f32 %v1189, %v1501
      %v1630 = vmax.f32 %v1192, %v1502
      %v1631 = vmax.f32 %v1197, %v1503
      %v1632 = vmax.f32 %v1200, %v1504
      %v1633 = vmax.f32 %v1205, %v1505
      %v1634 = vmax.f32 %v1208, %v1506
      %v1635 = vmax.f32 %v1213, %v1507
      %v1636 = vmax.f32 %v1216, %v1508
      %v1637 = vmax.f32 %v1221, %v1509
      %v1638 = vmax.f32 %v1224, %v1510
      %v1639 = vmax.f32 %v1229, %v1511
      %v1640 = vmax.f32 %v1232, %v1512
      %v1641 = vmax.f32 %v1237, %v1513
      %v1642 = vmax.f32 %v1240, %v1514
      %v1643 = vmax.f32 %v1245, %v1515
      %v1644 = vmax.f32 %v1248, %v1516
      %v1645 = vmax.f32 %v1253, %v1517
      %v1646 = vmax.f32 %v1256, %v1518
      %v1647 = vmax.f32 %v1261, %v1519
      %v1648 = vmax.f32 %v1264, %v1520
      %v1649 = vmax.f32 %v1269, %v1521
      %v1650 = vmax.f32 %v1272, %v1522
      %v1651 = vmax.f32 %v1277, %v1523
      %v1652 = vmax.f32 %v1280, %v1524
      %v1653 = vmax.f32 %v1285, %v1525
      %v1654 = vmax.f32 %v1288, %v1526
      %v1655 = vmax.f32 %v1293, %v1527
      %v1656 = vmax.f32 %v1296, %v1528
      %v1657 = vmax.f32 %v1301, %v1529
      %v1658 = vmax.f32 %v1304, %v1530
      %v1659 = vmax.f32 %v1309, %v1531
      %v1660 = vmax.f32 %v1312, %v1532
      %v1661 = vmax.f32 %v1317, %v1533
      %v1662 = vmax.f32 %v1320, %v1534
      %v1663 = vmax.f32 %v1325, %v1535
      %v1664 = vmax.f32 %v1328, %v1536
      %v1665 = vmax.f32 %v1333, %v1537
      %v1666 = vmax.f32 %v1336, %v1538
      %v1667 = vmax.f32 %v1341, %v1539
      %v1668 = vmax.f32 %v1344, %v1540
      %v1669 = vmax.f32 %v1349, %v1541
      %v1670 = vmax.f32 %v1352, %v1542
      %v1671 = vmax.f32 %v1357, %v1543
      %v1672 = vmax.f32 %v1360, %v1544
      %v1673 = vmax.f32 %v1365, %v1545
      %v1674 = vmax.f32 %v1368, %v1546
      %v1675 = vmax.f32 %v1373, %v1547
      %v1676 = vmax.f32 %v1376, %v1548
      %v1677 = vmax.f32 %v1381, %v1549
      %v1678 = vmax.f32 %v1384, %v1550
      %v1679 = vmax.f32 %v1389, %v1551
      %v1680 = vmax.f32 %v1392, %v1552
      %v1681 = vmax.f32 %v1397, %v1553
      %v1682 = vmax.f32 %v1400, %v1554
      %v1683 = vmax.f32 %v1405, %v1555
      %v1684 = vmax.f32 %v1408, %v1556
      %v1685 = vmax.f32 %v1413, %v1557
      %v1686 = vmax.f32 %v1416, %v1558
      %v1687 = vmax.f32 %v1421, %v1559
      %v1688 = vmax.f32 %v1424, %v1560
      %v1689 = vmax.f32 %v1429, %v1561
      %v1690 = vmax.f32 %v1432, %v1562
      %v1691 = vpack.c.bf16 %v1564, %v1563
      %v1692 = vpack.c.bf16 %v1566, %v1565
      %v1693 = vpack.c.bf16 %v1568, %v1567
      %v1694 = vpack.c.bf16 %v1570, %v1569
      %v1695 = vpack.c.bf16 %v1572, %v1571
      %v1696 = vpack.c.bf16 %v1574, %v1573
      %v1697 = vpack.c.bf16 %v1576, %v1575
      %v1698 = vpack.c.bf16 %v1578, %v1577
      %v1699 = vpack.c.bf16 %v1580, %v1579
      %v1700 = vpack.c.bf16 %v1582, %v1581
      %v1701 = vpack.c.bf16 %v1584, %v1583
      %v1702 = vpack.c.bf16 %v1586, %v1585
      %v1703 = vpack.c.bf16 %v1588, %v1587
      %v1704 = vpack.c.bf16 %v1590, %v1589
      %v1705 = vpack.c.bf16 %v1592, %v1591
      %v1706 = vpack.c.bf16 %v1594, %v1593
      %v1707 = vpack.c.bf16 %v1596, %v1595
      %v1708 = vpack.c.bf16 %v1598, %v1597
      %v1709 = vpack.c.bf16 %v1600, %v1599
      %v1710 = vpack.c.bf16 %v1602, %v1601
      %v1711 = vpack.c.bf16 %v1604, %v1603
      %v1712 = vpack.c.bf16 %v1606, %v1605
      %v1713 = vpack.c.bf16 %v1608, %v1607
      %v1714 = vpack.c.bf16 %v1610, %v1609
      %v1715 = vpack.c.bf16 %v1612, %v1611
      %v1716 = vpack.c.bf16 %v1614, %v1613
      %v1717 = vpack.c.bf16 %v1616, %v1615
      %v1718 = vpack.c.bf16 %v1618, %v1617
      %v1719 = vpack.c.bf16 %v1620, %v1619
      %v1720 = vpack.c.bf16 %v1622, %v1621
      %v1721 = vpack.c.bf16 %v1624, %v1623
      %v1722 = vpack.c.bf16 %v1626, %v1625
      %v1723 = vpack.c.bf16 %v1628, %v1627
      %v1724 = vpack.c.bf16 %v1630, %v1629
      %v1725 = vpack.c.bf16 %v1632, %v1631
      %v1726 = vpack.c.bf16 %v1634, %v1633
      %v1727 = vpack.c.bf16 %v1636, %v1635
      %v1728 = vpack.c.bf16 %v1638, %v1637
      %v1729 = vpack.c.bf16 %v1640, %v1639
      %v1730 = vpack.c.bf16 %v1642, %v1641
      %v1731 = vpack.c.bf16 %v1644, %v1643
      %v1732 = vpack.c.bf16 %v1646, %v1645
      %v1733 = vpack.c.bf16 %v1648, %v1647
      %v1734 = vpack.c.bf16 %v1650, %v1649
      %v1735 = vpack.c.bf16 %v1652, %v1651
      %v1736 = vpack.c.bf16 %v1654, %v1653
      %v1737 = vpack.c.bf16 %v1656, %v1655
      %v1738 = vpack.c.bf16 %v1658, %v1657
      %v1739 = vpack.c.bf16 %v1660, %v1659
      %v1740 = vpack.c.bf16 %v1662, %v1661
      %v1741 = vpack.c.bf16 %v1664, %v1663
      %v1742 = vpack.c.bf16 %v1666, %v1665
      %v1743 = vpack.c.bf16 %v1668, %v1667
      %v1744 = vpack.c.bf16 %v1670, %v1669
      %v1745 = vpack.c.bf16 %v1672, %v1671
      %v1746 = vpack.c.bf16 %v1674, %v1673
      %v1747 = vpack.c.bf16 %v1676, %v1675
      %v1748 = vpack.c.bf16 %v1678, %v1677
      %v1749 = vpack.c.bf16 %v1680, %v1679
      %v1750 = vpack.c.bf16 %v1682, %v1681
      %v1751 = vpack.c.bf16 %v1684, %v1683
      %v1752 = vpack.c.bf16 %v1686, %v1685
      %v1753 = vpack.c.bf16 %v1688, %v1687
      %v1754 = vpack.c.bf16 %v1690, %v1689
      %v1819 = vunpack.c.l.b16 %v1691
      %v1820 = vunpack.c.h.b16 %v1691
      %v1821 = vunpack.c.l.b16 %v1692
      %v1822 = vunpack.c.h.b16 %v1692
      %v1823 = vunpack.c.l.b16 %v1693
      %v1824 = vunpack.c.h.b16 %v1693
      %v1825 = vunpack.c.l.b16 %v1694
      %v1826 = vunpack.c.h.b16 %v1694
      %v1827 = vunpack.c.l.b16 %v1695
      %v1828 = vunpack.c.h.b16 %v1695
      %v1829 = vunpack.c.l.b16 %v1696
      %v1830 = vunpack.c.h.b16 %v1696
      %v1831 = vunpack.c.l.b16 %v1697
      %v1832 = vunpack.c.h.b16 %v1697
      %v1833 = vunpack.c.l.b16 %v1698
      %v1834 = vunpack.c.h.b16 %v1698
      %v1835 = vunpack.c.l.b16 %v1699
      %v1836 = vunpack.c.h.b16 %v1699
      %v1837 = vunpack.c.l.b16 %v1700
      %v1838 = vunpack.c.h.b16 %v1700
      %v1839 = vunpack.c.l.b16 %v1701
      %v1840 = vunpack.c.h.b16 %v1701
      %v1841 = vunpack.c.l.b16 %v1702
      %v1842 = vunpack.c.h.b16 %v1702
      %v1843 = vunpack.c.l.b16 %v1703
      %v1844 = vunpack.c.h.b16 %v1703
      %v1845 = vunpack.c.l.b16 %v1704
      %v1846 = vunpack.c.h.b16 %v1704
      %v1847 = vunpack.c.l.b16 %v1705
      %v1848 = vunpack.c.h.b16 %v1705
      %v1849 = vunpack.c.l.b16 %v1706
      %v1850 = vunpack.c.h.b16 %v1706
      %v1851 = vunpack.c.l.b16 %v1707
      %v1852 = vunpack.c.h.b16 %v1707
      %v1853 = vunpack.c.l.b16 %v1708
      %v1854 = vunpack.c.h.b16 %v1708
      %v1855 = vunpack.c.l.b16 %v1709
      %v1856 = vunpack.c.h.b16 %v1709
      %v1857 = vunpack.c.l.b16 %v1710
      %v1858 = vunpack.c.h.b16 %v1710
      %v1859 = vunpack.c.l.b16 %v1711
      %v1860 = vunpack.c.h.b16 %v1711
      %v1861 = vunpack.c.l.b16 %v1712
      %v1862 = vunpack.c.h.b16 %v1712
      %v1863 = vunpack.c.l.b16 %v1713
      %v1864 = vunpack.c.h.b16 %v1713
      %v1865 = vunpack.c.l.b16 %v1714
      %v1866 = vunpack.c.h.b16 %v1714
      %v1867 = vunpack.c.l.b16 %v1715
      %v1868 = vunpack.c.h.b16 %v1715
      %v1869 = vunpack.c.l.b16 %v1716
      %v1870 = vunpack.c.h.b16 %v1716
      %v1871 = vunpack.c.l.b16 %v1717
      %v1872 = vunpack.c.h.b16 %v1717
      %v1873 = vunpack.c.l.b16 %v1718
      %v1874 = vunpack.c.h.b16 %v1718
      %v1875 = vunpack.c.l.b16 %v1719
      %v1876 = vunpack.c.h.b16 %v1719
      %v1877 = vunpack.c.l.b16 %v1720
      %v1878 = vunpack.c.h.b16 %v1720
      %v1879 = vunpack.c.l.b16 %v1721
      %v1880 = vunpack.c.h.b16 %v1721
      %v1881 = vunpack.c.l.b16 %v1722
      %v1882 = vunpack.c.h.b16 %v1722
      %v1883 = vunpack.c.l.b16 %v1723
      %v1884 = vunpack.c.h.b16 %v1723
      %v1885 = vunpack.c.l.b16 %v1724
      %v1886 = vunpack.c.h.b16 %v1724
      %v1887 = vunpack.c.l.b16 %v1725
      %v1888 = vunpack.c.h.b16 %v1725
      %v1889 = vunpack.c.l.b16 %v1726
      %v1890 = vunpack.c.h.b16 %v1726
      %v1891 = vunpack.c.l.b16 %v1727
      %v1892 = vunpack.c.h.b16 %v1727
      %v1893 = vunpack.c.l.b16 %v1728
      %v1894 = vunpack.c.h.b16 %v1728
      %v1895 = vunpack.c.l.b16 %v1729
      %v1896 = vunpack.c.h.b16 %v1729
      %v1897 = vunpack.c.l.b16 %v1730
      %v1898 = vunpack.c.h.b16 %v1730
      %v1899 = vunpack.c.l.b16 %v1731
      %v1900 = vunpack.c.h.b16 %v1731
      %v1901 = vunpack.c.l.b16 %v1732
      %v1902 = vunpack.c.h.b16 %v1732
      %v1903 = vunpack.c.l.b16 %v1733
      %v1904 = vunpack.c.h.b16 %v1733
      %v1905 = vunpack.c.l.b16 %v1734
      %v1906 = vunpack.c.h.b16 %v1734
      %v1907 = vunpack.c.l.b16 %v1735
      %v1908 = vunpack.c.h.b16 %v1735
      %v1909 = vunpack.c.l.b16 %v1736
      %v1910 = vunpack.c.h.b16 %v1736
      %v1911 = vunpack.c.l.b16 %v1737
      %v1912 = vunpack.c.h.b16 %v1737
      %v1913 = vunpack.c.l.b16 %v1738
      %v1914 = vunpack.c.h.b16 %v1738
      %v1915 = vunpack.c.l.b16 %v1739
      %v1916 = vunpack.c.h.b16 %v1739
      %v1917 = vunpack.c.l.b16 %v1740
      %v1918 = vunpack.c.h.b16 %v1740
      %v1919 = vunpack.c.l.b16 %v1741
      %v1920 = vunpack.c.h.b16 %v1741
      %v1921 = vunpack.c.l.b16 %v1742
      %v1922 = vunpack.c.h.b16 %v1742
      %v1923 = vunpack.c.l.b16 %v1743
      %v1924 = vunpack.c.h.b16 %v1743
      %v1925 = vunpack.c.l.b16 %v1744
      %v1926 = vunpack.c.h.b16 %v1744
      %v1927 = vunpack.c.l.b16 %v1745
      %v1928 = vunpack.c.h.b16 %v1745
      %v1929 = vunpack.c.l.b16 %v1746
      %v1930 = vunpack.c.h.b16 %v1746
      %v1931 = vunpack.c.l.b16 %v1747
      %v1932 = vunpack.c.h.b16 %v1747
      %v1933 = vunpack.c.l.b16 %v1748
      %v1934 = vunpack.c.h.b16 %v1748
      %v1935 = vunpack.c.l.b16 %v1749
      %v1936 = vunpack.c.h.b16 %v1749
      %v1937 = vunpack.c.l.b16 %v1750
      %v1938 = vunpack.c.h.b16 %v1750
      %v1939 = vunpack.c.l.b16 %v1751
      %v1940 = vunpack.c.h.b16 %v1751
      %v1941 = vunpack.c.l.b16 %v1752
      %v1942 = vunpack.c.h.b16 %v1752
      %v1943 = vunpack.c.l.b16 %v1753
      %v1944 = vunpack.c.h.b16 %v1753
      %v1945 = vunpack.c.l.b16 %v1754
      %v1946 = vunpack.c.h.b16 %v1754
      %v1947 = vpack.c.b16 %v1819, %v1819
      %v1948 = vpack.c.b16 %v1820, %v1820
      %v1949 = vpack.c.b16 %v1821, %v1821
      %v1950 = vpack.c.b16 %v1822, %v1822
      %v1951 = vpack.c.b16 %v1823, %v1823
      %v1952 = vpack.c.b16 %v1824, %v1824
      %v1953 = vpack.c.b16 %v1825, %v1825
      %v1954 = vpack.c.b16 %v1826, %v1826
      %v1955 = vpack.c.b16 %v1827, %v1827
      %v1956 = vpack.c.b16 %v1828, %v1828
      %v1957 = vpack.c.b16 %v1829, %v1829
      %v1958 = vpack.c.b16 %v1830, %v1830
      %v1959 = vpack.c.b16 %v1831, %v1831
      %v1960 = vpack.c.b16 %v1832, %v1832
      %v1961 = vpack.c.b16 %v1833, %v1833
      %v1962 = vpack.c.b16 %v1834, %v1834
      %v1963 = vpack.c.b16 %v1835, %v1835
      %v1964 = vpack.c.b16 %v1836, %v1836
      %v1965 = vpack.c.b16 %v1837, %v1837
      %v1966 = vpack.c.b16 %v1838, %v1838
      %v1967 = vpack.c.b16 %v1839, %v1839
      %v1968 = vpack.c.b16 %v1840, %v1840
      %v1969 = vpack.c.b16 %v1841, %v1841
      %v1970 = vpack.c.b16 %v1842, %v1842
      %v1971 = vpack.c.b16 %v1843, %v1843
      %v1972 = vpack.c.b16 %v1844, %v1844
      %v1973 = vpack.c.b16 %v1845, %v1845
      %v1974 = vpack.c.b16 %v1846, %v1846
      %v1975 = vpack.c.b16 %v1847, %v1847
      %v1976 = vpack.c.b16 %v1848, %v1848
      %v1977 = vpack.c.b16 %v1849, %v1849
      %v1978 = vpack.c.b16 %v1850, %v1850
      %v1979 = vpack.c.b16 %v1851, %v1851
      %v1980 = vpack.c.b16 %v1852, %v1852
      %v1981 = vpack.c.b16 %v1853, %v1853
      %v1982 = vpack.c.b16 %v1854, %v1854
      %v1983 = vpack.c.b16 %v1855, %v1855
      %v1984 = vpack.c.b16 %v1856, %v1856
      %v1985 = vpack.c.b16 %v1857, %v1857
      %v1986 = vpack.c.b16 %v1858, %v1858
      %v1987 = vpack.c.b16 %v1859, %v1859
      %v1988 = vpack.c.b16 %v1860, %v1860
      %v1989 = vpack.c.b16 %v1861, %v1861
      %v1990 = vpack.c.b16 %v1862, %v1862
      %v1991 = vpack.c.b16 %v1863, %v1863
      %v1992 = vpack.c.b16 %v1864, %v1864
      %v1993 = vpack.c.b16 %v1865, %v1865
      %v1994 = vpack.c.b16 %v1866, %v1866
      %v1995 = vpack.c.b16 %v1867, %v1867
      %v1996 = vpack.c.b16 %v1868, %v1868
      %v1997 = vpack.c.b16 %v1869, %v1869
      %v1998 = vpack.c.b16 %v1870, %v1870
      %v1999 = vpack.c.b16 %v1871, %v1871
      %v2000 = vpack.c.b16 %v1872, %v1872
      %v2001 = vpack.c.b16 %v1873, %v1873
      %v2002 = vpack.c.b16 %v1874, %v1874
      %v2003 = vpack.c.b16 %v1875, %v1875
      %v2004 = vpack.c.b16 %v1876, %v1876
      %v2005 = vpack.c.b16 %v1877, %v1877
      %v2006 = vpack.c.b16 %v1878, %v1878
      %v2007 = vpack.c.b16 %v1879, %v1879
      %v2008 = vpack.c.b16 %v1880, %v1880
      %v2009 = vpack.c.b16 %v1881, %v1881
      %v2010 = vpack.c.b16 %v1882, %v1882
      %v2011 = vpack.c.b16 %v1883, %v1883
      %v2012 = vpack.c.b16 %v1884, %v1884
      %v2013 = vpack.c.b16 %v1885, %v1885
      %v2014 = vpack.c.b16 %v1886, %v1886
      %v2015 = vpack.c.b16 %v1887, %v1887
      %v2016 = vpack.c.b16 %v1888, %v1888
      %v2017 = vpack.c.b16 %v1889, %v1889
      %v2018 = vpack.c.b16 %v1890, %v1890
      %v2019 = vpack.c.b16 %v1891, %v1891
      %v2020 = vpack.c.b16 %v1892, %v1892
      %v2021 = vpack.c.b16 %v1893, %v1893
      %v2022 = vpack.c.b16 %v1894, %v1894
      %v2023 = vpack.c.b16 %v1895, %v1895
      %v2024 = vpack.c.b16 %v1896, %v1896
      %v2025 = vpack.c.b16 %v1897, %v1897
      %v2026 = vpack.c.b16 %v1898, %v1898
      %v2027 = vpack.c.b16 %v1899, %v1899
      %v2028 = vpack.c.b16 %v1900, %v1900
      %v2029 = vpack.c.b16 %v1901, %v1901
      %v2030 = vpack.c.b16 %v1902, %v1902
      %v2031 = vpack.c.b16 %v1903, %v1903
      %v2032 = vpack.c.b16 %v1904, %v1904
      %v2033 = vpack.c.b16 %v1905, %v1905
      %v2034 = vpack.c.b16 %v1906, %v1906
      %v2035 = vpack.c.b16 %v1907, %v1907
      %v2036 = vpack.c.b16 %v1908, %v1908
      %v2037 = vpack.c.b16 %v1909, %v1909
      %v2038 = vpack.c.b16 %v1910, %v1910
      %v2039 = vpack.c.b16 %v1911, %v1911
      %v2040 = vpack.c.b16 %v1912, %v1912
      %v2041 = vpack.c.b16 %v1913, %v1913
      %v2042 = vpack.c.b16 %v1914, %v1914
      %v2043 = vpack.c.b16 %v1915, %v1915
      %v2044 = vpack.c.b16 %v1916, %v1916
      %v2045 = vpack.c.b16 %v1917, %v1917
      %v2046 = vpack.c.b16 %v1918, %v1918
      %v2047 = vpack.c.b16 %v1919, %v1919
      %v2048 = vpack.c.b16 %v1920, %v1920
      %v2049 = vpack.c.b16 %v1921, %v1921
      %v2050 = vpack.c.b16 %v1922, %v1922
      %v2051 = vpack.c.b16 %v1923, %v1923
      %v2052 = vpack.c.b16 %v1924, %v1924
      %v2053 = vpack.c.b16 %v1925, %v1925
      %v2054 = vpack.c.b16 %v1926, %v1926
      %v2055 = vpack.c.b16 %v1927, %v1927
      %v2056 = vpack.c.b16 %v1928, %v1928
      %v2057 = vpack.c.b16 %v1929, %v1929
      %v2058 = vpack.c.b16 %v1930, %v1930
      %v2059 = vpack.c.b16 %v1931, %v1931
      %v2060 = vpack.c.b16 %v1932, %v1932
      %v2061 = vpack.c.b16 %v1933, %v1933
      %v2062 = vpack.c.b16 %v1934, %v1934
      %v2063 = vpack.c.b16 %v1935, %v1935
      %v2064 = vpack.c.b16 %v1936, %v1936
      %v2065 = vpack.c.b16 %v1937, %v1937
      %v2066 = vpack.c.b16 %v1938, %v1938
      %v2067 = vpack.c.b16 %v1939, %v1939
      %v2068 = vpack.c.b16 %v1940, %v1940
      %v2069 = vpack.c.b16 %v1941, %v1941
      %v2070 = vpack.c.b16 %v1942, %v1942
      %v2071 = vpack.c.b16 %v1943, %v1943
      %v2072 = vpack.c.b16 %v1944, %v1944
      %v2073 = vpack.c.b16 %v1945, %v1945
      %v2074 = vpack.c.b16 %v1946, %v1946
      %2203 = vst [vmem:[%s223] sm:$0xf] %v1947
      %2204 = vst [vmem:[%s223 + $0x4] sm:$0xf] %v1948
      %2205 = vst [vmem:[%s223 + $0x8] sm:$0xf] %v1949
      %2206 = vst [vmem:[%s223 + $0xc] sm:$0xf] %v1950
      %2207 = vst [vmem:[%s223 + $0x10] sm:$0xf] %v1951
      %2208 = vst [vmem:[%s223 + $0x14] sm:$0xf] %v1952
      %2209 = vst [vmem:[%s223 + $0x18] sm:$0xf] %v1953
      %2210 = vst [vmem:[%s223 + $0x1c] sm:$0xf] %v1954
      %2211 = vst [vmem:[%s223 + $0x20] sm:$0xf] %v1955
      %2212 = vst [vmem:[%s223 + $0x24] sm:$0xf] %v1956
      %2213 = vst [vmem:[%s223 + $0x28] sm:$0xf] %v1957
      %2214 = vst [vmem:[%s223 + $0x2c] sm:$0xf] %v1958
      %2215 = vst [vmem:[%s223 + $0x30] sm:$0xf] %v1959
      %2216 = vst [vmem:[%s223 + $0x34] sm:$0xf] %v1960
      %2217 = vst [vmem:[%s223 + $0x38] sm:$0xf] %v1961
      %2218 = vst [vmem:[%s223 + $0x3c] sm:$0xf] %v1962
      %2219 = vst [vmem:[%s223 + $0x40] sm:$0xf] %v1963
      %2220 = vst [vmem:[%s223 + $0x44] sm:$0xf] %v1964
      %2221 = vst [vmem:[%s223 + $0x48] sm:$0xf] %v1965
      %2222 = vst [vmem:[%s223 + $0x4c] sm:$0xf] %v1966
      %2223 = vst [vmem:[%s223 + $0x50] sm:$0xf] %v1967
      %2224 = vst [vmem:[%s223 + $0x54] sm:$0xf] %v1968
      %2225 = vst [vmem:[%s223 + $0x58] sm:$0xf] %v1969
      %2226 = vst [vmem:[%s223 + $0x5c] sm:$0xf] %v1970
      %2227 = vst [vmem:[%s223 + $0x60] sm:$0xf] %v1971
      %2228 = vst [vmem:[%s223 + $0x64] sm:$0xf] %v1972
      %2229 = vst [vmem:[%s223 + $0x68] sm:$0xf] %v1973
      %2230 = vst [vmem:[%s223 + $0x6c] sm:$0xf] %v1974
      %2231 = vst [vmem:[%s223 + $0x70] sm:$0xf] %v1975
      %2232 = vst [vmem:[%s223 + $0x74] sm:$0xf] %v1976
      %2233 = vst [vmem:[%s223 + $0x78] sm:$0xf] %v1977
      %2234 = vst [vmem:[%s223 + $0x7c] sm:$0xf] %v1978
      %2235 = vst [vmem:[%s223 + $0x80] sm:$0xf] %v1979
      %2236 = vst [vmem:[%s223 + $0x84] sm:$0xf] %v1980
      %2237 = vst [vmem:[%s223 + $0x88] sm:$0xf] %v1981
      %2238 = vst [vmem:[%s223 + $0x8c] sm:$0xf] %v1982
      %2239 = vst [vmem:[%s223 + $0x90] sm:$0xf] %v1983
      %2240 = vst [vmem:[%s223 + $0x94] sm:$0xf] %v1984
      %2241 = vst [vmem:[%s223 + $0x98] sm:$0xf] %v1985
      %2242 = vst [vmem:[%s223 + $0x9c] sm:$0xf] %v1986
      %2243 = vst [vmem:[%s223 + $0xa0] sm:$0xf] %v1987
      %2244 = vst [vmem:[%s223 + $0xa4] sm:$0xf] %v1988
      %2245 = vst [vmem:[%s223 + $0xa8] sm:$0xf] %v1989
      %2246 = vst [vmem:[%s223 + $0xac] sm:$0xf] %v1990
      %2247 = vst [vmem:[%s223 + $0xb0] sm:$0xf] %v1991
      %2248 = vst [vmem:[%s223 + $0xb4] sm:$0xf] %v1992
      %2249 = vst [vmem:[%s223 + $0xb8] sm:$0xf] %v1993
      %2250 = vst [vmem:[%s223 + $0xbc] sm:$0xf] %v1994
      %2251 = vst [vmem:[%s223 + $0xc0] sm:$0xf] %v1995
      %2252 = vst [vmem:[%s223 + $0xc4] sm:$0xf] %v1996
      %2253 = vst [vmem:[%s223 + $0xc8] sm:$0xf] %v1997
      %2254 = vst [vmem:[%s223 + $0xcc] sm:$0xf] %v1998
      %2255 = vst [vmem:[%s223 + $0xd0] sm:$0xf] %v1999
      %2256 = vst [vmem:[%s223 + $0xd4] sm:$0xf] %v2000
      %2257 = vst [vmem:[%s223 + $0xd8] sm:$0xf] %v2001
      %2258 = vst [vmem:[%s223 + $0xdc] sm:$0xf] %v2002
      %2259 = vst [vmem:[%s223 + $0xe0] sm:$0xf] %v2003
      %2260 = vst [vmem:[%s223 + $0xe4] sm:$0xf] %v2004
      %2261 = vst [vmem:[%s223 + $0xe8] sm:$0xf] %v2005
      %2262 = vst [vmem:[%s223 + $0xec] sm:$0xf] %v2006
      %2263 = vst [vmem:[%s223 + $0xf0] sm:$0xf] %v2007
      %2264 = vst [vmem:[%s223 + $0xf4] sm:$0xf] %v2008
      %2265 = vst [vmem:[%s223 + $0xf8] sm:$0xf] %v2009
      %2266 = vst [vmem:[%s223 + $0xfc] sm:$0xf] %v2010
      %2267 = vst [vmem:[%s223 + $0x100] sm:$0xf] %v2011
      %2268 = vst [vmem:[%s223 + $0x104] sm:$0xf] %v2012
      %2269 = vst [vmem:[%s223 + $0x108] sm:$0xf] %v2013
      %2270 = vst [vmem:[%s223 + $0x10c] sm:$0xf] %v2014
      %2271 = vst [vmem:[%s223 + $0x110] sm:$0xf] %v2015
      %2272 = vst [vmem:[%s223 + $0x114] sm:$0xf] %v2016
      %2273 = vst [vmem:[%s223 + $0x118] sm:$0xf] %v2017
      %2274 = vst [vmem:[%s223 + $0x11c] sm:$0xf] %v2018
      %2275 = vst [vmem:[%s223 + $0x120] sm:$0xf] %v2019
      %2276 = vst [vmem:[%s223 + $0x124] sm:$0xf] %v2020
      %2277 = vst [vmem:[%s223 + $0x128] sm:$0xf] %v2021
      %2278 = vst [vmem:[%s223 + $0x12c] sm:$0xf] %v2022
      %2279 = vst [vmem:[%s223 + $0x130] sm:$0xf] %v2023
      %2280 = vst [vmem:[%s223 + $0x134] sm:$0xf] %v2024
      %2281 = vst [vmem:[%s223 + $0x138] sm:$0xf] %v2025
      %2282 = vst [vmem:[%s223 + $0x13c] sm:$0xf] %v2026
      %2283 = vst [vmem:[%s223 + $0x140] sm:$0xf] %v2027
      %2284 = vst [vmem:[%s223 + $0x144] sm:$0xf] %v2028
      %2285 = vst [vmem:[%s223 + $0x148] sm:$0xf] %v2029
      %2286 = vst [vmem:[%s223 + $0x14c] sm:$0xf] %v2030
      %2287 = vst [vmem:[%s223 + $0x150] sm:$0xf] %v2031
      %2288 = vst [vmem:[%s223 + $0x154] sm:$0xf] %v2032
      %2289 = vst [vmem:[%s223 + $0x158] sm:$0xf] %v2033
      %2290 = vst [vmem:[%s223 + $0x15c] sm:$0xf] %v2034
      %2291 = vst [vmem:[%s223 + $0x160] sm:$0xf] %v2035
      %2292 = vst [vmem:[%s223 + $0x164] sm:$0xf] %v2036
      %2293 = vst [vmem:[%s223 + $0x168] sm:$0xf] %v2037
      %2294 = vst [vmem:[%s223 + $0x16c] sm:$0xf] %v2038
      %2295 = vst [vmem:[%s223 + $0x170] sm:$0xf] %v2039
      %2296 = vst [vmem:[%s223 + $0x174] sm:$0xf] %v2040
      %2297 = vst [vmem:[%s223 + $0x178] sm:$0xf] %v2041
      %2298 = vst [vmem:[%s223 + $0x17c] sm:$0xf] %v2042
      %2299 = vst [vmem:[%s223 + $0x180] sm:$0xf] %v2043
      %2300 = vst [vmem:[%s223 + $0x184] sm:$0xf] %v2044
      %2301 = vst [vmem:[%s223 + $0x188] sm:$0xf] %v2045
      %2302 = vst [vmem:[%s223 + $0x18c] sm:$0xf] %v2046
      %2303 = vst [vmem:[%s223 + $0x190] sm:$0xf] %v2047
      %2304 = vst [vmem:[%s223 + $0x194] sm:$0xf] %v2048
      %2305 = vst [vmem:[%s223 + $0x198] sm:$0xf] %v2049
      %2306 = vst [vmem:[%s223 + $0x19c] sm:$0xf] %v2050
      %2307 = vst [vmem:[%s223 + $0x1a0] sm:$0xf] %v2051
      %2308 = vst [vmem:[%s223 + $0x1a4] sm:$0xf] %v2052
      %2309 = vst [vmem:[%s223 + $0x1a8] sm:$0xf] %v2053
      %2310 = vst [vmem:[%s223 + $0x1ac] sm:$0xf] %v2054
      %2311 = vst [vmem:[%s223 + $0x1b0] sm:$0xf] %v2055
      %2312 = vst [vmem:[%s223 + $0x1b4] sm:$0xf] %v2056
      %2313 = vst [vmem:[%s223 + $0x1b8] sm:$0xf] %v2057
      %2314 = vst [vmem:[%s223 + $0x1bc] sm:$0xf] %v2058
      %2315 = vst [vmem:[%s223 + $0x1c0] sm:$0xf] %v2059
      %2316 = vst [vmem:[%s223 + $0x1c4] sm:$0xf] %v2060
      %2317 = vst [vmem:[%s223 + $0x1c8] sm:$0xf] %v2061
      %2318 = vst [vmem:[%s223 + $0x1cc] sm:$0xf] %v2062
      %2319 = vst [vmem:[%s223 + $0x1d0] sm:$0xf] %v2063
      %2320 = vst [vmem:[%s223 + $0x1d4] sm:$0xf] %v2064
      %2321 = vst [vmem:[%s223 + $0x1d8] sm:$0xf] %v2065
      %2322 = vst [vmem:[%s223 + $0x1dc] sm:$0xf] %v2066
      %2323 = vst [vmem:[%s223 + $0x1e0] sm:$0xf] %v2067
      %2324 = vst [vmem:[%s223 + $0x1e4] sm:$0xf] %v2068
      %2325 = vst [vmem:[%s223 + $0x1e8] sm:$0xf] %v2069
      %2326 = vst [vmem:[%s223 + $0x1ec] sm:$0xf] %v2070
      %2327 = vst [vmem:[%s223 + $0x1f0] sm:$0xf] %v2071
      %2328 = vst [vmem:[%s223 + $0x1f4] sm:$0xf] %v2072
      %2329 = vst [vmem:[%s223 + $0x1f8] sm:$0xf] %v2073
      %2330 = vst [vmem:[%s223 + $0x1fc] sm:$0xf] %v2074
      %s2331 = smul.u32 128, %s18
      %p2332 = scmp.lt.s32.totalorder %s2331, 255
      %s2333 = scalar_select %p2332, %s2331, 255
      %p2334 = scmp.lt.s32.totalorder %s19, 0
      %s2335 = scalar_select %p2334, %s19, 0
      %s2336 = sadd.s32 %s2335, %s2333
      %s2337 = smul.addr %s2336, 4
      %s2338 = scalar_lea.vmem %s3, %s2337
      // Predicated region
      $region33: #{discriminator_forward.5} parent=31 // pred_check
        %p2339 = pneg %p124
      $region34: #{discriminator_forward.5} parent=31 // pred_check_branch
        %2341 = sbr.rel (%p2339) target = $region36
      $region35: #{discriminator_forward.5} parent=31 // pred_region
        %s2342 = smul.u32 128, %s18
      $region36: #{discriminator_forward.5} parent=31 // pred_fallthru
        _
    $region32: #{discriminator_forward.5} parent=5 // pred_fallthru
      _
    %p2343 = scmp.le.s32.totalorder 2, %s9
    // Predicated region
    $region37: #{discriminator_forward.5} parent=5 // pred_check
      %p2344 = pneg %p2343
    $region38: #{discriminator_forward.5} parent=5 // pred_check_branch
      %2346 = sbr.rel (%p2344) target = $region40
    $region39: #{discriminator_forward.5} parent=5 // pred_region
      %s2347 = ssub.s32 %s9, 2
      // Predicated region
      $region41: #{discriminator_forward.5} parent=39 // pred_check
        %p2348 = pneg %p130
      $region42: #{discriminator_forward.5} parent=39 // pred_check_branch
        %2350 = sbr.rel (%p2348) target = $region44
      $region43: #{discriminator_forward.5} parent=39 // pred_region
        %s2351 = smul.u32 128, %s20
        %p2352 = scmp.lt.s32.totalorder %s2351, 255
        %s2353 = scalar_select %p2352, %s2351, 255
        %p2354 = scmp.lt.s32.totalorder %s21, 0
        %s2355 = scalar_select %p2354, %s21, 0
        %s2356 = sadd.s32 %s2355, %s2353
        %s2357 = smul.addr %s2356, 4
        %s2358 = scalar_lea.vmem %s3, %s2357
      $region44: #{discriminator_forward.5} parent=39 // pred_fallthru
        _
    $region40: #{discriminator_forward.5} parent=5 // pred_fallthru
      _
  $region6: #{discriminator_forward.5} parent=0 // loop_footer
    %s13 = sadd.s32 1, %s9
  $region7: #{discriminator_forward.5} parent=0 // loop_footer_branch
    %8 = sbr.rel target = $region3
  $region8: #{discriminator_forward.5} parent=0 // loop_exit
    _

// kernel: discriminator_forward.6
$region0: #{discriminator_forward.6}
  #allocation0 [shape = 'u32[]', space=smem, size = 0x4, offset = 0x4, fixed_abs, tag = 'smem constant byte address 0x4 - core index']
  #allocation1 [shape = 'u32[144,128]{1,0:T(1,128)}', space=vmem, size = 0x12000, scoped, tag = 'internal scratch']
  %s0 = inlined_call_operand.vmem [shape: bf16[512,576], index: 0, kind: input, shape index: {}]
  %s1 = inlined_call_operand.vmem [shape: bf16[576,128], index: 1, kind: input, shape index: {}]
  %s2 = inlined_call_operand.vmem [shape: f32[1,128], index: 2, kind: input, shape index: {}]
  %s3 = inlined_call_operand.vmem [shape: bf16[512,128], index: 3, kind: output, shape index: {}]
  %s4 = sld [smem:[#allocation0]]
  $region22: #{discriminator_forward.6} parent=0
    _
  %s6 = ssub.s32 1, %s4
  %s7 = scalar_select 0, %s6, %s4
  // Predicated region
  $region2: #{discriminator_forward.6} parent=0 // pred_check
    _
  $region3: #{discriminator_forward.6} parent=0 // pred_check_branch
    %9 = sbr.rel (0) target = $region5
  $region4: #{discriminator_forward.6} parent=0 // pred_region
    _
  $region5: #{discriminator_forward.6} parent=0 // pred_fallthru
    _
  // Predicated region
  $region6: #{discriminator_forward.6} parent=0 // pred_check
    _
  $region7: #{discriminator_forward.6} parent=0 // pred_check_branch
    %11 = sbr.rel (0) target = $region9
  $region8: #{discriminator_forward.6} parent=0 // pred_region
    _
  $region9: #{discriminator_forward.6} parent=0 // pred_fallthru
    _
  // Predicated region
  $region10: #{discriminator_forward.6} parent=0 // pred_check
    _
  $region11: #{discriminator_forward.6} parent=0 // pred_check_branch
    %13 = sbr.rel (0) target = $region13
  $region12: #{discriminator_forward.6} parent=0 // pred_region
    _
  $region13: #{discriminator_forward.6} parent=0 // pred_fallthru
    _
  %v15 = vld [vmem:[%s0] sm:$0xff]
  %v16 = vld [vmem:[%s0 + $0x8] sm:$0xff]
  %v17 = vld [vmem:[%s0 + $0x10] sm:$0xf]
  %v18 = vld [vmem:[%s0 + $0x14] sm:$0xff]
  %v19 = vld [vmem:[%s0 + $0x1c] sm:$0xff]
  %v20 = vld [vmem:[%s0 + $0x24] sm:$0xf]
  %v21 = vld [vmem:[%s0 + $0x28] sm:$0xff]
  %v22 = vld [vmem:[%s0 + $0x30] sm:$0xff]
  %v23 = vld [vmem:[%s0 + $0x38] sm:$0xf]
  %v24 = vld [vmem:[%s0 + $0x3c] sm:$0xff]
  %v25 = vld [vmem:[%s0 + $0x44] sm:$0xff]
  %v26 = vld [vmem:[%s0 + $0x4c] sm:$0xf]
  %v27 = vld [vmem:[%s0 + $0x50] sm:$0xff]
  %v28 = vld [vmem:[%s0 + $0x58] sm:$0xff]
  %v29 = vld [vmem:[%s0 + $0x60] sm:$0xf]
  %v30 = vld [vmem:[%s0 + $0x64] sm:$0xff]
  %v31 = vld [vmem:[%s0 + $0x6c] sm:$0xff]
  %v32 = vld [vmem:[%s0 + $0x74] sm:$0xf]
  %v33 = vld [vmem:[%s0 + $0x78] sm:$0xff]
  %v34 = vld [vmem:[%s0 + $0x80] sm:$0xff]
  %v35 = vld [vmem:[%s0 + $0x88] sm:$0xf]
  %v36 = vld [vmem:[%s0 + $0x8c] sm:$0xff]
  %v37 = vld [vmem:[%s0 + $0x94] sm:$0xff]
  %v38 = vld [vmem:[%s0 + $0x9c] sm:$0xf]
  %v39 = vld [vmem:[%s0 + $0xa0] sm:$0xff]
  %v40 = vld [vmem:[%s0 + $0xa8] sm:$0xff]
  %v41 = vld [vmem:[%s0 + $0xb0] sm:$0xf]
  %v42 = vld [vmem:[%s0 + $0xb4] sm:$0xff]
  %v43 = vld [vmem:[%s0 + $0xbc] sm:$0xff]
  %v44 = vld [vmem:[%s0 + $0xc4] sm:$0xf]
  %v45 = vld [vmem:[%s0 + $0xc8] sm:$0xff]
  %v46 = vld [vmem:[%s0 + $0xd0] sm:$0xff]
  %v47 = vld [vmem:[%s0 + $0xd8] sm:$0xf]
  %v48 = vld [vmem:[%s0 + $0xdc] sm:$0xff]
  %v49 = vld [vmem:[%s0 + $0xe4] sm:$0xff]
  %v50 = vld [vmem:[%s0 + $0xec] sm:$0xf]
  %v51 = vld [vmem:[%s0 + $0xf0] sm:$0xff]
  %v52 = vld [vmem:[%s0 + $0xf8] sm:$0xff]
  %v53 = vld [vmem:[%s0 + $0x100] sm:$0xf]
  %v54 = vld [vmem:[%s0 + $0x104] sm:$0xff]
  %v55 = vld [vmem:[%s0 + $0x10c] sm:$0xff]
  %v56 = vld [vmem:[%s0 + $0x114] sm:$0xf]
  %v57 = vld [vmem:[%s0 + $0x118] sm:$0xff]
  %v58 = vld [vmem:[%s0 + $0x120] sm:$0xff]
  %v59 = vld [vmem:[%s0 + $0x128] sm:$0xf]
  %v60 = vld [vmem:[%s0 + $0x12c] sm:$0xff]
  %v61 = vld [vmem:[%s0 + $0x134] sm:$0xff]
  %v62 = vld [vmem:[%s0 + $0x13c] sm:$0xf]
  %v63 = vld [vmem:[%s0 + $0x140] sm:$0xff]
  %v64 = vld [vmem:[%s0 + $0x148] sm:$0xff]
  %v65 = vld [vmem:[%s0 + $0x150] sm:$0xf]
  %v66 = vld [vmem:[%s0 + $0x154] sm:$0xff]
  %v67 = vld [vmem:[%s0 + $0x15c] sm:$0xff]
  %v68 = vld [vmem:[%s0 + $0x164] sm:$0xf]
  %v69 = vld [vmem:[%s0 + $0x168] sm:$0xff]
  %v70 = vld [vmem:[%s0 + $0x170] sm:$0xff]
  %v71 = vld [vmem:[%s0 + $0x178] sm:$0xf]
  %v72 = vld [vmem:[%s0 + $0x17c] sm:$0xff]
  %v73 = vld [vmem:[%s0 + $0x184] sm:$0xff]
  %v74 = vld [vmem:[%s0 + $0x18c] sm:$0xf]
  %v75 = vld [vmem:[%s0 + $0x190] sm:$0xff]
  %v76 = vld [vmem:[%s0 + $0x198] sm:$0xff]
  %v77 = vld [vmem:[%s0 + $0x1a0] sm:$0xf]
  %v78 = vld [vmem:[%s0 + $0x1a4] sm:$0xff]
  %v79 = vld [vmem:[%s0 + $0x1ac] sm:$0xff]
  %v80 = vld [vmem:[%s0 + $0x1b4] sm:$0xf]
  %v81 = vld [vmem:[%s0 + $0x1b8] sm:$0xff]
  %v82 = vld [vmem:[%s0 + $0x1c0] sm:$0xff]
  %v83 = vld [vmem:[%s0 + $0x1c8] sm:$0xf]
  %v84 = vld [vmem:[%s0 + $0x1cc] sm:$0xff]
  %v85 = vld [vmem:[%s0 + $0x1d4] sm:$0xff]
  %v86 = vld [vmem:[%s0 + $0x1dc] sm:$0xf]
  %v87 = vld [vmem:[%s0 + $0x1e0] sm:$0xff]
  %v88 = vld [vmem:[%s0 + $0x1e8] sm:$0xff]
  %v89 = vld [vmem:[%s0 + $0x1f0] sm:$0xf]
  %v90 = vld [vmem:[%s0 + $0x1f4] sm:$0xff]
  %v91 = vld [vmem:[%s0 + $0x1fc] sm:$0xff]
  %v92 = vld [vmem:[%s0 + $0x204] sm:$0xf]
  %v93 = vld [vmem:[%s0 + $0x208] sm:$0xff]
  %v94 = vld [vmem:[%s0 + $0x210] sm:$0xff]
  %v95 = vld [vmem:[%s0 + $0x218] sm:$0xf]
  %v96 = vld [vmem:[%s0 + $0x21c] sm:$0xff]
  %v97 = vld [vmem:[%s0 + $0x224] sm:$0xff]
  %v98 = vld [vmem:[%s0 + $0x22c] sm:$0xf]
  %v99 = vld [vmem:[%s0 + $0x230] sm:$0xff]
  %v100 = vld [vmem:[%s0 + $0x238] sm:$0xff]
  %v101 = vld [vmem:[%s0 + $0x240] sm:$0xf]
  %v102 = vld [vmem:[%s0 + $0x244] sm:$0xff]
  %v103 = vld [vmem:[%s0 + $0x24c] sm:$0xff]
  %v104 = vld [vmem:[%s0 + $0x254] sm:$0xf]
  %v105 = vld [vmem:[%s0 + $0x258] sm:$0xff]
  %v106 = vld [vmem:[%s0 + $0x260] sm:$0xff]
  %v107 = vld [vmem:[%s0 + $0x268] sm:$0xf]
  %v108 = vld [vmem:[%s0 + $0x26c] sm:$0xff]
  %v109 = vld [vmem:[%s0 + $0x274] sm:$0xff]
  %v110 = vld [vmem:[%s0 + $0x27c] sm:$0xf]
  %v111 = vld [vmem:[%s0 + $0x280] sm:$0xff]
  %v112 = vld [vmem:[%s0 + $0x288] sm:$0xff]
  %v113 = vld [vmem:[%s0 + $0x290] sm:$0xf]
  %v114 = vld [vmem:[%s0 + $0x294] sm:$0xff]
  %v115 = vld [vmem:[%s0 + $0x29c] sm:$0xff]
  %v116 = vld [vmem:[%s0 + $0x2a4] sm:$0xf]
  %v117 = vld [vmem:[%s0 + $0x2a8] sm:$0xff]
  %v118 = vld [vmem:[%s0 + $0x2b0] sm:$0xff]
  %v119 = vld [vmem:[%s0 + $0x2b8] sm:$0xf]
  %v120 = vld [vmem:[%s0 + $0x2bc] sm:$0xff]
  %v121 = vld [vmem:[%s0 + $0x2c4] sm:$0xff]
  %v122 = vld [vmem:[%s0 + $0x2cc] sm:$0xf]
  %v123 = vld [vmem:[%s0 + $0x2d0] sm:$0xff]
  %v124 = vld [vmem:[%s0 + $0x2d8] sm:$0xff]
  %v125 = vld [vmem:[%s0 + $0x2e0] sm:$0xf]
  %v126 = vld [vmem:[%s0 + $0x2e4] sm:$0xff]
  %v127 = vld [vmem:[%s0 + $0x2ec] sm:$0xff]
  %v128 = vld [vmem:[%s0 + $0x2f4] sm:$0xf]
  %v129 = vld [vmem:[%s0 + $0x2f8] sm:$0xff]
  %v130 = vld [vmem:[%s0 + $0x300] sm:$0xff]
  %v131 = vld [vmem:[%s0 + $0x308] sm:$0xf]
  %v132 = vld [vmem:[%s0 + $0x30c] sm:$0xff]
  %v133 = vld [vmem:[%s0 + $0x314] sm:$0xff]
  %v134 = vld [vmem:[%s0 + $0x31c] sm:$0xf]
  %v135 = vld [vmem:[%s0 + $0x320] sm:$0xff]
  %v136 = vld [vmem:[%s0 + $0x328] sm:$0xff]
  %v137 = vld [vmem:[%s0 + $0x330] sm:$0xf]
  %v138 = vld [vmem:[%s0 + $0x334] sm:$0xff]
  %v139 = vld [vmem:[%s0 + $0x33c] sm:$0xff]
  %v140 = vld [vmem:[%s0 + $0x344] sm:$0xf]
  %v141 = vld [vmem:[%s0 + $0x348] sm:$0xff]
  %v142 = vld [vmem:[%s0 + $0x350] sm:$0xff]
  %v143 = vld [vmem:[%s0 + $0x358] sm:$0xf]
  %v144 = vld [vmem:[%s0 + $0x35c] sm:$0xff]
  %v145 = vld [vmem:[%s0 + $0x364] sm:$0xff]
  %v146 = vld [vmem:[%s0 + $0x36c] sm:$0xf]
  %v147 = vld [vmem:[%s0 + $0x370] sm:$0xff]
  %v148 = vld [vmem:[%s0 + $0x378] sm:$0xff]
  %v149 = vld [vmem:[%s0 + $0x380] sm:$0xf]
  %v150 = vld [vmem:[%s0 + $0x384] sm:$0xff]
  %v151 = vld [vmem:[%s0 + $0x38c] sm:$0xff]
  %v152 = vld [vmem:[%s0 + $0x394] sm:$0xf]
  %v153 = vld [vmem:[%s0 + $0x398] sm:$0xff]
  %v154 = vld [vmem:[%s0 + $0x3a0] sm:$0xff]
  %v155 = vld [vmem:[%s0 + $0x3a8] sm:$0xf]
  %v156 = vld [vmem:[%s0 + $0x3ac] sm:$0xff]
  %v157 = vld [vmem:[%s0 + $0x3b4] sm:$0xff]
  %v158 = vld [vmem:[%s0 + $0x3bc] sm:$0xf]
  %v159 = vld [vmem:[%s0 + $0x3c0] sm:$0xff]
  %v160 = vld [vmem:[%s0 + $0x3c8] sm:$0xff]
  %v161 = vld [vmem:[%s0 + $0x3d0] sm:$0xf]
  %v162 = vld [vmem:[%s0 + $0x3d4] sm:$0xff]
  %v163 = vld [vmem:[%s0 + $0x3dc] sm:$0xff]
  %v164 = vld [vmem:[%s0 + $0x3e4] sm:$0xf]
  %v165 = vld [vmem:[%s0 + $0x3e8] sm:$0xff]
  %v166 = vld [vmem:[%s0 + $0x3f0] sm:$0xff]
  %v167 = vld [vmem:[%s0 + $0x3f8] sm:$0xf]
  %v168 = vld [vmem:[%s0 + $0x3fc] sm:$0xff]
  %v169 = vld [vmem:[%s0 + $0x404] sm:$0xff]
  %v170 = vld [vmem:[%s0 + $0x40c] sm:$0xf]
  %v171 = vld [vmem:[%s0 + $0x410] sm:$0xff]
  %v172 = vld [vmem:[%s0 + $0x418] sm:$0xff]
  %v173 = vld [vmem:[%s0 + $0x420] sm:$0xf]
  %v174 = vld [vmem:[%s0 + $0x424] sm:$0xff]
  %v175 = vld [vmem:[%s0 + $0x42c] sm:$0xff]
  %v176 = vld [vmem:[%s0 + $0x434] sm:$0xf]
  %v177 = vld [vmem:[%s0 + $0x438] sm:$0xff]
  %v178 = vld [vmem:[%s0 + $0x440] sm:$0xff]
  %v179 = vld [vmem:[%s0 + $0x448] sm:$0xf]
  %v180 = vld [vmem:[%s0 + $0x44c] sm:$0xff]
  %v181 = vld [vmem:[%s0 + $0x454] sm:$0xff]
  %v182 = vld [vmem:[%s0 + $0x45c] sm:$0xf]
  %v183 = vld [vmem:[%s0 + $0x460] sm:$0xff]
  %v184 = vld [vmem:[%s0 + $0x468] sm:$0xff]
  %v185 = vld [vmem:[%s0 + $0x470] sm:$0xf]
  %v186 = vld [vmem:[%s0 + $0x474] sm:$0xff]
  %v187 = vld [vmem:[%s0 + $0x47c] sm:$0xff]
  %v188 = vld [vmem:[%s0 + $0x484] sm:$0xf]
  %v189 = vld [vmem:[%s0 + $0x488] sm:$0xff]
  %v190 = vld [vmem:[%s0 + $0x490] sm:$0xff]
  %v191 = vld [vmem:[%s0 + $0x498] sm:$0xf]
  %v192 = vld [vmem:[%s0 + $0x49c] sm:$0xff]
  %v193 = vld [vmem:[%s0 + $0x4a4] sm:$0xff]
  %v194 = vld [vmem:[%s0 + $0x4ac] sm:$0xf]
  %v195 = vld [vmem:[%s0 + $0x4b0] sm:$0xff]
  %v196 = vld [vmem:[%s0 + $0x4b8] sm:$0xff]
  %v197 = vld [vmem:[%s0 + $0x4c0] sm:$0xf]
  %v198 = vld [vmem:[%s0 + $0x4c4] sm:$0xff]
  %v199 = vld [vmem:[%s0 + $0x4cc] sm:$0xff]
  %v200 = vld [vmem:[%s0 + $0x4d4] sm:$0xf]
  %v201 = vld [vmem:[%s0 + $0x4d8] sm:$0xff]
  %v202 = vld [vmem:[%s0 + $0x4e0] sm:$0xff]
  %v203 = vld [vmem:[%s0 + $0x4e8] sm:$0xf]
  %v204 = vld [vmem:[%s0 + $0x4ec] sm:$0xff]
  %v205 = vld [vmem:[%s0 + $0x4f4] sm:$0xff]
  %v206 = vld [vmem:[%s0 + $0x4fc] sm:$0xf]
  %v207 = vld [vmem:[%s1] sm:$0xf]
  %v208 = vld [vmem:[%s1 + $0x4] sm:$0xf]
  %v209 = vld [vmem:[%s1 + $0x8] sm:$0xf]
  %v210 = vld [vmem:[%s1 + $0xc] sm:$0xf]
  %v211 = vld [vmem:[%s1 + $0x10] sm:$0xf]
  %v212 = vld [vmem:[%s1 + $0x14] sm:$0xf]
  %v213 = vld [vmem:[%s1 + $0x18] sm:$0xf]
  %v214 = vld [vmem:[%s1 + $0x1c] sm:$0xf]
  %v215 = vld [vmem:[%s1 + $0x20] sm:$0xf]
  %v216 = vld [vmem:[%s1 + $0x24] sm:$0xf]
  %v217 = vld [vmem:[%s1 + $0x28] sm:$0xf]
  %v218 = vld [vmem:[%s1 + $0x2c] sm:$0xf]
  %v219 = vld [vmem:[%s1 + $0x30] sm:$0xf]
  %v220 = vld [vmem:[%s1 + $0x34] sm:$0xf]
  %v221 = vld [vmem:[%s1 + $0x38] sm:$0xf]
  %v222 = vld [vmem:[%s1 + $0x3c] sm:$0xf]
  %v223 = vld [vmem:[%s1 + $0x40] sm:$0xf]
  %v224 = vld [vmem:[%s1 + $0x44] sm:$0xf]
  %v225 = vld [vmem:[%s1 + $0x48] sm:$0xf]
  %v226 = vld [vmem:[%s1 + $0x4c] sm:$0xf]
  %v227 = vld [vmem:[%s1 + $0x50] sm:$0xf]
  %v228 = vld [vmem:[%s1 + $0x54] sm:$0xf]
  %v229 = vld [vmem:[%s1 + $0x58] sm:$0xf]
  %v230 = vld [vmem:[%s1 + $0x5c] sm:$0xf]
  %v231 = vld [vmem:[%s1 + $0x60] sm:$0xf]
  %v232 = vld [vmem:[%s1 + $0x64] sm:$0xf]
  %v233 = vld [vmem:[%s1 + $0x68] sm:$0xf]
  %v234 = vld [vmem:[%s1 + $0x6c] sm:$0xf]
  %v235 = vld [vmem:[%s1 + $0x70] sm:$0xf]
  %v236 = vld [vmem:[%s1 + $0x74] sm:$0xf]
  %v237 = vld [vmem:[%s1 + $0x78] sm:$0xf]
  %v238 = vld [vmem:[%s1 + $0x7c] sm:$0xf]
  %v239 = vld [vmem:[%s1 + $0x80] sm:$0xf]
  %v240 = vld [vmem:[%s1 + $0x84] sm:$0xf]
  %v241 = vld [vmem:[%s1 + $0x88] sm:$0xf]
  %v242 = vld [vmem:[%s1 + $0x8c] sm:$0xf]
  %v243 = vld [vmem:[%s1 + $0x90] sm:$0xf]
  %v244 = vld [vmem:[%s1 + $0x94] sm:$0xf]
  %v245 = vld [vmem:[%s1 + $0x98] sm:$0xf]
  %v246 = vld [vmem:[%s1 + $0x9c] sm:$0xf]
  %v247 = vld [vmem:[%s1 + $0xa0] sm:$0xf]
  %v248 = vld [vmem:[%s1 + $0xa4] sm:$0xf]
  %v249 = vld [vmem:[%s1 + $0xa8] sm:$0xf]
  %v250 = vld [vmem:[%s1 + $0xac] sm:$0xf]
  %v251 = vld [vmem:[%s1 + $0xb0] sm:$0xf]
  %v252 = vld [vmem:[%s1 + $0xb4] sm:$0xf]
  %v253 = vld [vmem:[%s1 + $0xb8] sm:$0xf]
  %v254 = vld [vmem:[%s1 + $0xbc] sm:$0xf]
  %v255 = vld [vmem:[%s1 + $0xc0] sm:$0xf]
  %v256 = vld [vmem:[%s1 + $0xc4] sm:$0xf]
  %v257 = vld [vmem:[%s1 + $0xc8] sm:$0xf]
  %v258 = vld [vmem:[%s1 + $0xcc] sm:$0xf]
  %v259 = vld [vmem:[%s1 + $0xd0] sm:$0xf]
  %v260 = vld [vmem:[%s1 + $0xd4] sm:$0xf]
  %v261 = vld [vmem:[%s1 + $0xd8] sm:$0xf]
  %v262 = vld [vmem:[%s1 + $0xdc] sm:$0xf]
  %v263 = vld [vmem:[%s1 + $0xe0] sm:$0xf]
  %v264 = vld [vmem:[%s1 + $0xe4] sm:$0xf]
  %v265 = vld [vmem:[%s1 + $0xe8] sm:$0xf]
  %v266 = vld [vmem:[%s1 + $0xec] sm:$0xf]
  %v267 = vld [vmem:[%s1 + $0xf0] sm:$0xf]
  %v268 = vld [vmem:[%s1 + $0xf4] sm:$0xf]
  %v269 = vld [vmem:[%s1 + $0xf8] sm:$0xf]
  %v270 = vld [vmem:[%s1 + $0xfc] sm:$0xf]
  %v271 = vld [vmem:[%s1 + $0x100] sm:$0xf]
  %v272 = vld [vmem:[%s1 + $0x104] sm:$0xf]
  %v273 = vld [vmem:[%s1 + $0x108] sm:$0xf]
  %v274 = vld [vmem:[%s1 + $0x10c] sm:$0xf]
  %v275 = vld [vmem:[%s1 + $0x110] sm:$0xf]
  %v276 = vld [vmem:[%s1 + $0x114] sm:$0xf]
  %v277 = vld [vmem:[%s1 + $0x118] sm:$0xf]
  %v278 = vld [vmem:[%s1 + $0x11c] sm:$0xf]
  %v279 = vld [vmem:[%s2] sm:$0x1]
  %v281 = vlaneseq
  %v282 = vshrl.u32 %v281, 7
  %v283 = vsub.s32 0, %v282
  %v284 = vrot.slane %v279, %v283
  %v478 = vunpack.c.l.b16 %v15
  %v479 = vunpack.c.h.b16 %v15
  %v480 = vunpack.c.l.b16 %v16
  %v481 = vunpack.c.h.b16 %v16
  %v482 = vunpack.c.l.b16 %v17
  %v483 = vunpack.c.l.b16 %v18
  %v484 = vunpack.c.h.b16 %v18
  %v485 = vunpack.c.l.b16 %v19
  %v486 = vunpack.c.h.b16 %v19
  %v487 = vunpack.c.l.b16 %v20
  %v488 = vunpack.c.l.b16 %v21
  %v489 = vunpack.c.h.b16 %v21
  %v490 = vunpack.c.l.b16 %v22
  %v491 = vunpack.c.h.b16 %v22
  %v492 = vunpack.c.l.b16 %v23
  %v493 = vunpack.c.l.b16 %v24
  %v494 = vunpack.c.h.b16 %v24
  %v495 = vunpack.c.l.b16 %v25
  %v496 = vunpack.c.h.b16 %v25
  %v497 = vunpack.c.l.b16 %v26
  %v498 = vunpack.c.l.b16 %v27
  %v499 = vunpack.c.h.b16 %v27
  %v500 = vunpack.c.l.b16 %v28
  %v501 = vunpack.c.h.b16 %v28
  %v502 = vunpack.c.l.b16 %v29
  %v503 = vunpack.c.l.b16 %v30
  %v504 = vunpack.c.h.b16 %v30
  %v505 = vunpack.c.l.b16 %v31
  %v506 = vunpack.c.h.b16 %v31
  %v507 = vunpack.c.l.b16 %v32
  %v508 = vunpack.c.l.b16 %v33
  %v509 = vunpack.c.h.b16 %v33
  %v510 = vunpack.c.l.b16 %v34
  %v511 = vunpack.c.h.b16 %v34
  %v512 = vunpack.c.l.b16 %v35
  %v513 = vunpack.c.l.b16 %v36
  %v514 = vunpack.c.h.b16 %v36
  %v515 = vunpack.c.l.b16 %v37
  %v516 = vunpack.c.h.b16 %v37
  %v517 = vunpack.c.l.b16 %v38
  %v518 = vunpack.c.l.b16 %v39
  %v519 = vunpack.c.h.b16 %v39
  %v520 = vunpack.c.l.b16 %v40
  %v521 = vunpack.c.h.b16 %v40
  %v522 = vunpack.c.l.b16 %v41
  %v523 = vunpack.c.l.b16 %v42
  %v524 = vunpack.c.h.b16 %v42
  %v525 = vunpack.c.l.b16 %v43
  %v526 = vunpack.c.h.b16 %v43
  %v527 = vunpack.c.l.b16 %v44
  %v528 = vunpack.c.l.b16 %v45
  %v529 = vunpack.c.h.b16 %v45
  %v530 = vunpack.c.l.b16 %v46
  %v531 = vunpack.c.h.b16 %v46
  %v532 = vunpack.c.l.b16 %v47
  %v533 = vunpack.c.l.b16 %v48
  %v534 = vunpack.c.h.b16 %v48
  %v535 = vunpack.c.l.b16 %v49
  %v536 = vunpack.c.h.b16 %v49
  %v537 = vunpack.c.l.b16 %v50
  %v538 = vunpack.c.l.b16 %v51
  %v539 = vunpack.c.h.b16 %v51
  %v540 = vunpack.c.l.b16 %v52
  %v541 = vunpack.c.h.b16 %v52
  %v542 = vunpack.c.l.b16 %v53
  %v543 = vunpack.c.l.b16 %v54
  %v544 = vunpack.c.h.b16 %v54
  %v545 = vunpack.c.l.b16 %v55
  %v546 = vunpack.c.h.b16 %v55
  %v547 = vunpack.c.l.b16 %v56
  %v548 = vunpack.c.l.b16 %v57
  %v549 = vunpack.c.h.b16 %v57
  %v550 = vunpack.c.l.b16 %v58
  %v551 = vunpack.c.h.b16 %v58
  %v552 = vunpack.c.l.b16 %v59
  %v553 = vunpack.c.l.b16 %v60
  %v554 = vunpack.c.h.b16 %v60
  %v555 = vunpack.c.l.b16 %v61
  %v556 = vunpack.c.h.b16 %v61
  %v557 = vunpack.c.l.b16 %v62
  %v558 = vunpack.c.l.b16 %v63
  %v559 = vunpack.c.h.b16 %v63
  %v560 = vunpack.c.l.b16 %v64
  %v561 = vunpack.c.h.b16 %v64
  %v562 = vunpack.c.l.b16 %v65
  %v563 = vunpack.c.l.b16 %v66
  %v564 = vunpack.c.h.b16 %v66
  %v565 = vunpack.c.l.b16 %v67
  %v566 = vunpack.c.h.b16 %v67
  %v567 = vunpack.c.l.b16 %v68
  %v568 = vunpack.c.l.b16 %v69
  %v569 = vunpack.c.h.b16 %v69
  %v570 = vunpack.c.l.b16 %v70
  %v571 = vunpack.c.h.b16 %v70
  %v572 = vunpack.c.l.b16 %v71
  %v573 = vunpack.c.l.b16 %v72
  %v574 = vunpack.c.h.b16 %v72
  %v575 = vunpack.c.l.b16 %v73
  %v576 = vunpack.c.h.b16 %v73
  %v577 = vunpack.c.l.b16 %v74
  %v578 = vunpack.c.l.b16 %v75
  %v579 = vunpack.c.h.b16 %v75
  %v580 = vunpack.c.l.b16 %v76
  %v581 = vunpack.c.h.b16 %v76
  %v582 = vunpack.c.l.b16 %v77
  %v583 = vunpack.c.l.b16 %v78
  %v584 = vunpack.c.h.b16 %v78
  %v585 = vunpack.c.l.b16 %v79
  %v586 = vunpack.c.h.b16 %v79
  %v587 = vunpack.c.l.b16 %v80
  %v588 = vunpack.c.l.b16 %v81
  %v589 = vunpack.c.h.b16 %v81
  %v590 = vunpack.c.l.b16 %v82
  %v591 = vunpack.c.h.b16 %v82
  %v592 = vunpack.c.l.b16 %v83
  %v593 = vunpack.c.l.b16 %v84
  %v594 = vunpack.c.h.b16 %v84
  %v595 = vunpack.c.l.b16 %v85
  %v596 = vunpack.c.h.b16 %v85
  %v597 = vunpack.c.l.b16 %v86
  %v598 = vunpack.c.l.b16 %v87
  %v599 = vunpack.c.h.b16 %v87
  %v600 = vunpack.c.l.b16 %v88
  %v601 = vunpack.c.h.b16 %v88
  %v602 = vunpack.c.l.b16 %v89
  %v603 = vunpack.c.l.b16 %v90
  %v604 = vunpack.c.h.b16 %v90
  %v605 = vunpack.c.l.b16 %v91
  %v606 = vunpack.c.h.b16 %v91
  %v607 = vunpack.c.l.b16 %v92
  %v608 = vunpack.c.l.b16 %v93
  %v609 = vunpack.c.h.b16 %v93
  %v610 = vunpack.c.l.b16 %v94
  %v611 = vunpack.c.h.b16 %v94
  %v612 = vunpack.c.l.b16 %v95
  %v613 = vunpack.c.l.b16 %v96
  %v614 = vunpack.c.h.b16 %v96
  %v615 = vunpack.c.l.b16 %v97
  %v616 = vunpack.c.h.b16 %v97
  %v617 = vunpack.c.l.b16 %v98
  %v618 = vunpack.c.l.b16 %v99
  %v619 = vunpack.c.h.b16 %v99
  %v620 = vunpack.c.l.b16 %v100
  %v621 = vunpack.c.h.b16 %v100
  %v622 = vunpack.c.l.b16 %v101
  %v623 = vunpack.c.l.b16 %v102
  %v624 = vunpack.c.h.b16 %v102
  %v625 = vunpack.c.l.b16 %v103
  %v626 = vunpack.c.h.b16 %v103
  %v627 = vunpack.c.l.b16 %v104
  %v628 = vunpack.c.l.b16 %v105
  %v629 = vunpack.c.h.b16 %v105
  %v630 = vunpack.c.l.b16 %v106
  %v631 = vunpack.c.h.b16 %v106
  %v632 = vunpack.c.l.b16 %v107
  %v633 = vunpack.c.l.b16 %v108
  %v634 = vunpack.c.h.b16 %v108
  %v635 = vunpack.c.l.b16 %v109
  %v636 = vunpack.c.h.b16 %v109
  %v637 = vunpack.c.l.b16 %v110
  %v638 = vunpack.c.l.b16 %v111
  %v639 = vunpack.c.h.b16 %v111
  %v640 = vunpack.c.l.b16 %v112
  %v641 = vunpack.c.h.b16 %v112
  %v642 = vunpack.c.l.b16 %v113
  %v643 = vunpack.c.l.b16 %v114
  %v644 = vunpack.c.h.b16 %v114
  %v645 = vunpack.c.l.b16 %v115
  %v646 = vunpack.c.h.b16 %v115
  %v647 = vunpack.c.l.b16 %v116
  %v648 = vunpack.c.l.b16 %v117
  %v649 = vunpack.c.h.b16 %v117
  %v650 = vunpack.c.l.b16 %v118
  %v651 = vunpack.c.h.b16 %v118
  %v652 = vunpack.c.l.b16 %v119
  %v653 = vunpack.c.l.b16 %v120
  %v654 = vunpack.c.h.b16 %v120
  %v655 = vunpack.c.l.b16 %v121
  %v656 = vunpack.c.h.b16 %v121
  %v657 = vunpack.c.l.b16 %v122
  %v658 = vunpack.c.l.b16 %v123
  %v659 = vunpack.c.h.b16 %v123
  %v660 = vunpack.c.l.b16 %v124
  %v661 = vunpack.c.h.b16 %v124
  %v662 = vunpack.c.l.b16 %v125
  %v663 = vunpack.c.l.b16 %v126
  %v664 = vunpack.c.h.b16 %v126
  %v665 = vunpack.c.l.b16 %v127
  %v666 = vunpack.c.h.b16 %v127
  %v667 = vunpack.c.l.b16 %v128
  %v668 = vunpack.c.l.b16 %v129
  %v669 = vunpack.c.h.b16 %v129
  %v670 = vunpack.c.l.b16 %v130
  %v671 = vunpack.c.h.b16 %v130
  %v672 = vunpack.c.l.b16 %v131
  %v673 = vunpack.c.l.b16 %v132
  %v674 = vunpack.c.h.b16 %v132
  %v675 = vunpack.c.l.b16 %v133
  %v676 = vunpack.c.h.b16 %v133
  %v677 = vunpack.c.l.b16 %v134
  %v678 = vunpack.c.l.b16 %v135
  %v679 = vunpack.c.h.b16 %v135
  %v680 = vunpack.c.l.b16 %v136
  %v681 = vunpack.c.h.b16 %v136
  %v682 = vunpack.c.l.b16 %v137
  %v683 = vunpack.c.l.b16 %v138
  %v684 = vunpack.c.h.b16 %v138
  %v685 = vunpack.c.l.b16 %v139
  %v686 = vunpack.c.h.b16 %v139
  %v687 = vunpack.c.l.b16 %v140
  %v688 = vunpack.c.l.b16 %v141
  %v689 = vunpack.c.h.b16 %v141
  %v690 = vunpack.c.l.b16 %v142
  %v691 = vunpack.c.h.b16 %v142
  %v692 = vunpack.c.l.b16 %v143
  %v693 = vunpack.c.l.b16 %v144
  %v694 = vunpack.c.h.b16 %v144
  %v695 = vunpack.c.l.b16 %v145
  %v696 = vunpack.c.h.b16 %v145
  %v697 = vunpack.c.l.b16 %v146
  %v698 = vunpack.c.l.b16 %v147
  %v699 = vunpack.c.h.b16 %v147
  %v700 = vunpack.c.l.b16 %v148
  %v701 = vunpack.c.h.b16 %v148
  %v702 = vunpack.c.l.b16 %v149
  %v703 = vunpack.c.l.b16 %v150
  %v704 = vunpack.c.h.b16 %v150
  %v705 = vunpack.c.l.b16 %v151
  %v706 = vunpack.c.h.b16 %v151
  %v707 = vunpack.c.l.b16 %v152
  %v708 = vunpack.c.l.b16 %v153
  %v709 = vunpack.c.h.b16 %v153
  %v710 = vunpack.c.l.b16 %v154
  %v711 = vunpack.c.h.b16 %v154
  %v712 = vunpack.c.l.b16 %v155
  %v713 = vunpack.c.l.b16 %v156
  %v714 = vunpack.c.h.b16 %v156
  %v715 = vunpack.c.l.b16 %v157
  %v716 = vunpack.c.h.b16 %v157
  %v717 = vunpack.c.l.b16 %v158
  %v718 = vunpack.c.l.b16 %v159
  %v719 = vunpack.c.h.b16 %v159
  %v720 = vunpack.c.l.b16 %v160
  %v721 = vunpack.c.h.b16 %v160
  %v722 = vunpack.c.l.b16 %v161
  %v723 = vunpack.c.l.b16 %v162
  %v724 = vunpack.c.h.b16 %v162
  %v725 = vunpack.c.l.b16 %v163
  %v726 = vunpack.c.h.b16 %v163
  %v727 = vunpack.c.l.b16 %v164
  %v728 = vunpack.c.l.b16 %v165
  %v729 = vunpack.c.h.b16 %v165
  %v730 = vunpack.c.l.b16 %v166
  %v731 = vunpack.c.h.b16 %v166
  %v732 = vunpack.c.l.b16 %v167
  %v733 = vunpack.c.l.b16 %v168
  %v734 = vunpack.c.h.b16 %v168
  %v735 = vunpack.c.l.b16 %v169
  %v736 = vunpack.c.h.b16 %v169
  %v737 = vunpack.c.l.b16 %v170
  %v738 = vunpack.c.l.b16 %v171
  %v739 = vunpack.c.h.b16 %v171
  %v740 = vunpack.c.l.b16 %v172
  %v741 = vunpack.c.h.b16 %v172
  %v742 = vunpack.c.l.b16 %v173
  %v743 = vunpack.c.l.b16 %v174
  %v744 = vunpack.c.h.b16 %v174
  %v745 = vunpack.c.l.b16 %v175
  %v746 = vunpack.c.h.b16 %v175
  %v747 = vunpack.c.l.b16 %v176
  %v748 = vunpack.c.l.b16 %v177
  %v749 = vunpack.c.h.b16 %v177
  %v750 = vunpack.c.l.b16 %v178
  %v751 = vunpack.c.h.b16 %v178
  %v752 = vunpack.c.l.b16 %v179
  %v753 = vunpack.c.l.b16 %v180
  %v754 = vunpack.c.h.b16 %v180
  %v755 = vunpack.c.l.b16 %v181
  %v756 = vunpack.c.h.b16 %v181
  %v757 = vunpack.c.l.b16 %v182
  %v758 = vunpack.c.l.b16 %v183
  %v759 = vunpack.c.h.b16 %v183
  %v760 = vunpack.c.l.b16 %v184
  %v761 = vunpack.c.h.b16 %v184
  %v762 = vunpack.c.l.b16 %v185
  %v763 = vunpack.c.l.b16 %v186
  %v764 = vunpack.c.h.b16 %v186
  %v765 = vunpack.c.l.b16 %v187
  %v766 = vunpack.c.h.b16 %v187
  %v767 = vunpack.c.l.b16 %v188
  %v768 = vunpack.c.l.b16 %v189
  %v769 = vunpack.c.h.b16 %v189
  %v770 = vunpack.c.l.b16 %v190
  %v771 = vunpack.c.h.b16 %v190
  %v772 = vunpack.c.l.b16 %v191
  %v773 = vunpack.c.l.b16 %v192
  %v774 = vunpack.c.h.b16 %v192
  %v775 = vunpack.c.l.b16 %v193
  %v776 = vunpack.c.h.b16 %v193
  %v777 = vunpack.c.l.b16 %v194
  %v778 = vunpack.c.l.b16 %v195
  %v779 = vunpack.c.h.b16 %v195
  %v780 = vunpack.c.l.b16 %v196
  %v781 = vunpack.c.h.b16 %v196
  %v782 = vunpack.c.l.b16 %v197
  %v783 = vunpack.c.l.b16 %v198
  %v784 = vunpack.c.h.b16 %v198
  %v785 = vunpack.c.l.b16 %v199
  %v786 = vunpack.c.h.b16 %v199
  %v787 = vunpack.c.l.b16 %v200
  %v788 = vunpack.c.l.b16 %v201
  %v789 = vunpack.c.h.b16 %v201
  %v790 = vunpack.c.l.b16 %v202
  %v791 = vunpack.c.h.b16 %v202
  %v792 = vunpack.c.l.b16 %v203
  %v793 = vunpack.c.l.b16 %v204
  %v794 = vunpack.c.h.b16 %v204
  %v795 = vunpack.c.l.b16 %v205
  %v796 = vunpack.c.h.b16 %v205
  %v797 = vunpack.c.l.b16 %v206
  %v798 = vpack.c.b16 %v483, %v478
  %v799 = vpack.c.b16 %v484, %v479
  %v800 = vpack.c.b16 %v485, %v480
  %v801 = vpack.c.b16 %v486, %v481
  %v802 = vpack.c.b16 %v487, %v482
  %v803 = vpack.c.b16 %v493, %v488
  %v804 = vpack.c.b16 %v494, %v489
  %v805 = vpack.c.b16 %v495, %v490
  %v806 = vpack.c.b16 %v496, %v491
  %v807 = vpack.c.b16 %v497, %v492
  %v808 = vpack.c.b16 %v503, %v498
  %v809 = vpack.c.b16 %v504, %v499
  %v810 = vpack.c.b16 %v505, %v500
  %v811 = vpack.c.b16 %v506, %v501
  %v812 = vpack.c.b16 %v507, %v502
  %v813 = vpack.c.b16 %v513, %v508
  %v814 = vpack.c.b16 %v514, %v509
  %v815 = vpack.c.b16 %v515, %v510
  %v816 = vpack.c.b16 %v516, %v511
  %v817 = vpack.c.b16 %v517, %v512
  %v818 = vpack.c.b16 %v523, %v518
  %v819 = vpack.c.b16 %v524, %v519
  %v820 = vpack.c.b16 %v525, %v520
  %v821 = vpack.c.b16 %v526, %v521
  %v822 = vpack.c.b16 %v527, %v522
  %v823 = vpack.c.b16 %v533, %v528
  %v824 = vpack.c.b16 %v534, %v529
  %v825 = vpack.c.b16 %v535, %v530
  %v826 = vpack.c.b16 %v536, %v531
  %v827 = vpack.c.b16 %v537, %v532
  %v828 = vpack.c.b16 %v543, %v538
  %v829 = vpack.c.b16 %v544, %v539
  %v830 = vpack.c.b16 %v545, %v540
  %v831 = vpack.c.b16 %v546, %v541
  %v832 = vpack.c.b16 %v547, %v542
  %v833 = vpack.c.b16 %v553, %v548
  %v834 = vpack.c.b16 %v554, %v549
  %v835 = vpack.c.b16 %v555, %v550
  %v836 = vpack.c.b16 %v556, %v551
  %v837 = vpack.c.b16 %v557, %v552
  %v838 = vpack.c.b16 %v563, %v558
  %v839 = vpack.c.b16 %v564, %v559
  %v840 = vpack.c.b16 %v565, %v560
  %v841 = vpack.c.b16 %v566, %v561
  %v842 = vpack.c.b16 %v567, %v562
  %v843 = vpack.c.b16 %v573, %v568
  %v844 = vpack.c.b16 %v574, %v569
  %v845 = vpack.c.b16 %v575, %v570
  %v846 = vpack.c.b16 %v576, %v571
  %v847 = vpack.c.b16 %v577, %v572
  %v848 = vpack.c.b16 %v583, %v578
  %v849 = vpack.c.b16 %v584, %v579
  %v850 = vpack.c.b16 %v585, %v580
  %v851 = vpack.c.b16 %v586, %v581
  %v852 = vpack.c.b16 %v587, %v582
  %v853 = vpack.c.b16 %v593, %v588
  %v854 = vpack.c.b16 %v594, %v589
  %v855 = vpack.c.b16 %v595, %v590
  %v856 = vpack.c.b16 %v596, %v591
  %v857 = vpack.c.b16 %v597, %v592
  %v858 = vpack.c.b16 %v603, %v598
  %v859 = vpack.c.b16 %v604, %v599
  %v860 = vpack.c.b16 %v605, %v600
  %v861 = vpack.c.b16 %v606, %v601
  %v862 = vpack.c.b16 %v607, %v602
  %v863 = vpack.c.b16 %v613, %v608
  %v864 = vpack.c.b16 %v614, %v609
  %v865 = vpack.c.b16 %v615, %v610
  %v866 = vpack.c.b16 %v616, %v611
  %v867 = vpack.c.b16 %v617, %v612
  %v868 = vpack.c.b16 %v623, %v618
  %v869 = vpack.c.b16 %v624, %v619
  %v870 = vpack.c.b16 %v625, %v620
  %v871 = vpack.c.b16 %v626, %v621
  %v872 = vpack.c.b16 %v627, %v622
  %v873 = vpack.c.b16 %v633, %v628
  %v874 = vpack.c.b16 %v634, %v629
  %v875 = vpack.c.b16 %v635, %v630
  %v876 = vpack.c.b16 %v636, %v631
  %v877 = vpack.c.b16 %v637, %v632
  %v878 = vpack.c.b16 %v643, %v638
  %v879 = vpack.c.b16 %v644, %v639
  %v880 = vpack.c.b16 %v645, %v640
  %v881 = vpack.c.b16 %v646, %v641
  %v882 = vpack.c.b16 %v647, %v642
  %v883 = vpack.c.b16 %v653, %v648
  %v884 = vpack.c.b16 %v654, %v649
  %v885 = vpack.c.b16 %v655, %v650
  %v886 = vpack.c.b16 %v656, %v651
  %v887 = vpack.c.b16 %v657, %v652
  %v888 = vpack.c.b16 %v663, %v658
  %v889 = vpack.c.b16 %v664, %v659
  %v890 = vpack.c.b16 %v665, %v660
  %v891 = vpack.c.b16 %v666, %v661
  %v892 = vpack.c.b16 %v667, %v662
  %v893 = vpack.c.b16 %v673, %v668
  %v894 = vpack.c.b16 %v674, %v669
  %v895 = vpack.c.b16 %v675, %v670
  %v896 = vpack.c.b16 %v676, %v671
  %v897 = vpack.c.b16 %v677, %v672
  %v898 = vpack.c.b16 %v683, %v678
  %v899 = vpack.c.b16 %v684, %v679
  %v900 = vpack.c.b16 %v685, %v680
  %v901 = vpack.c.b16 %v686, %v681
  %v902 = vpack.c.b16 %v687, %v682
  %v903 = vpack.c.b16 %v693, %v688
  %v904 = vpack.c.b16 %v694, %v689
  %v905 = vpack.c.b16 %v695, %v690
  %v906 = vpack.c.b16 %v696, %v691
  %v907 = vpack.c.b16 %v697, %v692
  %v908 = vpack.c.b16 %v703, %v698
  %v909 = vpack.c.b16 %v704, %v699
  %v910 = vpack.c.b16 %v705, %v700
  %v911 = vpack.c.b16 %v706, %v701
  %v912 = vpack.c.b16 %v707, %v702
  %v913 = vpack.c.b16 %v713, %v708
  %v914 = vpack.c.b16 %v714, %v709
  %v915 = vpack.c.b16 %v715, %v710
  %v916 = vpack.c.b16 %v716, %v711
  %v917 = vpack.c.b16 %v717, %v712
  %v918 = vpack.c.b16 %v723, %v718
  %v919 = vpack.c.b16 %v724, %v719
  %v920 = vpack.c.b16 %v725, %v720
  %v921 = vpack.c.b16 %v726, %v721
  %v922 = vpack.c.b16 %v727, %v722
  %v923 = vpack.c.b16 %v733, %v728
  %v924 = vpack.c.b16 %v734, %v729
  %v925 = vpack.c.b16 %v735, %v730
  %v926 = vpack.c.b16 %v736, %v731
  %v927 = vpack.c.b16 %v737, %v732
  %v928 = vpack.c.b16 %v743, %v738
  %v929 = vpack.c.b16 %v744, %v739
  %v930 = vpack.c.b16 %v745, %v740
  %v931 = vpack.c.b16 %v746, %v741
  %v932 = vpack.c.b16 %v747, %v742
  %v933 = vpack.c.b16 %v753, %v748
  %v934 = vpack.c.b16 %v754, %v749
  %v935 = vpack.c.b16 %v755, %v750
  %v936 = vpack.c.b16 %v756, %v751
  %v937 = vpack.c.b16 %v757, %v752
  %v938 = vpack.c.b16 %v763, %v758
  %v939 = vpack.c.b16 %v764, %v759
  %v940 = vpack.c.b16 %v765, %v760
  %v941 = vpack.c.b16 %v766, %v761
  %v942 = vpack.c.b16 %v767, %v762
  %v943 = vpack.c.b16 %v773, %v768
  %v944 = vpack.c.b16 %v774, %v769
  %v945 = vpack.c.b16 %v775, %v770
  %v946 = vpack.c.b16 %v776, %v771
  %v947 = vpack.c.b16 %v777, %v772
  %v948 = vpack.c.b16 %v783, %v778
  %v949 = vpack.c.b16 %v784, %v779
  %v950 = vpack.c.b16 %v785, %v780
  %v951 = vpack.c.b16 %v786, %v781
  %v952 = vpack.c.b16 %v787, %v782
  %v953 = vpack.c.b16 %v793, %v788
  %v954 = vpack.c.b16 %v794, %v789
  %v955 = vpack.c.b16 %v795, %v790
  %v956 = vpack.c.b16 %v796, %v791
  %v957 = vpack.c.b16 %v797, %v792
  %v1158 = vunpack.c.l.b16 %v207
  %v1159 = vunpack.c.l.b16 %v208
  %v1160 = vunpack.c.l.b16 %v209
  %v1161 = vunpack.c.l.b16 %v210
  %v1162 = vunpack.c.l.b16 %v211
  %v1163 = vunpack.c.l.b16 %v212
  %v1164 = vunpack.c.l.b16 %v213
  %v1165 = vunpack.c.l.b16 %v214
  %v1166 = vunpack.c.l.b16 %v215
  %v1167 = vunpack.c.l.b16 %v216
  %v1168 = vunpack.c.l.b16 %v217
  %v1169 = vunpack.c.l.b16 %v218
  %v1170 = vunpack.c.l.b16 %v219
  %v1171 = vunpack.c.l.b16 %v220
  %v1172 = vunpack.c.l.b16 %v221
  %v1173 = vunpack.c.l.b16 %v222
  %v1174 = vunpack.c.l.b16 %v223
  %v1175 = vunpack.c.l.b16 %v224
  %v1176 = vunpack.c.l.b16 %v225
  %v1177 = vunpack.c.l.b16 %v226
  %v1178 = vunpack.c.l.b16 %v227
  %v1179 = vunpack.c.l.b16 %v228
  %v1180 = vunpack.c.l.b16 %v229
  %v1181 = vunpack.c.l.b16 %v230
  %v1182 = vunpack.c.l.b16 %v231
  %v1183 = vunpack.c.l.b16 %v232
  %v1184 = vunpack.c.l.b16 %v233
  %v1185 = vunpack.c.l.b16 %v234
  %v1186 = vunpack.c.l.b16 %v235
  %v1187 = vunpack.c.l.b16 %v236
  %v1188 = vunpack.c.l.b16 %v237
  %v1189 = vunpack.c.l.b16 %v238
  %v1190 = vunpack.c.l.b16 %v239
  %v1191 = vunpack.c.l.b16 %v240
  %v1192 = vunpack.c.l.b16 %v241
  %v1193 = vunpack.c.l.b16 %v242
  %v1194 = vunpack.c.l.b16 %v243
  %v1195 = vunpack.c.l.b16 %v244
  %v1196 = vunpack.c.l.b16 %v245
  %v1197 = vunpack.c.l.b16 %v246
  %v1198 = vunpack.c.l.b16 %v247
  %v1199 = vunpack.c.l.b16 %v248
  %v1200 = vunpack.c.l.b16 %v249
  %v1201 = vunpack.c.l.b16 %v250
  %v1202 = vunpack.c.l.b16 %v251
  %v1203 = vunpack.c.l.b16 %v252
  %v1204 = vunpack.c.l.b16 %v253
  %v1205 = vunpack.c.l.b16 %v254
  %v1206 = vunpack.c.l.b16 %v255
  %v1207 = vunpack.c.l.b16 %v256
  %v1208 = vunpack.c.l.b16 %v257
  %v1209 = vunpack.c.l.b16 %v258
  %v1210 = vunpack.c.l.b16 %v259
  %v1211 = vunpack.c.l.b16 %v260
  %v1212 = vunpack.c.l.b16 %v261
  %v1213 = vunpack.c.l.b16 %v262
  %v1214 = vunpack.c.l.b16 %v263
  %v1215 = vunpack.c.l.b16 %v264
  %v1216 = vunpack.c.l.b16 %v265
  %v1217 = vunpack.c.l.b16 %v266
  %v1218 = vunpack.c.l.b16 %v267
  %v1219 = vunpack.c.l.b16 %v268
  %v1220 = vunpack.c.l.b16 %v269
  %v1221 = vunpack.c.l.b16 %v270
  %v1222 = vunpack.c.l.b16 %v271
  %v1223 = vunpack.c.l.b16 %v272
  %v1224 = vunpack.c.l.b16 %v273
  %v1225 = vunpack.c.l.b16 %v274
  %v1226 = vunpack.c.l.b16 %v275
  %v1227 = vunpack.c.l.b16 %v276
  %v1228 = vunpack.c.l.b16 %v277
  %v1229 = vunpack.c.l.b16 %v278
  %v1230 = vpack.c.b16 %v1159, %v1158
  %v1231 = vpack.c.b16 %v1161, %v1160
  %v1232 = vpack.c.b16 %v1163, %v1162
  %v1233 = vpack.c.b16 %v1165, %v1164
  %v1234 = vpack.c.b16 %v1167, %v1166
  %v1235 = vpack.c.b16 %v1169, %v1168
  %v1236 = vpack.c.b16 %v1171, %v1170
  %v1237 = vpack.c.b16 %v1173, %v1172
  %v1238 = vpack.c.b16 %v1175, %v1174
  %v1239 = vpack.c.b16 %v1177, %v1176
  %v1240 = vpack.c.b16 %v1179, %v1178
  %v1241 = vpack.c.b16 %v1181, %v1180
  %v1242 = vpack.c.b16 %v1183, %v1182
  %v1243 = vpack.c.b16 %v1185, %v1184
  %v1244 = vpack.c.b16 %v1187, %v1186
  %v1245 = vpack.c.b16 %v1189, %v1188
  %v1246 = vpack.c.b16 %v1191, %v1190
  %v1247 = vpack.c.b16 %v1193, %v1192
  %v1248 = vpack.c.b16 %v1195, %v1194
  %v1249 = vpack.c.b16 %v1197, %v1196
  %v1250 = vpack.c.b16 %v1199, %v1198
  %v1251 = vpack.c.b16 %v1201, %v1200
  %v1252 = vpack.c.b16 %v1203, %v1202
  %v1253 = vpack.c.b16 %v1205, %v1204
  %v1254 = vpack.c.b16 %v1207, %v1206
  %v1255 = vpack.c.b16 %v1209, %v1208
  %v1256 = vpack.c.b16 %v1211, %v1210
  %v1257 = vpack.c.b16 %v1213, %v1212
  %v1258 = vpack.c.b16 %v1215, %v1214
  %v1259 = vpack.c.b16 %v1217, %v1216
  %v1260 = vpack.c.b16 %v1219, %v1218
  %v1261 = vpack.c.b16 %v1221, %v1220
  %v1262 = vpack.c.b16 %v1223, %v1222
  %v1263 = vpack.c.b16 %v1225, %v1224
  %v1264 = vpack.c.b16 %v1227, %v1226
  %v1265 = vpack.c.b16 %v1229, %v1228
  %vm1302 = vcmask 523264
  %v1304 = vsel %vm1302, %v802, 0
  %v1307 = vsel %vm1302, %v807, 0
  %v1310 = vsel %vm1302, %v812, 0
  %v1313 = vsel %vm1302, %v817, 0
  %v1316 = vsel %vm1302, %v822, 0
  %v1319 = vsel %vm1302, %v827, 0
  %v1322 = vsel %vm1302, %v832, 0
  %v1325 = vsel %vm1302, %v837, 0
  %v1328 = vsel %vm1302, %v842, 0
  %v1331 = vsel %vm1302, %v847, 0
  %v1334 = vsel %vm1302, %v852, 0
  %v1337 = vsel %vm1302, %v857, 0
  %v1340 = vsel %vm1302, %v862, 0
  %v1343 = vsel %vm1302, %v867, 0
  %v1346 = vsel %vm1302, %v872, 0
  %v1349 = vsel %vm1302, %v877, 0
  %v1352 = vsel %vm1302, %v882, 0
  %v1355 = vsel %vm1302, %v887, 0
  %v1358 = vsel %vm1302, %v892, 0
  %v1361 = vsel %vm1302, %v897, 0
  %v1364 = vsel %vm1302, %v902, 0
  %v1367 = vsel %vm1302, %v907, 0
  %v1370 = vsel %vm1302, %v912, 0
  %v1373 = vsel %vm1302, %v917, 0
  %v1376 = vsel %vm1302, %v922, 0
  %v1379 = vsel %vm1302, %v927, 0
  %v1382 = vsel %vm1302, %v932, 0
  %v1385 = vsel %vm1302, %v937, 0
  %v1388 = vsel %vm1302, %v942, 0
  %v1391 = vsel %vm1302, %v947, 0
  %v1394 = vsel %vm1302, %v952, 0
  %v1397 = vsel %vm1302, %v957, 0
  %1399 = vmatprep.subr.bf16.mxu0 0
  %1400 = vmatpush1.bf16.msra.mxu0 %v1237
  %1401 = vmatprep.subr.bf16.mxu0 0
  %1402 = vmatpush1.bf16.msra.mxu0 %v1236
  %1403 = vmatprep.subr.bf16.mxu0 0
  %1404 = vmatpush1.bf16.msra.mxu0 %v1235
  %1405 = vmatprep.subr.bf16.mxu0 0
  %1406 = vmatpush1.bf16.msra.mxu0 %v1234
  %1407 = vmatprep.subr.bf16.mxu0 0
  %1408 = vmatpush1.bf16.msra.mxu0 %v1233
  %1409 = vmatprep.subr.bf16.mxu0 0
  %1410 = vmatpush1.bf16.msra.mxu0 %v1232
  %1411 = vmatprep.subr.bf16.mxu0 0
  %1412 = vmatpush1.bf16.msra.mxu0 %v1231
  %1413 = vmatprep.subr.bf16.mxu0 0
  %1414 = vmatpush1.bf16.msra.mxu0 %v1230
  %1415 = vmatprep.subr.bf16.mxu0 0
  %1416 = vmatpush2.bf16.msra.mxu0 %v1245
  %1417 = vmatprep.subr.bf16.mxu0 0
  %1418 = vmatpush2.bf16.msra.mxu0 %v1244
  %1419 = vmatprep.subr.bf16.mxu0 0
  %1420 = vmatpush2.bf16.msra.mxu0 %v1243
  %1421 = vmatprep.subr.bf16.mxu0 0
  %1422 = vmatpush2.bf16.msra.mxu0 %v1242
  %1423 = vmatprep.subr.bf16.mxu0 0
  %1424 = vmatpush2.bf16.msra.mxu0 %v1241
  %1425 = vmatprep.subr.bf16.mxu0 0
  %1426 = vmatpush2.bf16.msra.mxu0 %v1240
  %1427 = vmatprep.subr.bf16.mxu0 0
  %1428 = vmatpush2.bf16.msra.mxu0 %v1239
  %1429 = vmatprep.subr.bf16.mxu0 0
  %1430 = vmatpush2.bf16.msra.mxu0 %v1238
  %1431 = vmatprep.mubr.bf16.mxu0 %v799
  %1432 = vmatmul.mubr.bf16.gmra.mxu0 %v798
  %v1433 = vpop.f32.mrf.mxu0
  %v1434 = vadd.f32 %v284, %v1433
  %v1435 = vpop.f32.mrf.mxu0
  %v1436 = vpop.f32.mrf.mxu0
  %v1437 = vadd.f32 %v284, %v1436
  %v1438 = vpop.f32.mrf.mxu0
  %1439 = vmatprep.mubr.bf16.mxu0 %v804
  %1440 = vmatmul.mubr.bf16.gmra.mxu0 %v803
  %v1441 = vpop.f32.mrf.mxu0
  %v1442 = vadd.f32 %v284, %v1441
  %v1443 = vpop.f32.mrf.mxu0
  %v1444 = vpop.f32.mrf.mxu0
  %v1445 = vadd.f32 %v284, %v1444
  %v1446 = vpop.f32.mrf.mxu0
  %1447 = vmatprep.mubr.bf16.mxu0 %v809
  %1448 = vmatmul.mubr.bf16.gmra.mxu0 %v808
  %v1449 = vpop.f32.mrf.mxu0
  %v1450 = vadd.f32 %v284, %v1449
  %v1451 = vpop.f32.mrf.mxu0
  %v1452 = vpop.f32.mrf.mxu0
  %v1453 = vadd.f32 %v284, %v1452
  %v1454 = vpop.f32.mrf.mxu0
  %1455 = vmatprep.mubr.bf16.mxu0 %v814
  %1456 = vmatmul.mubr.bf16.gmra.mxu0 %v813
  %v1457 = vpop.f32.mrf.mxu0
  %v1458 = vadd.f32 %v284, %v1457
  %v1459 = vpop.f32.mrf.mxu0
  %v1460 = vpop.f32.mrf.mxu0
  %v1461 = vadd.f32 %v284, %v1460
  %v1462 = vpop.f32.mrf.mxu0
  %1463 = vmatprep.mubr.bf16.mxu0 %v819
  %1464 = vmatmul.mubr.bf16.gmra.mxu0 %v818
  %v1465 = vpop.f32.mrf.mxu0
  %v1466 = vadd.f32 %v284, %v1465
  %v1467 = vpop.f32.mrf.mxu0
  %v1468 = vpop.f32.mrf.mxu0
  %v1469 = vadd.f32 %v284, %v1468
  %v1470 = vpop.f32.mrf.mxu0
  %1471 = vmatprep.mubr.bf16.mxu0 %v824
  %1472 = vmatmul.mubr.bf16.gmra.mxu0 %v823
  %v1473 = vpop.f32.mrf.mxu0
  %v1474 = vadd.f32 %v284, %v1473
  %v1475 = vpop.f32.mrf.mxu0
  %v1476 = vpop.f32.mrf.mxu0
  %v1477 = vadd.f32 %v284, %v1476
  %v1478 = vpop.f32.mrf.mxu0
  %1479 = vmatprep.mubr.bf16.mxu0 %v829
  %1480 = vmatmul.mubr.bf16.gmra.mxu0 %v828
  %v1481 = vpop.f32.mrf.mxu0
  %v1482 = vadd.f32 %v284, %v1481
  %v1483 = vpop.f32.mrf.mxu0
  %v1484 = vpop.f32.mrf.mxu0
  %v1485 = vadd.f32 %v284, %v1484
  %v1486 = vpop.f32.mrf.mxu0
  %1487 = vmatprep.mubr.bf16.mxu0 %v834
  %1488 = vmatmul.mubr.bf16.gmra.mxu0 %v833
  %v1489 = vpop.f32.mrf.mxu0
  %v1490 = vadd.f32 %v284, %v1489
  %v1491 = vpop.f32.mrf.mxu0
  %v1492 = vpop.f32.mrf.mxu0
  %v1493 = vadd.f32 %v284, %v1492
  %v1494 = vpop.f32.mrf.mxu0
  %1495 = vmatprep.mubr.bf16.mxu0 %v839
  %1496 = vmatmul.mubr.bf16.gmra.mxu0 %v838
  %v1497 = vpop.f32.mrf.mxu0
  %v1498 = vadd.f32 %v284, %v1497
  %v1499 = vpop.f32.mrf.mxu0
  %v1500 = vpop.f32.mrf.mxu0
  %v1501 = vadd.f32 %v284, %v1500
  %v1502 = vpop.f32.mrf.mxu0
  %1503 = vmatprep.mubr.bf16.mxu0 %v844
  %1504 = vmatmul.mubr.bf16.gmra.mxu0 %v843
  %v1505 = vpop.f32.mrf.mxu0
  %v1506 = vadd.f32 %v284, %v1505
  %v1507 = vpop.f32.mrf.mxu0
  %v1508 = vpop.f32.mrf.mxu0
  %v1509 = vadd.f32 %v284, %v1508
  %v1510 = vpop.f32.mrf.mxu0
  %1511 = vmatprep.mubr.bf16.mxu0 %v849
  %1512 = vmatmul.mubr.bf16.gmra.mxu0 %v848
  %v1513 = vpop.f32.mrf.mxu0
  %v1514 = vadd.f32 %v284, %v1513
  %v1515 = vpop.f32.mrf.mxu0
  %v1516 = vpop.f32.mrf.mxu0
  %v1517 = vadd.f32 %v284, %v1516
  %v1518 = vpop.f32.mrf.mxu0
  %1519 = vmatprep.mubr.bf16.mxu0 %v854
  %1520 = vmatmul.mubr.bf16.gmra.mxu0 %v853
  %v1521 = vpop.f32.mrf.mxu0
  %v1522 = vadd.f32 %v284, %v1521
  %v1523 = vpop.f32.mrf.mxu0
  %v1524 = vpop.f32.mrf.mxu0
  %v1525 = vadd.f32 %v284, %v1524
  %v1526 = vpop.f32.mrf.mxu0
  %1527 = vmatprep.mubr.bf16.mxu0 %v859
  %1528 = vmatmul.mubr.bf16.gmra.mxu0 %v858
  %v1529 = vpop.f32.mrf.mxu0
  %v1530 = vadd.f32 %v284, %v1529
  %v1531 = vpop.f32.mrf.mxu0
  %v1532 = vpop.f32.mrf.mxu0
  %v1533 = vadd.f32 %v284, %v1532
  %v1534 = vpop.f32.mrf.mxu0
  %1535 = vmatprep.mubr.bf16.mxu0 %v864
  %1536 = vmatmul.mubr.bf16.gmra.mxu0 %v863
  %v1537 = vpop.f32.mrf.mxu0
  %v1538 = vadd.f32 %v284, %v1537
  %v1539 = vpop.f32.mrf.mxu0
  %v1540 = vpop.f32.mrf.mxu0
  %v1541 = vadd.f32 %v284, %v1540
  %v1542 = vpop.f32.mrf.mxu0
  %1543 = vmatprep.mubr.bf16.mxu0 %v869
  %1544 = vmatmul.mubr.bf16.gmra.mxu0 %v868
  %v1545 = vpop.f32.mrf.mxu0
  %v1546 = vadd.f32 %v284, %v1545
  %v1547 = vpop.f32.mrf.mxu0
  %v1548 = vpop.f32.mrf.mxu0
  %v1549 = vadd.f32 %v284, %v1548
  %v1550 = vpop.f32.mrf.mxu0
  %1551 = vmatprep.mubr.bf16.mxu0 %v874
  %1552 = vmatmul.mubr.bf16.gmra.mxu0 %v873
  %v1553 = vpop.f32.mrf.mxu0
  %v1554 = vadd.f32 %v284, %v1553
  %v1555 = vpop.f32.mrf.mxu0
  %v1556 = vpop.f32.mrf.mxu0
  %v1557 = vadd.f32 %v284, %v1556
  %v1558 = vpop.f32.mrf.mxu0
  %1559 = vmatprep.mubr.bf16.mxu0 %v879
  %1560 = vmatmul.mubr.bf16.gmra.mxu0 %v878
  %v1561 = vpop.f32.mrf.mxu0
  %v1562 = vadd.f32 %v284, %v1561
  %v1563 = vpop.f32.mrf.mxu0
  %v1564 = vpop.f32.mrf.mxu0
  %v1565 = vadd.f32 %v284, %v1564
  %v1566 = vpop.f32.mrf.mxu0
  %1567 = vmatprep.mubr.bf16.mxu0 %v884
  %1568 = vmatmul.mubr.bf16.gmra.mxu0 %v883
  %v1569 = vpop.f32.mrf.mxu0
  %v1570 = vadd.f32 %v284, %v1569
  %v1571 = vpop.f32.mrf.mxu0
  %v1572 = vpop.f32.mrf.mxu0
  %v1573 = vadd.f32 %v284, %v1572
  %v1574 = vpop.f32.mrf.mxu0
  %1575 = vmatprep.mubr.bf16.mxu0 %v889
  %1576 = vmatmul.mubr.bf16.gmra.mxu0 %v888
  %v1577 = vpop.f32.mrf.mxu0
  %v1578 = vadd.f32 %v284, %v1577
  %v1579 = vpop.f32.mrf.mxu0
  %v1580 = vpop.f32.mrf.mxu0
  %v1581 = vadd.f32 %v284, %v1580
  %v1582 = vpop.f32.mrf.mxu0
  %1583 = vmatprep.mubr.bf16.mxu0 %v894
  %1584 = vmatmul.mubr.bf16.gmra.mxu0 %v893
  %v1585 = vpop.f32.mrf.mxu0
  %v1586 = vadd.f32 %v284, %v1585
  %v1587 = vpop.f32.mrf.mxu0
  %v1588 = vpop.f32.mrf.mxu0
  %v1589 = vadd.f32 %v284, %v1588
  %v1590 = vpop.f32.mrf.mxu0
  %1591 = vmatprep.mubr.bf16.mxu0 %v899
  %1592 = vmatmul.mubr.bf16.gmra.mxu0 %v898
  %v1593 = vpop.f32.mrf.mxu0
  %v1594 = vadd.f32 %v284, %v1593
  %v1595 = vpop.f32.mrf.mxu0
  %v1596 = vpop.f32.mrf.mxu0
  %v1597 = vadd.f32 %v284, %v1596
  %v1598 = vpop.f32.mrf.mxu0
  %1599 = vmatprep.mubr.bf16.mxu0 %v904
  %1600 = vmatmul.mubr.bf16.gmra.mxu0 %v903
  %v1601 = vpop.f32.mrf.mxu0
  %v1602 = vadd.f32 %v284, %v1601
  %v1603 = vpop.f32.mrf.mxu0
  %v1604 = vpop.f32.mrf.mxu0
  %v1605 = vadd.f32 %v284, %v1604
  %v1606 = vpop.f32.mrf.mxu0
  %1607 = vmatprep.mubr.bf16.mxu0 %v909
  %1608 = vmatmul.mubr.bf16.gmra.mxu0 %v908
  %v1609 = vpop.f32.mrf.mxu0
  %v1610 = vadd.f32 %v284, %v1609
  %v1611 = vpop.f32.mrf.mxu0
  %v1612 = vpop.f32.mrf.mxu0
  %v1613 = vadd.f32 %v284, %v1612
  %v1614 = vpop.f32.mrf.mxu0
  %1615 = vmatprep.mubr.bf16.mxu0 %v914
  %1616 = vmatmul.mubr.bf16.gmra.mxu0 %v913
  %v1617 = vpop.f32.mrf.mxu0
  %v1618 = vadd.f32 %v284, %v1617
  %v1619 = vpop.f32.mrf.mxu0
  %v1620 = vpop.f32.mrf.mxu0
  %v1621 = vadd.f32 %v284, %v1620
  %v1622 = vpop.f32.mrf.mxu0
  %1623 = vmatprep.mubr.bf16.mxu0 %v919
  %1624 = vmatmul.mubr.bf16.gmra.mxu0 %v918
  %v1625 = vpop.f32.mrf.mxu0
  %v1626 = vadd.f32 %v284, %v1625
  %v1627 = vpop.f32.mrf.mxu0
  %v1628 = vpop.f32.mrf.mxu0
  %v1629 = vadd.f32 %v284, %v1628
  %v1630 = vpop.f32.mrf.mxu0
  %1631 = vmatprep.mubr.bf16.mxu0 %v924
  %1632 = vmatmul.mubr.bf16.gmra.mxu0 %v923
  %v1633 = vpop.f32.mrf.mxu0
  %v1634 = vadd.f32 %v284, %v1633
  %v1635 = vpop.f32.mrf.mxu0
  %v1636 = vpop.f32.mrf.mxu0
  %v1637 = vadd.f32 %v284, %v1636
  %v1638 = vpop.f32.mrf.mxu0
  %1639 = vmatprep.mubr.bf16.mxu0 %v929
  %1640 = vmatmul.mubr.bf16.gmra.mxu0 %v928
  %v1641 = vpop.f32.mrf.mxu0
  %v1642 = vadd.f32 %v284, %v1641
  %v1643 = vpop.f32.mrf.mxu0
  %v1644 = vpop.f32.mrf.mxu0
  %v1645 = vadd.f32 %v284, %v1644
  %v1646 = vpop.f32.mrf.mxu0
  %1647 = vmatprep.mubr.bf16.mxu0 %v934
  %1648 = vmatmul.mubr.bf16.gmra.mxu0 %v933
  %v1649 = vpop.f32.mrf.mxu0
  %v1650 = vadd.f32 %v284, %v1649
  %v1651 = vpop.f32.mrf.mxu0
  %v1652 = vpop.f32.mrf.mxu0
  %v1653 = vadd.f32 %v284, %v1652
  %v1654 = vpop.f32.mrf.mxu0
  %1655 = vmatprep.mubr.bf16.mxu0 %v939
  %1656 = vmatmul.mubr.bf16.gmra.mxu0 %v938
  %v1657 = vpop.f32.mrf.mxu0
  %v1658 = vadd.f32 %v284, %v1657
  %v1659 = vpop.f32.mrf.mxu0
  %v1660 = vpop.f32.mrf.mxu0
  %v1661 = vadd.f32 %v284, %v1660
  %v1662 = vpop.f32.mrf.mxu0
  %1663 = vmatprep.mubr.bf16.mxu0 %v944
  %1664 = vmatmul.mubr.bf16.gmra.mxu0 %v943
  %v1665 = vpop.f32.mrf.mxu0
  %v1666 = vadd.f32 %v284, %v1665
  %v1667 = vpop.f32.mrf.mxu0
  %v1668 = vpop.f32.mrf.mxu0
  %v1669 = vadd.f32 %v284, %v1668
  %v1670 = vpop.f32.mrf.mxu0
  %1671 = vmatprep.mubr.bf16.mxu0 %v949
  %1672 = vmatmul.mubr.bf16.gmra.mxu0 %v948
  %v1673 = vpop.f32.mrf.mxu0
  %v1674 = vadd.f32 %v284, %v1673
  %v1675 = vpop.f32.mrf.mxu0
  %v1676 = vpop.f32.mrf.mxu0
  %v1677 = vadd.f32 %v284, %v1676
  %v1678 = vpop.f32.mrf.mxu0
  %1679 = vmatprep.mubr.bf16.mxu0 %v954
  %1680 = vmatmul.mubr.bf16.gmra.mxu0 %v953
  %v1681 = vpop.f32.mrf.mxu0
  %v1682 = vadd.f32 %v284, %v1681
  %v1683 = vpop.f32.mrf.mxu0
  %v1684 = vpop.f32.mrf.mxu0
  %v1685 = vadd.f32 %v284, %v1684
  %v1686 = vpop.f32.mrf.mxu0
  %1687 = vdwg.mxu0
  %1688 = vmatprep.subr.bf16.mxu0 0
  %1689 = vmatpush1.bf16.msra.mxu0 %v1253
  %1690 = vmatprep.subr.bf16.mxu0 0
  %1691 = vmatpush1.bf16.msra.mxu0 %v1252
  %1692 = vmatprep.subr.bf16.mxu0 0
  %1693 = vmatpush1.bf16.msra.mxu0 %v1251
  %1694 = vmatprep.subr.bf16.mxu0 0
  %1695 = vmatpush1.bf16.msra.mxu0 %v1250
  %1696 = vmatprep.subr.bf16.mxu0 0
  %1697 = vmatpush1.bf16.msra.mxu0 %v1249
  %1698 = vmatprep.subr.bf16.mxu0 0
  %1699 = vmatpush1.bf16.msra.mxu0 %v1248
  %1700 = vmatprep.subr.bf16.mxu0 0
  %1701 = vmatpush1.bf16.msra.mxu0 %v1247
  %1702 = vmatprep.subr.bf16.mxu0 0
  %1703 = vmatpush1.bf16.msra.mxu0 %v1246
  %1704 = vmatprep.subr.bf16.mxu0 0
  %1705 = vmatpush2.bf16.msra.mxu0 %v1261
  %1706 = vmatprep.subr.bf16.mxu0 0
  %1707 = vmatpush2.bf16.msra.mxu0 %v1260
  %1708 = vmatprep.subr.bf16.mxu0 0
  %1709 = vmatpush2.bf16.msra.mxu0 %v1259
  %1710 = vmatprep.subr.bf16.mxu0 0
  %1711 = vmatpush2.bf16.msra.mxu0 %v1258
  %1712 = vmatprep.subr.bf16.mxu0 0
  %1713 = vmatpush2.bf16.msra.mxu0 %v1257
  %1714 = vmatprep.subr.bf16.mxu0 0
  %1715 = vmatpush2.bf16.msra.mxu0 %v1256
  %1716 = vmatprep.subr.bf16.mxu0 0
  %1717 = vmatpush2.bf16.msra.mxu0 %v1255
  %1718 = vmatprep.subr.bf16.mxu0 0
  %1719 = vmatpush2.bf16.msra.mxu0 %v1254
  %1720 = vmatprep.mubr.bf16.mxu0 %v801
  %1721 = vmatmul.mubr.bf16.gmra.mxu0 %v800
  %v1722 = vpop.f32.mrf.mxu0
  %v1723 = vadd.f32 %v1434, %v1722
  %v1724 = vpop.f32.mrf.mxu0
  %v1725 = vpop.f32.mrf.mxu0
  %v1726 = vadd.f32 %v1437, %v1725
  %v1727 = vpop.f32.mrf.mxu0
  %1728 = vmatprep.mubr.bf16.mxu0 %v806
  %1729 = vmatmul.mubr.bf16.gmra.mxu0 %v805
  %v1730 = vpop.f32.mrf.mxu0
  %v1731 = vadd.f32 %v1442, %v1730
  %v1732 = vpop.f32.mrf.mxu0
  %v1733 = vpop.f32.mrf.mxu0
  %v1734 = vadd.f32 %v1445, %v1733
  %v1735 = vpop.f32.mrf.mxu0
  %1736 = vmatprep.mubr.bf16.mxu0 %v811
  %1737 = vmatmul.mubr.bf16.gmra.mxu0 %v810
  %v1738 = vpop.f32.mrf.mxu0
  %v1739 = vadd.f32 %v1450, %v1738
  %v1740 = vpop.f32.mrf.mxu0
  %v1741 = vpop.f32.mrf.mxu0
  %v1742 = vadd.f32 %v1453, %v1741
  %v1743 = vpop.f32.mrf.mxu0
  %1744 = vmatprep.mubr.bf16.mxu0 %v816
  %1745 = vmatmul.mubr.bf16.gmra.mxu0 %v815
  %v1746 = vpop.f32.mrf.mxu0
  %v1747 = vadd.f32 %v1458, %v1746
  %v1748 = vpop.f32.mrf.mxu0
  %v1749 = vpop.f32.mrf.mxu0
  %v1750 = vadd.f32 %v1461, %v1749
  %v1751 = vpop.f32.mrf.mxu0
  %1752 = vmatprep.mubr.bf16.mxu0 %v821
  %1753 = vmatmul.mubr.bf16.gmra.mxu0 %v820
  %v1754 = vpop.f32.mrf.mxu0
  %v1755 = vadd.f32 %v1466, %v1754
  %v1756 = vpop.f32.mrf.mxu0
  %v1757 = vpop.f32.mrf.mxu0
  %v1758 = vadd.f32 %v1469, %v1757
  %v1759 = vpop.f32.mrf.mxu0
  %1760 = vmatprep.mubr.bf16.mxu0 %v826
  %1761 = vmatmul.mubr.bf16.gmra.mxu0 %v825
  %v1762 = vpop.f32.mrf.mxu0
  %v1763 = vadd.f32 %v1474, %v1762
  %v1764 = vpop.f32.mrf.mxu0
  %v1765 = vpop.f32.mrf.mxu0
  %v1766 = vadd.f32 %v1477, %v1765
  %v1767 = vpop.f32.mrf.mxu0
  %1768 = vmatprep.mubr.bf16.mxu0 %v831
  %1769 = vmatmul.mubr.bf16.gmra.mxu0 %v830
  %v1770 = vpop.f32.mrf.mxu0
  %v1771 = vadd.f32 %v1482, %v1770
  %v1772 = vpop.f32.mrf.mxu0
  %v1773 = vpop.f32.mrf.mxu0
  %v1774 = vadd.f32 %v1485, %v1773
  %v1775 = vpop.f32.mrf.mxu0
  %1776 = vmatprep.mubr.bf16.mxu0 %v836
  %1777 = vmatmul.mubr.bf16.gmra.mxu0 %v835
  %v1778 = vpop.f32.mrf.mxu0
  %v1779 = vadd.f32 %v1490, %v1778
  %v1780 = vpop.f32.mrf.mxu0
  %v1781 = vpop.f32.mrf.mxu0
  %v1782 = vadd.f32 %v1493, %v1781
  %v1783 = vpop.f32.mrf.mxu0
  %1784 = vmatprep.mubr.bf16.mxu0 %v841
  %1785 = vmatmul.mubr.bf16.gmra.mxu0 %v840
  %v1786 = vpop.f32.mrf.mxu0
  %v1787 = vadd.f32 %v1498, %v1786
  %v1788 = vpop.f32.mrf.mxu0
  %v1789 = vpop.f32.mrf.mxu0
  %v1790 = vadd.f32 %v1501, %v1789
  %v1791 = vpop.f32.mrf.mxu0
  %1792 = vmatprep.mubr.bf16.mxu0 %v846
  %1793 = vmatmul.mubr.bf16.gmra.mxu0 %v845
  %v1794 = vpop.f32.mrf.mxu0
  %v1795 = vadd.f32 %v1506, %v1794
  %v1796 = vpop.f32.mrf.mxu0
  %v1797 = vpop.f32.mrf.mxu0
  %v1798 = vadd.f32 %v1509, %v1797
  %v1799 = vpop.f32.mrf.mxu0
  %1800 = vmatprep.mubr.bf16.mxu0 %v851
  %1801 = vmatmul.mubr.bf16.gmra.mxu0 %v850
  %v1802 = vpop.f32.mrf.mxu0
  %v1803 = vadd.f32 %v1514, %v1802
  %v1804 = vpop.f32.mrf.mxu0
  %v1805 = vpop.f32.mrf.mxu0
  %v1806 = vadd.f32 %v1517, %v1805
  %v1807 = vpop.f32.mrf.mxu0
  %1808 = vmatprep.mubr.bf16.mxu0 %v856
  %1809 = vmatmul.mubr.bf16.gmra.mxu0 %v855
  %v1810 = vpop.f32.mrf.mxu0
  %v1811 = vadd.f32 %v1522, %v1810
  %v1812 = vpop.f32.mrf.mxu0
  %v1813 = vpop.f32.mrf.mxu0
  %v1814 = vadd.f32 %v1525, %v1813
  %v1815 = vpop.f32.mrf.mxu0
  %1816 = vmatprep.mubr.bf16.mxu0 %v861
  %1817 = vmatmul.mubr.bf16.gmra.mxu0 %v860
  %v1818 = vpop.f32.mrf.mxu0
  %v1819 = vadd.f32 %v1530, %v1818
  %v1820 = vpop.f32.mrf.mxu0
  %v1821 = vpop.f32.mrf.mxu0
  %v1822 = vadd.f32 %v1533, %v1821
  %v1823 = vpop.f32.mrf.mxu0
  %1824 = vmatprep.mubr.bf16.mxu0 %v866
  %1825 = vmatmul.mubr.bf16.gmra.mxu0 %v865
  %v1826 = vpop.f32.mrf.mxu0
  %v1827 = vadd.f32 %v1538, %v1826
  %v1828 = vpop.f32.mrf.mxu0
  %v1829 = vpop.f32.mrf.mxu0
  %v1830 = vadd.f32 %v1541, %v1829
  %v1831 = vpop.f32.mrf.mxu0
  %1832 = vmatprep.mubr.bf16.mxu0 %v871
  %1833 = vmatmul.mubr.bf16.gmra.mxu0 %v870
  %v1834 = vpop.f32.mrf.mxu0
  %v1835 = vadd.f32 %v1546, %v1834
  %v1836 = vpop.f32.mrf.mxu0
  %v1837 = vpop.f32.mrf.mxu0
  %v1838 = vadd.f32 %v1549, %v1837
  %v1839 = vpop.f32.mrf.mxu0
  %1840 = vmatprep.mubr.bf16.mxu0 %v876
  %1841 = vmatmul.mubr.bf16.gmra.mxu0 %v875
  %v1842 = vpop.f32.mrf.mxu0
  %v1843 = vadd.f32 %v1554, %v1842
  %v1844 = vpop.f32.mrf.mxu0
  %v1845 = vpop.f32.mrf.mxu0
  %v1846 = vadd.f32 %v1557, %v1845
  %v1847 = vpop.f32.mrf.mxu0
  %1848 = vmatprep.mubr.bf16.mxu0 %v881
  %1849 = vmatmul.mubr.bf16.gmra.mxu0 %v880
  %v1850 = vpop.f32.mrf.mxu0
  %v1851 = vadd.f32 %v1562, %v1850
  %v1852 = vpop.f32.mrf.mxu0
  %v1853 = vpop.f32.mrf.mxu0
  %v1854 = vadd.f32 %v1565, %v1853
  %v1855 = vpop.f32.mrf.mxu0
  %1856 = vmatprep.mubr.bf16.mxu0 %v886
  %1857 = vmatmul.mubr.bf16.gmra.mxu0 %v885
  %v1858 = vpop.f32.mrf.mxu0
  %v1859 = vadd.f32 %v1570, %v1858
  %v1860 = vpop.f32.mrf.mxu0
  %v1861 = vpop.f32.mrf.mxu0
  %v1862 = vadd.f32 %v1573, %v1861
  %v1863 = vpop.f32.mrf.mxu0
  %1864 = vmatprep.mubr.bf16.mxu0 %v891
  %1865 = vmatmul.mubr.bf16.gmra.mxu0 %v890
  %v1866 = vpop.f32.mrf.mxu0
  %v1867 = vadd.f32 %v1578, %v1866
  %v1868 = vpop.f32.mrf.mxu0
  %v1869 = vpop.f32.mrf.mxu0
  %v1870 = vadd.f32 %v1581, %v1869
  %v1871 = vpop.f32.mrf.mxu0
  %1872 = vmatprep.mubr.bf16.mxu0 %v896
  %1873 = vmatmul.mubr.bf16.gmra.mxu0 %v895
  %v1874 = vpop.f32.mrf.mxu0
  %v1875 = vadd.f32 %v1586, %v1874
  %v1876 = vpop.f32.mrf.mxu0
  %v1877 = vpop.f32.mrf.mxu0
  %v1878 = vadd.f32 %v1589, %v1877
  %v1879 = vpop.f32.mrf.mxu0
  %1880 = vmatprep.mubr.bf16.mxu0 %v901
  %1881 = vmatmul.mubr.bf16.gmra.mxu0 %v900
  %v1882 = vpop.f32.mrf.mxu0
  %v1883 = vadd.f32 %v1594, %v1882
  %v1884 = vpop.f32.mrf.mxu0
  %v1885 = vpop.f32.mrf.mxu0
  %v1886 = vadd.f32 %v1597, %v1885
  %v1887 = vpop.f32.mrf.mxu0
  %1888 = vmatprep.mubr.bf16.mxu0 %v906
  %1889 = vmatmul.mubr.bf16.gmra.mxu0 %v905
  %v1890 = vpop.f32.mrf.mxu0
  %v1891 = vadd.f32 %v1602, %v1890
  %v1892 = vpop.f32.mrf.mxu0
  %v1893 = vpop.f32.mrf.mxu0
  %v1894 = vadd.f32 %v1605, %v1893
  %v1895 = vpop.f32.mrf.mxu0
  %1896 = vmatprep.mubr.bf16.mxu0 %v911
  %1897 = vmatmul.mubr.bf16.gmra.mxu0 %v910
  %v1898 = vpop.f32.mrf.mxu0
  %v1899 = vadd.f32 %v1610, %v1898
  %v1900 = vpop.f32.mrf.mxu0
  %v1901 = vpop.f32.mrf.mxu0
  %v1902 = vadd.f32 %v1613, %v1901
  %v1903 = vpop.f32.mrf.mxu0
  %1904 = vmatprep.mubr.bf16.mxu0 %v916
  %1905 = vmatmul.mubr.bf16.gmra.mxu0 %v915
  %v1906 = vpop.f32.mrf.mxu0
  %v1907 = vadd.f32 %v1618, %v1906
  %v1908 = vpop.f32.mrf.mxu0
  %v1909 = vpop.f32.mrf.mxu0
  %v1910 = vadd.f32 %v1621, %v1909
  %v1911 = vpop.f32.mrf.mxu0
  %1912 = vmatprep.mubr.bf16.mxu0 %v921
  %1913 = vmatmul.mubr.bf16.gmra.mxu0 %v920
  %v1914 = vpop.f32.mrf.mxu0
  %v1915 = vadd.f32 %v1626, %v1914
  %v1916 = vpop.f32.mrf.mxu0
  %v1917 = vpop.f32.mrf.mxu0
  %v1918 = vadd.f32 %v1629, %v1917
  %v1919 = vpop.f32.mrf.mxu0
  %1920 = vmatprep.mubr.bf16.mxu0 %v926
  %1921 = vmatmul.mubr.bf16.gmra.mxu0 %v925
  %v1922 = vpop.f32.mrf.mxu0
  %v1923 = vadd.f32 %v1634, %v1922
  %v1924 = vpop.f32.mrf.mxu0
  %v1925 = vpop.f32.mrf.mxu0
  %v1926 = vadd.f32 %v1637, %v1925
  %v1927 = vpop.f32.mrf.mxu0
  %1928 = vmatprep.mubr.bf16.mxu0 %v931
  %1929 = vmatmul.mubr.bf16.gmra.mxu0 %v930
  %v1930 = vpop.f32.mrf.mxu0
  %v1931 = vadd.f32 %v1642, %v1930
  %v1932 = vpop.f32.mrf.mxu0
  %v1933 = vpop.f32.mrf.mxu0
  %v1934 = vadd.f32 %v1645, %v1933
  %v1935 = vpop.f32.mrf.mxu0
  %1936 = vmatprep.mubr.bf16.mxu0 %v936
  %1937 = vmatmul.mubr.bf16.gmra.mxu0 %v935
  %v1938 = vpop.f32.mrf.mxu0
  %v1939 = vadd.f32 %v1650, %v1938
  %v1940 = vpop.f32.mrf.mxu0
  %v1941 = vpop.f32.mrf.mxu0
  %v1942 = vadd.f32 %v1653, %v1941
  %v1943 = vpop.f32.mrf.mxu0
  %1944 = vmatprep.mubr.bf16.mxu0 %v941
  %1945 = vmatmul.mubr.bf16.gmra.mxu0 %v940
  %v1946 = vpop.f32.mrf.mxu0
  %v1947 = vadd.f32 %v1658, %v1946
  %v1948 = vpop.f32.mrf.mxu0
  %v1949 = vpop.f32.mrf.mxu0
  %v1950 = vadd.f32 %v1661, %v1949
  %v1951 = vpop.f32.mrf.mxu0
  %1952 = vmatprep.mubr.bf16.mxu0 %v946
  %1953 = vmatmul.mubr.bf16.gmra.mxu0 %v945
  %v1954 = vpop.f32.mrf.mxu0
  %v1955 = vadd.f32 %v1666, %v1954
  %v1956 = vpop.f32.mrf.mxu0
  %v1957 = vpop.f32.mrf.mxu0
  %v1958 = vadd.f32 %v1669, %v1957
  %v1959 = vpop.f32.mrf.mxu0
  %1960 = vmatprep.mubr.bf16.mxu0 %v951
  %1961 = vmatmul.mubr.bf16.gmra.mxu0 %v950
  %v1962 = vpop.f32.mrf.mxu0
  %v1963 = vadd.f32 %v1674, %v1962
  %v1964 = vpop.f32.mrf.mxu0
  %v1965 = vpop.f32.mrf.mxu0
  %v1966 = vadd.f32 %v1677, %v1965
  %v1967 = vpop.f32.mrf.mxu0
  %1968 = vmatprep.mubr.bf16.mxu0 %v956
  %1969 = vmatmul.mubr.bf16.gmra.mxu0 %v955
  %v1970 = vpop.f32.mrf.mxu0
  %v1971 = vadd.f32 %v1682, %v1970
  %v1972 = vpop.f32.mrf.mxu0
  %v1973 = vpop.f32.mrf.mxu0
  %v1974 = vadd.f32 %v1685, %v1973
  %v1975 = vpop.f32.mrf.mxu0
  %1976 = vdwg.mxu0
  %1977 = vmatprep.subr.bf16.mxu0 0
  %1978 = vmatpush1.bf16.msra.mxu0 0
  %1979 = vmatprep.subr.bf16.mxu0 0
  %1980 = vmatpush1.bf16.msra.mxu0 0
  %1981 = vmatprep.subr.bf16.mxu0 0
  %1982 = vmatpush1.bf16.msra.mxu0 0
  %1983 = vmatprep.subr.bf16.mxu0 0
  %1984 = vmatpush1.bf16.msra.mxu0 0
  %1985 = vmatprep.subr.bf16.mxu0 0
  %1986 = vmatpush1.bf16.msra.mxu0 %v1265
  %1987 = vmatprep.subr.bf16.mxu0 0
  %1988 = vmatpush1.bf16.msra.mxu0 %v1264
  %1989 = vmatprep.subr.bf16.mxu0 0
  %1990 = vmatpush1.bf16.msra.mxu0 %v1263
  %1991 = vmatprep.subr.bf16.mxu0 0
  %1992 = vmatpush1.bf16.msra.mxu0 %v1262
  %1993 = vmatprep.subr.bf16.mxu0 0
  %1994 = vmatpush2.bf16.msra.mxu0 0
  %1995 = vmatprep.subr.bf16.mxu0 0
  %1996 = vmatpush2.bf16.msra.mxu0 0
  %1997 = vmatprep.subr.bf16.mxu0 0
  %1998 = vmatpush2.bf16.msra.mxu0 0
  %1999 = vmatprep.subr.bf16.mxu0 0
  %2000 = vmatpush2.bf16.msra.mxu0 0
  %2001 = vmatprep.subr.bf16.mxu0 0
  %2002 = vmatpush2.bf16.msra.mxu0 0
  %2003 = vmatprep.subr.bf16.mxu0 0
  %2004 = vmatpush2.bf16.msra.mxu0 0
  %2005 = vmatprep.subr.bf16.mxu0 0
  %2006 = vmatpush2.bf16.msra.mxu0 0
  %2007 = vmatprep.subr.bf16.mxu0 0
  %2008 = vmatpush2.bf16.msra.mxu0 0
  %2009 = vmatprep.mubr.bf16.mxu0 0
  %2010 = vmatmul.mubr.bf16.gmra.mxu0 %v1304
  %v2011 = vpop.f32.mrf.mxu0
  %v2012 = vadd.f32 %v1723, %v2011
  %v2013 = vpop.f32.mrf.mxu0
  %v2014 = vpop.f32.mrf.mxu0
  %v2015 = vadd.f32 %v1726, %v2014
  %v2016 = vpop.f32.mrf.mxu0
  %2017 = vmatprep.mubr.bf16.mxu0 0
  %2018 = vmatmul.mubr.bf16.gmra.mxu0 %v1307
  %v2019 = vpop.f32.mrf.mxu0
  %v2020 = vadd.f32 %v1731, %v2019
  %v2021 = vpop.f32.mrf.mxu0
  %v2022 = vpop.f32.mrf.mxu0
  %v2023 = vadd.f32 %v1734, %v2022
  %v2024 = vpop.f32.mrf.mxu0
  %2025 = vmatprep.mubr.bf16.mxu0 0
  %2026 = vmatmul.mubr.bf16.gmra.mxu0 %v1310
  %v2027 = vpop.f32.mrf.mxu0
  %v2028 = vadd.f32 %v1739, %v2027
  %v2029 = vpop.f32.mrf.mxu0
  %v2030 = vpop.f32.mrf.mxu0
  %v2031 = vadd.f32 %v1742, %v2030
  %v2032 = vpop.f32.mrf.mxu0
  %2033 = vmatprep.mubr.bf16.mxu0 0
  %2034 = vmatmul.mubr.bf16.gmra.mxu0 %v1313
  %v2035 = vpop.f32.mrf.mxu0
  %v2036 = vadd.f32 %v1747, %v2035
  %v2037 = vpop.f32.mrf.mxu0
  %v2038 = vpop.f32.mrf.mxu0
  %v2039 = vadd.f32 %v1750, %v2038
  %v2040 = vpop.f32.mrf.mxu0
  %2041 = vmatprep.mubr.bf16.mxu0 0
  %2042 = vmatmul.mubr.bf16.gmra.mxu0 %v1316
  %v2043 = vpop.f32.mrf.mxu0
  %v2044 = vadd.f32 %v1755, %v2043
  %v2045 = vpop.f32.mrf.mxu0
  %v2046 = vpop.f32.mrf.mxu0
  %v2047 = vadd.f32 %v1758, %v2046
  %v2048 = vpop.f32.mrf.mxu0
  %2049 = vmatprep.mubr.bf16.mxu0 0
  %2050 = vmatmul.mubr.bf16.gmra.mxu0 %v1319
  %v2051 = vpop.f32.mrf.mxu0
  %v2052 = vadd.f32 %v1763, %v2051
  %v2053 = vpop.f32.mrf.mxu0
  %v2054 = vpop.f32.mrf.mxu0
  %v2055 = vadd.f32 %v1766, %v2054
  %v2056 = vpop.f32.mrf.mxu0
  %2057 = vmatprep.mubr.bf16.mxu0 0
  %2058 = vmatmul.mubr.bf16.gmra.mxu0 %v1322
  %v2059 = vpop.f32.mrf.mxu0
  %v2060 = vadd.f32 %v1771, %v2059
  %v2061 = vpop.f32.mrf.mxu0
  %v2062 = vpop.f32.mrf.mxu0
  %v2063 = vadd.f32 %v1774, %v2062
  %v2064 = vpop.f32.mrf.mxu0
  %2065 = vmatprep.mubr.bf16.mxu0 0
  %2066 = vmatmul.mubr.bf16.gmra.mxu0 %v1325
  %v2067 = vpop.f32.mrf.mxu0
  %v2068 = vadd.f32 %v1779, %v2067
  %v2069 = vpop.f32.mrf.mxu0
  %v2070 = vpop.f32.mrf.mxu0
  %v2071 = vadd.f32 %v1782, %v2070
  %v2072 = vpop.f32.mrf.mxu0
  %2073 = vmatprep.mubr.bf16.mxu0 0
  %2074 = vmatmul.mubr.bf16.gmra.mxu0 %v1328
  %v2075 = vpop.f32.mrf.mxu0
  %v2076 = vadd.f32 %v1787, %v2075
  %v2077 = vpop.f32.mrf.mxu0
  %v2078 = vpop.f32.mrf.mxu0
  %v2079 = vadd.f32 %v1790, %v2078
  %v2080 = vpop.f32.mrf.mxu0
  %2081 = vmatprep.mubr.bf16.mxu0 0
  %2082 = vmatmul.mubr.bf16.gmra.mxu0 %v1331
  %v2083 = vpop.f32.mrf.mxu0
  %v2084 = vadd.f32 %v1795, %v2083
  %v2085 = vpop.f32.mrf.mxu0
  %v2086 = vpop.f32.mrf.mxu0
  %v2087 = vadd.f32 %v1798, %v2086
  %v2088 = vpop.f32.mrf.mxu0
  %2089 = vmatprep.mubr.bf16.mxu0 0
  %2090 = vmatmul.mubr.bf16.gmra.mxu0 %v1334
  %v2091 = vpop.f32.mrf.mxu0
  %v2092 = vadd.f32 %v1803, %v2091
  %v2093 = vpop.f32.mrf.mxu0
  %v2094 = vpop.f32.mrf.mxu0
  %v2095 = vadd.f32 %v1806, %v2094
  %v2096 = vpop.f32.mrf.mxu0
  %2097 = vmatprep.mubr.bf16.mxu0 0
  %2098 = vmatmul.mubr.bf16.gmra.mxu0 %v1337
  %v2099 = vpop.f32.mrf.mxu0
  %v2100 = vadd.f32 %v1811, %v2099
  %v2101 = vpop.f32.mrf.mxu0
  %v2102 = vpop.f32.mrf.mxu0
  %v2103 = vadd.f32 %v1814, %v2102
  %v2104 = vpop.f32.mrf.mxu0
  %2105 = vmatprep.mubr.bf16.mxu0 0
  %2106 = vmatmul.mubr.bf16.gmra.mxu0 %v1340
  %v2107 = vpop.f32.mrf.mxu0
  %v2108 = vadd.f32 %v1819, %v2107
  %v2109 = vpop.f32.mrf.mxu0
  %v2110 = vpop.f32.mrf.mxu0
  %v2111 = vadd.f32 %v1822, %v2110
  %v2112 = vpop.f32.mrf.mxu0
  %2113 = vmatprep.mubr.bf16.mxu0 0
  %2114 = vmatmul.mubr.bf16.gmra.mxu0 %v1343
  %v2115 = vpop.f32.mrf.mxu0
  %v2116 = vadd.f32 %v1827, %v2115
  %v2117 = vpop.f32.mrf.mxu0
  %v2118 = vpop.f32.mrf.mxu0
  %v2119 = vadd.f32 %v1830, %v2118
  %v2120 = vpop.f32.mrf.mxu0
  %2121 = vmatprep.mubr.bf16.mxu0 0
  %2122 = vmatmul.mubr.bf16.gmra.mxu0 %v1346
  %v2123 = vpop.f32.mrf.mxu0
  %v2124 = vadd.f32 %v1835, %v2123
  %v2125 = vpop.f32.mrf.mxu0
  %v2126 = vpop.f32.mrf.mxu0
  %v2127 = vadd.f32 %v1838, %v2126
  %v2128 = vpop.f32.mrf.mxu0
  %2129 = vmatprep.mubr.bf16.mxu0 0
  %2130 = vmatmul.mubr.bf16.gmra.mxu0 %v1349
  %v2131 = vpop.f32.mrf.mxu0
  %v2132 = vadd.f32 %v1843, %v2131
  %v2133 = vpop.f32.mrf.mxu0
  %v2134 = vpop.f32.mrf.mxu0
  %v2135 = vadd.f32 %v1846, %v2134
  %v2136 = vpop.f32.mrf.mxu0
  %2137 = vmatprep.mubr.bf16.mxu0 0
  %2138 = vmatmul.mubr.bf16.gmra.mxu0 %v1352
  %v2139 = vpop.f32.mrf.mxu0
  %v2140 = vadd.f32 %v1851, %v2139
  %v2141 = vpop.f32.mrf.mxu0
  %v2142 = vpop.f32.mrf.mxu0
  %v2143 = vadd.f32 %v1854, %v2142
  %v2144 = vpop.f32.mrf.mxu0
  %2145 = vmatprep.mubr.bf16.mxu0 0
  %2146 = vmatmul.mubr.bf16.gmra.mxu0 %v1355
  %v2147 = vpop.f32.mrf.mxu0
  %v2148 = vadd.f32 %v1859, %v2147
  %v2149 = vpop.f32.mrf.mxu0
  %v2150 = vpop.f32.mrf.mxu0
  %v2151 = vadd.f32 %v1862, %v2150
  %v2152 = vpop.f32.mrf.mxu0
  %2153 = vmatprep.mubr.bf16.mxu0 0
  %2154 = vmatmul.mubr.bf16.gmra.mxu0 %v1358
  %v2155 = vpop.f32.mrf.mxu0
  %v2156 = vadd.f32 %v1867, %v2155
  %v2157 = vpop.f32.mrf.mxu0
  %v2158 = vpop.f32.mrf.mxu0
  %v2159 = vadd.f32 %v1870, %v2158
  %v2160 = vpop.f32.mrf.mxu0
  %2161 = vmatprep.mubr.bf16.mxu0 0
  %2162 = vmatmul.mubr.bf16.gmra.mxu0 %v1361
  %v2163 = vpop.f32.mrf.mxu0
  %v2164 = vadd.f32 %v1875, %v2163
  %v2165 = vpop.f32.mrf.mxu0
  %v2166 = vpop.f32.mrf.mxu0
  %v2167 = vadd.f32 %v1878, %v2166
  %v2168 = vpop.f32.mrf.mxu0
  %2169 = vmatprep.mubr.bf16.mxu0 0
  %2170 = vmatmul.mubr.bf16.gmra.mxu0 %v1364
  %v2171 = vpop.f32.mrf.mxu0
  %v2172 = vadd.f32 %v1883, %v2171
  %v2173 = vpop.f32.mrf.mxu0
  %v2174 = vpop.f32.mrf.mxu0
  %v2175 = vadd.f32 %v1886, %v2174
  %v2176 = vpop.f32.mrf.mxu0
  %2177 = vmatprep.mubr.bf16.mxu0 0
  %2178 = vmatmul.mubr.bf16.gmra.mxu0 %v1367
  %v2179 = vpop.f32.mrf.mxu0
  %v2180 = vadd.f32 %v1891, %v2179
  %v2181 = vpop.f32.mrf.mxu0
  %v2182 = vpop.f32.mrf.mxu0
  %v2183 = vadd.f32 %v1894, %v2182
  %v2184 = vpop.f32.mrf.mxu0
  %2185 = vmatprep.mubr.bf16.mxu0 0
  %2186 = vmatmul.mubr.bf16.gmra.mxu0 %v1370
  %v2187 = vpop.f32.mrf.mxu0
  %v2188 = vadd.f32 %v1899, %v2187
  %v2189 = vpop.f32.mrf.mxu0
  %v2190 = vpop.f32.mrf.mxu0
  %v2191 = vadd.f32 %v1902, %v2190
  %v2192 = vpop.f32.mrf.mxu0
  %2193 = vmatprep.mubr.bf16.mxu0 0
  %2194 = vmatmul.mubr.bf16.gmra.mxu0 %v1373
  %v2195 = vpop.f32.mrf.mxu0
  %v2196 = vadd.f32 %v1907, %v2195
  %v2197 = vpop.f32.mrf.mxu0
  %v2198 = vpop.f32.mrf.mxu0
  %v2199 = vadd.f32 %v1910, %v2198
  %v2200 = vpop.f32.mrf.mxu0
  %2201 = vmatprep.mubr.bf16.mxu0 0
  %2202 = vmatmul.mubr.bf16.gmra.mxu0 %v1376
  %v2203 = vpop.f32.mrf.mxu0
  %v2204 = vadd.f32 %v1915, %v2203
  %v2205 = vpop.f32.mrf.mxu0
  %v2206 = vpop.f32.mrf.mxu0
  %v2207 = vadd.f32 %v1918, %v2206
  %v2208 = vpop.f32.mrf.mxu0
  %2209 = vmatprep.mubr.bf16.mxu0 0
  %2210 = vmatmul.mubr.bf16.gmra.mxu0 %v1379
  %v2211 = vpop.f32.mrf.mxu0
  %v2212 = vadd.f32 %v1923, %v2211
  %v2213 = vpop.f32.mrf.mxu0
  %v2214 = vpop.f32.mrf.mxu0
  %v2215 = vadd.f32 %v1926, %v2214
  %v2216 = vpop.f32.mrf.mxu0
  %2217 = vmatprep.mubr.bf16.mxu0 0
  %2218 = vmatmul.mubr.bf16.gmra.mxu0 %v1382
  %v2219 = vpop.f32.mrf.mxu0
  %v2220 = vadd.f32 %v1931, %v2219
  %v2221 = vpop.f32.mrf.mxu0
  %v2222 = vpop.f32.mrf.mxu0
  %v2223 = vadd.f32 %v1934, %v2222
  %v2224 = vpop.f32.mrf.mxu0
  %2225 = vmatprep.mubr.bf16.mxu0 0
  %2226 = vmatmul.mubr.bf16.gmra.mxu0 %v1385
  %v2227 = vpop.f32.mrf.mxu0
  %v2228 = vadd.f32 %v1939, %v2227
  %v2229 = vpop.f32.mrf.mxu0
  %v2230 = vpop.f32.mrf.mxu0
  %v2231 = vadd.f32 %v1942, %v2230
  %v2232 = vpop.f32.mrf.mxu0
  %2233 = vmatprep.mubr.bf16.mxu0 0
  %2234 = vmatmul.mubr.bf16.gmra.mxu0 %v1388
  %v2235 = vpop.f32.mrf.mxu0
  %v2236 = vadd.f32 %v1947, %v2235
  %v2237 = vpop.f32.mrf.mxu0
  %v2238 = vpop.f32.mrf.mxu0
  %v2239 = vadd.f32 %v1950, %v2238
  %v2240 = vpop.f32.mrf.mxu0
  %2241 = vmatprep.mubr.bf16.mxu0 0
  %2242 = vmatmul.mubr.bf16.gmra.mxu0 %v1391
  %v2243 = vpop.f32.mrf.mxu0
  %v2244 = vadd.f32 %v1955, %v2243
  %v2245 = vpop.f32.mrf.mxu0
  %v2246 = vpop.f32.mrf.mxu0
  %v2247 = vadd.f32 %v1958, %v2246
  %v2248 = vpop.f32.mrf.mxu0
  %2249 = vmatprep.mubr.bf16.mxu0 0
  %2250 = vmatmul.mubr.bf16.gmra.mxu0 %v1394
  %v2251 = vpop.f32.mrf.mxu0
  %v2252 = vadd.f32 %v1963, %v2251
  %v2253 = vpop.f32.mrf.mxu0
  %v2254 = vpop.f32.mrf.mxu0
  %v2255 = vadd.f32 %v1966, %v2254
  %v2256 = vpop.f32.mrf.mxu0
  %2257 = vmatprep.mubr.bf16.mxu0 0
  %2258 = vmatmul.mubr.bf16.gmra.mxu0 %v1397
  %v2259 = vpop.f32.mrf.mxu0
  %v2260 = vadd.f32 %v1971, %v2259
  %v2261 = vpop.f32.mrf.mxu0
  %v2262 = vpop.f32.mrf.mxu0
  %v2263 = vadd.f32 %v1974, %v2262
  %v2264 = vpop.f32.mrf.mxu0
  %2265 = vdwg.mxu0
  %v2266 = vmul.f32 %v2012, 0.2
  %v2267 = vmul.f32 %v2015, 0.2
  %v2268 = vmul.f32 %v2020, 0.2
  %v2269 = vmul.f32 %v2023, 0.2
  %v2270 = vmul.f32 %v2028, 0.2
  %v2271 = vmul.f32 %v2031, 0.2
  %v2272 = vmul.f32 %v2036, 0.2
  %v2273 = vmul.f32 %v2039, 0.2
  %v2274 = vmul.f32 %v2044, 0.2
  %v2275 = vmul.f32 %v2047, 0.2
  %v2276 = vmul.f32 %v2052, 0.2
  %v2277 = vmul.f32 %v2055, 0.2
  %v2278 = vmul.f32 %v2060, 0.2
  %v2279 = vmul.f32 %v2063, 0.2
  %v2280 = vmul.f32 %v2068, 0.2
  %v2281 = vmul.f32 %v2071, 0.2
  %v2282 = vmul.f32 %v2076, 0.2
  %v2283 = vmul.f32 %v2079, 0.2
  %v2284 = vmul.f32 %v2084, 0.2
  %v2285 = vmul.f32 %v2087, 0.2
  %v2286 = vmul.f32 %v2092, 0.2
  %v2287 = vmul.f32 %v2095, 0.2
  %v2288 = vmul.f32 %v2100, 0.2
  %v2289 = vmul.f32 %v2103, 0.2
  %v2290 = vmul.f32 %v2108, 0.2
  %v2291 = vmul.f32 %v2111, 0.2
  %v2292 = vmul.f32 %v2116, 0.2
  %v2293 = vmul.f32 %v2119, 0.2
  %v2294 = vmul.f32 %v2124, 0.2
  %v2295 = vmul.f32 %v2127, 0.2
  %v2296 = vmul.f32 %v2132, 0.2
  %v2297 = vmul.f32 %v2135, 0.2
  %v2298 = vmul.f32 %v2140, 0.2
  %v2299 = vmul.f32 %v2143, 0.2
  %v2300 = vmul.f32 %v2148, 0.2
  %v2301 = vmul.f32 %v2151, 0.2
  %v2302 = vmul.f32 %v2156, 0.2
  %v2303 = vmul.f32 %v2159, 0.2
  %v2304 = vmul.f32 %v2164, 0.2
  %v2305 = vmul.f32 %v2167, 0.2
  %v2306 = vmul.f32 %v2172, 0.2
  %v2307 = vmul.f32 %v2175, 0.2
  %v2308 = vmul.f32 %v2180, 0.2
  %v2309 = vmul.f32 %v2183, 0.2
  %v2310 = vmul.f32 %v2188, 0.2
  %v2311 = vmul.f32 %v2191, 0.2
  %v2312 = vmul.f32 %v2196, 0.2
  %v2313 = vmul.f32 %v2199, 0.2
  %v2314 = vmul.f32 %v2204, 0.2
  %v2315 = vmul.f32 %v2207, 0.2
  %v2316 = vmul.f32 %v2212, 0.2
  %v2317 = vmul.f32 %v2215, 0.2
  %v2318 = vmul.f32 %v2220, 0.2
  %v2319 = vmul.f32 %v2223, 0.2
  %v2320 = vmul.f32 %v2228, 0.2
  %v2321 = vmul.f32 %v2231, 0.2
  %v2322 = vmul.f32 %v2236, 0.2
  %v2323 = vmul.f32 %v2239, 0.2
  %v2324 = vmul.f32 %v2244, 0.2
  %v2325 = vmul.f32 %v2247, 0.2
  %v2326 = vmul.f32 %v2252, 0.2
  %v2327 = vmul.f32 %v2255, 0.2
  %v2328 = vmul.f32 %v2260, 0.2
  %v2329 = vmul.f32 %v2263, 0.2
  %v2330 = vmax.f32 %v2012, %v2266
  %v2331 = vmax.f32 %v2015, %v2267
  %v2332 = vmax.f32 %v2020, %v2268
  %v2333 = vmax.f32 %v2023, %v2269
  %v2334 = vmax.f32 %v2028, %v2270
  %v2335 = vmax.f32 %v2031, %v2271
  %v2336 = vmax.f32 %v2036, %v2272
  %v2337 = vmax.f32 %v2039, %v2273
  %v2338 = vmax.f32 %v2044, %v2274
  %v2339 = vmax.f32 %v2047, %v2275
  %v2340 = vmax.f32 %v2052, %v2276
  %v2341 = vmax.f32 %v2055, %v2277
  %v2342 = vmax.f32 %v2060, %v2278
  %v2343 = vmax.f32 %v2063, %v2279
  %v2344 = vmax.f32 %v2068, %v2280
  %v2345 = vmax.f32 %v2071, %v2281
  %v2346 = vmax.f32 %v2076, %v2282
  %v2347 = vmax.f32 %v2079, %v2283
  %v2348 = vmax.f32 %v2084, %v2284
  %v2349 = vmax.f32 %v2087, %v2285
  %v2350 = vmax.f32 %v2092, %v2286
  %v2351 = vmax.f32 %v2095, %v2287
  %v2352 = vmax.f32 %v2100, %v2288
  %v2353 = vmax.f32 %v2103, %v2289
  %v2354 = vmax.f32 %v2108, %v2290
  %v2355 = vmax.f32 %v2111, %v2291
  %v2356 = vmax.f32 %v2116, %v2292
  %v2357 = vmax.f32 %v2119, %v2293
  %v2358 = vmax.f32 %v2124, %v2294
  %v2359 = vmax.f32 %v2127, %v2295
  %v2360 = vmax.f32 %v2132, %v2296
  %v2361 = vmax.f32 %v2135, %v2297
  %v2362 = vmax.f32 %v2140, %v2298
  %v2363 = vmax.f32 %v2143, %v2299
  %v2364 = vmax.f32 %v2148, %v2300
  %v2365 = vmax.f32 %v2151, %v2301
  %v2366 = vmax.f32 %v2156, %v2302
  %v2367 = vmax.f32 %v2159, %v2303
  %v2368 = vmax.f32 %v2164, %v2304
  %v2369 = vmax.f32 %v2167, %v2305
  %v2370 = vmax.f32 %v2172, %v2306
  %v2371 = vmax.f32 %v2175, %v2307
  %v2372 = vmax.f32 %v2180, %v2308
  %v2373 = vmax.f32 %v2183, %v2309
  %v2374 = vmax.f32 %v2188, %v2310
  %v2375 = vmax.f32 %v2191, %v2311
  %v2376 = vmax.f32 %v2196, %v2312
  %v2377 = vmax.f32 %v2199, %v2313
  %v2378 = vmax.f32 %v2204, %v2314
  %v2379 = vmax.f32 %v2207, %v2315
  %v2380 = vmax.f32 %v2212, %v2316
  %v2381 = vmax.f32 %v2215, %v2317
  %v2382 = vmax.f32 %v2220, %v2318
  %v2383 = vmax.f32 %v2223, %v2319
  %v2384 = vmax.f32 %v2228, %v2320
  %v2385 = vmax.f32 %v2231, %v2321
  %v2386 = vmax.f32 %v2236, %v2322
  %v2387 = vmax.f32 %v2239, %v2323
  %v2388 = vmax.f32 %v2244, %v2324
  %v2389 = vmax.f32 %v2247, %v2325
  %v2390 = vmax.f32 %v2252, %v2326
  %v2391 = vmax.f32 %v2255, %v2327
  %v2392 = vmax.f32 %v2260, %v2328
  %v2393 = vmax.f32 %v2263, %v2329
  %v2394 = vpack.c.bf16 %v2331, %v2330
  %v2395 = vpack.c.bf16 %v2333, %v2332
  %v2396 = vpack.c.bf16 %v2335, %v2334
  %v2397 = vpack.c.bf16 %v2337, %v2336
  %v2398 = vpack.c.bf16 %v2339, %v2338
  %v2399 = vpack.c.bf16 %v2341, %v2340
  %v2400 = vpack.c.bf16 %v2343, %v2342
  %v2401 = vpack.c.bf16 %v2345, %v2344
  %v2402 = vpack.c.bf16 %v2347, %v2346
  %v2403 = vpack.c.bf16 %v2349, %v2348
  %v2404 = vpack.c.bf16 %v2351, %v2350
  %v2405 = vpack.c.bf16 %v2353, %v2352
  %v2406 = vpack.c.bf16 %v2355, %v2354
  %v2407 = vpack.c.bf16 %v2357, %v2356
  %v2408 = vpack.c.bf16 %v2359, %v2358
  %v2409 = vpack.c.bf16 %v2361, %v2360
  %v2410 = vpack.c.bf16 %v2363, %v2362
  %v2411 = vpack.c.bf16 %v2365, %v2364
  %v2412 = vpack.c.bf16 %v2367, %v2366
  %v2413 = vpack.c.bf16 %v2369, %v2368
  %v2414 = vpack.c.bf16 %v2371, %v2370
  %v2415 = vpack.c.bf16 %v2373, %v2372
  %v2416 = vpack.c.bf16 %v2375, %v2374
  %v2417 = vpack.c.bf16 %v2377, %v2376
  %v2418 = vpack.c.bf16 %v2379, %v2378
  %v2419 = vpack.c.bf16 %v2381, %v2380
  %v2420 = vpack.c.bf16 %v2383, %v2382
  %v2421 = vpack.c.bf16 %v2385, %v2384
  %v2422 = vpack.c.bf16 %v2387, %v2386
  %v2423 = vpack.c.bf16 %v2389, %v2388
  %v2424 = vpack.c.bf16 %v2391, %v2390
  %v2425 = vpack.c.bf16 %v2393, %v2392
  %v2458 = vunpack.c.l.b16 %v2394
  %v2459 = vunpack.c.h.b16 %v2394
  %v2460 = vunpack.c.l.b16 %v2395
  %v2461 = vunpack.c.h.b16 %v2395
  %v2462 = vunpack.c.l.b16 %v2396
  %v2463 = vunpack.c.h.b16 %v2396
  %v2464 = vunpack.c.l.b16 %v2397
  %v2465 = vunpack.c.h.b16 %v2397
  %v2466 = vunpack.c.l.b16 %v2398
  %v2467 = vunpack.c.h.b16 %v2398
  %v2468 = vunpack.c.l.b16 %v2399
  %v2469 = vunpack.c.h.b16 %v2399
  %v2470 = vunpack.c.l.b16 %v2400
  %v2471 = vunpack.c.h.b16 %v2400
  %v2472 = vunpack.c.l.b16 %v2401
  %v2473 = vunpack.c.h.b16 %v2401
  %v2474 = vunpack.c.l.b16 %v2402
  %v2475 = vunpack.c.h.b16 %v2402
  %v2476 = vunpack.c.l.b16 %v2403
  %v2477 = vunpack.c.h.b16 %v2403
  %v2478 = vunpack.c.l.b16 %v2404
  %v2479 = vunpack.c.h.b16 %v2404
  %v2480 = vunpack.c.l.b16 %v2405
  %v2481 = vunpack.c.h.b16 %v2405
  %v2482 = vunpack.c.l.b16 %v2406
  %v2483 = vunpack.c.h.b16 %v2406
  %v2484 = vunpack.c.l.b16 %v2407
  %v2485 = vunpack.c.h.b16 %v2407
  %v2486 = vunpack.c.l.b16 %v2408
  %v2487 = vunpack.c.h.b16 %v2408
  %v2488 = vunpack.c.l.b16 %v2409
  %v2489 = vunpack.c.h.b16 %v2409
  %v2490 = vunpack.c.l.b16 %v2410
  %v2491 = vunpack.c.h.b16 %v2410
  %v2492 = vunpack.c.l.b16 %v2411
  %v2493 = vunpack.c.h.b16 %v2411
  %v2494 = vunpack.c.l.b16 %v2412
  %v2495 = vunpack.c.h.b16 %v2412
  %v2496 = vunpack.c.l.b16 %v2413
  %v2497 = vunpack.c.h.b16 %v2413
  %v2498 = vunpack.c.l.b16 %v2414
  %v2499 = vunpack.c.h.b16 %v2414
  %v2500 = vunpack.c.l.b16 %v2415
  %v2501 = vunpack.c.h.b16 %v2415
  %v2502 = vunpack.c.l.b16 %v2416
  %v2503 = vunpack.c.h.b16 %v2416
  %v2504 = vunpack.c.l.b16 %v2417
  %v2505 = vunpack.c.h.b16 %v2417
  %v2506 = vunpack.c.l.b16 %v2418
  %v2507 = vunpack.c.h.b16 %v2418
  %v2508 = vunpack.c.l.b16 %v2419
  %v2509 = vunpack.c.h.b16 %v2419
  %v2510 = vunpack.c.l.b16 %v2420
  %v2511 = vunpack.c.h.b16 %v2420
  %v2512 = vunpack.c.l.b16 %v2421
  %v2513 = vunpack.c.h.b16 %v2421
  %v2514 = vunpack.c.l.b16 %v2422
  %v2515 = vunpack.c.h.b16 %v2422
  %v2516 = vunpack.c.l.b16 %v2423
  %v2517 = vunpack.c.h.b16 %v2423
  %v2518 = vunpack.c.l.b16 %v2424
  %v2519 = vunpack.c.h.b16 %v2424
  %v2520 = vunpack.c.l.b16 %v2425
  %v2521 = vunpack.c.h.b16 %v2425
  %v2522 = vpack.c.b16 %v2458, %v2458
  %v2523 = vpack.c.b16 %v2459, %v2459
  %v2524 = vpack.c.b16 %v2460, %v2460
  %v2525 = vpack.c.b16 %v2461, %v2461
  %v2526 = vpack.c.b16 %v2462, %v2462
  %v2527 = vpack.c.b16 %v2463, %v2463
  %v2528 = vpack.c.b16 %v2464, %v2464
  %v2529 = vpack.c.b16 %v2465, %v2465
  %v2530 = vpack.c.b16 %v2466, %v2466
  %v2531 = vpack.c.b16 %v2467, %v2467
  %v2532 = vpack.c.b16 %v2468, %v2468
  %v2533 = vpack.c.b16 %v2469, %v2469
  %v2534 = vpack.c.b16 %v2470, %v2470
  %v2535 = vpack.c.b16 %v2471, %v2471
  %v2536 = vpack.c.b16 %v2472, %v2472
  %v2537 = vpack.c.b16 %v2473, %v2473
  %v2538 = vpack.c.b16 %v2474, %v2474
  %v2539 = vpack.c.b16 %v2475, %v2475
  %v2540 = vpack.c.b16 %v2476, %v2476
  %v2541 = vpack.c.b16 %v2477, %v2477
  %v2542 = vpack.c.b16 %v2478, %v2478
  %v2543 = vpack.c.b16 %v2479, %v2479
  %v2544 = vpack.c.b16 %v2480, %v2480
  %v2545 = vpack.c.b16 %v2481, %v2481
  %v2546 = vpack.c.b16 %v2482, %v2482
  %v2547 = vpack.c.b16 %v2483, %v2483
  %v2548 = vpack.c.b16 %v2484, %v2484
  %v2549 = vpack.c.b16 %v2485, %v2485
  %v2550 = vpack.c.b16 %v2486, %v2486
  %v2551 = vpack.c.b16 %v2487, %v2487
  %v2552 = vpack.c.b16 %v2488, %v2488
  %v2553 = vpack.c.b16 %v2489, %v2489
  %v2554 = vpack.c.b16 %v2490, %v2490
  %v2555 = vpack.c.b16 %v2491, %v2491
  %v2556 = vpack.c.b16 %v2492, %v2492
  %v2557 = vpack.c.b16 %v2493, %v2493
  %v2558 = vpack.c.b16 %v2494, %v2494
  %v2559 = vpack.c.b16 %v2495, %v2495
  %v2560 = vpack.c.b16 %v2496, %v2496
  %v2561 = vpack.c.b16 %v2497, %v2497
  %v2562 = vpack.c.b16 %v2498, %v2498
  %v2563 = vpack.c.b16 %v2499, %v2499
  %v2564 = vpack.c.b16 %v2500, %v2500
  %v2565 = vpack.c.b16 %v2501, %v2501
  %v2566 = vpack.c.b16 %v2502, %v2502
  %v2567 = vpack.c.b16 %v2503, %v2503
  %v2568 = vpack.c.b16 %v2504, %v2504
  %v2569 = vpack.c.b16 %v2505, %v2505
  %v2570 = vpack.c.b16 %v2506, %v2506
  %v2571 = vpack.c.b16 %v2507, %v2507
  %v2572 = vpack.c.b16 %v2508, %v2508
  %v2573 = vpack.c.b16 %v2509, %v2509
  %v2574 = vpack.c.b16 %v2510, %v2510
  %v2575 = vpack.c.b16 %v2511, %v2511
  %v2576 = vpack.c.b16 %v2512, %v2512
  %v2577 = vpack.c.b16 %v2513, %v2513
  %v2578 = vpack.c.b16 %v2514, %v2514
  %v2579 = vpack.c.b16 %v2515, %v2515
  %v2580 = vpack.c.b16 %v2516, %v2516
  %v2581 = vpack.c.b16 %v2517, %v2517
  %v2582 = vpack.c.b16 %v2518, %v2518
  %v2583 = vpack.c.b16 %v2519, %v2519
  %v2584 = vpack.c.b16 %v2520, %v2520
  %v2585 = vpack.c.b16 %v2521, %v2521
  %2650 = vst [vmem:[%s3] sm:$0xf] %v2522
  %2651 = vst [vmem:[%s3 + $0x4] sm:$0xf] %v2523
  %2652 = vst [vmem:[%s3 + $0x8] sm:$0xf] %v2524
  %2653 = vst [vmem:[%s3 + $0xc] sm:$0xf] %v2525
  %2654 = vst [vmem:[%s3 + $0x10] sm:$0xf] %v2526
  %2655 = vst [vmem:[%s3 + $0x14] sm:$0xf] %v2527
  %2656 = vst [vmem:[%s3 + $0x18] sm:$0xf] %v2528
  %2657 = vst [vmem:[%s3 + $0x1c] sm:$0xf] %v2529
  %2658 = vst [vmem:[%s3 + $0x20] sm:$0xf] %v2530
  %2659 = vst [vmem:[%s3 + $0x24] sm:$0xf] %v2531
  %2660 = vst [vmem:[%s3 + $0x28] sm:$0xf] %v2532
  %2661 = vst [vmem:[%s3 + $0x2c] sm:$0xf] %v2533
  %2662 = vst [vmem:[%s3 + $0x30] sm:$0xf] %v2534
  %2663 = vst [vmem:[%s3 + $0x34] sm:$0xf] %v2535
  %2664 = vst [vmem:[%s3 + $0x38] sm:$0xf] %v2536
  %2665 = vst [vmem:[%s3 + $0x3c] sm:$0xf] %v2537
  %2666 = vst [vmem:[%s3 + $0x40] sm:$0xf] %v2538
  %2667 = vst [vmem:[%s3 + $0x44] sm:$0xf] %v2539
  %2668 = vst [vmem:[%s3 + $0x48] sm:$0xf] %v2540
  %2669 = vst [vmem:[%s3 + $0x4c] sm:$0xf] %v2541
  %2670 = vst [vmem:[%s3 + $0x50] sm:$0xf] %v2542
  %2671 = vst [vmem:[%s3 + $0x54] sm:$0xf] %v2543
  %2672 = vst [vmem:[%s3 + $0x58] sm:$0xf] %v2544
  %2673 = vst [vmem:[%s3 + $0x5c] sm:$0xf] %v2545
  %2674 = vst [vmem:[%s3 + $0x60] sm:$0xf] %v2546
  %2675 = vst [vmem:[%s3 + $0x64] sm:$0xf] %v2547
  %2676 = vst [vmem:[%s3 + $0x68] sm:$0xf] %v2548
  %2677 = vst [vmem:[%s3 + $0x6c] sm:$0xf] %v2549
  %2678 = vst [vmem:[%s3 + $0x70] sm:$0xf] %v2550
  %2679 = vst [vmem:[%s3 + $0x74] sm:$0xf] %v2551
  %2680 = vst [vmem:[%s3 + $0x78] sm:$0xf] %v2552
  %2681 = vst [vmem:[%s3 + $0x7c] sm:$0xf] %v2553
  %2682 = vst [vmem:[%s3 + $0x80] sm:$0xf] %v2554
  %2683 = vst [vmem:[%s3 + $0x84] sm:$0xf] %v2555
  %2684 = vst [vmem:[%s3 + $0x88] sm:$0xf] %v2556
  %2685 = vst [vmem:[%s3 + $0x8c] sm:$0xf] %v2557
  %2686 = vst [vmem:[%s3 + $0x90] sm:$0xf] %v2558
  %2687 = vst [vmem:[%s3 + $0x94] sm:$0xf] %v2559
  %2688 = vst [vmem:[%s3 + $0x98] sm:$0xf] %v2560
  %2689 = vst [vmem:[%s3 + $0x9c] sm:$0xf] %v2561
  %2690 = vst [vmem:[%s3 + $0xa0] sm:$0xf] %v2562
  %2691 = vst [vmem:[%s3 + $0xa4] sm:$0xf] %v2563
  %2692 = vst [vmem:[%s3 + $0xa8] sm:$0xf] %v2564
  %2693 = vst [vmem:[%s3 + $0xac] sm:$0xf] %v2565
  %2694 = vst [vmem:[%s3 + $0xb0] sm:$0xf] %v2566
  %2695 = vst [vmem:[%s3 + $0xb4] sm:$0xf] %v2567
  %2696 = vst [vmem:[%s3 + $0xb8] sm:$0xf] %v2568
  %2697 = vst [vmem:[%s3 + $0xbc] sm:$0xf] %v2569
  %2698 = vst [vmem:[%s3 + $0xc0] sm:$0xf] %v2570
  %2699 = vst [vmem:[%s3 + $0xc4] sm:$0xf] %v2571
  %2700 = vst [vmem:[%s3 + $0xc8] sm:$0xf] %v2572
  %2701 = vst [vmem:[%s3 + $0xcc] sm:$0xf] %v2573
  %2702 = vst [vmem:[%s3 + $0xd0] sm:$0xf] %v2574
  %2703 = vst [vmem:[%s3 + $0xd4] sm:$0xf] %v2575
  %2704 = vst [vmem:[%s3 + $0xd8] sm:$0xf] %v2576
  %2705 = vst [vmem:[%s3 + $0xdc] sm:$0xf] %v2577
  %2706 = vst [vmem:[%s3 + $0xe0] sm:$0xf] %v2578
  %2707 = vst [vmem:[%s3 + $0xe4] sm:$0xf] %v2579
  %2708 = vst [vmem:[%s3 + $0xe8] sm:$0xf] %v2580
  %2709 = vst [vmem:[%s3 + $0xec] sm:$0xf] %v2581
  %2710 = vst [vmem:[%s3 + $0xf0] sm:$0xf] %v2582
  %2711 = vst [vmem:[%s3 + $0xf4] sm:$0xf] %v2583
  %2712 = vst [vmem:[%s3 + $0xf8] sm:$0xf] %v2584
  %2713 = vst [vmem:[%s3 + $0xfc] sm:$0xf] %v2585
  // Predicated region
  $region14: #{discriminator_forward.6} parent=0 // pred_check
    _
  $region15: #{discriminator_forward.6} parent=0 // pred_check_branch
    %2715 = sbr.rel (0) target = $region17
  $region16: #{discriminator_forward.6} parent=0 // pred_region
    _
  $region17: #{discriminator_forward.6} parent=0 // pred_fallthru
    _
  // Predicated region
  $region18: #{discriminator_forward.6} parent=0 // pred_check
    _
  $region19: #{discriminator_forward.6} parent=0 // pred_check_branch
    %2717 = sbr.rel (0) target = $region21
  $region20: #{discriminator_forward.6} parent=0 // pred_region
    _
  $region21: #{discriminator_forward.6} parent=0 // pred_fallthru
    _

// kernel: discriminator_forward.7
$region0: #{discriminator_forward.7}
  #allocation0 [shape = 'u32[]', space=smem, size = 0x4, offset = 0x4, fixed_abs, tag = 'smem constant byte address 0x4 - core index']
  #allocation1 [shape = 'u32[144,128]{1,0:T(1,128)}', space=vmem, size = 0x12000, scoped, tag = 'internal scratch']
  %s0 = inlined_call_operand.vmem [shape: bf16[128,1152], index: 0, kind: input, shape index: {}]
  %s1 = inlined_call_operand.vmem [shape: bf16[1152,128], index: 1, kind: input, shape index: {}]
  %s2 = inlined_call_operand.vmem [shape: f32[1,128], index: 2, kind: input, shape index: {}]
  %s3 = inlined_call_operand.vmem [shape: bf16[128,128], index: 3, kind: output, shape index: {}]
  %s4 = sld [smem:[#allocation0]]
  $region22: #{discriminator_forward.7} parent=0
    _
  %s6 = ssub.s32 1, %s4
  %s7 = scalar_select 0, %s6, %s4
  // Predicated region
  $region2: #{discriminator_forward.7} parent=0 // pred_check
    _
  $region3: #{discriminator_forward.7} parent=0 // pred_check_branch
    %9 = sbr.rel (0) target = $region5
  $region4: #{discriminator_forward.7} parent=0 // pred_region
    _
  $region5: #{discriminator_forward.7} parent=0 // pred_fallthru
    _
  // Predicated region
  $region6: #{discriminator_forward.7} parent=0 // pred_check
    _
  $region7: #{discriminator_forward.7} parent=0 // pred_check_branch
    %11 = sbr.rel (0) target = $region9
  $region8: #{discriminator_forward.7} parent=0 // pred_region
    _
  $region9: #{discriminator_forward.7} parent=0 // pred_fallthru
    _
  // Predicated region
  $region10: #{discriminator_forward.7} parent=0 // pred_check
    _
  $region11: #{discriminator_forward.7} parent=0 // pred_check_branch
    %13 = sbr.rel (0) target = $region13
  $region12: #{discriminator_forward.7} parent=0 // pred_region
    _
  $region13: #{discriminator_forward.7} parent=0 // pred_fallthru
    _
  %v15 = vld [vmem:[%s0] sm:$0xff]
  %v16 = vld [vmem:[%s0 + $0x8] sm:$0xff]
  %v17 = vld [vmem:[%s0 + $0x10] sm:$0xff]
  %v18 = vld [vmem:[%s0 + $0x18] sm:$0xff]
  %v19 = vld [vmem:[%s0 + $0x20] sm:$0xf]
  %v20 = vld [vmem:[%s0 + $0x24] sm:$0xff]
  %v21 = vld [vmem:[%s0 + $0x2c] sm:$0xff]
  %v22 = vld [vmem:[%s0 + $0x34] sm:$0xff]
  %v23 = vld [vmem:[%s0 + $0x3c] sm:$0xff]
  %v24 = vld [vmem:[%s0 + $0x44] sm:$0xf]
  %v25 = vld [vmem:[%s0 + $0x48] sm:$0xff]
  %v26 = vld [vmem:[%s0 + $0x50] sm:$0xff]
  %v27 = vld [vmem:[%s0 + $0x58] sm:$0xff]
  %v28 = vld [vmem:[%s0 + $0x60] sm:$0xff]
  %v29 = vld [vmem:[%s0 + $0x68] sm:$0xf]
  %v30 = vld [vmem:[%s0 + $0x6c] sm:$0xff]
  %v31 = vld [vmem:[%s0 + $0x74] sm:$0xff]
  %v32 = vld [vmem:[%s0 + $0x7c] sm:$0xff]
  %v33 = vld [vmem:[%s0 + $0x84] sm:$0xff]
  %v34 = vld [vmem:[%s0 + $0x8c] sm:$0xf]
  %v35 = vld [vmem:[%s0 + $0x90] sm:$0xff]
  %v36 = vld [vmem:[%s0 + $0x98] sm:$0xff]
  %v37 = vld [vmem:[%s0 + $0xa0] sm:$0xff]
  %v38 = vld [vmem:[%s0 + $0xa8] sm:$0xff]
  %v39 = vld [vmem:[%s0 + $0xb0] sm:$0xf]
  %v40 = vld [vmem:[%s0 + $0xb4] sm:$0xff]
  %v41 = vld [vmem:[%s0 + $0xbc] sm:$0xff]
  %v42 = vld [vmem:[%s0 + $0xc4] sm:$0xff]
  %v43 = vld [vmem:[%s0 + $0xcc] sm:$0xff]
  %v44 = vld [vmem:[%s0 + $0xd4] sm:$0xf]
  %v45 = vld [vmem:[%s0 + $0xd8] sm:$0xff]
  %v46 = vld [vmem:[%s0 + $0xe0] sm:$0xff]
  %v47 = vld [vmem:[%s0 + $0xe8] sm:$0xff]
  %v48 = vld [vmem:[%s0 + $0xf0] sm:$0xff]
  %v49 = vld [vmem:[%s0 + $0xf8] sm:$0xf]
  %v50 = vld [vmem:[%s0 + $0xfc] sm:$0xff]
  %v51 = vld [vmem:[%s0 + $0x104] sm:$0xff]
  %v52 = vld [vmem:[%s0 + $0x10c] sm:$0xff]
  %v53 = vld [vmem:[%s0 + $0x114] sm:$0xff]
  %v54 = vld [vmem:[%s0 + $0x11c] sm:$0xf]
  %v55 = vld [vmem:[%s0 + $0x120] sm:$0xff]
  %v56 = vld [vmem:[%s0 + $0x128] sm:$0xff]
  %v57 = vld [vmem:[%s0 + $0x130] sm:$0xff]
  %v58 = vld [vmem:[%s0 + $0x138] sm:$0xff]
  %v59 = vld [vmem:[%s0 + $0x140] sm:$0xf]
  %v60 = vld [vmem:[%s0 + $0x144] sm:$0xff]
  %v61 = vld [vmem:[%s0 + $0x14c] sm:$0xff]
  %v62 = vld [vmem:[%s0 + $0x154] sm:$0xff]
  %v63 = vld [vmem:[%s0 + $0x15c] sm:$0xff]
  %v64 = vld [vmem:[%s0 + $0x164] sm:$0xf]
  %v65 = vld [vmem:[%s0 + $0x168] sm:$0xff]
  %v66 = vld [vmem:[%s0 + $0x170] sm:$0xff]
  %v67 = vld [vmem:[%s0 + $0x178] sm:$0xff]
  %v68 = vld [vmem:[%s0 + $0x180] sm:$0xff]
  %v69 = vld [vmem:[%s0 + $0x188] sm:$0xf]
  %v70 = vld [vmem:[%s0 + $0x18c] sm:$0xff]
  %v71 = vld [vmem:[%s0 + $0x194] sm:$0xff]
  %v72 = vld [vmem:[%s0 + $0x19c] sm:$0xff]
  %v73 = vld [vmem:[%s0 + $0x1a4] sm:$0xff]
  %v74 = vld [vmem:[%s0 + $0x1ac] sm:$0xf]
  %v75 = vld [vmem:[%s0 + $0x1b0] sm:$0xff]
  %v76 = vld [vmem:[%s0 + $0x1b8] sm:$0xff]
  %v77 = vld [vmem:[%s0 + $0x1c0] sm:$0xff]
  %v78 = vld [vmem:[%s0 + $0x1c8] sm:$0xff]
  %v79 = vld [vmem:[%s0 + $0x1d0] sm:$0xf]
  %v80 = vld [vmem:[%s0 + $0x1d4] sm:$0xff]
  %v81 = vld [vmem:[%s0 + $0x1dc] sm:$0xff]
  %v82 = vld [vmem:[%s0 + $0x1e4] sm:$0xff]
  %v83 = vld [vmem:[%s0 + $0x1ec] sm:$0xff]
  %v84 = vld [vmem:[%s0 + $0x1f4] sm:$0xf]
  %v85 = vld [vmem:[%s0 + $0x1f8] sm:$0xff]
  %v86 = vld [vmem:[%s0 + $0x200] sm:$0xff]
  %v87 = vld [vmem:[%s0 + $0x208] sm:$0xff]
  %v88 = vld [vmem:[%s0 + $0x210] sm:$0xff]
  %v89 = vld [vmem:[%s0 + $0x218] sm:$0xf]
  %v90 = vld [vmem:[%s0 + $0x21c] sm:$0xff]
  %v91 = vld [vmem:[%s0 + $0x224] sm:$0xff]
  %v92 = vld [vmem:[%s0 + $0x22c] sm:$0xff]
  %v93 = vld [vmem:[%s0 + $0x234] sm:$0xff]
  %v94 = vld [vmem:[%s0 + $0x23c] sm:$0xf]
  %v95 = vld [vmem:[%s1] sm:$0xf]
  %v96 = vld [vmem:[%s1 + $0x4] sm:$0xf]
  %v97 = vld [vmem:[%s1 + $0x8] sm:$0xf]
  %v98 = vld [vmem:[%s1 + $0xc] sm:$0xf]
  %v99 = vld [vmem:[%s1 + $0x10] sm:$0xf]
  %v100 = vld [vmem:[%s1 + $0x14] sm:$0xf]
  %v101 = vld [vmem:[%s1 + $0x18] sm:$0xf]
  %v102 = vld [vmem:[%s1 + $0x1c] sm:$0xf]
  %v103 = vld [vmem:[%s1 + $0x20] sm:$0xf]
  %v104 = vld [vmem:[%s1 + $0x24] sm:$0xf]
  %v105 = vld [vmem:[%s1 + $0x28] sm:$0xf]
  %v106 = vld [vmem:[%s1 + $0x2c] sm:$0xf]
  %v107 = vld [vmem:[%s1 + $0x30] sm:$0xf]
  %v108 = vld [vmem:[%s1 + $0x34] sm:$0xf]
  %v109 = vld [vmem:[%s1 + $0x38] sm:$0xf]
  %v110 = vld [vmem:[%s1 + $0x3c] sm:$0xf]
  %v111 = vld [vmem:[%s1 + $0x40] sm:$0xf]
  %v112 = vld [vmem:[%s1 + $0x44] sm:$0xf]
  %v113 = vld [vmem:[%s1 + $0x48] sm:$0xf]
  %v114 = vld [vmem:[%s1 + $0x4c] sm:$0xf]
  %v115 = vld [vmem:[%s1 + $0x50] sm:$0xf]
  %v116 = vld [vmem:[%s1 + $0x54] sm:$0xf]
  %v117 = vld [vmem:[%s1 + $0x58] sm:$0xf]
  %v118 = vld [vmem:[%s1 + $0x5c] sm:$0xf]
  %v119 = vld [vmem:[%s1 + $0x60] sm:$0xf]
  %v120 = vld [vmem:[%s1 + $0x64] sm:$0xf]
  %v121 = vld [vmem:[%s1 + $0x68] sm:$0xf]
  %v122 = vld [vmem:[%s1 + $0x6c] sm:$0xf]
  %v123 = vld [vmem:[%s1 + $0x70] sm:$0xf]
  %v124 = vld [vmem:[%s1 + $0x74] sm:$0xf]
  %v125 = vld [vmem:[%s1 + $0x78] sm:$0xf]
  %v126 = vld [vmem:[%s1 + $0x7c] sm:$0xf]
  %v127 = vld [vmem:[%s1 + $0x80] sm:$0xf]
  %v128 = vld [vmem:[%s1 + $0x84] sm:$0xf]
  %v129 = vld [vmem:[%s1 + $0x88] sm:$0xf]
  %v130 = vld [vmem:[%s1 + $0x8c] sm:$0xf]
  %v131 = vld [vmem:[%s1 + $0x90] sm:$0xf]
  %v132 = vld [vmem:[%s1 + $0x94] sm:$0xf]
  %v133 = vld [vmem:[%s1 + $0x98] sm:$0xf]
  %v134 = vld [vmem:[%s1 + $0x9c] sm:$0xf]
  %v135 = vld [vmem:[%s1 + $0xa0] sm:$0xf]
  %v136 = vld [vmem:[%s1 + $0xa4] sm:$0xf]
  %v137 = vld [vmem:[%s1 + $0xa8] sm:$0xf]
  %v138 = vld [vmem:[%s1 + $0xac] sm:$0xf]
  %v139 = vld [vmem:[%s1 + $0xb0] sm:$0xf]
  %v140 = vld [vmem:[%s1 + $0xb4] sm:$0xf]
  %v141 = vld [vmem:[%s1 + $0xb8] sm:$0xf]
  %v142 = vld [vmem:[%s1 + $0xbc] sm:$0xf]
  %v143 = vld [vmem:[%s1 + $0xc0] sm:$0xf]
  %v144 = vld [vmem:[%s1 + $0xc4] sm:$0xf]
  %v145 = vld [vmem:[%s1 + $0xc8] sm:$0xf]
  %v146 = vld [vmem:[%s1 + $0xcc] sm:$0xf]
  %v147 = vld [vmem:[%s1 + $0xd0] sm:$0xf]
  %v148 = vld [vmem:[%s1 + $0xd4] sm:$0xf]
  %v149 = vld [vmem:[%s1 + $0xd8] sm:$0xf]
  %v150 = vld [vmem:[%s1 + $0xdc] sm:$0xf]
  %v151 = vld [vmem:[%s1 + $0xe0] sm:$0xf]
  %v152 = vld [vmem:[%s1 + $0xe4] sm:$0xf]
  %v153 = vld [vmem:[%s1 + $0xe8] sm:$0xf]
  %v154 = vld [vmem:[%s1 + $0xec] sm:$0xf]
  %v155 = vld [vmem:[%s1 + $0xf0] sm:$0xf]
  %v156 = vld [vmem:[%s1 + $0xf4] sm:$0xf]
  %v157 = vld [vmem:[%s1 + $0xf8] sm:$0xf]
  %v158 = vld [vmem:[%s1 + $0xfc] sm:$0xf]
  %v159 = vld [vmem:[%s1 + $0x100] sm:$0xf]
  %v160 = vld [vmem:[%s1 + $0x104] sm:$0xf]
  %v161 = vld [vmem:[%s1 + $0x108] sm:$0xf]
  %v162 = vld [vmem:[%s1 + $0x10c] sm:$0xf]
  %v163 = vld [vmem:[%s1 + $0x110] sm:$0xf]
  %v164 = vld [vmem:[%s1 + $0x114] sm:$0xf]
  %v165 = vld [vmem:[%s1 + $0x118] sm:$0xf]
  %v166 = vld [vmem:[%s1 + $0x11c] sm:$0xf]
  %v167 = vld [vmem:[%s1 + $0x120] sm:$0xf]
  %v168 = vld [vmem:[%s1 + $0x124] sm:$0xf]
  %v169 = vld [vmem:[%s1 + $0x128] sm:$0xf]
  %v170 = vld [vmem:[%s1 + $0x12c] sm:$0xf]
  %v171 = vld [vmem:[%s1 + $0x130] sm:$0xf]
  %v172 = vld [vmem:[%s1 + $0x134] sm:$0xf]
  %v173 = vld [vmem:[%s1 + $0x138] sm:$0xf]
  %v174 = vld [vmem:[%s1 + $0x13c] sm:$0xf]
  %v175 = vld [vmem:[%s1 + $0x140] sm:$0xf]
  %v176 = vld [vmem:[%s1 + $0x144] sm:$0xf]
  %v177 = vld [vmem:[%s1 + $0x148] sm:$0xf]
  %v178 = vld [vmem:[%s1 + $0x14c] sm:$0xf]
  %v179 = vld [vmem:[%s1 + $0x150] sm:$0xf]
  %v180 = vld [vmem:[%s1 + $0x154] sm:$0xf]
  %v181 = vld [vmem:[%s1 + $0x158] sm:$0xf]
  %v182 = vld [vmem:[%s1 + $0x15c] sm:$0xf]
  %v183 = vld [vmem:[%s1 + $0x160] sm:$0xf]
  %v184 = vld [vmem:[%s1 + $0x164] sm:$0xf]
  %v185 = vld [vmem:[%s1 + $0x168] sm:$0xf]
  %v186 = vld [vmem:[%s1 + $0x16c] sm:$0xf]
  %v187 = vld [vmem:[%s1 + $0x170] sm:$0xf]
  %v188 = vld [vmem:[%s1 + $0x174] sm:$0xf]
  %v189 = vld [vmem:[%s1 + $0x178] sm:$0xf]
  %v190 = vld [vmem:[%s1 + $0x17c] sm:$0xf]
  %v191 = vld [vmem:[%s1 + $0x180] sm:$0xf]
  %v192 = vld [vmem:[%s1 + $0x184] sm:$0xf]
  %v193 = vld [vmem:[%s1 + $0x188] sm:$0xf]
  %v194 = vld [vmem:[%s1 + $0x18c] sm:$0xf]
  %v195 = vld [vmem:[%s1 + $0x190] sm:$0xf]
  %v196 = vld [vmem:[%s1 + $0x194] sm:$0xf]
  %v197 = vld [vmem:[%s1 + $0x198] sm:$0xf]
  %v198 = vld [vmem:[%s1 + $0x19c] sm:$0xf]
  %v199 = vld [vmem:[%s1 + $0x1a0] sm:$0xf]
  %v200 = vld [vmem:[%s1 + $0x1a4] sm:$0xf]
  %v201 = vld [vmem:[%s1 + $0x1a8] sm:$0xf]
  %v202 = vld [vmem:[%s1 + $0x1ac] sm:$0xf]
  %v203 = vld [vmem:[%s1 + $0x1b0] sm:$0xf]
  %v204 = vld [vmem:[%s1 + $0x1b4] sm:$0xf]
  %v205 = vld [vmem:[%s1 + $0x1b8] sm:$0xf]
  %v206 = vld [vmem:[%s1 + $0x1bc] sm:$0xf]
  %v207 = vld [vmem:[%s1 + $0x1c0] sm:$0xf]
  %v208 = vld [vmem:[%s1 + $0x1c4] sm:$0xf]
  %v209 = vld [vmem:[%s1 + $0x1c8] sm:$0xf]
  %v210 = vld [vmem:[%s1 + $0x1cc] sm:$0xf]
  %v211 = vld [vmem:[%s1 + $0x1d0] sm:$0xf]
  %v212 = vld [vmem:[%s1 + $0x1d4] sm:$0xf]
  %v213 = vld [vmem:[%s1 + $0x1d8] sm:$0xf]
  %v214 = vld [vmem:[%s1 + $0x1dc] sm:$0xf]
  %v215 = vld [vmem:[%s1 + $0x1e0] sm:$0xf]
  %v216 = vld [vmem:[%s1 + $0x1e4] sm:$0xf]
  %v217 = vld [vmem:[%s1 + $0x1e8] sm:$0xf]
  %v218 = vld [vmem:[%s1 + $0x1ec] sm:$0xf]
  %v219 = vld [vmem:[%s1 + $0x1f0] sm:$0xf]
  %v220 = vld [vmem:[%s1 + $0x1f4] sm:$0xf]
  %v221 = vld [vmem:[%s1 + $0x1f8] sm:$0xf]
  %v222 = vld [vmem:[%s1 + $0x1fc] sm:$0xf]
  %v223 = vld [vmem:[%s1 + $0x200] sm:$0xf]
  %v224 = vld [vmem:[%s1 + $0x204] sm:$0xf]
  %v225 = vld [vmem:[%s1 + $0x208] sm:$0xf]
  %v226 = vld [vmem:[%s1 + $0x20c] sm:$0xf]
  %v227 = vld [vmem:[%s1 + $0x210] sm:$0xf]
  %v228 = vld [vmem:[%s1 + $0x214] sm:$0xf]
  %v229 = vld [vmem:[%s1 + $0x218] sm:$0xf]
  %v230 = vld [vmem:[%s1 + $0x21c] sm:$0xf]
  %v231 = vld [vmem:[%s1 + $0x220] sm:$0xf]
  %v232 = vld [vmem:[%s1 + $0x224] sm:$0xf]
  %v233 = vld [vmem:[%s1 + $0x228] sm:$0xf]
  %v234 = vld [vmem:[%s1 + $0x22c] sm:$0xf]
  %v235 = vld [vmem:[%s1 + $0x230] sm:$0xf]
  %v236 = vld [vmem:[%s1 + $0x234] sm:$0xf]
  %v237 = vld [vmem:[%s1 + $0x238] sm:$0xf]
  %v238 = vld [vmem:[%s1 + $0x23c] sm:$0xf]
  %v239 = vld [vmem:[%s2] sm:$0x1]
  %v241 = vlaneseq
  %v242 = vshrl.u32 %v241, 7
  %v243 = vsub.s32 0, %v242
  %v244 = vrot.slane %v239, %v243
  %v326 = vunpack.c.l.b16 %v15
  %v327 = vunpack.c.h.b16 %v15
  %v328 = vunpack.c.l.b16 %v16
  %v329 = vunpack.c.h.b16 %v16
  %v330 = vunpack.c.l.b16 %v17
  %v331 = vunpack.c.h.b16 %v17
  %v332 = vunpack.c.l.b16 %v18
  %v333 = vunpack.c.h.b16 %v18
  %v334 = vunpack.c.l.b16 %v19
  %v335 = vunpack.c.l.b16 %v20
  %v336 = vunpack.c.h.b16 %v20
  %v337 = vunpack.c.l.b16 %v21
  %v338 = vunpack.c.h.b16 %v21
  %v339 = vunpack.c.l.b16 %v22
  %v340 = vunpack.c.h.b16 %v22
  %v341 = vunpack.c.l.b16 %v23
  %v342 = vunpack.c.h.b16 %v23
  %v343 = vunpack.c.l.b16 %v24
  %v344 = vunpack.c.l.b16 %v25
  %v345 = vunpack.c.h.b16 %v25
  %v346 = vunpack.c.l.b16 %v26
  %v347 = vunpack.c.h.b16 %v26
  %v348 = vunpack.c.l.b16 %v27
  %v349 = vunpack.c.h.b16 %v27
  %v350 = vunpack.c.l.b16 %v28
  %v351 = vunpack.c.h.b16 %v28
  %v352 = vunpack.c.l.b16 %v29
  %v353 = vunpack.c.l.b16 %v30
  %v354 = vunpack.c.h.b16 %v30
  %v355 = vunpack.c.l.b16 %v31
  %v356 = vunpack.c.h.b16 %v31
  %v357 = vunpack.c.l.b16 %v32
  %v358 = vunpack.c.h.b16 %v32
  %v359 = vunpack.c.l.b16 %v33
  %v360 = vunpack.c.h.b16 %v33
  %v361 = vunpack.c.l.b16 %v34
  %v362 = vunpack.c.l.b16 %v35
  %v363 = vunpack.c.h.b16 %v35
  %v364 = vunpack.c.l.b16 %v36
  %v365 = vunpack.c.h.b16 %v36
  %v366 = vunpack.c.l.b16 %v37
  %v367 = vunpack.c.h.b16 %v37
  %v368 = vunpack.c.l.b16 %v38
  %v369 = vunpack.c.h.b16 %v38
  %v370 = vunpack.c.l.b16 %v39
  %v371 = vunpack.c.l.b16 %v40
  %v372 = vunpack.c.h.b16 %v40
  %v373 = vunpack.c.l.b16 %v41
  %v374 = vunpack.c.h.b16 %v41
  %v375 = vunpack.c.l.b16 %v42
  %v376 = vunpack.c.h.b16 %v42
  %v377 = vunpack.c.l.b16 %v43
  %v378 = vunpack.c.h.b16 %v43
  %v379 = vunpack.c.l.b16 %v44
  %v380 = vunpack.c.l.b16 %v45
  %v381 = vunpack.c.h.b16 %v45
  %v382 = vunpack.c.l.b16 %v46
  %v383 = vunpack.c.h.b16 %v46
  %v384 = vunpack.c.l.b16 %v47
  %v385 = vunpack.c.h.b16 %v47
  %v386 = vunpack.c.l.b16 %v48
  %v387 = vunpack.c.h.b16 %v48
  %v388 = vunpack.c.l.b16 %v49
  %v389 = vunpack.c.l.b16 %v50
  %v390 = vunpack.c.h.b16 %v50
  %v391 = vunpack.c.l.b16 %v51
  %v392 = vunpack.c.h.b16 %v51
  %v393 = vunpack.c.l.b16 %v52
  %v394 = vunpack.c.h.b16 %v52
  %v395 = vunpack.c.l.b16 %v53
  %v396 = vunpack.c.h.b16 %v53
  %v397 = vunpack.c.l.b16 %v54
  %v398 = vunpack.c.l.b16 %v55
  %v399 = vunpack.c.h.b16 %v55
  %v400 = vunpack.c.l.b16 %v56
  %v401 = vunpack.c.h.b16 %v56
  %v402 = vunpack.c.l.b16 %v57
  %v403 = vunpack.c.h.b16 %v57
  %v404 = vunpack.c.l.b16 %v58
  %v405 = vunpack.c.h.b16 %v58
  %v406 = vunpack.c.l.b16 %v59
  %v407 = vunpack.c.l.b16 %v60
  %v408 = vunpack.c.h.b16 %v60
  %v409 = vunpack.c.l.b16 %v61
  %v410 = vunpack.c.h.b16 %v61
  %v411 = vunpack.c.l.b16 %v62
  %v412 = vunpack.c.h.b16 %v62
  %v413 = vunpack.c.l.b16 %v63
  %v414 = vunpack.c.h.b16 %v63
  %v415 = vunpack.c.l.b16 %v64
  %v416 = vunpack.c.l.b16 %v65
  %v417 = vunpack.c.h.b16 %v65
  %v418 = vunpack.c.l.b16 %v66
  %v419 = vunpack.c.h.b16 %v66
  %v420 = vunpack.c.l.b16 %v67
  %v421 = vunpack.c.h.b16 %v67
  %v422 = vunpack.c.l.b16 %v68
  %v423 = vunpack.c.h.b16 %v68
  %v424 = vunpack.c.l.b16 %v69
  %v425 = vunpack.c.l.b16 %v70
  %v426 = vunpack.c.h.b16 %v70
  %v427 = vunpack.c.l.b16 %v71
  %v428 = vunpack.c.h.b16 %v71
  %v429 = vunpack.c.l.b16 %v72
  %v430 = vunpack.c.h.b16 %v72
  %v431 = vunpack.c.l.b16 %v73
  %v432 = vunpack.c.h.b16 %v73
  %v433 = vunpack.c.l.b16 %v74
  %v434 = vunpack.c.l.b16 %v75
  %v435 = vunpack.c.h.b16 %v75
  %v436 = vunpack.c.l.b16 %v76
  %v437 = vunpack.c.h.b16 %v76
  %v438 = vunpack.c.l.b16 %v77
  %v439 = vunpack.c.h.b16 %v77
  %v440 = vunpack.c.l.b16 %v78
  %v441 = vunpack.c.h.b16 %v78
  %v442 = vunpack.c.l.b16 %v79
  %v443 = vunpack.c.l.b16 %v80
  %v444 = vunpack.c.h.b16 %v80
  %v445 = vunpack.c.l.b16 %v81
  %v446 = vunpack.c.h.b16 %v81
  %v447 = vunpack.c.l.b16 %v82
  %v448 = vunpack.c.h.b16 %v82
  %v449 = vunpack.c.l.b16 %v83
  %v450 = vunpack.c.h.b16 %v83
  %v451 = vunpack.c.l.b16 %v84
  %v452 = vunpack.c.l.b16 %v85
  %v453 = vunpack.c.h.b16 %v85
  %v454 = vunpack.c.l.b16 %v86
  %v455 = vunpack.c.h.b16 %v86
  %v456 = vunpack.c.l.b16 %v87
  %v457 = vunpack.c.h.b16 %v87
  %v458 = vunpack.c.l.b16 %v88
  %v459 = vunpack.c.h.b16 %v88
  %v460 = vunpack.c.l.b16 %v89
  %v461 = vunpack.c.l.b16 %v90
  %v462 = vunpack.c.h.b16 %v90
  %v463 = vunpack.c.l.b16 %v91
  %v464 = vunpack.c.h.b16 %v91
  %v465 = vunpack.c.l.b16 %v92
  %v466 = vunpack.c.h.b16 %v92
  %v467 = vunpack.c.l.b16 %v93
  %v468 = vunpack.c.h.b16 %v93
  %v469 = vunpack.c.l.b16 %v94
  %v470 = vpack.c.b16 %v335, %v326
  %v471 = vpack.c.b16 %v336, %v327
  %v472 = vpack.c.b16 %v337, %v328
  %v473 = vpack.c.b16 %v338, %v329
  %v474 = vpack.c.b16 %v339, %v330
  %v475 = vpack.c.b16 %v340, %v331
  %v476 = vpack.c.b16 %v341, %v332
  %v477 = vpack.c.b16 %v342, %v333
  %v478 = vpack.c.b16 %v343, %v334
  %v479 = vpack.c.b16 %v353, %v344
  %v480 = vpack.c.b16 %v354, %v345
  %v481 = vpack.c.b16 %v355, %v346
  %v482 = vpack.c.b16 %v356, %v347
  %v483 = vpack.c.b16 %v357, %v348
  %v484 = vpack.c.b16 %v358, %v349
  %v485 = vpack.c.b16 %v359, %v350
  %v486 = vpack.c.b16 %v360, %v351
  %v487 = vpack.c.b16 %v361, %v352
  %v488 = vpack.c.b16 %v371, %v362
  %v489 = vpack.c.b16 %v372, %v363
  %v490 = vpack.c.b16 %v373, %v364
  %v491 = vpack.c.b16 %v374, %v365
  %v492 = vpack.c.b16 %v375, %v366
  %v493 = vpack.c.b16 %v376, %v367
  %v494 = vpack.c.b16 %v377, %v368
  %v495 = vpack.c.b16 %v378, %v369
  %v496 = vpack.c.b16 %v379, %v370
  %v497 = vpack.c.b16 %v389, %v380
  %v498 = vpack.c.b16 %v390, %v381
  %v499 = vpack.c.b16 %v391, %v382
  %v500 = vpack.c.b16 %v392, %v383
  %v501 = vpack.c.b16 %v393, %v384
  %v502 = vpack.c.b16 %v394, %v385
  %v503 = vpack.c.b16 %v395, %v386
  %v504 = vpack.c.b16 %v396, %v387
  %v505 = vpack.c.b16 %v397, %v388
  %v506 = vpack.c.b16 %v407, %v398
  %v507 = vpack.c.b16 %v408, %v399
  %v508 = vpack.c.b16 %v409, %v400
  %v509 = vpack.c.b16 %v410, %v401
  %v510 = vpack.c.b16 %v411, %v402
  %v511 = vpack.c.b16 %v412, %v403
  %v512 = vpack.c.b16 %v413, %v404
  %v513 = vpack.c.b16 %v414, %v405
  %v514 = vpack.c.b16 %v415, %v406
  %v515 = vpack.c.b16 %v425, %v416
  %v516 = vpack.c.b16 %v426, %v417
  %v517 = vpack.c.b16 %v427, %v418
  %v518 = vpack.c.b16 %v428, %v419
  %v519 = vpack.c.b16 %v429, %v420
  %v520 = vpack.c.b16 %v430, %v421
  %v521 = vpack.c.b16 %v431, %v422
  %v522 = vpack.c.b16 %v432, %v423
  %v523 = vpack.c.b16 %v433, %v424
  %v524 = vpack.c.b16 %v443, %v434
  %v525 = vpack.c.b16 %v444, %v435
  %v526 = vpack.c.b16 %v445, %v436
  %v527 = vpack.c.b16 %v446, %v437
  %v528 = vpack.c.b16 %v447, %v438
  %v529 = vpack.c.b16 %v448, %v439
  %v530 = vpack.c.b16 %v449, %v440
  %v531 = vpack.c.b16 %v450, %v441
  %v532 = vpack.c.b16 %v451, %v442
  %v533 = vpack.c.b16 %v461, %v452
  %v534 = vpack.c.b16 %v462, %v453
  %v535 = vpack.c.b16 %v463, %v454
  %v536 = vpack.c.b16 %v464, %v455
  %v537 = vpack.c.b16 %v465, %v456
  %v538 = vpack.c.b16 %v466, %v457
  %v539 = vpack.c.b16 %v467, %v458
  %v540 = vpack.c.b16 %v468, %v459
  %v541 = vpack.c.b16 %v469, %v460
  %v758 = vunpack.c.l.b16 %v95
  %v759 = vunpack.c.l.b16 %v96
  %v760 = vunpack.c.l.b16 %v97
  %v761 = vunpack.c.l.b16 %v98
  %v762 = vunpack.c.l.b16 %v99
  %v763 = vunpack.c.l.b16 %v100
  %v764 = vunpack.c.l.b16 %v101
  %v765 = vunpack.c.l.b16 %v102
  %v766 = vunpack.c.l.b16 %v103
  %v767 = vunpack.c.l.b16 %v104
  %v768 = vunpack.c.l.b16 %v105
  %v769 = vunpack.c.l.b16 %v106
  %v770 = vunpack.c.l.b16 %v107
  %v771 = vunpack.c.l.b16 %v108
  %v772 = vunpack.c.l.b16 %v109
  %v773 = vunpack.c.l.b16 %v110
  %v774 = vunpack.c.l.b16 %v111
  %v775 = vunpack.c.l.b16 %v112
  %v776 = vunpack.c.l.b16 %v113
  %v777 = vunpack.c.l.b16 %v114
  %v778 = vunpack.c.l.b16 %v115
  %v779 = vunpack.c.l.b16 %v116
  %v780 = vunpack.c.l.b16 %v117
  %v781 = vunpack.c.l.b16 %v118
  %v782 = vunpack.c.l.b16 %v119
  %v783 = vunpack.c.l.b16 %v120
  %v784 = vunpack.c.l.b16 %v121
  %v785 = vunpack.c.l.b16 %v122
  %v786 = vunpack.c.l.b16 %v123
  %v787 = vunpack.c.l.b16 %v124
  %v788 = vunpack.c.l.b16 %v125
  %v789 = vunpack.c.l.b16 %v126
  %v790 = vunpack.c.l.b16 %v127
  %v791 = vunpack.c.l.b16 %v128
  %v792 = vunpack.c.l.b16 %v129
  %v793 = vunpack.c.l.b16 %v130
  %v794 = vunpack.c.l.b16 %v131
  %v795 = vunpack.c.l.b16 %v132
  %v796 = vunpack.c.l.b16 %v133
  %v797 = vunpack.c.l.b16 %v134
  %v798 = vunpack.c.l.b16 %v135
  %v799 = vunpack.c.l.b16 %v136
  %v800 = vunpack.c.l.b16 %v137
  %v801 = vunpack.c.l.b16 %v138
  %v802 = vunpack.c.l.b16 %v139
  %v803 = vunpack.c.l.b16 %v140
  %v804 = vunpack.c.l.b16 %v141
  %v805 = vunpack.c.l.b16 %v142
  %v806 = vunpack.c.l.b16 %v143
  %v807 = vunpack.c.l.b16 %v144
  %v808 = vunpack.c.l.b16 %v145
  %v809 = vunpack.c.l.b16 %v146
  %v810 = vunpack.c.l.b16 %v147
  %v811 = vunpack.c.l.b16 %v148
  %v812 = vunpack.c.l.b16 %v149
  %v813 = vunpack.c.l.b16 %v150
  %v814 = vunpack.c.l.b16 %v151
  %v815 = vunpack.c.l.b16 %v152
  %v816 = vunpack.c.l.b16 %v153
  %v817 = vunpack.c.l.b16 %v154
  %v818 = vunpack.c.l.b16 %v155
  %v819 = vunpack.c.l.b16 %v156
  %v820 = vunpack.c.l.b16 %v157
  %v821 = vunpack.c.l.b16 %v158
  %v822 = vunpack.c.l.b16 %v159
  %v823 = vunpack.c.l.b16 %v160
  %v824 = vunpack.c.l.b16 %v161
  %v825 = vunpack.c.l.b16 %v162
  %v826 = vunpack.c.l.b16 %v163
  %v827 = vunpack.c.l.b16 %v164
  %v828 = vunpack.c.l.b16 %v165
  %v829 = vunpack.c.l.b16 %v166
  %v830 = vunpack.c.l.b16 %v167
  %v831 = vunpack.c.l.b16 %v168
  %v832 = vunpack.c.l.b16 %v169
  %v833 = vunpack.c.l.b16 %v170
  %v834 = vunpack.c.l.b16 %v171
  %v835 = vunpack.c.l.b16 %v172
  %v836 = vunpack.c.l.b16 %v173
  %v837 = vunpack.c.l.b16 %v174
  %v838 = vunpack.c.l.b16 %v175
  %v839 = vunpack.c.l.b16 %v176
  %v840 = vunpack.c.l.b16 %v177
  %v841 = vunpack.c.l.b16 %v178
  %v842 = vunpack.c.l.b16 %v179
  %v843 = vunpack.c.l.b16 %v180
  %v844 = vunpack.c.l.b16 %v181
  %v845 = vunpack.c.l.b16 %v182
  %v846 = vunpack.c.l.b16 %v183
  %v847 = vunpack.c.l.b16 %v184
  %v848 = vunpack.c.l.b16 %v185
  %v849 = vunpack.c.l.b16 %v186
  %v850 = vunpack.c.l.b16 %v187
  %v851 = vunpack.c.l.b16 %v188
  %v852 = vunpack.c.l.b16 %v189
  %v853 = vunpack.c.l.b16 %v190
  %v854 = vunpack.c.l.b16 %v191
  %v855 = vunpack.c.l.b16 %v192
  %v856 = vunpack.c.l.b16 %v193
  %v857 = vunpack.c.l.b16 %v194
  %v858 = vunpack.c.l.b16 %v195
  %v859 = vunpack.c.l.b16 %v196
  %v860 = vunpack.c.l.b16 %v197
  %v861 = vunpack.c.l.b16 %v198
  %v862 = vunpack.c.l.b16 %v199
  %v863 = vunpack.c.l.b16 %v200
  %v864 = vunpack.c.l.b16 %v201
  %v865 = vunpack.c.l.b16 %v202
  %v866 = vunpack.c.l.b16 %v203
  %v867 = vunpack.c.l.b16 %v204
  %v868 = vunpack.c.l.b16 %v205
  %v869 = vunpack.c.l.b16 %v206
  %v870 = vunpack.c.l.b16 %v207
  %v871 = vunpack.c.l.b16 %v208
  %v872 = vunpack.c.l.b16 %v209
  %v873 = vunpack.c.l.b16 %v210
  %v874 = vunpack.c.l.b16 %v211
  %v875 = vunpack.c.l.b16 %v212
  %v876 = vunpack.c.l.b16 %v213
  %v877 = vunpack.c.l.b16 %v214
  %v878 = vunpack.c.l.b16 %v215
  %v879 = vunpack.c.l.b16 %v216
  %v880 = vunpack.c.l.b16 %v217
  %v881 = vunpack.c.l.b16 %v218
  %v882 = vunpack.c.l.b16 %v219
  %v883 = vunpack.c.l.b16 %v220
  %v884 = vunpack.c.l.b16 %v221
  %v885 = vunpack.c.l.b16 %v222
  %v886 = vunpack.c.l.b16 %v223
  %v887 = vunpack.c.l.b16 %v224
  %v888 = vunpack.c.l.b16 %v225
  %v889 = vunpack.c.l.b16 %v226
  %v890 = vunpack.c.l.b16 %v227
  %v891 = vunpack.c.l.b16 %v228
  %v892 = vunpack.c.l.b16 %v229
  %v893 = vunpack.c.l.b16 %v230
  %v894 = vunpack.c.l.b16 %v231
  %v895 = vunpack.c.l.b16 %v232
  %v896 = vunpack.c.l.b16 %v233
  %v897 = vunpack.c.l.b16 %v234
  %v898 = vunpack.c.l.b16 %v235
  %v899 = vunpack.c.l.b16 %v236
  %v900 = vunpack.c.l.b16 %v237
  %v901 = vunpack.c.l.b16 %v238
  %v902 = vpack.c.b16 %v759, %v758
  %v903 = vpack.c.b16 %v761, %v760
  %v904 = vpack.c.b16 %v763, %v762
  %v905 = vpack.c.b16 %v765, %v764
  %v906 = vpack.c.b16 %v767, %v766
  %v907 = vpack.c.b16 %v769, %v768
  %v908 = vpack.c.b16 %v771, %v770
  %v909 = vpack.c.b16 %v773, %v772
  %v910 = vpack.c.b16 %v775, %v774
  %v911 = vpack.c.b16 %v777, %v776
  %v912 = vpack.c.b16 %v779, %v778
  %v913 = vpack.c.b16 %v781, %v780
  %v914 = vpack.c.b16 %v783, %v782
  %v915 = vpack.c.b16 %v785, %v784
  %v916 = vpack.c.b16 %v787, %v786
  %v917 = vpack.c.b16 %v789, %v788
  %v918 = vpack.c.b16 %v791, %v790
  %v919 = vpack.c.b16 %v793, %v792
  %v920 = vpack.c.b16 %v795, %v794
  %v921 = vpack.c.b16 %v797, %v796
  %v922 = vpack.c.b16 %v799, %v798
  %v923 = vpack.c.b16 %v801, %v800
  %v924 = vpack.c.b16 %v803, %v802
  %v925 = vpack.c.b16 %v805, %v804
  %v926 = vpack.c.b16 %v807, %v806
  %v927 = vpack.c.b16 %v809, %v808
  %v928 = vpack.c.b16 %v811, %v810
  %v929 = vpack.c.b16 %v813, %v812
  %v930 = vpack.c.b16 %v815, %v814
  %v931 = vpack.c.b16 %v817, %v816
  %v932 = vpack.c.b16 %v819, %v818
  %v933 = vpack.c.b16 %v821, %v820
  %v934 = vpack.c.b16 %v823, %v822
  %v935 = vpack.c.b16 %v825, %v824
  %v936 = vpack.c.b16 %v827, %v826
  %v937 = vpack.c.b16 %v829, %v828
  %v938 = vpack.c.b16 %v831, %v830
  %v939 = vpack.c.b16 %v833, %v832
  %v940 = vpack.c.b16 %v835, %v834
  %v941 = vpack.c.b16 %v837, %v836
  %v942 = vpack.c.b16 %v839, %v838
  %v943 = vpack.c.b16 %v841, %v840
  %v944 = vpack.c.b16 %v843, %v842
  %v945 = vpack.c.b16 %v845, %v844
  %v946 = vpack.c.b16 %v847, %v846
  %v947 = vpack.c.b16 %v849, %v848
  %v948 = vpack.c.b16 %v851, %v850
  %v949 = vpack.c.b16 %v853, %v852
  %v950 = vpack.c.b16 %v855, %v854
  %v951 = vpack.c.b16 %v857, %v856
  %v952 = vpack.c.b16 %v859, %v858
  %v953 = vpack.c.b16 %v861, %v860
  %v954 = vpack.c.b16 %v863, %v862
  %v955 = vpack.c.b16 %v865, %v864
  %v956 = vpack.c.b16 %v867, %v866
  %v957 = vpack.c.b16 %v869, %v868
  %v958 = vpack.c.b16 %v871, %v870
  %v959 = vpack.c.b16 %v873, %v872
  %v960 = vpack.c.b16 %v875, %v874
  %v961 = vpack.c.b16 %v877, %v876
  %v962 = vpack.c.b16 %v879, %v878
  %v963 = vpack.c.b16 %v881, %v880
  %v964 = vpack.c.b16 %v883, %v882
  %v965 = vpack.c.b16 %v885, %v884
  %v966 = vpack.c.b16 %v887, %v886
  %v967 = vpack.c.b16 %v889, %v888
  %v968 = vpack.c.b16 %v891, %v890
  %v969 = vpack.c.b16 %v893, %v892
  %v970 = vpack.c.b16 %v895, %v894
  %v971 = vpack.c.b16 %v897, %v896
  %v972 = vpack.c.b16 %v899, %v898
  %v973 = vpack.c.b16 %v901, %v900
  %1046 = vmatprep.subr.bf16.mxu0 0
  %1047 = vmatpush1.bf16.msra.mxu0 %v909
  %1048 = vmatprep.subr.bf16.mxu0 0
  %1049 = vmatpush1.bf16.msra.mxu0 %v908
  %1050 = vmatprep.subr.bf16.mxu0 0
  %1051 = vmatpush1.bf16.msra.mxu0 %v907
  %1052 = vmatprep.subr.bf16.mxu0 0
  %1053 = vmatpush1.bf16.msra.mxu0 %v906
  %1054 = vmatprep.subr.bf16.mxu0 0
  %1055 = vmatpush1.bf16.msra.mxu0 %v905
  %1056 = vmatprep.subr.bf16.mxu0 0
  %1057 = vmatpush1.bf16.msra.mxu0 %v904
  %1058 = vmatprep.subr.bf16.mxu0 0
  %1059 = vmatpush1.bf16.msra.mxu0 %v903
  %1060 = vmatprep.subr.bf16.mxu0 0
  %1061 = vmatpush1.bf16.msra.mxu0 %v902
  %1062 = vmatprep.subr.bf16.mxu0 0
  %1063 = vmatpush2.bf16.msra.mxu0 %v917
  %1064 = vmatprep.subr.bf16.mxu0 0
  %1065 = vmatpush2.bf16.msra.mxu0 %v916
  %1066 = vmatprep.subr.bf16.mxu0 0
  %1067 = vmatpush2.bf16.msra.mxu0 %v915
  %1068 = vmatprep.subr.bf16.mxu0 0
  %1069 = vmatpush2.bf16.msra.mxu0 %v914
  %1070 = vmatprep.subr.bf16.mxu0 0
  %1071 = vmatpush2.bf16.msra.mxu0 %v913
  %1072 = vmatprep.subr.bf16.mxu0 0
  %1073 = vmatpush2.bf16.msra.mxu0 %v912
  %1074 = vmatprep.subr.bf16.mxu0 0
  %1075 = vmatpush2.bf16.msra.mxu0 %v911
  %1076 = vmatprep.subr.bf16.mxu0 0
  %1077 = vmatpush2.bf16.msra.mxu0 %v910
  %1078 = vmatprep.mubr.bf16.mxu0 %v471
  %1079 = vmatmul.mubr.bf16.gmra.mxu0 %v470
  %v1080 = vpop.f32.mrf.mxu0
  %v1081 = vadd.f32 %v244, %v1080
  %v1082 = vpop.f32.mrf.mxu0
  %v1083 = vpop.f32.mrf.mxu0
  %v1084 = vadd.f32 %v244, %v1083
  %v1085 = vpop.f32.mrf.mxu0
  %1086 = vmatprep.mubr.bf16.mxu0 %v480
  %1087 = vmatmul.mubr.bf16.gmra.mxu0 %v479
  %v1088 = vpop.f32.mrf.mxu0
  %v1089 = vadd.f32 %v244, %v1088
  %v1090 = vpop.f32.mrf.mxu0
  %v1091 = vpop.f32.mrf.mxu0
  %v1092 = vadd.f32 %v244, %v1091
  %v1093 = vpop.f32.mrf.mxu0
  %1094 = vmatprep.mubr.bf16.mxu0 %v489
  %1095 = vmatmul.mubr.bf16.gmra.mxu0 %v488
  %v1096 = vpop.f32.mrf.mxu0
  %v1097 = vadd.f32 %v244, %v1096
  %v1098 = vpop.f32.mrf.mxu0
  %v1099 = vpop.f32.mrf.mxu0
  %v1100 = vadd.f32 %v244, %v1099
  %v1101 = vpop.f32.mrf.mxu0
  %1102 = vmatprep.mubr.bf16.mxu0 %v498
  %1103 = vmatmul.mubr.bf16.gmra.mxu0 %v497
  %v1104 = vpop.f32.mrf.mxu0
  %v1105 = vadd.f32 %v244, %v1104
  %v1106 = vpop.f32.mrf.mxu0
  %v1107 = vpop.f32.mrf.mxu0
  %v1108 = vadd.f32 %v244, %v1107
  %v1109 = vpop.f32.mrf.mxu0
  %1110 = vmatprep.mubr.bf16.mxu0 %v507
  %1111 = vmatmul.mubr.bf16.gmra.mxu0 %v506
  %v1112 = vpop.f32.mrf.mxu0
  %v1113 = vadd.f32 %v244, %v1112
  %v1114 = vpop.f32.mrf.mxu0
  %v1115 = vpop.f32.mrf.mxu0
  %v1116 = vadd.f32 %v244, %v1115
  %v1117 = vpop.f32.mrf.mxu0
  %1118 = vmatprep.mubr.bf16.mxu0 %v516
  %1119 = vmatmul.mubr.bf16.gmra.mxu0 %v515
  %v1120 = vpop.f32.mrf.mxu0
  %v1121 = vadd.f32 %v244, %v1120
  %v1122 = vpop.f32.mrf.mxu0
  %v1123 = vpop.f32.mrf.mxu0
  %v1124 = vadd.f32 %v244, %v1123
  %v1125 = vpop.f32.mrf.mxu0
  %1126 = vmatprep.mubr.bf16.mxu0 %v525
  %1127 = vmatmul.mubr.bf16.gmra.mxu0 %v524
  %v1128 = vpop.f32.mrf.mxu0
  %v1129 = vadd.f32 %v244, %v1128
  %v1130 = vpop.f32.mrf.mxu0
  %v1131 = vpop.f32.mrf.mxu0
  %v1132 = vadd.f32 %v244, %v1131
  %v1133 = vpop.f32.mrf.mxu0
  %1134 = vmatprep.mubr.bf16.mxu0 %v534
  %1135 = vmatmul.mubr.bf16.gmra.mxu0 %v533
  %v1136 = vpop.f32.mrf.mxu0
  %v1137 = vadd.f32 %v244, %v1136
  %v1138 = vpop.f32.mrf.mxu0
  %v1139 = vpop.f32.mrf.mxu0
  %v1140 = vadd.f32 %v244, %v1139
  %v1141 = vpop.f32.mrf.mxu0
  %1142 = vdwg.mxu0
  %1143 = vmatprep.subr.bf16.mxu0 0
  %1144 = vmatpush1.bf16.msra.mxu0 %v925
  %1145 = vmatprep.subr.bf16.mxu0 0
  %1146 = vmatpush1.bf16.msra.mxu0 %v924
  %1147 = vmatprep.subr.bf16.mxu0 0
  %1148 = vmatpush1.bf16.msra.mxu0 %v923
  %1149 = vmatprep.subr.bf16.mxu0 0
  %1150 = vmatpush1.bf16.msra.mxu0 %v922
  %1151 = vmatprep.subr.bf16.mxu0 0
  %1152 = vmatpush1.bf16.msra.mxu0 %v921
  %1153 = vmatprep.subr.bf16.mxu0 0
  %1154 = vmatpush1.bf16.msra.mxu0 %v920
  %1155 = vmatprep.subr.bf16.mxu0 0
  %1156 = vmatpush1.bf16.msra.mxu0 %v919
  %1157 = vmatprep.subr.bf16.mxu0 0
  %1158 = vmatpush1.bf16.msra.mxu0 %v918
  %1159 = vmatprep.subr.bf16.mxu0 0
  %1160 = vmatpush2.bf16.msra.mxu0 %v933
  %1161 = vmatprep.subr.bf16.mxu0 0
  %1162 = vmatpush2.bf16.msra.mxu0 %v932
  %1163 = vmatprep.subr.bf16.mxu0 0
  %1164 = vmatpush2.bf16.msra.mxu0 %v931
  %1165 = vmatprep.subr.bf16.mxu0 0
  %1166 = vmatpush2.bf16.msra.mxu0 %v930
  %1167 = vmatprep.subr.bf16.mxu0 0
  %1168 = vmatpush2.bf16.msra.mxu0 %v929
  %1169 = vmatprep.subr.bf16.mxu0 0
  %1170 = vmatpush2.bf16.msra.mxu0 %v928
  %1171 = vmatprep.subr.bf16.mxu0 0
  %1172 = vmatpush2.bf16.msra.mxu0 %v927
  %1173 = vmatprep.subr.bf16.mxu0 0
  %1174 = vmatpush2.bf16.msra.mxu0 %v926
  %1175 = vmatprep.mubr.bf16.mxu0 %v473
  %1176 = vmatmul.mubr.bf16.gmra.mxu0 %v472
  %v1177 = vpop.f32.mrf.mxu0
  %v1178 = vadd.f32 %v1081, %v1177
  %v1179 = vpop.f32.mrf.mxu0
  %v1180 = vpop.f32.mrf.mxu0
  %v1181 = vadd.f32 %v1084, %v1180
  %v1182 = vpop.f32.mrf.mxu0
  %1183 = vmatprep.mubr.bf16.mxu0 %v482
  %1184 = vmatmul.mubr.bf16.gmra.mxu0 %v481
  %v1185 = vpop.f32.mrf.mxu0
  %v1186 = vadd.f32 %v1089, %v1185
  %v1187 = vpop.f32.mrf.mxu0
  %v1188 = vpop.f32.mrf.mxu0
  %v1189 = vadd.f32 %v1092, %v1188
  %v1190 = vpop.f32.mrf.mxu0
  %1191 = vmatprep.mubr.bf16.mxu0 %v491
  %1192 = vmatmul.mubr.bf16.gmra.mxu0 %v490
  %v1193 = vpop.f32.mrf.mxu0
  %v1194 = vadd.f32 %v1097, %v1193
  %v1195 = vpop.f32.mrf.mxu0
  %v1196 = vpop.f32.mrf.mxu0
  %v1197 = vadd.f32 %v1100, %v1196
  %v1198 = vpop.f32.mrf.mxu0
  %1199 = vmatprep.mubr.bf16.mxu0 %v500
  %1200 = vmatmul.mubr.bf16.gmra.mxu0 %v499
  %v1201 = vpop.f32.mrf.mxu0
  %v1202 = vadd.f32 %v1105, %v1201
  %v1203 = vpop.f32.mrf.mxu0
  %v1204 = vpop.f32.mrf.mxu0
  %v1205 = vadd.f32 %v1108, %v1204
  %v1206 = vpop.f32.mrf.mxu0
  %1207 = vmatprep.mubr.bf16.mxu0 %v509
  %1208 = vmatmul.mubr.bf16.gmra.mxu0 %v508
  %v1209 = vpop.f32.mrf.mxu0
  %v1210 = vadd.f32 %v1113, %v1209
  %v1211 = vpop.f32.mrf.mxu0
  %v1212 = vpop.f32.mrf.mxu0
  %v1213 = vadd.f32 %v1116, %v1212
  %v1214 = vpop.f32.mrf.mxu0
  %1215 = vmatprep.mubr.bf16.mxu0 %v518
  %1216 = vmatmul.mubr.bf16.gmra.mxu0 %v517
  %v1217 = vpop.f32.mrf.mxu0
  %v1218 = vadd.f32 %v1121, %v1217
  %v1219 = vpop.f32.mrf.mxu0
  %v1220 = vpop.f32.mrf.mxu0
  %v1221 = vadd.f32 %v1124, %v1220
  %v1222 = vpop.f32.mrf.mxu0
  %1223 = vmatprep.mubr.bf16.mxu0 %v527
  %1224 = vmatmul.mubr.bf16.gmra.mxu0 %v526
  %v1225 = vpop.f32.mrf.mxu0
  %v1226 = vadd.f32 %v1129, %v1225
  %v1227 = vpop.f32.mrf.mxu0
  %v1228 = vpop.f32.mrf.mxu0
  %v1229 = vadd.f32 %v1132, %v1228
  %v1230 = vpop.f32.mrf.mxu0
  %1231 = vmatprep.mubr.bf16.mxu0 %v536
  %1232 = vmatmul.mubr.bf16.gmra.mxu0 %v535
  %v1233 = vpop.f32.mrf.mxu0
  %v1234 = vadd.f32 %v1137, %v1233
  %v1235 = vpop.f32.mrf.mxu0
  %v1236 = vpop.f32.mrf.mxu0
  %v1237 = vadd.f32 %v1140, %v1236
  %v1238 = vpop.f32.mrf.mxu0
  %1239 = vdwg.mxu0
  %1240 = vmatprep.subr.bf16.mxu0 0
  %1241 = vmatpush1.bf16.msra.mxu0 %v941
  %1242 = vmatprep.subr.bf16.mxu0 0
  %1243 = vmatpush1.bf16.msra.mxu0 %v940
  %1244 = vmatprep.subr.bf16.mxu0 0
  %1245 = vmatpush1.bf16.msra.mxu0 %v939
  %1246 = vmatprep.subr.bf16.mxu0 0
  %1247 = vmatpush1.bf16.msra.mxu0 %v938
  %1248 = vmatprep.subr.bf16.mxu0 0
  %1249 = vmatpush1.bf16.msra.mxu0 %v937
  %1250 = vmatprep.subr.bf16.mxu0 0
  %1251 = vmatpush1.bf16.msra.mxu0 %v936
  %1252 = vmatprep.subr.bf16.mxu0 0
  %1253 = vmatpush1.bf16.msra.mxu0 %v935
  %1254 = vmatprep.subr.bf16.mxu0 0
  %1255 = vmatpush1.bf16.msra.mxu0 %v934
  %1256 = vmatprep.subr.bf16.mxu0 0
  %1257 = vmatpush2.bf16.msra.mxu0 %v949
  %1258 = vmatprep.subr.bf16.mxu0 0
  %1259 = vmatpush2.bf16.msra.mxu0 %v948
  %1260 = vmatprep.subr.bf16.mxu0 0
  %1261 = vmatpush2.bf16.msra.mxu0 %v947
  %1262 = vmatprep.subr.bf16.mxu0 0
  %1263 = vmatpush2.bf16.msra.mxu0 %v946
  %1264 = vmatprep.subr.bf16.mxu0 0
  %1265 = vmatpush2.bf16.msra.mxu0 %v945
  %1266 = vmatprep.subr.bf16.mxu0 0
  %1267 = vmatpush2.bf16.msra.mxu0 %v944
  %1268 = vmatprep.subr.bf16.mxu0 0
  %1269 = vmatpush2.bf16.msra.mxu0 %v943
  %1270 = vmatprep.subr.bf16.mxu0 0
  %1271 = vmatpush2.bf16.msra.mxu0 %v942
  %1272 = vmatprep.mubr.bf16.mxu0 %v475
  %1273 = vmatmul.mubr.bf16.gmra.mxu0 %v474
  %v1274 = vpop.f32.mrf.mxu0
  %v1275 = vadd.f32 %v1178, %v1274
  %v1276 = vpop.f32.mrf.mxu0
  %v1277 = vpop.f32.mrf.mxu0
  %v1278 = vadd.f32 %v1181, %v1277
  %v1279 = vpop.f32.mrf.mxu0
  %1280 = vmatprep.mubr.bf16.mxu0 %v484
  %1281 = vmatmul.mubr.bf16.gmra.mxu0 %v483
  %v1282 = vpop.f32.mrf.mxu0
  %v1283 = vadd.f32 %v1186, %v1282
  %v1284 = vpop.f32.mrf.mxu0
  %v1285 = vpop.f32.mrf.mxu0
  %v1286 = vadd.f32 %v1189, %v1285
  %v1287 = vpop.f32.mrf.mxu0
  %1288 = vmatprep.mubr.bf16.mxu0 %v493
  %1289 = vmatmul.mubr.bf16.gmra.mxu0 %v492
  %v1290 = vpop.f32.mrf.mxu0
  %v1291 = vadd.f32 %v1194, %v1290
  %v1292 = vpop.f32.mrf.mxu0
  %v1293 = vpop.f32.mrf.mxu0
  %v1294 = vadd.f32 %v1197, %v1293
  %v1295 = vpop.f32.mrf.mxu0
  %1296 = vmatprep.mubr.bf16.mxu0 %v502
  %1297 = vmatmul.mubr.bf16.gmra.mxu0 %v501
  %v1298 = vpop.f32.mrf.mxu0
  %v1299 = vadd.f32 %v1202, %v1298
  %v1300 = vpop.f32.mrf.mxu0
  %v1301 = vpop.f32.mrf.mxu0
  %v1302 = vadd.f32 %v1205, %v1301
  %v1303 = vpop.f32.mrf.mxu0
  %1304 = vmatprep.mubr.bf16.mxu0 %v511
  %1305 = vmatmul.mubr.bf16.gmra.mxu0 %v510
  %v1306 = vpop.f32.mrf.mxu0
  %v1307 = vadd.f32 %v1210, %v1306
  %v1308 = vpop.f32.mrf.mxu0
  %v1309 = vpop.f32.mrf.mxu0
  %v1310 = vadd.f32 %v1213, %v1309
  %v1311 = vpop.f32.mrf.mxu0
  %1312 = vmatprep.mubr.bf16.mxu0 %v520
  %1313 = vmatmul.mubr.bf16.gmra.mxu0 %v519
  %v1314 = vpop.f32.mrf.mxu0
  %v1315 = vadd.f32 %v1218, %v1314
  %v1316 = vpop.f32.mrf.mxu0
  %v1317 = vpop.f32.mrf.mxu0
  %v1318 = vadd.f32 %v1221, %v1317
  %v1319 = vpop.f32.mrf.mxu0
  %1320 = vmatprep.mubr.bf16.mxu0 %v529
  %1321 = vmatmul.mubr.bf16.gmra.mxu0 %v528
  %v1322 = vpop.f32.mrf.mxu0
  %v1323 = vadd.f32 %v1226, %v1322
  %v1324 = vpop.f32.mrf.mxu0
  %v1325 = vpop.f32.mrf.mxu0
  %v1326 = vadd.f32 %v1229, %v1325
  %v1327 = vpop.f32.mrf.mxu0
  %1328 = vmatprep.mubr.bf16.mxu0 %v538
  %1329 = vmatmul.mubr.bf16.gmra.mxu0 %v537
  %v1330 = vpop.f32.mrf.mxu0
  %v1331 = vadd.f32 %v1234, %v1330
  %v1332 = vpop.f32.mrf.mxu0
  %v1333 = vpop.f32.mrf.mxu0
  %v1334 = vadd.f32 %v1237, %v1333
  %v1335 = vpop.f32.mrf.mxu0
  %1336 = vdwg.mxu0
  %1337 = vmatprep.subr.bf16.mxu0 0
  %1338 = vmatpush1.bf16.msra.mxu0 %v957
  %1339 = vmatprep.subr.bf16.mxu0 0
  %1340 = vmatpush1.bf16.msra.mxu0 %v956
  %1341 = vmatprep.subr.bf16.mxu0 0
  %1342 = vmatpush1.bf16.msra.mxu0 %v955
  %1343 = vmatprep.subr.bf16.mxu0 0
  %1344 = vmatpush1.bf16.msra.mxu0 %v954
  %1345 = vmatprep.subr.bf16.mxu0 0
  %1346 = vmatpush1.bf16.msra.mxu0 %v953
  %1347 = vmatprep.subr.bf16.mxu0 0
  %1348 = vmatpush1.bf16.msra.mxu0 %v952
  %1349 = vmatprep.subr.bf16.mxu0 0
  %1350 = vmatpush1.bf16.msra.mxu0 %v951
  %1351 = vmatprep.subr.bf16.mxu0 0
  %1352 = vmatpush1.bf16.msra.mxu0 %v950
  %1353 = vmatprep.subr.bf16.mxu0 0
  %1354 = vmatpush2.bf16.msra.mxu0 %v965
  %1355 = vmatprep.subr.bf16.mxu0 0
  %1356 = vmatpush2.bf16.msra.mxu0 %v964
  %1357 = vmatprep.subr.bf16.mxu0 0
  %1358 = vmatpush2.bf16.msra.mxu0 %v963
  %1359 = vmatprep.subr.bf16.mxu0 0
  %1360 = vmatpush2.bf16.msra.mxu0 %v962
  %1361 = vmatprep.subr.bf16.mxu0 0
  %1362 = vmatpush2.bf16.msra.mxu0 %v961
  %1363 = vmatprep.subr.bf16.mxu0 0
  %1364 = vmatpush2.bf16.msra.mxu0 %v960
  %1365 = vmatprep.subr.bf16.mxu0 0
  %1366 = vmatpush2.bf16.msra.mxu0 %v959
  %1367 = vmatprep.subr.bf16.mxu0 0
  %1368 = vmatpush2.bf16.msra.mxu0 %v958
  %1369 = vmatprep.mubr.bf16.mxu0 %v477
  %1370 = vmatmul.mubr.bf16.gmra.mxu0 %v476
  %v1371 = vpop.f32.mrf.mxu0
  %v1372 = vadd.f32 %v1275, %v1371
  %v1373 = vpop.f32.mrf.mxu0
  %v1374 = vpop.f32.mrf.mxu0
  %v1375 = vadd.f32 %v1278, %v1374
  %v1376 = vpop.f32.mrf.mxu0
  %1377 = vmatprep.mubr.bf16.mxu0 %v486
  %1378 = vmatmul.mubr.bf16.gmra.mxu0 %v485
  %v1379 = vpop.f32.mrf.mxu0
  %v1380 = vadd.f32 %v1283, %v1379
  %v1381 = vpop.f32.mrf.mxu0
  %v1382 = vpop.f32.mrf.mxu0
  %v1383 = vadd.f32 %v1286, %v1382
  %v1384 = vpop.f32.mrf.mxu0
  %1385 = vmatprep.mubr.bf16.mxu0 %v495
  %1386 = vmatmul.mubr.bf16.gmra.mxu0 %v494
  %v1387 = vpop.f32.mrf.mxu0
  %v1388 = vadd.f32 %v1291, %v1387
  %v1389 = vpop.f32.mrf.mxu0
  %v1390 = vpop.f32.mrf.mxu0
  %v1391 = vadd.f32 %v1294, %v1390
  %v1392 = vpop.f32.mrf.mxu0
  %1393 = vmatprep.mubr.bf16.mxu0 %v504
  %1394 = vmatmul.mubr.bf16.gmra.mxu0 %v503
  %v1395 = vpop.f32.mrf.mxu0
  %v1396 = vadd.f32 %v1299, %v1395
  %v1397 = vpop.f32.mrf.mxu0
  %v1398 = vpop.f32.mrf.mxu0
  %v1399 = vadd.f32 %v1302, %v1398
  %v1400 = vpop.f32.mrf.mxu0
  %1401 = vmatprep.mubr.bf16.mxu0 %v513
  %1402 = vmatmul.mubr.bf16.gmra.mxu0 %v512
  %v1403 = vpop.f32.mrf.mxu0
  %v1404 = vadd.f32 %v1307, %v1403
  %v1405 = vpop.f32.mrf.mxu0
  %v1406 = vpop.f32.mrf.mxu0
  %v1407 = vadd.f32 %v1310, %v1406
  %v1408 = vpop.f32.mrf.mxu0
  %1409 = vmatprep.mubr.bf16.mxu0 %v522
  %1410 = vmatmul.mubr.bf16.gmra.mxu0 %v521
  %v1411 = vpop.f32.mrf.mxu0
  %v1412 = vadd.f32 %v1315, %v1411
  %v1413 = vpop.f32.mrf.mxu0
  %v1414 = vpop.f32.mrf.mxu0
  %v1415 = vadd.f32 %v1318, %v1414
  %v1416 = vpop.f32.mrf.mxu0
  %1417 = vmatprep.mubr.bf16.mxu0 %v531
  %1418 = vmatmul.mubr.bf16.gmra.mxu0 %v530
  %v1419 = vpop.f32.mrf.mxu0
  %v1420 = vadd.f32 %v1323, %v1419
  %v1421 = vpop.f32.mrf.mxu0
  %v1422 = vpop.f32.mrf.mxu0
  %v1423 = vadd.f32 %v1326, %v1422
  %v1424 = vpop.f32.mrf.mxu0
  %1425 = vmatprep.mubr.bf16.mxu0 %v540
  %1426 = vmatmul.mubr.bf16.gmra.mxu0 %v539
  %v1427 = vpop.f32.mrf.mxu0
  %v1428 = vadd.f32 %v1331, %v1427
  %v1429 = vpop.f32.mrf.mxu0
  %v1430 = vpop.f32.mrf.mxu0
  %v1431 = vadd.f32 %v1334, %v1430
  %v1432 = vpop.f32.mrf.mxu0
  %1433 = vdwg.mxu0
  %1434 = vmatprep.subr.bf16.mxu0 0
  %1435 = vmatpush1.bf16.msra.mxu0 %v973
  %1436 = vmatprep.subr.bf16.mxu0 0
  %1437 = vmatpush1.bf16.msra.mxu0 %v972
  %1438 = vmatprep.subr.bf16.mxu0 0
  %1439 = vmatpush1.bf16.msra.mxu0 %v971
  %1440 = vmatprep.subr.bf16.mxu0 0
  %1441 = vmatpush1.bf16.msra.mxu0 %v970
  %1442 = vmatprep.subr.bf16.mxu0 0
  %1443 = vmatpush1.bf16.msra.mxu0 %v969
  %1444 = vmatprep.subr.bf16.mxu0 0
  %1445 = vmatpush1.bf16.msra.mxu0 %v968
  %1446 = vmatprep.subr.bf16.mxu0 0
  %1447 = vmatpush1.bf16.msra.mxu0 %v967
  %1448 = vmatprep.subr.bf16.mxu0 0
  %1449 = vmatpush1.bf16.msra.mxu0 %v966
  %1450 = vmatprep.subr.bf16.mxu0 0
  %1451 = vmatpush2.bf16.msra.mxu0 0
  %1452 = vmatprep.subr.bf16.mxu0 0
  %1453 = vmatpush2.bf16.msra.mxu0 0
  %1454 = vmatprep.subr.bf16.mxu0 0
  %1455 = vmatpush2.bf16.msra.mxu0 0
  %1456 = vmatprep.subr.bf16.mxu0 0
  %1457 = vmatpush2.bf16.msra.mxu0 0
  %1458 = vmatprep.subr.bf16.mxu0 0
  %1459 = vmatpush2.bf16.msra.mxu0 0
  %1460 = vmatprep.subr.bf16.mxu0 0
  %1461 = vmatpush2.bf16.msra.mxu0 0
  %1462 = vmatprep.subr.bf16.mxu0 0
  %1463 = vmatpush2.bf16.msra.mxu0 0
  %1464 = vmatprep.subr.bf16.mxu0 0
  %1465 = vmatpush2.bf16.msra.mxu0 0
  %1466 = vmatprep.mubr.bf16.mxu0 0
  %1467 = vmatmul.mubr.bf16.gmra.mxu0 %v478
  %v1468 = vpop.f32.mrf.mxu0
  %v1469 = vadd.f32 %v1372, %v1468
  %v1470 = vpop.f32.mrf.mxu0
  %v1471 = vpop.f32.mrf.mxu0
  %v1472 = vadd.f32 %v1375, %v1471
  %v1473 = vpop.f32.mrf.mxu0
  %1474 = vmatprep.mubr.bf16.mxu0 0
  %1475 = vmatmul.mubr.bf16.gmra.mxu0 %v487
  %v1476 = vpop.f32.mrf.mxu0
  %v1477 = vadd.f32 %v1380, %v1476
  %v1478 = vpop.f32.mrf.mxu0
  %v1479 = vpop.f32.mrf.mxu0
  %v1480 = vadd.f32 %v1383, %v1479
  %v1481 = vpop.f32.mrf.mxu0
  %1482 = vmatprep.mubr.bf16.mxu0 0
  %1483 = vmatmul.mubr.bf16.gmra.mxu0 %v496
  %v1484 = vpop.f32.mrf.mxu0
  %v1485 = vadd.f32 %v1388, %v1484
  %v1486 = vpop.f32.mrf.mxu0
  %v1487 = vpop.f32.mrf.mxu0
  %v1488 = vadd.f32 %v1391, %v1487
  %v1489 = vpop.f32.mrf.mxu0
  %1490 = vmatprep.mubr.bf16.mxu0 0
  %1491 = vmatmul.mubr.bf16.gmra.mxu0 %v505
  %v1492 = vpop.f32.mrf.mxu0
  %v1493 = vadd.f32 %v1396, %v1492
  %v1494 = vpop.f32.mrf.mxu0
  %v1495 = vpop.f32.mrf.mxu0
  %v1496 = vadd.f32 %v1399, %v1495
  %v1497 = vpop.f32.mrf.mxu0
  %1498 = vmatprep.mubr.bf16.mxu0 0
  %1499 = vmatmul.mubr.bf16.gmra.mxu0 %v514
  %v1500 = vpop.f32.mrf.mxu0
  %v1501 = vadd.f32 %v1404, %v1500
  %v1502 = vpop.f32.mrf.mxu0
  %v1503 = vpop.f32.mrf.mxu0
  %v1504 = vadd.f32 %v1407, %v1503
  %v1505 = vpop.f32.mrf.mxu0
  %1506 = vmatprep.mubr.bf16.mxu0 0
  %1507 = vmatmul.mubr.bf16.gmra.mxu0 %v523
  %v1508 = vpop.f32.mrf.mxu0
  %v1509 = vadd.f32 %v1412, %v1508
  %v1510 = vpop.f32.mrf.mxu0
  %v1511 = vpop.f32.mrf.mxu0
  %v1512 = vadd.f32 %v1415, %v1511
  %v1513 = vpop.f32.mrf.mxu0
  %1514 = vmatprep.mubr.bf16.mxu0 0
  %1515 = vmatmul.mubr.bf16.gmra.mxu0 %v532
  %v1516 = vpop.f32.mrf.mxu0
  %v1517 = vadd.f32 %v1420, %v1516
  %v1518 = vpop.f32.mrf.mxu0
  %v1519 = vpop.f32.mrf.mxu0
  %v1520 = vadd.f32 %v1423, %v1519
  %v1521 = vpop.f32.mrf.mxu0
  %1522 = vmatprep.mubr.bf16.mxu0 0
  %1523 = vmatmul.mubr.bf16.gmra.mxu0 %v541
  %v1524 = vpop.f32.mrf.mxu0
  %v1525 = vadd.f32 %v1428, %v1524
  %v1526 = vpop.f32.mrf.mxu0
  %v1527 = vpop.f32.mrf.mxu0
  %v1528 = vadd.f32 %v1431, %v1527
  %v1529 = vpop.f32.mrf.mxu0
  %1530 = vdwg.mxu0
  %v1531 = vmul.f32 %v1469, 0.2
  %v1532 = vmul.f32 %v1472, 0.2
  %v1533 = vmul.f32 %v1477, 0.2
  %v1534 = vmul.f32 %v1480, 0.2
  %v1535 = vmul.f32 %v1485, 0.2
  %v1536 = vmul.f32 %v1488, 0.2
  %v1537 = vmul.f32 %v1493, 0.2
  %v1538 = vmul.f32 %v1496, 0.2
  %v1539 = vmul.f32 %v1501, 0.2
  %v1540 = vmul.f32 %v1504, 0.2
  %v1541 = vmul.f32 %v1509, 0.2
  %v1542 = vmul.f32 %v1512, 0.2
  %v1543 = vmul.f32 %v1517, 0.2
  %v1544 = vmul.f32 %v1520, 0.2
  %v1545 = vmul.f32 %v1525, 0.2
  %v1546 = vmul.f32 %v1528, 0.2
  %v1547 = vmax.f32 %v1469, %v1531
  %v1548 = vmax.f32 %v1472, %v1532
  %v1549 = vmax.f32 %v1477, %v1533
  %v1550 = vmax.f32 %v1480, %v1534
  %v1551 = vmax.f32 %v1485, %v1535
  %v1552 = vmax.f32 %v1488, %v1536
  %v1553 = vmax.f32 %v1493, %v1537
  %v1554 = vmax.f32 %v1496, %v1538
  %v1555 = vmax.f32 %v1501, %v1539
  %v1556 = vmax.f32 %v1504, %v1540
  %v1557 = vmax.f32 %v1509, %v1541
  %v1558 = vmax.f32 %v1512, %v1542
  %v1559 = vmax.f32 %v1517, %v1543
  %v1560 = vmax.f32 %v1520, %v1544
  %v1561 = vmax.f32 %v1525, %v1545
  %v1562 = vmax.f32 %v1528, %v1546
  %v1563 = vpack.c.bf16 %v1548, %v1547
  %v1564 = vpack.c.bf16 %v1550, %v1549
  %v1565 = vpack.c.bf16 %v1552, %v1551
  %v1566 = vpack.c.bf16 %v1554, %v1553
  %v1567 = vpack.c.bf16 %v1556, %v1555
  %v1568 = vpack.c.bf16 %v1558, %v1557
  %v1569 = vpack.c.bf16 %v1560, %v1559
  %v1570 = vpack.c.bf16 %v1562, %v1561
  %v1579 = vunpack.c.l.b16 %v1563
  %v1580 = vunpack.c.h.b16 %v1563
  %v1581 = vunpack.c.l.b16 %v1564
  %v1582 = vunpack.c.h.b16 %v1564
  %v1583 = vunpack.c.l.b16 %v1565
  %v1584 = vunpack.c.h.b16 %v1565
  %v1585 = vunpack.c.l.b16 %v1566
  %v1586 = vunpack.c.h.b16 %v1566
  %v1587 = vunpack.c.l.b16 %v1567
  %v1588 = vunpack.c.h.b16 %v1567
  %v1589 = vunpack.c.l.b16 %v1568
  %v1590 = vunpack.c.h.b16 %v1568
  %v1591 = vunpack.c.l.b16 %v1569
  %v1592 = vunpack.c.h.b16 %v1569
  %v1593 = vunpack.c.l.b16 %v1570
  %v1594 = vunpack.c.h.b16 %v1570
  %v1595 = vpack.c.b16 %v1579, %v1579
  %v1596 = vpack.c.b16 %v1580, %v1580
  %v1597 = vpack.c.b16 %v1581, %v1581
  %v1598 = vpack.c.b16 %v1582, %v1582
  %v1599 = vpack.c.b16 %v1583, %v1583
  %v1600 = vpack.c.b16 %v1584, %v1584
  %v1601 = vpack.c.b16 %v1585, %v1585
  %v1602 = vpack.c.b16 %v1586, %v1586
  %v1603 = vpack.c.b16 %v1587, %v1587
  %v1604 = vpack.c.b16 %v1588, %v1588
  %v1605 = vpack.c.b16 %v1589, %v1589
  %v1606 = vpack.c.b16 %v1590, %v1590
  %v1607 = vpack.c.b16 %v1591, %v1591
  %v1608 = vpack.c.b16 %v1592, %v1592
  %v1609 = vpack.c.b16 %v1593, %v1593
  %v1610 = vpack.c.b16 %v1594, %v1594
  %1627 = vst [vmem:[%s3] sm:$0xf] %v1595
  %1628 = vst [vmem:[%s3 + $0x4] sm:$0xf] %v1596
  %1629 = vst [vmem:[%s3 + $0x8] sm:$0xf] %v1597
  %1630 = vst [vmem:[%s3 + $0xc] sm:$0xf] %v1598
  %1631 = vst [vmem:[%s3 + $0x10] sm:$0xf] %v1599
  %1632 = vst [vmem:[%s3 + $0x14] sm:$0xf] %v1600
  %1633 = vst [vmem:[%s3 + $0x18] sm:$0xf] %v1601
  %1634 = vst [vmem:[%s3 + $0x1c] sm:$0xf] %v1602
  %1635 = vst [vmem:[%s3 + $0x20] sm:$0xf] %v1603
  %1636 = vst [vmem:[%s3 + $0x24] sm:$0xf] %v1604
  %1637 = vst [vmem:[%s3 + $0x28] sm:$0xf] %v1605
  %1638 = vst [vmem:[%s3 + $0x2c] sm:$0xf] %v1606
  %1639 = vst [vmem:[%s3 + $0x30] sm:$0xf] %v1607
  %1640 = vst [vmem:[%s3 + $0x34] sm:$0xf] %v1608
  %1641 = vst [vmem:[%s3 + $0x38] sm:$0xf] %v1609
  %1642 = vst [vmem:[%s3 + $0x3c] sm:$0xf] %v1610
  // Predicated region
  $region14: #{discriminator_forward.7} parent=0 // pred_check
    _
  $region15: #{discriminator_forward.7} parent=0 // pred_check_branch
    %1644 = sbr.rel (0) target = $region17
  $region16: #{discriminator_forward.7} parent=0 // pred_region
    _
  $region17: #{discriminator_forward.7} parent=0 // pred_fallthru
    _
  // Predicated region
  $region18: #{discriminator_forward.7} parent=0 // pred_check
    _
  $region19: #{discriminator_forward.7} parent=0 // pred_check_branch
    %1646 = sbr.rel (0) target = $region21
  $region20: #{discriminator_forward.7} parent=0 // pred_region
    _
  $region21: #{discriminator_forward.7} parent=0 // pred_fallthru
    _

// kernel: discriminator_forward.8
$region0: #{discriminator_forward.8}
  #allocation0 [shape = 'u32[]', space=smem, size = 0x4, offset = 0x4, fixed_abs, tag = 'smem constant byte address 0x4 - core index']
  #allocation1 [shape = 'u32[144,128]{1,0:T(1,128)}', space=vmem, size = 0x12000, scoped, tag = 'internal scratch']
  %s0 = inlined_call_operand.vmem [shape: bf16[32,1152], index: 0, kind: input, shape index: {}]
  %s1 = inlined_call_operand.vmem [shape: bf16[1152,256], index: 1, kind: input, shape index: {}]
  %s2 = inlined_call_operand.vmem [shape: f32[1,256], index: 2, kind: input, shape index: {}]
  %s3 = inlined_call_operand.vmem [shape: bf16[32,256], index: 3, kind: output, shape index: {}]
  %s4 = sld [smem:[#allocation0]]
  $region123: #{discriminator_forward.8} parent=0
    _
  %s6 = ssub.s32 1, %s4
  %s7 = scalar_select 0, %s6, %s4
  $region1: #{discriminator_forward.8} parent=0
    #allocation2 [shape = 'u8[589824]{0}', space=vmem, size = 0x90000, scoped, tag = 'input window, operand 1']
    #allocation3 [shape = 'u8[16384]{0}', space=vmem, size = 0x4000, scoped, tag = 'output window, operand 0']
    loop: start=0, step=1, limit=4
    $region2: #{discriminator_forward.8} parent=1 // loop_pre_header
      _
    $region3: #{discriminator_forward.8} parent=1 // loop_header
      %s9 = sphi 0, %s13
      %p10 = scmp.ge.s32.totalorder %s9, 4
      %s16 = sphi 0, %s28
      %s17 = sphi 0, %s24
      %s18 = sphi 0, %s16
      %s19 = sphi 0, %s17
      %s20 = sphi 0, %s18
      %s21 = sphi 0, %s19
      %s31 = sphi 0, %s33
      %s34 = sphi 0, %s31
      %s35 = sphi 0, %s34
      %s51 = sphi 0, %s35
      %s57 = sphi 0, %s59
      %s60 = sphi 0, %s57
      %s61 = sphi 0, %s60
      %s77 = sphi 0, %s61
      %s83 = sphi 0, %s85
      %s86 = sphi 0, %s83
      %s87 = sphi 0, %s86
      %s103 = sphi 0, %s87
      %s111 = sphi 0, %s113
      %s114 = sphi 0, %s111
      %s115 = sphi 0, %s114
      %s131 = sphi 0, %s115
    $region4: #{discriminator_forward.8} parent=1 // loop_header_branch
      %12 = sbr.rel (%p10) target = $region8
    $region5: #{discriminator_forward.8} parent=1 // loop_body
      %s14 = ssub.s32 %s9, 1
      %s15 = ssub.s32 %s9, 2
      %s22 = sadd.s32 1, %s17
      %p23 = scmp.ge.s32.totalorder %s22, 2
      %s24 = scalar_select %p23, 0, %s22
      %s25 = sadd.s32 1, %s16
      %s26 = scalar_select %p23, %s25, %s16
      %p27 = scmp.ge.s32.totalorder %s26, 1
      %s28 = scalar_select %p27, 0, %s26
      %s29 = ssub.s32 %s16, %s28
      %p30 = scmp.eq.s32.totalorder %s29, 0
      %s32 = sadd.s32 %s31, 1
      %s33 = scalar_select %p30, %s31, %s32
      %p36 = pneg %p30
      %p37 = scmp.eq.s32.totalorder %s9, 1
      %p38 = por %p36, %p37
      %p39 = scmp.ne.s32.totalorder %s31, %s34
      %p40 = scmp.eq.s32.totalorder %s9, 0
      %p41 = por %p39, %p40
      %p42 = scmp.ne.s32.totalorder %s31, %s34
      %p43 = scmp.eq.s32.totalorder %s14, 1
      %p44 = por %p42, %p43
      %p45 = scmp.ne.s32.totalorder %s34, %s35
      %p46 = scmp.eq.s32.totalorder %s14, 0
      %p47 = por %p45, %p46
      %p48 = scmp.ne.s32.totalorder %s34, %s35
      %p49 = scmp.eq.s32.totalorder %s15, 1
      %p50 = por %p48, %p49
      %p52 = scmp.ne.s32.totalorder %s35, %s51
      %p53 = scmp.eq.s32.totalorder %s15, 0
      %p54 = por %p52, %p53
      %s55 = ssub.s32 %s17, %s24
      %p56 = scmp.eq.s32.totalorder %s55, 0
      %s58 = sadd.s32 %s57, 1
      %s59 = scalar_select %p56, %s57, %s58
      %p62 = pneg %p56
      %p63 = scmp.eq.s32.totalorder %s9, 1
      %p64 = por %p62, %p63
      %p65 = scmp.ne.s32.totalorder %s57, %s60
      %p66 = scmp.eq.s32.totalorder %s9, 0
      %p67 = por %p65, %p66
      %p68 = scmp.ne.s32.totalorder %s57, %s60
      %p69 = scmp.eq.s32.totalorder %s14, 1
      %p70 = por %p68, %p69
      %p71 = scmp.ne.s32.totalorder %s60, %s61
      %p72 = scmp.eq.s32.totalorder %s14, 0
      %p73 = por %p71, %p72
      %p74 = scmp.ne.s32.totalorder %s60, %s61
      %p75 = scmp.eq.s32.totalorder %s15, 1
      %p76 = por %p74, %p75
      %p78 = scmp.ne.s32.totalorder %s61, %s77
      %p79 = scmp.eq.s32.totalorder %s15, 0
      %p80 = por %p78, %p79
      %s81 = ssub.s32 %s17, %s24
      %p82 = scmp.eq.s32.totalorder %s81, 0
      %s84 = sadd.s32 %s83, 1
      %s85 = scalar_select %p82, %s83, %s84
      %p88 = pneg %p82
      %p89 = scmp.eq.s32.totalorder %s9, 1
      %p90 = por %p88, %p89
      %p91 = scmp.ne.s32.totalorder %s83, %s86
      %p92 = scmp.eq.s32.totalorder %s9, 0
      %p93 = por %p91, %p92
      %p94 = scmp.ne.s32.totalorder %s83, %s86
      %p95 = scmp.eq.s32.totalorder %s14, 1
      %p96 = por %p94, %p95
      %p97 = scmp.ne.s32.totalorder %s86, %s87
      %p98 = scmp.eq.s32.totalorder %s14, 0
      %p99 = por %p97, %p98
      %p100 = scmp.ne.s32.totalorder %s86, %s87
      %p101 = scmp.eq.s32.totalorder %s15, 1
      %p102 = por %p100, %p101
      %p104 = scmp.ne.s32.totalorder %s87, %s103
      %p105 = scmp.eq.s32.totalorder %s15, 0
      %p106 = por %p104, %p105
      %s107 = ssub.s32 %s16, %s28
      %s108 = ssub.s32 %s17, %s24
      %s109 = sor.u32 %s107, %s108
      %p110 = scmp.eq.s32.totalorder %s109, 0
      %s112 = sadd.s32 %s111, 1
      %s113 = scalar_select %p110, %s111, %s112
      %p116 = pneg %p110
      %p117 = scmp.eq.s32.totalorder %s9, 1
      %p118 = por %p116, %p117
      %p119 = scmp.ne.s32.totalorder %s111, %s114
      %p120 = scmp.eq.s32.totalorder %s9, 0
      %p121 = por %p119, %p120
      %p122 = scmp.ne.s32.totalorder %s111, %s114
      %p123 = scmp.eq.s32.totalorder %s14, 1
      %p124 = por %p122, %p123
      %p125 = scmp.ne.s32.totalorder %s114, %s115
      %p126 = scmp.eq.s32.totalorder %s14, 0
      %p127 = por %p125, %p126
      %p128 = scmp.ne.s32.totalorder %s114, %s115
      %p129 = scmp.eq.s32.totalorder %s15, 1
      %p130 = por %p128, %p129
      %p132 = scmp.ne.s32.totalorder %s115, %s131
      %p133 = scmp.eq.s32.totalorder %s15, 0
      %p134 = por %p132, %p133
      %p135 = scmp.le.s32.totalorder 1, %s9
      %p136 = scmp.lt.s32.totalorder %s9, 3
      %p137 = pnand %p135, %p136
      %p138 = pneg %p137
      // Predicated region
      $region9: #{discriminator_forward.8} parent=5 // pred_check
        _
      $region10: #{discriminator_forward.8} parent=5 // pred_check_branch
        %140 = sbr.rel (%p137) target = $region12
      $region11: #{discriminator_forward.8} parent=5 // pred_region
        %s141 = ssub.s32 %s9, 1
        // Predicated region
        $region13: #{discriminator_forward.8} parent=11 // pred_check
          %p142 = pneg %p47
        $region14: #{discriminator_forward.8} parent=11 // pred_check_branch
          %144 = sbr.rel (%p142) target = $region16
        $region15: #{discriminator_forward.8} parent=11 // pred_region
          %s145 = smul.u32 4, %s18
          %p146 = scmp.lt.s32.totalorder %s145, 3
          %s147 = scalar_select %p146, %s145, 3
          %s148 = smul.addr %s147, 9
          %s149 = smul.addr %s148, 4
          %s150 = scalar_lea.vmem %s0, %s149
          %s151 = smul.u32 4, %s18
        $region16: #{discriminator_forward.8} parent=11 // pred_fallthru
          _
      $region12: #{discriminator_forward.8} parent=5 // pred_fallthru
        _
      %p152 = scmp.lt.s32.totalorder %s9, 2
      // Predicated region
      $region17: #{discriminator_forward.8} parent=5 // pred_check
        %p153 = pneg %p152
      $region18: #{discriminator_forward.8} parent=5 // pred_check_branch
        %155 = sbr.rel (%p153) target = $region20
      $region19: #{discriminator_forward.8} parent=5 // pred_region
        // Predicated region
        $region21: #{discriminator_forward.8} parent=19 // pred_check
          %p156 = pneg %p67
        $region22: #{discriminator_forward.8} parent=19 // pred_check_branch
          %158 = sbr.rel (%p156) target = $region24
        $region23: #{discriminator_forward.8} parent=19 // pred_region
          %s159 = sand.u32 %s57, 1
          %s160 = sand.u32 %s57, 1
          %s161 = smul.addr %s160, 576
          %s162 = scalar_lea.vmem [#allocation2], %s161
          %s163 = smul.addr %s17, 4
          %s164 = scalar_lea.vmem %s1, %s163
          // Predicated region
          $region25: #{discriminator_forward.8} parent=23 // pred_check
            _
          $region26: #{discriminator_forward.8} parent=23 // pred_check_branch
            %166 = sbr.rel (0) target = $region28
          $region27: #{discriminator_forward.8} parent=23 // pred_region
            // Predicated region
            $region29: #{discriminator_forward.8} parent=27 // pred_check
              _
            $region30: #{discriminator_forward.8} parent=27 // pred_check_branch
              %168 = sbr.rel target = $region32
            $region31: #{discriminator_forward.8} parent=27 // pred_region
              // Predicated region
              $region44: #{discriminator_forward.8} parent=31 // pred_check
                _
              $region45: #{discriminator_forward.8} parent=31 // pred_check_branch
                %470 = sbr.rel (0) target = $region47
              $region46: #{discriminator_forward.8} parent=31 // pred_region
                loop: start=0, step=1, limit=1
                $region48: #{discriminator_forward.8} parent=46 // loop_pre_header
                  _
                $region49: #{discriminator_forward.8} parent=46 // loop_header
                  %s472 = sphi 0, %s476
                  %p473 = scmp.ge.s32.totalorder %s472, 1
                  %s477 = sphi %s164, %s164
                  %s478 = sphi %s162, %s162
                $region50: #{discriminator_forward.8} parent=46 // loop_header_branch
                  %475 = sbr.rel (%p473) target = $region54
                $region51: #{discriminator_forward.8} parent=46 // loop_body
                  _
                $region52: #{discriminator_forward.8} parent=46 // loop_footer
                  %s476 = sadd.s32 1, %s472
                $region53: #{discriminator_forward.8} parent=46 // loop_footer_branch
                  %471 = sbr.rel target = $region49
                $region54: #{discriminator_forward.8} parent=46 // loop_exit
                  _
                %s480 = ssub.s32 16, 1
                loop: start=0, step=1, limit=1
                $region55: #{discriminator_forward.8} parent=46 // loop_pre_header
                  _
                $region56: #{discriminator_forward.8} parent=46 // loop_header
                  %s482 = sphi 0, %s486
                  %p483 = scmp.ge.s32.totalorder %s482, 1
                  %s487 = sphi %s164, %s164
                  %s488 = sphi %s162, %s162
                $region57: #{discriminator_forward.8} parent=46 // loop_header_branch
                  %485 = sbr.rel (%p483) target = $region61
                $region58: #{discriminator_forward.8} parent=46 // loop_body
                  %v489 = vld [vmem:[%s487] sm:%s480]
                  %490 = vst [vmem:[%s488] sm:%s480] %v489
                  %v491 = vld [vmem:[%s487 + $0x8] sm:%s480]
                  %492 = vst [vmem:[%s488 + $0x4] sm:%s480] %v491
                  %v493 = vld [vmem:[%s487 + $0x10] sm:%s480]
                  %494 = vst [vmem:[%s488 + $0x8] sm:%s480] %v493
                  %v495 = vld [vmem:[%s487 + $0x18] sm:%s480]
                  %496 = vst [vmem:[%s488 + $0xc] sm:%s480] %v495
                  %v497 = vld [vmem:[%s487 + $0x20] sm:%s480]
                  %498 = vst [vmem:[%s488 + $0x10] sm:%s480] %v497
                  %v499 = vld [vmem:[%s487 + $0x28] sm:%s480]
                  %500 = vst [vmem:[%s488 + $0x14] sm:%s480] %v499
                  %v501 = vld [vmem:[%s487 + $0x30] sm:%s480]
                  %502 = vst [vmem:[%s488 + $0x18] sm:%s480] %v501
                  %v503 = vld [vmem:[%s487 + $0x38] sm:%s480]
                  %504 = vst [vmem:[%s488 + $0x1c] sm:%s480] %v503
                  %v505 = vld [vmem:[%s487 + $0x40] sm:%s480]
                  %506 = vst [vmem:[%s488 + $0x20] sm:%s480] %v505
                  %v507 = vld [vmem:[%s487 + $0x48] sm:%s480]
                  %508 = vst [vmem:[%s488 + $0x24] sm:%s480] %v507
                  %v509 = vld [vmem:[%s487 + $0x50] sm:%s480]
                  %510 = vst [vmem:[%s488 + $0x28] sm:%s480] %v509
                  %v511 = vld [vmem:[%s487 + $0x58] sm:%s480]
                  %512 = vst [vmem:[%s488 + $0x2c] sm:%s480] %v511
                  %v513 = vld [vmem:[%s487 + $0x60] sm:%s480]
                  %514 = vst [vmem:[%s488 + $0x30] sm:%s480] %v513
                  %v515 = vld [vmem:[%s487 + $0x68] sm:%s480]
                  %516 = vst [vmem:[%s488 + $0x34] sm:%s480] %v515
                  %v517 = vld [vmem:[%s487 + $0x70] sm:%s480]
                  %518 = vst [vmem:[%s488 + $0x38] sm:%s480] %v517
                  %v519 = vld [vmem:[%s487 + $0x78] sm:%s480]
                  %520 = vst [vmem:[%s488 + $0x3c] sm:%s480] %v519
                  %v521 = vld [vmem:[%s487 + $0x80] sm:%s480]
                  %522 = vst [vmem:[%s488 + $0x40] sm:%s480] %v521
                  %v523 = vld [vmem:[%s487 + $0x88] sm:%s480]
                  %524 = vst [vmem:[%s488 + $0x44] sm:%s480] %v523
                  %v525 = vld [vmem:[%s487 + $0x90] sm:%s480]
                  %526 = vst [vmem:[%s488 + $0x48] sm:%s480] %v525
                  %v527 = vld [vmem:[%s487 + $0x98] sm:%s480]
                  %528 = vst [vmem:[%s488 + $0x4c] sm:%s480] %v527
                  %v529 = vld [vmem:[%s487 + $0xa0] sm:%s480]
                  %530 = vst [vmem:[%s488 + $0x50] sm:%s480] %v529
                  %v531 = vld [vmem:[%s487 + $0xa8] sm:%s480]
                  %532 = vst [vmem:[%s488 + $0x54] sm:%s480] %v531
                  %v533 = vld [vmem:[%s487 + $0xb0] sm:%s480]
                  %534 = vst [vmem:[%s488 + $0x58] sm:%s480] %v533
                  %v535 = vld [vmem:[%s487 + $0xb8] sm:%s480]
                  %536 = vst [vmem:[%s488 + $0x5c] sm:%s480] %v535
                  %v537 = vld [vmem:[%s487 + $0xc0] sm:%s480]
                  %538 = vst [vmem:[%s488 + $0x60] sm:%s480] %v537
                  %v539 = vld [vmem:[%s487 + $0xc8] sm:%s480]
                  %540 = vst [vmem:[%s488 + $0x64] sm:%s480] %v539
                  %v541 = vld [vmem:[%s487 + $0xd0] sm:%s480]
                  %542 = vst [vmem:[%s488 + $0x68] sm:%s480] %v541
                  %v543 = vld [vmem:[%s487 + $0xd8] sm:%s480]
                  %544 = vst [vmem:[%s488 + $0x6c] sm:%s480] %v543
                  %v545 = vld [vmem:[%s487 + $0xe0] sm:%s480]
                  %546 = vst [vmem:[%s488 + $0x70] sm:%s480] %v545
                  %v547 = vld [vmem:[%s487 + $0xe8] sm:%s480]
                  %548 = vst [vmem:[%s488 + $0x74] sm:%s480] %v547
                  %v549 = vld [vmem:[%s487 + $0xf0] sm:%s480]
                  %550 = vst [vmem:[%s488 + $0x78] sm:%s480] %v549
                  %v551 = vld [vmem:[%s487 + $0xf8] sm:%s480]
                  %552 = vst [vmem:[%s488 + $0x7c] sm:%s480] %v551
                  %v553 = vld [vmem:[%s487 + $0x100] sm:%s480]
                  %554 = vst [vmem:[%s488 + $0x80] sm:%s480] %v553
                  %v555 = vld [vmem:[%s487 + $0x108] sm:%s480]
                  %556 = vst [vmem:[%s488 + $0x84] sm:%s480] %v555
                  %v557 = vld [vmem:[%s487 + $0x110] sm:%s480]
                  %558 = vst [vmem:[%s488 + $0x88] sm:%s480] %v557
                  %v559 = vld [vmem:[%s487 + $0x118] sm:%s480]
                  %560 = vst [vmem:[%s488 + $0x8c] sm:%s480] %v559
                  %v561 = vld [vmem:[%s487 + $0x120] sm:%s480]
                  %562 = vst [vmem:[%s488 + $0x90] sm:%s480] %v561
                  %v563 = vld [vmem:[%s487 + $0x128] sm:%s480]
                  %564 = vst [vmem:[%s488 + $0x94] sm:%s480] %v563
                  %v565 = vld [vmem:[%s487 + $0x130] sm:%s480]
                  %566 = vst [vmem:[%s488 + $0x98] sm:%s480] %v565
                  %v567 = vld [vmem:[%s487 + $0x138] sm:%s480]
                  %568 = vst [vmem:[%s488 + $0x9c] sm:%s480] %v567
                  %v569 = vld [vmem:[%s487 + $0x140] sm:%s480]
                  %570 = vst [vmem:[%s488 + $0xa0] sm:%s480] %v569
                  %v571 = vld [vmem:[%s487 + $0x148] sm:%s480]
                  %572 = vst [vmem:[%s488 + $0xa4] sm:%s480] %v571
                  %v573 = vld [vmem:[%s487 + $0x150] sm:%s480]
                  %574 = vst [vmem:[%s488 + $0xa8] sm:%s480] %v573
                  %v575 = vld [vmem:[%s487 + $0x158] sm:%s480]
                  %576 = vst [vmem:[%s488 + $0xac] sm:%s480] %v575
                  %v577 = vld [vmem:[%s487 + $0x160] sm:%s480]
                  %578 = vst [vmem:[%s488 + $0xb0] sm:%s480] %v577
                  %v579 = vld [vmem:[%s487 + $0x168] sm:%s480]
                  %580 = vst [vmem:[%s488 + $0xb4] sm:%s480] %v579
                  %v581 = vld [vmem:[%s487 + $0x170] sm:%s480]
                  %582 = vst [vmem:[%s488 + $0xb8] sm:%s480] %v581
                  %v583 = vld [vmem:[%s487 + $0x178] sm:%s480]
                  %584 = vst [vmem:[%s488 + $0xbc] sm:%s480] %v583
                  %v585 = vld [vmem:[%s487 + $0x180] sm:%s480]
                  %586 = vst [vmem:[%s488 + $0xc0] sm:%s480] %v585
                  %v587 = vld [vmem:[%s487 + $0x188] sm:%s480]
                  %588 = vst [vmem:[%s488 + $0xc4] sm:%s480] %v587
                  %v589 = vld [vmem:[%s487 + $0x190] sm:%s480]
                  %590 = vst [vmem:[%s488 + $0xc8] sm:%s480] %v589
                  %v591 = vld [vmem:[%s487 + $0x198] sm:%s480]
                  %592 = vst [vmem:[%s488 + $0xcc] sm:%s480] %v591
                  %v593 = vld [vmem:[%s487 + $0x1a0] sm:%s480]
                  %594 = vst [vmem:[%s488 + $0xd0] sm:%s480] %v593
                  %v595 = vld [vmem:[%s487 + $0x1a8] sm:%s480]
                  %596 = vst [vmem:[%s488 + $0xd4] sm:%s480] %v595
                  %v597 = vld [vmem:[%s487 + $0x1b0] sm:%s480]
                  %598 = vst [vmem:[%s488 + $0xd8] sm:%s480] %v597
                  %v599 = vld [vmem:[%s487 + $0x1b8] sm:%s480]
                  %600 = vst [vmem:[%s488 + $0xdc] sm:%s480] %v599
                  %v601 = vld [vmem:[%s487 + $0x1c0] sm:%s480]
                  %602 = vst [vmem:[%s488 + $0xe0] sm:%s480] %v601
                  %v603 = vld [vmem:[%s487 + $0x1c8] sm:%s480]
                  %604 = vst [vmem:[%s488 + $0xe4] sm:%s480] %v603
                  %v605 = vld [vmem:[%s487 + $0x1d0] sm:%s480]
                  %606 = vst [vmem:[%s488 + $0xe8] sm:%s480] %v605
                  %v607 = vld [vmem:[%s487 + $0x1d8] sm:%s480]
                  %608 = vst [vmem:[%s488 + $0xec] sm:%s480] %v607
                  %v609 = vld [vmem:[%s487 + $0x1e0] sm:%s480]
                  %610 = vst [vmem:[%s488 + $0xf0] sm:%s480] %v609
                  %v611 = vld [vmem:[%s487 + $0x1e8] sm:%s480]
                  %612 = vst [vmem:[%s488 + $0xf4] sm:%s480] %v611
                  %v613 = vld [vmem:[%s487 + $0x1f0] sm:%s480]
                  %614 = vst [vmem:[%s488 + $0xf8] sm:%s480] %v613
                  %v615 = vld [vmem:[%s487 + $0x1f8] sm:%s480]
                  %616 = vst [vmem:[%s488 + $0xfc] sm:%s480] %v615
                  %v617 = vld [vmem:[%s487 + $0x200] sm:%s480]
                  %618 = vst [vmem:[%s488 + $0x100] sm:%s480] %v617
                  %v619 = vld [vmem:[%s487 + $0x208] sm:%s480]
                  %620 = vst [vmem:[%s488 + $0x104] sm:%s480] %v619
                  %v621 = vld [vmem:[%s487 + $0x210] sm:%s480]
                  %622 = vst [vmem:[%s488 + $0x108] sm:%s480] %v621
                  %v623 = vld [vmem:[%s487 + $0x218] sm:%s480]
                  %624 = vst [vmem:[%s488 + $0x10c] sm:%s480] %v623
                  %v625 = vld [vmem:[%s487 + $0x220] sm:%s480]
                  %626 = vst [vmem:[%s488 + $0x110] sm:%s480] %v625
                  %v627 = vld [vmem:[%s487 + $0x228] sm:%s480]
                  %628 = vst [vmem:[%s488 + $0x114] sm:%s480] %v627
                  %v629 = vld [vmem:[%s487 + $0x230] sm:%s480]
                  %630 = vst [vmem:[%s488 + $0x118] sm:%s480] %v629
                  %v631 = vld [vmem:[%s487 + $0x238] sm:%s480]
                  %632 = vst [vmem:[%s488 + $0x11c] sm:%s480] %v631
                  %v633 = vld [vmem:[%s487 + $0x240] sm:%s480]
                  %634 = vst [vmem:[%s488 + $0x120] sm:%s480] %v633
                  %v635 = vld [vmem:[%s487 + $0x248] sm:%s480]
                  %636 = vst [vmem:[%s488 + $0x124] sm:%s480] %v635
                  %v637 = vld [vmem:[%s487 + $0x250] sm:%s480]
                  %638 = vst [vmem:[%s488 + $0x128] sm:%s480] %v637
                  %v639 = vld [vmem:[%s487 + $0x258] sm:%s480]
                  %640 = vst [vmem:[%s488 + $0x12c] sm:%s480] %v639
                  %v641 = vld [vmem:[%s487 + $0x260] sm:%s480]
                  %642 = vst [vmem:[%s488 + $0x130] sm:%s480] %v641
                  %v643 = vld [vmem:[%s487 + $0x268] sm:%s480]
                  %644 = vst [vmem:[%s488 + $0x134] sm:%s480] %v643
                  %v645 = vld [vmem:[%s487 + $0x270] sm:%s480]
                  %646 = vst [vmem:[%s488 + $0x138] sm:%s480] %v645
                  %v647 = vld [vmem:[%s487 + $0x278] sm:%s480]
                  %648 = vst [vmem:[%s488 + $0x13c] sm:%s480] %v647
                  %v649 = vld [vmem:[%s487 + $0x280] sm:%s480]
                  %650 = vst [vmem:[%s488 + $0x140] sm:%s480] %v649
                  %v651 = vld [vmem:[%s487 + $0x288] sm:%s480]
                  %652 = vst [vmem:[%s488 + $0x144] sm:%s480] %v651
                  %v653 = vld [vmem:[%s487 + $0x290] sm:%s480]
                  %654 = vst [vmem:[%s488 + $0x148] sm:%s480] %v653
                  %v655 = vld [vmem:[%s487 + $0x298] sm:%s480]
                  %656 = vst [vmem:[%s488 + $0x14c] sm:%s480] %v655
                  %v657 = vld [vmem:[%s487 + $0x2a0] sm:%s480]
                  %658 = vst [vmem:[%s488 + $0x150] sm:%s480] %v657
                  %v659 = vld [vmem:[%s487 + $0x2a8] sm:%s480]
                  %660 = vst [vmem:[%s488 + $0x154] sm:%s480] %v659
                  %v661 = vld [vmem:[%s487 + $0x2b0] sm:%s480]
                  %662 = vst [vmem:[%s488 + $0x158] sm:%s480] %v661
                  %v663 = vld [vmem:[%s487 + $0x2b8] sm:%s480]
                  %664 = vst [vmem:[%s488 + $0x15c] sm:%s480] %v663
                  %v665 = vld [vmem:[%s487 + $0x2c0] sm:%s480]
                  %666 = vst [vmem:[%s488 + $0x160] sm:%s480] %v665
                  %v667 = vld [vmem:[%s487 + $0x2c8] sm:%s480]
                  %668 = vst [vmem:[%s488 + $0x164] sm:%s480] %v667
                  %v669 = vld [vmem:[%s487 + $0x2d0] sm:%s480]
                  %670 = vst [vmem:[%s488 + $0x168] sm:%s480] %v669
                  %v671 = vld [vmem:[%s487 + $0x2d8] sm:%s480]
                  %672 = vst [vmem:[%s488 + $0x16c] sm:%s480] %v671
                  %v673 = vld [vmem:[%s487 + $0x2e0] sm:%s480]
                  %674 = vst [vmem:[%s488 + $0x170] sm:%s480] %v673
                  %v675 = vld [vmem:[%s487 + $0x2e8] sm:%s480]
                  %676 = vst [vmem:[%s488 + $0x174] sm:%s480] %v675
                  %v677 = vld [vmem:[%s487 + $0x2f0] sm:%s480]
                  %678 = vst [vmem:[%s488 + $0x178] sm:%s480] %v677
                  %v679 = vld [vmem:[%s487 + $0x2f8] sm:%s480]
                  %680 = vst [vmem:[%s488 + $0x17c] sm:%s480] %v679
                  %v681 = vld [vmem:[%s487 + $0x300] sm:%s480]
                  %682 = vst [vmem:[%s488 + $0x180] sm:%s480] %v681
                  %v683 = vld [vmem:[%s487 + $0x308] sm:%s480]
                  %684 = vst [vmem:[%s488 + $0x184] sm:%s480] %v683
                  %v685 = vld [vmem:[%s487 + $0x310] sm:%s480]
                  %686 = vst [vmem:[%s488 + $0x188] sm:%s480] %v685
                  %v687 = vld [vmem:[%s487 + $0x318] sm:%s480]
                  %688 = vst [vmem:[%s488 + $0x18c] sm:%s480] %v687
                  %v689 = vld [vmem:[%s487 + $0x320] sm:%s480]
                  %690 = vst [vmem:[%s488 + $0x190] sm:%s480] %v689
                  %v691 = vld [vmem:[%s487 + $0x328] sm:%s480]
                  %692 = vst [vmem:[%s488 + $0x194] sm:%s480] %v691
                  %v693 = vld [vmem:[%s487 + $0x330] sm:%s480]
                  %694 = vst [vmem:[%s488 + $0x198] sm:%s480] %v693
                  %v695 = vld [vmem:[%s487 + $0x338] sm:%s480]
                  %696 = vst [vmem:[%s488 + $0x19c] sm:%s480] %v695
                  %v697 = vld [vmem:[%s487 + $0x340] sm:%s480]
                  %698 = vst [vmem:[%s488 + $0x1a0] sm:%s480] %v697
                  %v699 = vld [vmem:[%s487 + $0x348] sm:%s480]
                  %700 = vst [vmem:[%s488 + $0x1a4] sm:%s480] %v699
                  %v701 = vld [vmem:[%s487 + $0x350] sm:%s480]
                  %702 = vst [vmem:[%s488 + $0x1a8] sm:%s480] %v701
                  %v703 = vld [vmem:[%s487 + $0x358] sm:%s480]
                  %704 = vst [vmem:[%s488 + $0x1ac] sm:%s480] %v703
                  %v705 = vld [vmem:[%s487 + $0x360] sm:%s480]
                  %706 = vst [vmem:[%s488 + $0x1b0] sm:%s480] %v705
                  %v707 = vld [vmem:[%s487 + $0x368] sm:%s480]
                  %708 = vst [vmem:[%s488 + $0x1b4] sm:%s480] %v707
                  %v709 = vld [vmem:[%s487 + $0x370] sm:%s480]
                  %710 = vst [vmem:[%s488 + $0x1b8] sm:%s480] %v709
                  %v711 = vld [vmem:[%s487 + $0x378] sm:%s480]
                  %712 = vst [vmem:[%s488 + $0x1bc] sm:%s480] %v711
                  %v713 = vld [vmem:[%s487 + $0x380] sm:%s480]
                  %714 = vst [vmem:[%s488 + $0x1c0] sm:%s480] %v713
                  %v715 = vld [vmem:[%s487 + $0x388] sm:%s480]
                  %716 = vst [vmem:[%s488 + $0x1c4] sm:%s480] %v715
                  %v717 = vld [vmem:[%s487 + $0x390] sm:%s480]
                  %718 = vst [vmem:[%s488 + $0x1c8] sm:%s480] %v717
                  %v719 = vld [vmem:[%s487 + $0x398] sm:%s480]
                  %720 = vst [vmem:[%s488 + $0x1cc] sm:%s480] %v719
                  %v721 = vld [vmem:[%s487 + $0x3a0] sm:%s480]
                  %722 = vst [vmem:[%s488 + $0x1d0] sm:%s480] %v721
                  %v723 = vld [vmem:[%s487 + $0x3a8] sm:%s480]
                  %724 = vst [vmem:[%s488 + $0x1d4] sm:%s480] %v723
                  %v725 = vld [vmem:[%s487 + $0x3b0] sm:%s480]
                  %726 = vst [vmem:[%s488 + $0x1d8] sm:%s480] %v725
                  %v727 = vld [vmem:[%s487 + $0x3b8] sm:%s480]
                  %728 = vst [vmem:[%s488 + $0x1dc] sm:%s480] %v727
                  %v729 = vld [vmem:[%s487 + $0x3c0] sm:%s480]
                  %730 = vst [vmem:[%s488 + $0x1e0] sm:%s480] %v729
                  %v731 = vld [vmem:[%s487 + $0x3c8] sm:%s480]
                  %732 = vst [vmem:[%s488 + $0x1e4] sm:%s480] %v731
                  %v733 = vld [vmem:[%s487 + $0x3d0] sm:%s480]
                  %734 = vst [vmem:[%s488 + $0x1e8] sm:%s480] %v733
                  %v735 = vld [vmem:[%s487 + $0x3d8] sm:%s480]
                  %736 = vst [vmem:[%s488 + $0x1ec] sm:%s480] %v735
                  %v737 = vld [vmem:[%s487 + $0x3e0] sm:%s480]
                  %738 = vst [vmem:[%s488 + $0x1f0] sm:%s480] %v737
                  %v739 = vld [vmem:[%s487 + $0x3e8] sm:%s480]
                  %740 = vst [vmem:[%s488 + $0x1f4] sm:%s480] %v739
                  %v741 = vld [vmem:[%s487 + $0x3f0] sm:%s480]
                  %742 = vst [vmem:[%s488 + $0x1f8] sm:%s480] %v741
                  %v743 = vld [vmem:[%s487 + $0x3f8] sm:%s480]
                  %744 = vst [vmem:[%s488 + $0x1fc] sm:%s480] %v743
                  %v745 = vld [vmem:[%s487 + $0x400] sm:%s480]
                  %746 = vst [vmem:[%s488 + $0x200] sm:%s480] %v745
                  %v747 = vld [vmem:[%s487 + $0x408] sm:%s480]
                  %748 = vst [vmem:[%s488 + $0x204] sm:%s480] %v747
                  %v749 = vld [vmem:[%s487 + $0x410] sm:%s480]
                  %750 = vst [vmem:[%s488 + $0x208] sm:%s480] %v749
                  %v751 = vld [vmem:[%s487 + $0x418] sm:%s480]
                  %752 = vst [vmem:[%s488 + $0x20c] sm:%s480] %v751
                  %v753 = vld [vmem:[%s487 + $0x420] sm:%s480]
                  %754 = vst [vmem:[%s488 + $0x210] sm:%s480] %v753
                  %v755 = vld [vmem:[%s487 + $0x428] sm:%s480]
                  %756 = vst [vmem:[%s488 + $0x214] sm:%s480] %v755
                  %v757 = vld [vmem:[%s487 + $0x430] sm:%s480]
                  %758 = vst [vmem:[%s488 + $0x218] sm:%s480] %v757
                  %v759 = vld [vmem:[%s487 + $0x438] sm:%s480]
                  %760 = vst [vmem:[%s488 + $0x21c] sm:%s480] %v759
                  %v761 = vld [vmem:[%s487 + $0x440] sm:%s480]
                  %762 = vst [vmem:[%s488 + $0x220] sm:%s480] %v761
                  %v763 = vld [vmem:[%s487 + $0x448] sm:%s480]
                  %764 = vst [vmem:[%s488 + $0x224] sm:%s480] %v763
                  %v765 = vld [vmem:[%s487 + $0x450] sm:%s480]
                  %766 = vst [vmem:[%s488 + $0x228] sm:%s480] %v765
                  %v767 = vld [vmem:[%s487 + $0x458] sm:%s480]
                  %768 = vst [vmem:[%s488 + $0x22c] sm:%s480] %v767
                  %v769 = vld [vmem:[%s487 + $0x460] sm:%s480]
                  %770 = vst [vmem:[%s488 + $0x230] sm:%s480] %v769
                  %v771 = vld [vmem:[%s487 + $0x468] sm:%s480]
                  %772 = vst [vmem:[%s488 + $0x234] sm:%s480] %v771
                  %v773 = vld [vmem:[%s487 + $0x470] sm:%s480]
                  %774 = vst [vmem:[%s488 + $0x238] sm:%s480] %v773
                  %v775 = vld [vmem:[%s487 + $0x478] sm:%s480]
                  %776 = vst [vmem:[%s488 + $0x23c] sm:%s480] %v775
                $region59: #{discriminator_forward.8} parent=46 // loop_footer
                  %s486 = sadd.s32 1, %s482
                $region60: #{discriminator_forward.8} parent=46 // loop_footer_branch
                  %481 = sbr.rel target = $region56
                $region61: #{discriminator_forward.8} parent=46 // loop_exit
                  _
              $region47: #{discriminator_forward.8} parent=31 // pred_fallthru
                _
            $region32: #{discriminator_forward.8} parent=27 // pred_fallthru
              _
            // Predicated region
            $region33: #{discriminator_forward.8} parent=27 // pred_check
              _
            $region34: #{discriminator_forward.8} parent=27 // pred_check_branch
              %170 = sbr.rel (0) target = $region36
            $region35: #{discriminator_forward.8} parent=27 // pred_region
              %s172 = ssub.s32 16, 1
              loop: start=0, step=1, limit=1
              $region37: #{discriminator_forward.8} parent=35 // loop_pre_header
                _
              $region38: #{discriminator_forward.8} parent=35 // loop_header
                %s174 = sphi 0, %s178
                %p175 = scmp.ge.s32.totalorder %s174, 1
                %s179 = sphi %s164, %s164
                %s180 = sphi %s162, %s162
              $region39: #{discriminator_forward.8} parent=35 // loop_header_branch
                %177 = sbr.rel (%p175) target = $region43
              $region40: #{discriminator_forward.8} parent=35 // loop_body
                %v181 = vld [vmem:[%s179] sm:%s172]
                %182 = vst [vmem:[%s180] sm:%s172] %v181
                %v183 = vld [vmem:[%s179 + $0x8] sm:%s172]
                %184 = vst [vmem:[%s180 + $0x4] sm:%s172] %v183
                %v185 = vld [vmem:[%s179 + $0x10] sm:%s172]
                %186 = vst [vmem:[%s180 + $0x8] sm:%s172] %v185
                %v187 = vld [vmem:[%s179 + $0x18] sm:%s172]
                %188 = vst [vmem:[%s180 + $0xc] sm:%s172] %v187
                %v189 = vld [vmem:[%s179 + $0x20] sm:%s172]
                %190 = vst [vmem:[%s180 + $0x10] sm:%s172] %v189
                %v191 = vld [vmem:[%s179 + $0x28] sm:%s172]
                %192 = vst [vmem:[%s180 + $0x14] sm:%s172] %v191
                %v193 = vld [vmem:[%s179 + $0x30] sm:%s172]
                %194 = vst [vmem:[%s180 + $0x18] sm:%s172] %v193
                %v195 = vld [vmem:[%s179 + $0x38] sm:%s172]
                %196 = vst [vmem:[%s180 + $0x1c] sm:%s172] %v195
                %v197 = vld [vmem:[%s179 + $0x40] sm:%s172]
                %198 = vst [vmem:[%s180 + $0x20] sm:%s172] %v197
                %v199 = vld [vmem:[%s179 + $0x48] sm:%s172]
                %200 = vst [vmem:[%s180 + $0x24] sm:%s172] %v199
                %v201 = vld [vmem:[%s179 + $0x50] sm:%s172]
                %202 = vst [vmem:[%s180 + $0x28] sm:%s172] %v201
                %v203 = vld [vmem:[%s179 + $0x58] sm:%s172]
                %204 = vst [vmem:[%s180 + $0x2c] sm:%s172] %v203
                %v205 = vld [vmem:[%s179 + $0x60] sm:%s172]
                %206 = vst [vmem:[%s180 + $0x30] sm:%s172] %v205
                %v207 = vld [vmem:[%s179 + $0x68] sm:%s172]
                %208 = vst [vmem:[%s180 + $0x34] sm:%s172] %v207
                %v209 = vld [vmem:[%s179 + $0x70] sm:%s172]
                %210 = vst [vmem:[%s180 + $0x38] sm:%s172] %v209
                %v211 = vld [vmem:[%s179 + $0x78] sm:%s172]
                %212 = vst [vmem:[%s180 + $0x3c] sm:%s172] %v211
                %v213 = vld [vmem:[%s179 + $0x80] sm:%s172]
                %214 = vst [vmem:[%s180 + $0x40] sm:%s172] %v213
                %v215 = vld [vmem:[%s179 + $0x88] sm:%s172]
                %216 = vst [vmem:[%s180 + $0x44] sm:%s172] %v215
                %v217 = vld [vmem:[%s179 + $0x90] sm:%s172]
                %218 = vst [vmem:[%s180 + $0x48] sm:%s172] %v217
                %v219 = vld [vmem:[%s179 + $0x98] sm:%s172]
                %220 = vst [vmem:[%s180 + $0x4c] sm:%s172] %v219
                %v221 = vld [vmem:[%s179 + $0xa0] sm:%s172]
                %222 = vst [vmem:[%s180 + $0x50] sm:%s172] %v221
                %v223 = vld [vmem:[%s179 + $0xa8] sm:%s172]
                %224 = vst [vmem:[%s180 + $0x54] sm:%s172] %v223
                %v225 = vld [vmem:[%s179 + $0xb0] sm:%s172]
                %226 = vst [vmem:[%s180 + $0x58] sm:%s172] %v225
                %v227 = vld [vmem:[%s179 + $0xb8] sm:%s172]
                %228 = vst [vmem:[%s180 + $0x5c] sm:%s172] %v227
                %v229 = vld [vmem:[%s179 + $0xc0] sm:%s172]
                %230 = vst [vmem:[%s180 + $0x60] sm:%s172] %v229
                %v231 = vld [vmem:[%s179 + $0xc8] sm:%s172]
                %232 = vst [vmem:[%s180 + $0x64] sm:%s172] %v231
                %v233 = vld [vmem:[%s179 + $0xd0] sm:%s172]
                %234 = vst [vmem:[%s180 + $0x68] sm:%s172] %v233
                %v235 = vld [vmem:[%s179 + $0xd8] sm:%s172]
                %236 = vst [vmem:[%s180 + $0x6c] sm:%s172] %v235
                %v237 = vld [vmem:[%s179 + $0xe0] sm:%s172]
                %238 = vst [vmem:[%s180 + $0x70] sm:%s172] %v237
                %v239 = vld [vmem:[%s179 + $0xe8] sm:%s172]
                %240 = vst [vmem:[%s180 + $0x74] sm:%s172] %v239
                %v241 = vld [vmem:[%s179 + $0xf0] sm:%s172]
                %242 = vst [vmem:[%s180 + $0x78] sm:%s172] %v241
                %v243 = vld [vmem:[%s179 + $0xf8] sm:%s172]
                %244 = vst [vmem:[%s180 + $0x7c] sm:%s172] %v243
                %v245 = vld [vmem:[%s179 + $0x100] sm:%s172]
                %246 = vst [vmem:[%s180 + $0x80] sm:%s172] %v245
                %v247 = vld [vmem:[%s179 + $0x108] sm:%s172]
                %248 = vst [vmem:[%s180 + $0x84] sm:%s172] %v247
                %v249 = vld [vmem:[%s179 + $0x110] sm:%s172]
                %250 = vst [vmem:[%s180 + $0x88] sm:%s172] %v249
                %v251 = vld [vmem:[%s179 + $0x118] sm:%s172]
                %252 = vst [vmem:[%s180 + $0x8c] sm:%s172] %v251
                %v253 = vld [vmem:[%s179 + $0x120] sm:%s172]
                %254 = vst [vmem:[%s180 + $0x90] sm:%s172] %v253
                %v255 = vld [vmem:[%s179 + $0x128] sm:%s172]
                %256 = vst [vmem:[%s180 + $0x94] sm:%s172] %v255
                %v257 = vld [vmem:[%s179 + $0x130] sm:%s172]
                %258 = vst [vmem:[%s180 + $0x98] sm:%s172] %v257
                %v259 = vld [vmem:[%s179 + $0x138] sm:%s172]
                %260 = vst [vmem:[%s180 + $0x9c] sm:%s172] %v259
                %v261 = vld [vmem:[%s179 + $0x140] sm:%s172]
                %262 = vst [vmem:[%s180 + $0xa0] sm:%s172] %v261
                %v263 = vld [vmem:[%s179 + $0x148] sm:%s172]
                %264 = vst [vmem:[%s180 + $0xa4] sm:%s172] %v263
                %v265 = vld [vmem:[%s179 + $0x150] sm:%s172]
                %266 = vst [vmem:[%s180 + $0xa8] sm:%s172] %v265
                %v267 = vld [vmem:[%s179 + $0x158] sm:%s172]
                %268 = vst [vmem:[%s180 + $0xac] sm:%s172] %v267
                %v269 = vld [vmem:[%s179 + $0x160] sm:%s172]
                %270 = vst [vmem:[%s180 + $0xb0] sm:%s172] %v269
                %v271 = vld [vmem:[%s179 + $0x168] sm:%s172]
                %272 = vst [vmem:[%s180 + $0xb4] sm:%s172] %v271
                %v273 = vld [vmem:[%s179 + $0x170] sm:%s172]
                %274 = vst [vmem:[%s180 + $0xb8] sm:%s172] %v273
                %v275 = vld [vmem:[%s179 + $0x178] sm:%s172]
                %276 = vst [vmem:[%s180 + $0xbc] sm:%s172] %v275
                %v277 = vld [vmem:[%s179 + $0x180] sm:%s172]
                %278 = vst [vmem:[%s180 + $0xc0] sm:%s172] %v277
                %v279 = vld [vmem:[%s179 + $0x188] sm:%s172]
                %280 = vst [vmem:[%s180 + $0xc4] sm:%s172] %v279
                %v281 = vld [vmem:[%s179 + $0x190] sm:%s172]
                %282 = vst [vmem:[%s180 + $0xc8] sm:%s172] %v281
                %v283 = vld [vmem:[%s179 + $0x198] sm:%s172]
                %284 = vst [vmem:[%s180 + $0xcc] sm:%s172] %v283
                %v285 = vld [vmem:[%s179 + $0x1a0] sm:%s172]
                %286 = vst [vmem:[%s180 + $0xd0] sm:%s172] %v285
                %v287 = vld [vmem:[%s179 + $0x1a8] sm:%s172]
                %288 = vst [vmem:[%s180 + $0xd4] sm:%s172] %v287
                %v289 = vld [vmem:[%s179 + $0x1b0] sm:%s172]
                %290 = vst [vmem:[%s180 + $0xd8] sm:%s172] %v289
                %v291 = vld [vmem:[%s179 + $0x1b8] sm:%s172]
                %292 = vst [vmem:[%s180 + $0xdc] sm:%s172] %v291
                %v293 = vld [vmem:[%s179 + $0x1c0] sm:%s172]
                %294 = vst [vmem:[%s180 + $0xe0] sm:%s172] %v293
                %v295 = vld [vmem:[%s179 + $0x1c8] sm:%s172]
                %296 = vst [vmem:[%s180 + $0xe4] sm:%s172] %v295
                %v297 = vld [vmem:[%s179 + $0x1d0] sm:%s172]
                %298 = vst [vmem:[%s180 + $0xe8] sm:%s172] %v297
                %v299 = vld [vmem:[%s179 + $0x1d8] sm:%s172]
                %300 = vst [vmem:[%s180 + $0xec] sm:%s172] %v299
                %v301 = vld [vmem:[%s179 + $0x1e0] sm:%s172]
                %302 = vst [vmem:[%s180 + $0xf0] sm:%s172] %v301
                %v303 = vld [vmem:[%s179 + $0x1e8] sm:%s172]
                %304 = vst [vmem:[%s180 + $0xf4] sm:%s172] %v303
                %v305 = vld [vmem:[%s179 + $0x1f0] sm:%s172]
                %306 = vst [vmem:[%s180 + $0xf8] sm:%s172] %v305
                %v307 = vld [vmem:[%s179 + $0x1f8] sm:%s172]
                %308 = vst [vmem:[%s180 + $0xfc] sm:%s172] %v307
                %v309 = vld [vmem:[%s179 + $0x200] sm:%s172]
                %310 = vst [vmem:[%s180 + $0x100] sm:%s172] %v309
                %v311 = vld [vmem:[%s179 + $0x208] sm:%s172]
                %312 = vst [vmem:[%s180 + $0x104] sm:%s172] %v311
                %v313 = vld [vmem:[%s179 + $0x210] sm:%s172]
                %314 = vst [vmem:[%s180 + $0x108] sm:%s172] %v313
                %v315 = vld [vmem:[%s179 + $0x218] sm:%s172]
                %316 = vst [vmem:[%s180 + $0x10c] sm:%s172] %v315
                %v317 = vld [vmem:[%s179 + $0x220] sm:%s172]
                %318 = vst [vmem:[%s180 + $0x110] sm:%s172] %v317
                %v319 = vld [vmem:[%s179 + $0x228] sm:%s172]
                %320 = vst [vmem:[%s180 + $0x114] sm:%s172] %v319
                %v321 = vld [vmem:[%s179 + $0x230] sm:%s172]
                %322 = vst [vmem:[%s180 + $0x118] sm:%s172] %v321
                %v323 = vld [vmem:[%s179 + $0x238] sm:%s172]
                %324 = vst [vmem:[%s180 + $0x11c] sm:%s172] %v323
                %v325 = vld [vmem:[%s179 + $0x240] sm:%s172]
                %326 = vst [vmem:[%s180 + $0x120] sm:%s172] %v325
                %v327 = vld [vmem:[%s179 + $0x248] sm:%s172]
                %328 = vst [vmem:[%s180 + $0x124] sm:%s172] %v327
                %v329 = vld [vmem:[%s179 + $0x250] sm:%s172]
                %330 = vst [vmem:[%s180 + $0x128] sm:%s172] %v329
                %v331 = vld [vmem:[%s179 + $0x258] sm:%s172]
                %332 = vst [vmem:[%s180 + $0x12c] sm:%s172] %v331
                %v333 = vld [vmem:[%s179 + $0x260] sm:%s172]
                %334 = vst [vmem:[%s180 + $0x130] sm:%s172] %v333
                %v335 = vld [vmem:[%s179 + $0x268] sm:%s172]
                %336 = vst [vmem:[%s180 + $0x134] sm:%s172] %v335
                %v337 = vld [vmem:[%s179 + $0x270] sm:%s172]
                %338 = vst [vmem:[%s180 + $0x138] sm:%s172] %v337
                %v339 = vld [vmem:[%s179 + $0x278] sm:%s172]
                %340 = vst [vmem:[%s180 + $0x13c] sm:%s172] %v339
                %v341 = vld [vmem:[%s179 + $0x280] sm:%s172]
                %342 = vst [vmem:[%s180 + $0x140] sm:%s172] %v341
                %v343 = vld [vmem:[%s179 + $0x288] sm:%s172]
                %344 = vst [vmem:[%s180 + $0x144] sm:%s172] %v343
                %v345 = vld [vmem:[%s179 + $0x290] sm:%s172]
                %346 = vst [vmem:[%s180 + $0x148] sm:%s172] %v345
                %v347 = vld [vmem:[%s179 + $0x298] sm:%s172]
                %348 = vst [vmem:[%s180 + $0x14c] sm:%s172] %v347
                %v349 = vld [vmem:[%s179 + $0x2a0] sm:%s172]
                %350 = vst [vmem:[%s180 + $0x150] sm:%s172] %v349
                %v351 = vld [vmem:[%s179 + $0x2a8] sm:%s172]
                %352 = vst [vmem:[%s180 + $0x154] sm:%s172] %v351
                %v353 = vld [vmem:[%s179 + $0x2b0] sm:%s172]
                %354 = vst [vmem:[%s180 + $0x158] sm:%s172] %v353
                %v355 = vld [vmem:[%s179 + $0x2b8] sm:%s172]
                %356 = vst [vmem:[%s180 + $0x15c] sm:%s172] %v355
                %v357 = vld [vmem:[%s179 + $0x2c0] sm:%s172]
                %358 = vst [vmem:[%s180 + $0x160] sm:%s172] %v357
                %v359 = vld [vmem:[%s179 + $0x2c8] sm:%s172]
                %360 = vst [vmem:[%s180 + $0x164] sm:%s172] %v359
                %v361 = vld [vmem:[%s179 + $0x2d0] sm:%s172]
                %362 = vst [vmem:[%s180 + $0x168] sm:%s172] %v361
                %v363 = vld [vmem:[%s179 + $0x2d8] sm:%s172]
                %364 = vst [vmem:[%s180 + $0x16c] sm:%s172] %v363
                %v365 = vld [vmem:[%s179 + $0x2e0] sm:%s172]
                %366 = vst [vmem:[%s180 + $0x170] sm:%s172] %v365
                %v367 = vld [vmem:[%s179 + $0x2e8] sm:%s172]
                %368 = vst [vmem:[%s180 + $0x174] sm:%s172] %v367
                %v369 = vld [vmem:[%s179 + $0x2f0] sm:%s172]
                %370 = vst [vmem:[%s180 + $0x178] sm:%s172] %v369
                %v371 = vld [vmem:[%s179 + $0x2f8] sm:%s172]
                %372 = vst [vmem:[%s180 + $0x17c] sm:%s172] %v371
                %v373 = vld [vmem:[%s179 + $0x300] sm:%s172]
                %374 = vst [vmem:[%s180 + $0x180] sm:%s172] %v373
                %v375 = vld [vmem:[%s179 + $0x308] sm:%s172]
                %376 = vst [vmem:[%s180 + $0x184] sm:%s172] %v375
                %v377 = vld [vmem:[%s179 + $0x310] sm:%s172]
                %378 = vst [vmem:[%s180 + $0x188] sm:%s172] %v377
                %v379 = vld [vmem:[%s179 + $0x318] sm:%s172]
                %380 = vst [vmem:[%s180 + $0x18c] sm:%s172] %v379
                %v381 = vld [vmem:[%s179 + $0x320] sm:%s172]
                %382 = vst [vmem:[%s180 + $0x190] sm:%s172] %v381
                %v383 = vld [vmem:[%s179 + $0x328] sm:%s172]
                %384 = vst [vmem:[%s180 + $0x194] sm:%s172] %v383
                %v385 = vld [vmem:[%s179 + $0x330] sm:%s172]
                %386 = vst [vmem:[%s180 + $0x198] sm:%s172] %v385
                %v387 = vld [vmem:[%s179 + $0x338] sm:%s172]
                %388 = vst [vmem:[%s180 + $0x19c] sm:%s172] %v387
                %v389 = vld [vmem:[%s179 + $0x340] sm:%s172]
                %390 = vst [vmem:[%s180 + $0x1a0] sm:%s172] %v389
                %v391 = vld [vmem:[%s179 + $0x348] sm:%s172]
                %392 = vst [vmem:[%s180 + $0x1a4] sm:%s172] %v391
                %v393 = vld [vmem:[%s179 + $0x350] sm:%s172]
                %394 = vst [vmem:[%s180 + $0x1a8] sm:%s172] %v393
                %v395 = vld [vmem:[%s179 + $0x358] sm:%s172]
                %396 = vst [vmem:[%s180 + $0x1ac] sm:%s172] %v395
                %v397 = vld [vmem:[%s179 + $0x360] sm:%s172]
                %398 = vst [vmem:[%s180 + $0x1b0] sm:%s172] %v397
                %v399 = vld [vmem:[%s179 + $0x368] sm:%s172]
                %400 = vst [vmem:[%s180 + $0x1b4] sm:%s172] %v399
                %v401 = vld [vmem:[%s179 + $0x370] sm:%s172]
                %402 = vst [vmem:[%s180 + $0x1b8] sm:%s172] %v401
                %v403 = vld [vmem:[%s179 + $0x378] sm:%s172]
                %404 = vst [vmem:[%s180 + $0x1bc] sm:%s172] %v403
                %v405 = vld [vmem:[%s179 + $0x380] sm:%s172]
                %406 = vst [vmem:[%s180 + $0x1c0] sm:%s172] %v405
                %v407 = vld [vmem:[%s179 + $0x388] sm:%s172]
                %408 = vst [vmem:[%s180 + $0x1c4] sm:%s172] %v407
                %v409 = vld [vmem:[%s179 + $0x390] sm:%s172]
                %410 = vst [vmem:[%s180 + $0x1c8] sm:%s172] %v409
                %v411 = vld [vmem:[%s179 + $0x398] sm:%s172]
                %412 = vst [vmem:[%s180 + $0x1cc] sm:%s172] %v411
                %v413 = vld [vmem:[%s179 + $0x3a0] sm:%s172]
                %414 = vst [vmem:[%s180 + $0x1d0] sm:%s172] %v413
                %v415 = vld [vmem:[%s179 + $0x3a8] sm:%s172]
                %416 = vst [vmem:[%s180 + $0x1d4] sm:%s172] %v415
                %v417 = vld [vmem:[%s179 + $0x3b0] sm:%s172]
                %418 = vst [vmem:[%s180 + $0x1d8] sm:%s172] %v417
                %v419 = vld [vmem:[%s179 + $0x3b8] sm:%s172]
                %420 = vst [vmem:[%s180 + $0x1dc] sm:%s172] %v419
                %v421 = vld [vmem:[%s179 + $0x3c0] sm:%s172]
                %422 = vst [vmem:[%s180 + $0x1e0] sm:%s172] %v421
                %v423 = vld [vmem:[%s179 + $0x3c8] sm:%s172]
                %424 = vst [vmem:[%s180 + $0x1e4] sm:%s172] %v423
                %v425 = vld [vmem:[%s179 + $0x3d0] sm:%s172]
                %426 = vst [vmem:[%s180 + $0x1e8] sm:%s172] %v425
                %v427 = vld [vmem:[%s179 + $0x3d8] sm:%s172]
                %428 = vst [vmem:[%s180 + $0x1ec] sm:%s172] %v427
                %v429 = vld [vmem:[%s179 + $0x3e0] sm:%s172]
                %430 = vst [vmem:[%s180 + $0x1f0] sm:%s172] %v429
                %v431 = vld [vmem:[%s179 + $0x3e8] sm:%s172]
                %432 = vst [vmem:[%s180 + $0x1f4] sm:%s172] %v431
                %v433 = vld [vmem:[%s179 + $0x3f0] sm:%s172]
                %434 = vst [vmem:[%s180 + $0x1f8] sm:%s172] %v433
                %v435 = vld [vmem:[%s179 + $0x3f8] sm:%s172]
                %436 = vst [vmem:[%s180 + $0x1fc] sm:%s172] %v435
                %v437 = vld [vmem:[%s179 + $0x400] sm:%s172]
                %438 = vst [vmem:[%s180 + $0x200] sm:%s172] %v437
                %v439 = vld [vmem:[%s179 + $0x408] sm:%s172]
                %440 = vst [vmem:[%s180 + $0x204] sm:%s172] %v439
                %v441 = vld [vmem:[%s179 + $0x410] sm:%s172]
                %442 = vst [vmem:[%s180 + $0x208] sm:%s172] %v441
                %v443 = vld [vmem:[%s179 + $0x418] sm:%s172]
                %444 = vst [vmem:[%s180 + $0x20c] sm:%s172] %v443
                %v445 = vld [vmem:[%s179 + $0x420] sm:%s172]
                %446 = vst [vmem:[%s180 + $0x210] sm:%s172] %v445
                %v447 = vld [vmem:[%s179 + $0x428] sm:%s172]
                %448 = vst [vmem:[%s180 + $0x214] sm:%s172] %v447
                %v449 = vld [vmem:[%s179 + $0x430] sm:%s172]
                %450 = vst [vmem:[%s180 + $0x218] sm:%s172] %v449
                %v451 = vld [vmem:[%s179 + $0x438] sm:%s172]
                %452 = vst [vmem:[%s180 + $0x21c] sm:%s172] %v451
                %v453 = vld [vmem:[%s179 + $0x440] sm:%s172]
                %454 = vst [vmem:[%s180 + $0x220] sm:%s172] %v453
                %v455 = vld [vmem:[%s179 + $0x448] sm:%s172]
                %456 = vst [vmem:[%s180 + $0x224] sm:%s172] %v455
                %v457 = vld [vmem:[%s179 + $0x450] sm:%s172]
                %458 = vst [vmem:[%s180 + $0x228] sm:%s172] %v457
                %v459 = vld [vmem:[%s179 + $0x458] sm:%s172]
                %460 = vst [vmem:[%s180 + $0x22c] sm:%s172] %v459
                %v461 = vld [vmem:[%s179 + $0x460] sm:%s172]
                %462 = vst [vmem:[%s180 + $0x230] sm:%s172] %v461
                %v463 = vld [vmem:[%s179 + $0x468] sm:%s172]
                %464 = vst [vmem:[%s180 + $0x234] sm:%s172] %v463
                %v465 = vld [vmem:[%s179 + $0x470] sm:%s172]
                %466 = vst [vmem:[%s180 + $0x238] sm:%s172] %v465
                %v467 = vld [vmem:[%s179 + $0x478] sm:%s172]
                %468 = vst [vmem:[%s180 + $0x23c] sm:%s172] %v467
              $region41: #{discriminator_forward.8} parent=35 // loop_footer
                %s178 = sadd.s32 1, %s174
              $region42: #{discriminator_forward.8} parent=35 // loop_footer_branch
                %173 = sbr.rel target = $region38
              $region43: #{discriminator_forward.8} parent=35 // loop_exit
                _
            $region36: #{discriminator_forward.8} parent=27 // pred_fallthru
              _
          $region28: #{discriminator_forward.8} parent=23 // pred_fallthru
            _
          %777 = vnop
        $region24: #{discriminator_forward.8} parent=19 // pred_fallthru
          _
        // Predicated region
        $region62: #{discriminator_forward.8} parent=19 // pred_check
          %p778 = pneg %p93
        $region63: #{discriminator_forward.8} parent=19 // pred_check_branch
          %780 = sbr.rel (%p778) target = $region65
        $region64: #{discriminator_forward.8} parent=19 // pred_region
          %p781 = scmp.lt.s32.totalorder %s17, 1
          %s782 = scalar_select %p781, %s17, 1
          %s783 = scalar_lea.vmem %s2, %s782
        $region65: #{discriminator_forward.8} parent=19 // pred_fallthru
          _
      $region20: #{discriminator_forward.8} parent=5 // pred_fallthru
        _
      %p784 = scmp.le.s32.totalorder 1, %s9
      %p785 = scmp.lt.s32.totalorder %s9, 3
      %p786 = pnand %p784, %p785
      %p787 = pneg %p786
      // Predicated region
      $region66: #{discriminator_forward.8} parent=5 // pred_check
        _
      $region67: #{discriminator_forward.8} parent=5 // pred_check_branch
        %789 = sbr.rel (%p786) target = $region69
      $region68: #{discriminator_forward.8} parent=5 // pred_region
        %s790 = ssub.s32 %s9, 1
        %s791 = sand.u32 %s60, 1
        %s792 = sand.u32 %s60, 1
        %s793 = smul.addr %s792, 576
        %s794 = scalar_lea.vmem [#allocation2], %s793
        // Predicated region
        $region70: #{discriminator_forward.8} parent=68 // pred_check
          %p795 = pneg %p73
        $region71: #{discriminator_forward.8} parent=68 // pred_check_branch
          %797 = sbr.rel (%p795) target = $region73
        $region72: #{discriminator_forward.8} parent=68 // pred_region
          _
        $region73: #{discriminator_forward.8} parent=68 // pred_fallthru
          _
        %s798 = smul.u32 4, %s18
        %p799 = scmp.lt.s32.totalorder %s798, 3
        %s800 = scalar_select %p799, %s798, 3
        %s801 = smul.addr %s800, 9
        %s802 = smul.addr %s801, 4
        %s803 = scalar_lea.vmem %s0, %s802
        %p804 = pneg %p47
        %p805 = pneg %p44
        %s806 = sand.u32 %s60, 1
        %s807 = sand.u32 %s60, 1
        %s808 = smul.addr %s807, 576
        %s809 = scalar_lea.vmem [#allocation2], %s808
        %p810 = pneg %p73
        %p811 = pneg %p70
        %p812 = scmp.lt.s32.totalorder %s19, 1
        %s813 = scalar_select %p812, %s19, 1
        %s814 = scalar_lea.vmem %s2, %s813
        %p815 = pneg %p99
        %p816 = pneg %p96
        %p817 = pneg %p127
        %p818 = pneg %p124
        %s819 = sand.u32 %s114, 1
        %s820 = sand.u32 %s114, 1
        %s821 = smul.addr %s820, 16
        %s822 = scalar_lea.vmem [#allocation3], %s821
        %s823 = smul.u32 4, %s18
        %p824 = scmp.lt.s32.totalorder %s823, 3
        %s825 = scalar_select %p824, %s823, 3
        %s826 = smul.addr %s825, 9
        %s827 = smul.addr %s826, 4
        %s828 = scalar_lea.vmem %s0, %s827
        %s829 = smul.u32 4, %s18
        %p830 = scmp.lt.s32.totalorder %s19, 1
        %s831 = scalar_select %p830, %s19, 1
        %s832 = scalar_lea.vmem %s2, %s831
        %s833 = smul.u32 4, %s18
        %v835 = vld [vmem:[%s828] sm:$0xff]
        %v836 = vld [vmem:[%s828 + $0x8] sm:$0xff]
        %v837 = vld [vmem:[%s828 + $0x10] sm:$0xff]
        %v838 = vld [vmem:[%s828 + $0x18] sm:$0xff]
        %v839 = vld [vmem:[%s828 + $0x20] sm:$0xf]
        %v840 = vld [vmem:[%s828 + $0x24] sm:$0xff]
        %v841 = vld [vmem:[%s828 + $0x2c] sm:$0xff]
        %v842 = vld [vmem:[%s828 + $0x34] sm:$0xff]
        %v843 = vld [vmem:[%s828 + $0x3c] sm:$0xff]
        %v844 = vld [vmem:[%s828 + $0x44] sm:$0xf]
        %v845 = vld [vmem:[%s828 + $0x48] sm:$0xff]
        %v846 = vld [vmem:[%s828 + $0x50] sm:$0xff]
        %v847 = vld [vmem:[%s828 + $0x58] sm:$0xff]
        %v848 = vld [vmem:[%s828 + $0x60] sm:$0xff]
        %v849 = vld [vmem:[%s828 + $0x68] sm:$0xf]
        %v850 = vld [vmem:[%s828 + $0x6c] sm:$0xff]
        %v851 = vld [vmem:[%s828 + $0x74] sm:$0xff]
        %v852 = vld [vmem:[%s828 + $0x7c] sm:$0xff]
        %v853 = vld [vmem:[%s828 + $0x84] sm:$0xff]
        %v854 = vld [vmem:[%s828 + $0x8c] sm:$0xf]
        %v855 = vld [vmem:[%s794] sm:$0xf]
        %v856 = vld [vmem:[%s794 + $0x4] sm:$0xf]
        %v857 = vld [vmem:[%s794 + $0x8] sm:$0xf]
        %v858 = vld [vmem:[%s794 + $0xc] sm:$0xf]
        %v859 = vld [vmem:[%s794 + $0x10] sm:$0xf]
        %v860 = vld [vmem:[%s794 + $0x14] sm:$0xf]
        %v861 = vld [vmem:[%s794 + $0x18] sm:$0xf]
        %v862 = vld [vmem:[%s794 + $0x1c] sm:$0xf]
        %v863 = vld [vmem:[%s794 + $0x20] sm:$0xf]
        %v864 = vld [vmem:[%s794 + $0x24] sm:$0xf]
        %v865 = vld [vmem:[%s794 + $0x28] sm:$0xf]
        %v866 = vld [vmem:[%s794 + $0x2c] sm:$0xf]
        %v867 = vld [vmem:[%s794 + $0x30] sm:$0xf]
        %v868 = vld [vmem:[%s794 + $0x34] sm:$0xf]
        %v869 = vld [vmem:[%s794 + $0x38] sm:$0xf]
        %v870 = vld [vmem:[%s794 + $0x3c] sm:$0xf]
        %v871 = vld [vmem:[%s794 + $0x40] sm:$0xf]
        %v872 = vld [vmem:[%s794 + $0x44] sm:$0xf]
        %v873 = vld [vmem:[%s794 + $0x48] sm:$0xf]
        %v874 = vld [vmem:[%s794 + $0x4c] sm:$0xf]
        %v875 = vld [vmem:[%s794 + $0x50] sm:$0xf]
        %v876 = vld [vmem:[%s794 + $0x54] sm:$0xf]
        %v877 = vld [vmem:[%s794 + $0x58] sm:$0xf]
        %v878 = vld [vmem:[%s794 + $0x5c] sm:$0xf]
        %v879 = vld [vmem:[%s794 + $0x60] sm:$0xf]
        %v880 = vld [vmem:[%s794 + $0x64] sm:$0xf]
        %v881 = vld [vmem:[%s794 + $0x68] sm:$0xf]
        %v882 = vld [vmem:[%s794 + $0x6c] sm:$0xf]
        %v883 = vld [vmem:[%s794 + $0x70] sm:$0xf]
        %v884 = vld [vmem:[%s794 + $0x74] sm:$0xf]
        %v885 = vld [vmem:[%s794 + $0x78] sm:$0xf]
        %v886 = vld [vmem:[%s794 + $0x7c] sm:$0xf]
        %v887 = vld [vmem:[%s794 + $0x80] sm:$0xf]
        %v888 = vld [vmem:[%s794 + $0x84] sm:$0xf]
        %v889 = vld [vmem:[%s794 + $0x88] sm:$0xf]
        %v890 = vld [vmem:[%s794 + $0x8c] sm:$0xf]
        %v891 = vld [vmem:[%s794 + $0x90] sm:$0xf]
        %v892 = vld [vmem:[%s794 + $0x94] sm:$0xf]
        %v893 = vld [vmem:[%s794 + $0x98] sm:$0xf]
        %v894 = vld [vmem:[%s794 + $0x9c] sm:$0xf]
        %v895 = vld [vmem:[%s794 + $0xa0] sm:$0xf]
        %v896 = vld [vmem:[%s794 + $0xa4] sm:$0xf]
        %v897 = vld [vmem:[%s794 + $0xa8] sm:$0xf]
        %v898 = vld [vmem:[%s794 + $0xac] sm:$0xf]
        %v899 = vld [vmem:[%s794 + $0xb0] sm:$0xf]
        %v900 = vld [vmem:[%s794 + $0xb4] sm:$0xf]
        %v901 = vld [vmem:[%s794 + $0xb8] sm:$0xf]
        %v902 = vld [vmem:[%s794 + $0xbc] sm:$0xf]
        %v903 = vld [vmem:[%s794 + $0xc0] sm:$0xf]
        %v904 = vld [vmem:[%s794 + $0xc4] sm:$0xf]
        %v905 = vld [vmem:[%s794 + $0xc8] sm:$0xf]
        %v906 = vld [vmem:[%s794 + $0xcc] sm:$0xf]
        %v907 = vld [vmem:[%s794 + $0xd0] sm:$0xf]
        %v908 = vld [vmem:[%s794 + $0xd4] sm:$0xf]
        %v909 = vld [vmem:[%s794 + $0xd8] sm:$0xf]
        %v910 = vld [vmem:[%s794 + $0xdc] sm:$0xf]
        %v911 = vld [vmem:[%s794 + $0xe0] sm:$0xf]
        %v912 = vld [vmem:[%s794 + $0xe4] sm:$0xf]
        %v913 = vld [vmem:[%s794 + $0xe8] sm:$0xf]
        %v914 = vld [vmem:[%s794 + $0xec] sm:$0xf]
        %v915 = vld [vmem:[%s794 + $0xf0] sm:$0xf]
        %v916 = vld [vmem:[%s794 + $0xf4] sm:$0xf]
        %v917 = vld [vmem:[%s794 + $0xf8] sm:$0xf]
        %v918 = vld [vmem:[%s794 + $0xfc] sm:$0xf]
        %v919 = vld [vmem:[%s794 + $0x100] sm:$0xf]
        %v920 = vld [vmem:[%s794 + $0x104] sm:$0xf]
        %v921 = vld [vmem:[%s794 + $0x108] sm:$0xf]
        %v922 = vld [vmem:[%s794 + $0x10c] sm:$0xf]
        %v923 = vld [vmem:[%s794 + $0x110] sm:$0xf]
        %v924 = vld [vmem:[%s794 + $0x114] sm:$0xf]
        %v925 = vld [vmem:[%s794 + $0x118] sm:$0xf]
        %v926 = vld [vmem:[%s794 + $0x11c] sm:$0xf]
        %v927 = vld [vmem:[%s794 + $0x120] sm:$0xf]
        %v928 = vld [vmem:[%s794 + $0x124] sm:$0xf]
        %v929 = vld [vmem:[%s794 + $0x128] sm:$0xf]
        %v930 = vld [vmem:[%s794 + $0x12c] sm:$0xf]
        %v931 = vld [vmem:[%s794 + $0x130] sm:$0xf]
        %v932 = vld [vmem:[%s794 + $0x134] sm:$0xf]
        %v933 = vld [vmem:[%s794 + $0x138] sm:$0xf]
        %v934 = vld [vmem:[%s794 + $0x13c] sm:$0xf]
        %v935 = vld [vmem:[%s794 + $0x140] sm:$0xf]
        %v936 = vld [vmem:[%s794 + $0x144] sm:$0xf]
        %v937 = vld [vmem:[%s794 + $0x148] sm:$0xf]
        %v938 = vld [vmem:[%s794 + $0x14c] sm:$0xf]
        %v939 = vld [vmem:[%s794 + $0x150] sm:$0xf]
        %v940 = vld [vmem:[%s794 + $0x154] sm:$0xf]
        %v941 = vld [vmem:[%s794 + $0x158] sm:$0xf]
        %v942 = vld [vmem:[%s794 + $0x15c] sm:$0xf]
        %v943 = vld [vmem:[%s794 + $0x160] sm:$0xf]
        %v944 = vld [vmem:[%s794 + $0x164] sm:$0xf]
        %v945 = vld [vmem:[%s794 + $0x168] sm:$0xf]
        %v946 = vld [vmem:[%s794 + $0x16c] sm:$0xf]
        %v947 = vld [vmem:[%s794 + $0x170] sm:$0xf]
        %v948 = vld [vmem:[%s794 + $0x174] sm:$0xf]
        %v949 = vld [vmem:[%s794 + $0x178] sm:$0xf]
        %v950 = vld [vmem:[%s794 + $0x17c] sm:$0xf]
        %v951 = vld [vmem:[%s794 + $0x180] sm:$0xf]
        %v952 = vld [vmem:[%s794 + $0x184] sm:$0xf]
        %v953 = vld [vmem:[%s794 + $0x188] sm:$0xf]
        %v954 = vld [vmem:[%s794 + $0x18c] sm:$0xf]
        %v955 = vld [vmem:[%s794 + $0x190] sm:$0xf]
        %v956 = vld [vmem:[%s794 + $0x194] sm:$0xf]
        %v957 = vld [vmem:[%s794 + $0x198] sm:$0xf]
        %v958 = vld [vmem:[%s794 + $0x19c] sm:$0xf]
        %v959 = vld [vmem:[%s794 + $0x1a0] sm:$0xf]
        %v960 = vld [vmem:[%s794 + $0x1a4] sm:$0xf]
        %v961 = vld [vmem:[%s794 + $0x1a8] sm:$0xf]
        %v962 = vld [vmem:[%s794 + $0x1ac] sm:$0xf]
        %v963 = vld [vmem:[%s794 + $0x1b0] sm:$0xf]
        %v964 = vld [vmem:[%s794 + $0x1b4] sm:$0xf]
        %v965 = vld [vmem:[%s794 + $0x1b8] sm:$0xf]
        %v966 = vld [vmem:[%s794 + $0x1bc] sm:$0xf]
        %v967 = vld [vmem:[%s794 + $0x1c0] sm:$0xf]
        %v968 = vld [vmem:[%s794 + $0x1c4] sm:$0xf]
        %v969 = vld [vmem:[%s794 + $0x1c8] sm:$0xf]
        %v970 = vld [vmem:[%s794 + $0x1cc] sm:$0xf]
        %v971 = vld [vmem:[%s794 + $0x1d0] sm:$0xf]
        %v972 = vld [vmem:[%s794 + $0x1d4] sm:$0xf]
        %v973 = vld [vmem:[%s794 + $0x1d8] sm:$0xf]
        %v974 = vld [vmem:[%s794 + $0x1dc] sm:$0xf]
        %v975 = vld [vmem:[%s794 + $0x1e0] sm:$0xf]
        %v976 = vld [vmem:[%s794 + $0x1e4] sm:$0xf]
        %v977 = vld [vmem:[%s794 + $0x1e8] sm:$0xf]
        %v978 = vld [vmem:[%s794 + $0x1ec] sm:$0xf]
        %v979 = vld [vmem:[%s794 + $0x1f0] sm:$0xf]
        %v980 = vld [vmem:[%s794 + $0x1f4] sm:$0xf]
        %v981 = vld [vmem:[%s794 + $0x1f8] sm:$0xf]
        %v982 = vld [vmem:[%s794 + $0x1fc] sm:$0xf]
        %v983 = vld [vmem:[%s794 + $0x200] sm:$0xf]
        %v984 = vld [vmem:[%s794 + $0x204] sm:$0xf]
        %v985 = vld [vmem:[%s794 + $0x208] sm:$0xf]
        %v986 = vld [vmem:[%s794 + $0x20c] sm:$0xf]
        %v987 = vld [vmem:[%s794 + $0x210] sm:$0xf]
        %v988 = vld [vmem:[%s794 + $0x214] sm:$0xf]
        %v989 = vld [vmem:[%s794 + $0x218] sm:$0xf]
        %v990 = vld [vmem:[%s794 + $0x21c] sm:$0xf]
        %v991 = vld [vmem:[%s794 + $0x220] sm:$0xf]
        %v992 = vld [vmem:[%s794 + $0x224] sm:$0xf]
        %v993 = vld [vmem:[%s794 + $0x228] sm:$0xf]
        %v994 = vld [vmem:[%s794 + $0x22c] sm:$0xf]
        %v995 = vld [vmem:[%s794 + $0x230] sm:$0xf]
        %v996 = vld [vmem:[%s794 + $0x234] sm:$0xf]
        %v997 = vld [vmem:[%s794 + $0x238] sm:$0xf]
        %v998 = vld [vmem:[%s794 + $0x23c] sm:$0xf]
        %v999 = vld [vmem:[%s832] sm:$0x1]
        %v1001 = vlaneseq
        %v1002 = vshrl.u32 %v1001, 7
        %v1003 = vsub.s32 0, %v1002
        %v1004 = vrot.slane %v999, %v1003
        %v1026 = vunpack.c.l.b16 %v835
        %v1027 = vunpack.c.h.b16 %v835
        %v1028 = vunpack.c.l.b16 %v836
        %v1029 = vunpack.c.h.b16 %v836
        %v1030 = vunpack.c.l.b16 %v837
        %v1031 = vunpack.c.h.b16 %v837
        %v1032 = vunpack.c.l.b16 %v838
        %v1033 = vunpack.c.h.b16 %v838
        %v1034 = vunpack.c.l.b16 %v839
        %v1035 = vunpack.c.l.b16 %v840
        %v1036 = vunpack.c.h.b16 %v840
        %v1037 = vunpack.c.l.b16 %v841
        %v1038 = vunpack.c.h.b16 %v841
        %v1039 = vunpack.c.l.b16 %v842
        %v1040 = vunpack.c.h.b16 %v842
        %v1041 = vunpack.c.l.b16 %v843
        %v1042 = vunpack.c.h.b16 %v843
        %v1043 = vunpack.c.l.b16 %v844
        %v1044 = vunpack.c.l.b16 %v845
        %v1045 = vunpack.c.h.b16 %v845
        %v1046 = vunpack.c.l.b16 %v846
        %v1047 = vunpack.c.h.b16 %v846
        %v1048 = vunpack.c.l.b16 %v847
        %v1049 = vunpack.c.h.b16 %v847
        %v1050 = vunpack.c.l.b16 %v848
        %v1051 = vunpack.c.h.b16 %v848
        %v1052 = vunpack.c.l.b16 %v849
        %v1053 = vunpack.c.l.b16 %v850
        %v1054 = vunpack.c.h.b16 %v850
        %v1055 = vunpack.c.l.b16 %v851
        %v1056 = vunpack.c.h.b16 %v851
        %v1057 = vunpack.c.l.b16 %v852
        %v1058 = vunpack.c.h.b16 %v852
        %v1059 = vunpack.c.l.b16 %v853
        %v1060 = vunpack.c.h.b16 %v853
        %v1061 = vunpack.c.l.b16 %v854
        %v1062 = vpack.c.b16 %v1035, %v1026
        %v1063 = vpack.c.b16 %v1036, %v1027
        %v1064 = vpack.c.b16 %v1037, %v1028
        %v1065 = vpack.c.b16 %v1038, %v1029
        %v1066 = vpack.c.b16 %v1039, %v1030
        %v1067 = vpack.c.b16 %v1040, %v1031
        %v1068 = vpack.c.b16 %v1041, %v1032
        %v1069 = vpack.c.b16 %v1042, %v1033
        %v1070 = vpack.c.b16 %v1043, %v1034
        %v1071 = vpack.c.b16 %v1053, %v1044
        %v1072 = vpack.c.b16 %v1054, %v1045
        %v1073 = vpack.c.b16 %v1055, %v1046
        %v1074 = vpack.c.b16 %v1056, %v1047
        %v1075 = vpack.c.b16 %v1057, %v1048
        %v1076 = vpack.c.b16 %v1058, %v1049
        %v1077 = vpack.c.b16 %v1059, %v1050
        %v1078 = vpack.c.b16 %v1060, %v1051
        %v1079 = vpack.c.b16 %v1061, %v1052
        %v1242 = vunpack.c.l.b16 %v855
        %v1243 = vunpack.c.l.b16 %v856
        %v1244 = vunpack.c.l.b16 %v857
        %v1245 = vunpack.c.l.b16 %v858
        %v1246 = vunpack.c.l.b16 %v859
        %v1247 = vunpack.c.l.b16 %v860
        %v1248 = vunpack.c.l.b16 %v861
        %v1249 = vunpack.c.l.b16 %v862
        %v1250 = vunpack.c.l.b16 %v863
        %v1251 = vunpack.c.l.b16 %v864
        %v1252 = vunpack.c.l.b16 %v865
        %v1253 = vunpack.c.l.b16 %v866
        %v1254 = vunpack.c.l.b16 %v867
        %v1255 = vunpack.c.l.b16 %v868
        %v1256 = vunpack.c.l.b16 %v869
        %v1257 = vunpack.c.l.b16 %v870
        %v1258 = vunpack.c.l.b16 %v871
        %v1259 = vunpack.c.l.b16 %v872
        %v1260 = vunpack.c.l.b16 %v873
        %v1261 = vunpack.c.l.b16 %v874
        %v1262 = vunpack.c.l.b16 %v875
        %v1263 = vunpack.c.l.b16 %v876
        %v1264 = vunpack.c.l.b16 %v877
        %v1265 = vunpack.c.l.b16 %v878
        %v1266 = vunpack.c.l.b16 %v879
        %v1267 = vunpack.c.l.b16 %v880
        %v1268 = vunpack.c.l.b16 %v881
        %v1269 = vunpack.c.l.b16 %v882
        %v1270 = vunpack.c.l.b16 %v883
        %v1271 = vunpack.c.l.b16 %v884
        %v1272 = vunpack.c.l.b16 %v885
        %v1273 = vunpack.c.l.b16 %v886
        %v1274 = vunpack.c.l.b16 %v887
        %v1275 = vunpack.c.l.b16 %v888
        %v1276 = vunpack.c.l.b16 %v889
        %v1277 = vunpack.c.l.b16 %v890
        %v1278 = vunpack.c.l.b16 %v891
        %v1279 = vunpack.c.l.b16 %v892
        %v1280 = vunpack.c.l.b16 %v893
        %v1281 = vunpack.c.l.b16 %v894
        %v1282 = vunpack.c.l.b16 %v895
        %v1283 = vunpack.c.l.b16 %v896
        %v1284 = vunpack.c.l.b16 %v897
        %v1285 = vunpack.c.l.b16 %v898
        %v1286 = vunpack.c.l.b16 %v899
        %v1287 = vunpack.c.l.b16 %v900
        %v1288 = vunpack.c.l.b16 %v901
        %v1289 = vunpack.c.l.b16 %v902
        %v1290 = vunpack.c.l.b16 %v903
        %v1291 = vunpack.c.l.b16 %v904
        %v1292 = vunpack.c.l.b16 %v905
        %v1293 = vunpack.c.l.b16 %v906
        %v1294 = vunpack.c.l.b16 %v907
        %v1295 = vunpack.c.l.b16 %v908
        %v1296 = vunpack.c.l.b16 %v909
        %v1297 = vunpack.c.l.b16 %v910
        %v1298 = vunpack.c.l.b16 %v911
        %v1299 = vunpack.c.l.b16 %v912
        %v1300 = vunpack.c.l.b16 %v913
        %v1301 = vunpack.c.l.b16 %v914
        %v1302 = vunpack.c.l.b16 %v915
        %v1303 = vunpack.c.l.b16 %v916
        %v1304 = vunpack.c.l.b16 %v917
        %v1305 = vunpack.c.l.b16 %v918
        %v1306 = vunpack.c.l.b16 %v919
        %v1307 = vunpack.c.l.b16 %v920
        %v1308 = vunpack.c.l.b16 %v921
        %v1309 = vunpack.c.l.b16 %v922
        %v1310 = vunpack.c.l.b16 %v923
        %v1311 = vunpack.c.l.b16 %v924
        %v1312 = vunpack.c.l.b16 %v925
        %v1313 = vunpack.c.l.b16 %v926
        %v1314 = vunpack.c.l.b16 %v927
        %v1315 = vunpack.c.l.b16 %v928
        %v1316 = vunpack.c.l.b16 %v929
        %v1317 = vunpack.c.l.b16 %v930
        %v1318 = vunpack.c.l.b16 %v931
        %v1319 = vunpack.c.l.b16 %v932
        %v1320 = vunpack.c.l.b16 %v933
        %v1321 = vunpack.c.l.b16 %v934
        %v1322 = vunpack.c.l.b16 %v935
        %v1323 = vunpack.c.l.b16 %v936
        %v1324 = vunpack.c.l.b16 %v937
        %v1325 = vunpack.c.l.b16 %v938
        %v1326 = vunpack.c.l.b16 %v939
        %v1327 = vunpack.c.l.b16 %v940
        %v1328 = vunpack.c.l.b16 %v941
        %v1329 = vunpack.c.l.b16 %v942
        %v1330 = vunpack.c.l.b16 %v943
        %v1331 = vunpack.c.l.b16 %v944
        %v1332 = vunpack.c.l.b16 %v945
        %v1333 = vunpack.c.l.b16 %v946
        %v1334 = vunpack.c.l.b16 %v947
        %v1335 = vunpack.c.l.b16 %v948
        %v1336 = vunpack.c.l.b16 %v949
        %v1337 = vunpack.c.l.b16 %v950
        %v1338 = vunpack.c.l.b16 %v951
        %v1339 = vunpack.c.l.b16 %v952
        %v1340 = vunpack.c.l.b16 %v953
        %v1341 = vunpack.c.l.b16 %v954
        %v1342 = vunpack.c.l.b16 %v955
        %v1343 = vunpack.c.l.b16 %v956
        %v1344 = vunpack.c.l.b16 %v957
        %v1345 = vunpack.c.l.b16 %v958
        %v1346 = vunpack.c.l.b16 %v959
        %v1347 = vunpack.c.l.b16 %v960
        %v1348 = vunpack.c.l.b16 %v961
        %v1349 = vunpack.c.l.b16 %v962
        %v1350 = vunpack.c.l.b16 %v963
        %v1351 = vunpack.c.l.b16 %v964
        %v1352 = vunpack.c.l.b16 %v965
        %v1353 = vunpack.c.l.b16 %v966
        %v1354 = vunpack.c.l.b16 %v967
        %v1355 = vunpack.c.l.b16 %v968
        %v1356 = vunpack.c.l.b16 %v969
        %v1357 = vunpack.c.l.b16 %v970
        %v1358 = vunpack.c.l.b16 %v971
        %v1359 = vunpack.c.l.b16 %v972
        %v1360 = vunpack.c.l.b16 %v973
        %v1361 = vunpack.c.l.b16 %v974
        %v1362 = vunpack.c.l.b16 %v975
        %v1363 = vunpack.c.l.b16 %v976
        %v1364 = vunpack.c.l.b16 %v977
        %v1365 = vunpack.c.l.b16 %v978
        %v1366 = vunpack.c.l.b16 %v979
        %v1367 = vunpack.c.l.b16 %v980
        %v1368 = vunpack.c.l.b16 %v981
        %v1369 = vunpack.c.l.b16 %v982
        %v1370 = vunpack.c.l.b16 %v983
        %v1371 = vunpack.c.l.b16 %v984
        %v1372 = vunpack.c.l.b16 %v985
        %v1373 = vunpack.c.l.b16 %v986
        %v1374 = vunpack.c.l.b16 %v987
        %v1375 = vunpack.c.l.b16 %v988
        %v1376 = vunpack.c.l.b16 %v989
        %v1377 = vunpack.c.l.b16 %v990
        %v1378 = vunpack.c.l.b16 %v991
        %v1379 = vunpack.c.l.b16 %v992
        %v1380 = vunpack.c.l.b16 %v993
        %v1381 = vunpack.c.l.b16 %v994
        %v1382 = vunpack.c.l.b16 %v995
        %v1383 = vunpack.c.l.b16 %v996
        %v1384 = vunpack.c.l.b16 %v997
        %v1385 = vunpack.c.l.b16 %v998
        %v1386 = vpack.c.b16 %v1243, %v1242
        %v1387 = vpack.c.b16 %v1245, %v1244
        %v1388 = vpack.c.b16 %v1247, %v1246
        %v1389 = vpack.c.b16 %v1249, %v1248
        %v1390 = vpack.c.b16 %v1251, %v1250
        %v1391 = vpack.c.b16 %v1253, %v1252
        %v1392 = vpack.c.b16 %v1255, %v1254
        %v1393 = vpack.c.b16 %v1257, %v1256
        %v1394 = vpack.c.b16 %v1259, %v1258
        %v1395 = vpack.c.b16 %v1261, %v1260
        %v1396 = vpack.c.b16 %v1263, %v1262
        %v1397 = vpack.c.b16 %v1265, %v1264
        %v1398 = vpack.c.b16 %v1267, %v1266
        %v1399 = vpack.c.b16 %v1269, %v1268
        %v1400 = vpack.c.b16 %v1271, %v1270
        %v1401 = vpack.c.b16 %v1273, %v1272
        %v1402 = vpack.c.b16 %v1275, %v1274
        %v1403 = vpack.c.b16 %v1277, %v1276
        %v1404 = vpack.c.b16 %v1279, %v1278
        %v1405 = vpack.c.b16 %v1281, %v1280
        %v1406 = vpack.c.b16 %v1283, %v1282
        %v1407 = vpack.c.b16 %v1285, %v1284
        %v1408 = vpack.c.b16 %v1287, %v1286
        %v1409 = vpack.c.b16 %v1289, %v1288
        %v1410 = vpack.c.b16 %v1291, %v1290
        %v1411 = vpack.c.b16 %v1293, %v1292
        %v1412 = vpack.c.b16 %v1295, %v1294
        %v1413 = vpack.c.b16 %v1297, %v1296
        %v1414 = vpack.c.b16 %v1299, %v1298
        %v1415 = vpack.c.b16 %v1301, %v1300
        %v1416 = vpack.c.b16 %v1303, %v1302
        %v1417 = vpack.c.b16 %v1305, %v1304
        %v1418 = vpack.c.b16 %v1307, %v1306
        %v1419 = vpack.c.b16 %v1309, %v1308
        %v1420 = vpack.c.b16 %v1311, %v1310
        %v1421 = vpack.c.b16 %v1313, %v1312
        %v1422 = vpack.c.b16 %v1315, %v1314
        %v1423 = vpack.c.b16 %v1317, %v1316
        %v1424 = vpack.c.b16 %v1319, %v1318
        %v1425 = vpack.c.b16 %v1321, %v1320
        %v1426 = vpack.c.b16 %v1323, %v1322
        %v1427 = vpack.c.b16 %v1325, %v1324
        %v1428 = vpack.c.b16 %v1327, %v1326
        %v1429 = vpack.c.b16 %v1329, %v1328
        %v1430 = vpack.c.b16 %v1331, %v1330
        %v1431 = vpack.c.b16 %v1333, %v1332
        %v1432 = vpack.c.b16 %v1335, %v1334
        %v1433 = vpack.c.b16 %v1337, %v1336
        %v1434 = vpack.c.b16 %v1339, %v1338
        %v1435 = vpack.c.b16 %v1341, %v1340
        %v1436 = vpack.c.b16 %v1343, %v1342
        %v1437 = vpack.c.b16 %v1345, %v1344
        %v1438 = vpack.c.b16 %v1347, %v1346
        %v1439 = vpack.c.b16 %v1349, %v1348
        %v1440 = vpack.c.b16 %v1351, %v1350
        %v1441 = vpack.c.b16 %v1353, %v1352
        %v1442 = vpack.c.b16 %v1355, %v1354
        %v1443 = vpack.c.b16 %v1357, %v1356
        %v1444 = vpack.c.b16 %v1359, %v1358
        %v1445 = vpack.c.b16 %v1361, %v1360
        %v1446 = vpack.c.b16 %v1363, %v1362
        %v1447 = vpack.c.b16 %v1365, %v1364
        %v1448 = vpack.c.b16 %v1367, %v1366
        %v1449 = vpack.c.b16 %v1369, %v1368
        %v1450 = vpack.c.b16 %v1371, %v1370
        %v1451 = vpack.c.b16 %v1373, %v1372
        %v1452 = vpack.c.b16 %v1375, %v1374
        %v1453 = vpack.c.b16 %v1377, %v1376
        %v1454 = vpack.c.b16 %v1379, %v1378
        %v1455 = vpack.c.b16 %v1381, %v1380
        %v1456 = vpack.c.b16 %v1383, %v1382
        %v1457 = vpack.c.b16 %v1385, %v1384
        %1530 = vmatprep.subr.bf16.mxu0 0
        %1531 = vmatpush1.bf16.msra.mxu0 %v1393
        %1532 = vmatprep.subr.bf16.mxu0 0
        %1533 = vmatpush1.bf16.msra.mxu0 %v1392
        %1534 = vmatprep.subr.bf16.mxu0 0
        %1535 = vmatpush1.bf16.msra.mxu0 %v1391
        %1536 = vmatprep.subr.bf16.mxu0 0
        %1537 = vmatpush1.bf16.msra.mxu0 %v1390
        %1538 = vmatprep.subr.bf16.mxu0 0
        %1539 = vmatpush1.bf16.msra.mxu0 %v1389
        %1540 = vmatprep.subr.bf16.mxu0 0
        %1541 = vmatpush1.bf16.msra.mxu0 %v1388
        %1542 = vmatprep.subr.bf16.mxu0 0
        %1543 = vmatpush1.bf16.msra.mxu0 %v1387
        %1544 = vmatprep.subr.bf16.mxu0 0
        %1545 = vmatpush1.bf16.msra.mxu0 %v1386
        %1546 = vmatprep.subr.bf16.mxu0 0
        %1547 = vmatpush2.bf16.msra.mxu0 %v1401
        %1548 = vmatprep.subr.bf16.mxu0 0
        %1549 = vmatpush2.bf16.msra.mxu0 %v1400
        %1550 = vmatprep.subr.bf16.mxu0 0
        %1551 = vmatpush2.bf16.msra.mxu0 %v1399
        %1552 = vmatprep.subr.bf16.mxu0 0
        %1553 = vmatpush2.bf16.msra.mxu0 %v1398
        %1554 = vmatprep.subr.bf16.mxu0 0
        %1555 = vmatpush2.bf16.msra.mxu0 %v1397
        %1556 = vmatprep.subr.bf16.mxu0 0
        %1557 = vmatpush2.bf16.msra.mxu0 %v1396
        %1558 = vmatprep.subr.bf16.mxu0 0
        %1559 = vmatpush2.bf16.msra.mxu0 %v1395
        %1560 = vmatprep.subr.bf16.mxu0 0
        %1561 = vmatpush2.bf16.msra.mxu0 %v1394
        %1562 = vmatprep.mubr.bf16.mxu0 %v1063
        %1563 = vmatmul.mubr.bf16.gmra.mxu0 %v1062
        %v1564 = vpop.f32.mrf.mxu0
        %v1565 = vadd.f32 %v1004, %v1564
        %v1566 = vpop.f32.mrf.mxu0
        %v1567 = vpop.f32.mrf.mxu0
        %v1568 = vadd.f32 %v1004, %v1567
        %v1569 = vpop.f32.mrf.mxu0
        %1570 = vmatprep.mubr.bf16.mxu0 %v1072
        %1571 = vmatmul.mubr.bf16.gmra.mxu0 %v1071
        %v1572 = vpop.f32.mrf.mxu0
        %v1573 = vadd.f32 %v1004, %v1572
        %v1574 = vpop.f32.mrf.mxu0
        %v1575 = vpop.f32.mrf.mxu0
        %v1576 = vadd.f32 %v1004, %v1575
        %v1577 = vpop.f32.mrf.mxu0
        %1578 = vdwg.mxu0
        %1579 = vmatprep.subr.bf16.mxu0 0
        %1580 = vmatpush1.bf16.msra.mxu0 %v1409
        %1581 = vmatprep.subr.bf16.mxu0 0
        %1582 = vmatpush1.bf16.msra.mxu0 %v1408
        %1583 = vmatprep.subr.bf16.mxu0 0
        %1584 = vmatpush1.bf16.msra.mxu0 %v1407
        %1585 = vmatprep.subr.bf16.mxu0 0
        %1586 = vmatpush1.bf16.msra.mxu0 %v1406
        %1587 = vmatprep.subr.bf16.mxu0 0
        %1588 = vmatpush1.bf16.msra.mxu0 %v1405
        %1589 = vmatprep.subr.bf16.mxu0 0
        %1590 = vmatpush1.bf16.msra.mxu0 %v1404
        %1591 = vmatprep.subr.bf16.mxu0 0
        %1592 = vmatpush1.bf16.msra.mxu0 %v1403
        %1593 = vmatprep.subr.bf16.mxu0 0
        %1594 = vmatpush1.bf16.msra.mxu0 %v1402
        %1595 = vmatprep.subr.bf16.mxu0 0
        %1596 = vmatpush2.bf16.msra.mxu0 %v1417
        %1597 = vmatprep.subr.bf16.mxu0 0
        %1598 = vmatpush2.bf16.msra.mxu0 %v1416
        %1599 = vmatprep.subr.bf16.mxu0 0
        %1600 = vmatpush2.bf16.msra.mxu0 %v1415
        %1601 = vmatprep.subr.bf16.mxu0 0
        %1602 = vmatpush2.bf16.msra.mxu0 %v1414
        %1603 = vmatprep.subr.bf16.mxu0 0
        %1604 = vmatpush2.bf16.msra.mxu0 %v1413
        %1605 = vmatprep.subr.bf16.mxu0 0
        %1606 = vmatpush2.bf16.msra.mxu0 %v1412
        %1607 = vmatprep.subr.bf16.mxu0 0
        %1608 = vmatpush2.bf16.msra.mxu0 %v1411
        %1609 = vmatprep.subr.bf16.mxu0 0
        %1610 = vmatpush2.bf16.msra.mxu0 %v1410
        %1611 = vmatprep.mubr.bf16.mxu0 %v1065
        %1612 = vmatmul.mubr.bf16.gmra.mxu0 %v1064
        %v1613 = vpop.f32.mrf.mxu0
        %v1614 = vadd.f32 %v1565, %v1613
        %v1615 = vpop.f32.mrf.mxu0
        %v1616 = vpop.f32.mrf.mxu0
        %v1617 = vadd.f32 %v1568, %v1616
        %v1618 = vpop.f32.mrf.mxu0
        %1619 = vmatprep.mubr.bf16.mxu0 %v1074
        %1620 = vmatmul.mubr.bf16.gmra.mxu0 %v1073
        %v1621 = vpop.f32.mrf.mxu0
        %v1622 = vadd.f32 %v1573, %v1621
        %v1623 = vpop.f32.mrf.mxu0
        %v1624 = vpop.f32.mrf.mxu0
        %v1625 = vadd.f32 %v1576, %v1624
        %v1626 = vpop.f32.mrf.mxu0
        %1627 = vdwg.mxu0
        %1628 = vmatprep.subr.bf16.mxu0 0
        %1629 = vmatpush1.bf16.msra.mxu0 %v1425
        %1630 = vmatprep.subr.bf16.mxu0 0
        %1631 = vmatpush1.bf16.msra.mxu0 %v1424
        %1632 = vmatprep.subr.bf16.mxu0 0
        %1633 = vmatpush1.bf16.msra.mxu0 %v1423
        %1634 = vmatprep.subr.bf16.mxu0 0
        %1635 = vmatpush1.bf16.msra.mxu0 %v1422
        %1636 = vmatprep.subr.bf16.mxu0 0
        %1637 = vmatpush1.bf16.msra.mxu0 %v1421
        %1638 = vmatprep.subr.bf16.mxu0 0
        %1639 = vmatpush1.bf16.msra.mxu0 %v1420
        %1640 = vmatprep.subr.bf16.mxu0 0
        %1641 = vmatpush1.bf16.msra.mxu0 %v1419
        %1642 = vmatprep.subr.bf16.mxu0 0
        %1643 = vmatpush1.bf16.msra.mxu0 %v1418
        %1644 = vmatprep.subr.bf16.mxu0 0
        %1645 = vmatpush2.bf16.msra.mxu0 %v1433
        %1646 = vmatprep.subr.bf16.mxu0 0
        %1647 = vmatpush2.bf16.msra.mxu0 %v1432
        %1648 = vmatprep.subr.bf16.mxu0 0
        %1649 = vmatpush2.bf16.msra.mxu0 %v1431
        %1650 = vmatprep.subr.bf16.mxu0 0
        %1651 = vmatpush2.bf16.msra.mxu0 %v1430
        %1652 = vmatprep.subr.bf16.mxu0 0
        %1653 = vmatpush2.bf16.msra.mxu0 %v1429
        %1654 = vmatprep.subr.bf16.mxu0 0
        %1655 = vmatpush2.bf16.msra.mxu0 %v1428
        %1656 = vmatprep.subr.bf16.mxu0 0
        %1657 = vmatpush2.bf16.msra.mxu0 %v1427
        %1658 = vmatprep.subr.bf16.mxu0 0
        %1659 = vmatpush2.bf16.msra.mxu0 %v1426
        %1660 = vmatprep.mubr.bf16.mxu0 %v1067
        %1661 = vmatmul.mubr.bf16.gmra.mxu0 %v1066
        %v1662 = vpop.f32.mrf.mxu0
        %v1663 = vadd.f32 %v1614, %v1662
        %v1664 = vpop.f32.mrf.mxu0
        %v1665 = vpop.f32.mrf.mxu0
        %v1666 = vadd.f32 %v1617, %v1665
        %v1667 = vpop.f32.mrf.mxu0
        %1668 = vmatprep.mubr.bf16.mxu0 %v1076
        %1669 = vmatmul.mubr.bf16.gmra.mxu0 %v1075
        %v1670 = vpop.f32.mrf.mxu0
        %v1671 = vadd.f32 %v1622, %v1670
        %v1672 = vpop.f32.mrf.mxu0
        %v1673 = vpop.f32.mrf.mxu0
        %v1674 = vadd.f32 %v1625, %v1673
        %v1675 = vpop.f32.mrf.mxu0
        %1676 = vdwg.mxu0
        %1677 = vmatprep.subr.bf16.mxu0 0
        %1678 = vmatpush1.bf16.msra.mxu0 %v1441
        %1679 = vmatprep.subr.bf16.mxu0 0
        %1680 = vmatpush1.bf16.msra.mxu0 %v1440
        %1681 = vmatprep.subr.bf16.mxu0 0
        %1682 = vmatpush1.bf16.msra.mxu0 %v1439
        %1683 = vmatprep.subr.bf16.mxu0 0
        %1684 = vmatpush1.bf16.msra.mxu0 %v1438
        %1685 = vmatprep.subr.bf16.mxu0 0
        %1686 = vmatpush1.bf16.msra.mxu0 %v1437
        %1687 = vmatprep.subr.bf16.mxu0 0
        %1688 = vmatpush1.bf16.msra.mxu0 %v1436
        %1689 = vmatprep.subr.bf16.mxu0 0
        %1690 = vmatpush1.bf16.msra.mxu0 %v1435
        %1691 = vmatprep.subr.bf16.mxu0 0
        %1692 = vmatpush1.bf16.msra.mxu0 %v1434
        %1693 = vmatprep.subr.bf16.mxu0 0
        %1694 = vmatpush2.bf16.msra.mxu0 %v1449
        %1695 = vmatprep.subr.bf16.mxu0 0
        %1696 = vmatpush2.bf16.msra.mxu0 %v1448
        %1697 = vmatprep.subr.bf16.mxu0 0
        %1698 = vmatpush2.bf16.msra.mxu0 %v1447
        %1699 = vmatprep.subr.bf16.mxu0 0
        %1700 = vmatpush2.bf16.msra.mxu0 %v1446
        %1701 = vmatprep.subr.bf16.mxu0 0
        %1702 = vmatpush2.bf16.msra.mxu0 %v1445
        %1703 = vmatprep.subr.bf16.mxu0 0
        %1704 = vmatpush2.bf16.msra.mxu0 %v1444
        %1705 = vmatprep.subr.bf16.mxu0 0
        %1706 = vmatpush2.bf16.msra.mxu0 %v1443
        %1707 = vmatprep.subr.bf16.mxu0 0
        %1708 = vmatpush2.bf16.msra.mxu0 %v1442
        %1709 = vmatprep.mubr.bf16.mxu0 %v1069
        %1710 = vmatmul.mubr.bf16.gmra.mxu0 %v1068
        %v1711 = vpop.f32.mrf.mxu0
        %v1712 = vadd.f32 %v1663, %v1711
        %v1713 = vpop.f32.mrf.mxu0
        %v1714 = vpop.f32.mrf.mxu0
        %v1715 = vadd.f32 %v1666, %v1714
        %v1716 = vpop.f32.mrf.mxu0
        %1717 = vmatprep.mubr.bf16.mxu0 %v1078
        %1718 = vmatmul.mubr.bf16.gmra.mxu0 %v1077
        %v1719 = vpop.f32.mrf.mxu0
        %v1720 = vadd.f32 %v1671, %v1719
        %v1721 = vpop.f32.mrf.mxu0
        %v1722 = vpop.f32.mrf.mxu0
        %v1723 = vadd.f32 %v1674, %v1722
        %v1724 = vpop.f32.mrf.mxu0
        %1725 = vdwg.mxu0
        %1726 = vmatprep.subr.bf16.mxu0 0
        %1727 = vmatpush1.bf16.msra.mxu0 %v1457
        %1728 = vmatprep.subr.bf16.mxu0 0
        %1729 = vmatpush1.bf16.msra.mxu0 %v1456
        %1730 = vmatprep.subr.bf16.mxu0 0
        %1731 = vmatpush1.bf16.msra.mxu0 %v1455
        %1732 = vmatprep.subr.bf16.mxu0 0
        %1733 = vmatpush1.bf16.msra.mxu0 %v1454
        %1734 = vmatprep.subr.bf16.mxu0 0
        %1735 = vmatpush1.bf16.msra.mxu0 %v1453
        %1736 = vmatprep.subr.bf16.mxu0 0
        %1737 = vmatpush1.bf16.msra.mxu0 %v1452
        %1738 = vmatprep.subr.bf16.mxu0 0
        %1739 = vmatpush1.bf16.msra.mxu0 %v1451
        %1740 = vmatprep.subr.bf16.mxu0 0
        %1741 = vmatpush1.bf16.msra.mxu0 %v1450
        %1742 = vmatprep.subr.bf16.mxu0 0
        %1743 = vmatpush2.bf16.msra.mxu0 0
        %1744 = vmatprep.subr.bf16.mxu0 0
        %1745 = vmatpush2.bf16.msra.mxu0 0
        %1746 = vmatprep.subr.bf16.mxu0 0
        %1747 = vmatpush2.bf16.msra.mxu0 0
        %1748 = vmatprep.subr.bf16.mxu0 0
        %1749 = vmatpush2.bf16.msra.mxu0 0
        %1750 = vmatprep.subr.bf16.mxu0 0
        %1751 = vmatpush2.bf16.msra.mxu0 0
        %1752 = vmatprep.subr.bf16.mxu0 0
        %1753 = vmatpush2.bf16.msra.mxu0 0
        %1754 = vmatprep.subr.bf16.mxu0 0
        %1755 = vmatpush2.bf16.msra.mxu0 0
        %1756 = vmatprep.subr.bf16.mxu0 0
        %1757 = vmatpush2.bf16.msra.mxu0 0
        %1758 = vmatprep.mubr.bf16.mxu0 0
        %1759 = vmatmul.mubr.bf16.gmra.mxu0 %v1070
        %v1760 = vpop.f32.mrf.mxu0
        %v1761 = vadd.f32 %v1712, %v1760
        %v1762 = vpop.f32.mrf.mxu0
        %v1763 = vpop.f32.mrf.mxu0
        %v1764 = vadd.f32 %v1715, %v1763
        %v1765 = vpop.f32.mrf.mxu0
        %1766 = vmatprep.mubr.bf16.mxu0 0
        %1767 = vmatmul.mubr.bf16.gmra.mxu0 %v1079
        %v1768 = vpop.f32.mrf.mxu0
        %v1769 = vadd.f32 %v1720, %v1768
        %v1770 = vpop.f32.mrf.mxu0
        %v1771 = vpop.f32.mrf.mxu0
        %v1772 = vadd.f32 %v1723, %v1771
        %v1773 = vpop.f32.mrf.mxu0
        %1774 = vdwg.mxu0
        %v1775 = vmul.f32 %v1761, 0.2
        %v1776 = vmul.f32 %v1764, 0.2
        %v1777 = vmul.f32 %v1769, 0.2
        %v1778 = vmul.f32 %v1772, 0.2
        %v1779 = vmax.f32 %v1761, %v1775
        %v1780 = vmax.f32 %v1764, %v1776
        %v1781 = vmax.f32 %v1769, %v1777
        %v1782 = vmax.f32 %v1772, %v1778
        %v1783 = vpack.c.bf16 %v1780, %v1779
        %v1784 = vpack.c.bf16 %v1782, %v1781
        %v1787 = vunpack.c.l.b16 %v1783
        %v1788 = vunpack.c.h.b16 %v1783
        %v1789 = vunpack.c.l.b16 %v1784
        %v1790 = vunpack.c.h.b16 %v1784
        %v1791 = vpack.c.b16 %v1787, %v1787
        %v1792 = vpack.c.b16 %v1788, %v1788
        %v1793 = vpack.c.b16 %v1789, %v1789
        %v1794 = vpack.c.b16 %v1790, %v1790
        %1799 = vst [vmem:[%s822] sm:$0xf] %v1791
        %1800 = vst [vmem:[%s822 + $0x4] sm:$0xf] %v1792
        %1801 = vst [vmem:[%s822 + $0x8] sm:$0xf] %v1793
        %1802 = vst [vmem:[%s822 + $0xc] sm:$0xf] %v1794
        %s1803 = sand.u32 %s114, 1
        %s1804 = sand.u32 %s114, 1
        %s1805 = smul.addr %s1804, 16
        %s1806 = scalar_lea.vmem [#allocation3], %s1805
        // Predicated region
        $region74: #{discriminator_forward.8} parent=68 // pred_check
          %p1807 = pneg %p124
        $region75: #{discriminator_forward.8} parent=68 // pred_check_branch
          %1809 = sbr.rel (%p1807) target = $region77
        $region76: #{discriminator_forward.8} parent=68 // pred_region
          %s1810 = smul.u32 4, %s18
          %s1811 = smul.addr %s1810, 2
          %s1812 = sadd.s32 %s19, %s1811
          %s1813 = smul.addr %s1812, 4
          %s1814 = scalar_lea.vmem %s3, %s1813
          // Predicated region
          $region78: #{discriminator_forward.8} parent=76 // pred_check
            _
          $region79: #{discriminator_forward.8} parent=76 // pred_check_branch
            %1816 = sbr.rel (0) target = $region81
          $region80: #{discriminator_forward.8} parent=76 // pred_region
            // Predicated region
            $region82: #{discriminator_forward.8} parent=80 // pred_check
              _
            $region83: #{discriminator_forward.8} parent=80 // pred_check_branch
              %1818 = sbr.rel target = $region85
            $region84: #{discriminator_forward.8} parent=80 // pred_region
              // Predicated region
              $region97: #{discriminator_forward.8} parent=84 // pred_check
                _
              $region98: #{discriminator_forward.8} parent=84 // pred_check_branch
                %1840 = sbr.rel (0) target = $region100
              $region99: #{discriminator_forward.8} parent=84 // pred_region
                loop: start=0, step=1, limit=1
                $region101: #{discriminator_forward.8} parent=99 // loop_pre_header
                  _
                $region102: #{discriminator_forward.8} parent=99 // loop_header
                  %s1842 = sphi 0, %s1846
                  %p1843 = scmp.ge.s32.totalorder %s1842, 1
                  %s1847 = sphi %s1806, %s1806
                  %s1848 = sphi %s1814, %s1814
                $region103: #{discriminator_forward.8} parent=99 // loop_header_branch
                  %1845 = sbr.rel (%p1843) target = $region107
                $region104: #{discriminator_forward.8} parent=99 // loop_body
                  _
                $region105: #{discriminator_forward.8} parent=99 // loop_footer
                  %s1846 = sadd.s32 1, %s1842
                $region106: #{discriminator_forward.8} parent=99 // loop_footer_branch
                  %1841 = sbr.rel target = $region102
                $region107: #{discriminator_forward.8} parent=99 // loop_exit
                  _
                %s1850 = ssub.s32 16, 1
                loop: start=0, step=1, limit=1
                $region108: #{discriminator_forward.8} parent=99 // loop_pre_header
                  _
                $region109: #{discriminator_forward.8} parent=99 // loop_header
                  %s1852 = sphi 0, %s1856
                  %p1853 = scmp.ge.s32.totalorder %s1852, 1
                  %s1857 = sphi %s1806, %s1806
                  %s1858 = sphi %s1814, %s1814
                $region110: #{discriminator_forward.8} parent=99 // loop_header_branch
                  %1855 = sbr.rel (%p1853) target = $region114
                $region111: #{discriminator_forward.8} parent=99 // loop_body
                  %v1859 = vld [vmem:[%s1857] sm:%s1850]
                  %1860 = vst [vmem:[%s1858] sm:%s1850] %v1859
                  %v1861 = vld [vmem:[%s1857 + $0x4] sm:%s1850]
                  %1862 = vst [vmem:[%s1858 + $0x8] sm:%s1850] %v1861
                  %v1863 = vld [vmem:[%s1857 + $0x8] sm:%s1850]
                  %1864 = vst [vmem:[%s1858 + $0x10] sm:%s1850] %v1863
                  %v1865 = vld [vmem:[%s1857 + $0xc] sm:%s1850]
                  %1866 = vst [vmem:[%s1858 + $0x18] sm:%s1850] %v1865
                $region112: #{discriminator_forward.8} parent=99 // loop_footer
                  %s1856 = sadd.s32 1, %s1852
                $region113: #{discriminator_forward.8} parent=99 // loop_footer_branch
                  %1851 = sbr.rel target = $region109
                $region114: #{discriminator_forward.8} parent=99 // loop_exit
                  _
              $region100: #{discriminator_forward.8} parent=84 // pred_fallthru
                _
            $region85: #{discriminator_forward.8} parent=80 // pred_fallthru
              _
            // Predicated region
            $region86: #{discriminator_forward.8} parent=80 // pred_check
              _
            $region87: #{discriminator_forward.8} parent=80 // pred_check_branch
              %1820 = sbr.rel (0) target = $region89
            $region88: #{discriminator_forward.8} parent=80 // pred_region
              %s1822 = ssub.s32 16, 1
              loop: start=0, step=1, limit=1
              $region90: #{discriminator_forward.8} parent=88 // loop_pre_header
                _
              $region91: #{discriminator_forward.8} parent=88 // loop_header
                %s1824 = sphi 0, %s1828
                %p1825 = scmp.ge.s32.totalorder %s1824, 1
                %s1829 = sphi %s1806, %s1806
                %s1830 = sphi %s1814, %s1814
              $region92: #{discriminator_forward.8} parent=88 // loop_header_branch
                %1827 = sbr.rel (%p1825) target = $region96
              $region93: #{discriminator_forward.8} parent=88 // loop_body
                %v1831 = vld [vmem:[%s1829] sm:%s1822]
                %1832 = vst [vmem:[%s1830] sm:%s1822] %v1831
                %v1833 = vld [vmem:[%s1829 + $0x4] sm:%s1822]
                %1834 = vst [vmem:[%s1830 + $0x8] sm:%s1822] %v1833
                %v1835 = vld [vmem:[%s1829 + $0x8] sm:%s1822]
                %1836 = vst [vmem:[%s1830 + $0x10] sm:%s1822] %v1835
                %v1837 = vld [vmem:[%s1829 + $0xc] sm:%s1822]
                %1838 = vst [vmem:[%s1830 + $0x18] sm:%s1822] %v1837
              $region94: #{discriminator_forward.8} parent=88 // loop_footer
                %s1828 = sadd.s32 1, %s1824
              $region95: #{discriminator_forward.8} parent=88 // loop_footer_branch
                %1823 = sbr.rel target = $region91
              $region96: #{discriminator_forward.8} parent=88 // loop_exit
                _
            $region89: #{discriminator_forward.8} parent=80 // pred_fallthru
              _
          $region81: #{discriminator_forward.8} parent=76 // pred_fallthru
            _
          %1867 = vnop
        $region77: #{discriminator_forward.8} parent=68 // pred_fallthru
          _
      $region69: #{discriminator_forward.8} parent=5 // pred_fallthru
        _
      %p1868 = scmp.le.s32.totalorder 2, %s9
      // Predicated region
      $region115: #{discriminator_forward.8} parent=5 // pred_check
        %p1869 = pneg %p1868
      $region116: #{discriminator_forward.8} parent=5 // pred_check_branch
        %1871 = sbr.rel (%p1869) target = $region118
      $region117: #{discriminator_forward.8} parent=5 // pred_region
        %s1872 = ssub.s32 %s9, 2
        // Predicated region
        $region119: #{discriminator_forward.8} parent=117 // pred_check
          %p1873 = pneg %p130
        $region120: #{discriminator_forward.8} parent=117 // pred_check_branch
          %1875 = sbr.rel (%p1873) target = $region122
        $region121: #{discriminator_forward.8} parent=117 // pred_region
          %s1876 = sand.u32 %s115, 1
          %s1877 = sand.u32 %s115, 1
          %s1878 = smul.addr %s1877, 16
          %s1879 = scalar_lea.vmem [#allocation3], %s1878
        $region122: #{discriminator_forward.8} parent=117 // pred_fallthru
          _
      $region118: #{discriminator_forward.8} parent=5 // pred_fallthru
        _
    $region6: #{discriminator_forward.8} parent=1 // loop_footer
      %s13 = sadd.s32 1, %s9
    $region7: #{discriminator_forward.8} parent=1 // loop_footer_branch
      %8 = sbr.rel target = $region3
    $region8: #{discriminator_forward.8} parent=1 // loop_exit
      _

// kernel: discriminator_forward.9
$region0: #{discriminator_forward.9}
  #allocation0 [shape = 'u32[]', space=smem, size = 0x4, offset = 0x4, fixed_abs, tag = 'smem constant byte address 0x4 - core index']
  #allocation1 [shape = 'u32[144,128]{1,0:T(1,128)}', space=vmem, size = 0x12000, scoped, tag = 'internal scratch']
  %s0 = inlined_call_operand.vmem [shape: bf16[16,4096], index: 0, kind: input, shape index: {}]
  %s1 = inlined_call_operand.vmem [shape: bf16[4096,8], index: 1, kind: input, shape index: {}]
  %s2 = inlined_call_operand.vmem [shape: f32[1,8], index: 2, kind: input, shape index: {}]
  %s3 = inlined_call_operand.vmem [shape: f32[16,8], index: 3, kind: output, shape index: {}]
  %s4 = sld [smem:[#allocation0]]
  $region22: #{discriminator_forward.9} parent=0
    _
  %s6 = ssub.s32 1, %s4
  %s7 = scalar_select 0, %s6, %s4
  // Predicated region
  $region2: #{discriminator_forward.9} parent=0 // pred_check
    _
  $region3: #{discriminator_forward.9} parent=0 // pred_check_branch
    %9 = sbr.rel (0) target = $region5
  $region4: #{discriminator_forward.9} parent=0 // pred_region
    _
  $region5: #{discriminator_forward.9} parent=0 // pred_fallthru
    _
  // Predicated region
  $region6: #{discriminator_forward.9} parent=0 // pred_check
    _
  $region7: #{discriminator_forward.9} parent=0 // pred_check_branch
    %11 = sbr.rel (0) target = $region9
  $region8: #{discriminator_forward.9} parent=0 // pred_region
    _
  $region9: #{discriminator_forward.9} parent=0 // pred_fallthru
    _
  // Predicated region
  $region10: #{discriminator_forward.9} parent=0 // pred_check
    _
  $region11: #{discriminator_forward.9} parent=0 // pred_check_branch
    %13 = sbr.rel (0) target = $region13
  $region12: #{discriminator_forward.9} parent=0 // pred_region
    _
  $region13: #{discriminator_forward.9} parent=0 // pred_fallthru
    _
  %v15 = vld [vmem:[%s0] sm:$0xff]
  %v16 = vld [vmem:[%s0 + $0x8] sm:$0xff]
  %v17 = vld [vmem:[%s0 + $0x10] sm:$0xff]
  %v18 = vld [vmem:[%s0 + $0x18] sm:$0xff]
  %v19 = vld [vmem:[%s0 + $0x20] sm:$0xff]
  %v20 = vld [vmem:[%s0 + $0x28] sm:$0xff]
  %v21 = vld [vmem:[%s0 + $0x30] sm:$0xff]
  %v22 = vld [vmem:[%s0 + $0x38] sm:$0xff]
  %v23 = vld [vmem:[%s0 + $0x40] sm:$0xff]
  %v24 = vld [vmem:[%s0 + $0x48] sm:$0xff]
  %v25 = vld [vmem:[%s0 + $0x50] sm:$0xff]
  %v26 = vld [vmem:[%s0 + $0x58] sm:$0xff]
  %v27 = vld [vmem:[%s0 + $0x60] sm:$0xff]
  %v28 = vld [vmem:[%s0 + $0x68] sm:$0xff]
  %v29 = vld [vmem:[%s0 + $0x70] sm:$0xff]
  %v30 = vld [vmem:[%s0 + $0x78] sm:$0xff]
  %v31 = vld [vmem:[%s0 + $0x80] sm:$0xff]
  %v32 = vld [vmem:[%s0 + $0x88] sm:$0xff]
  %v33 = vld [vmem:[%s0 + $0x90] sm:$0xff]
  %v34 = vld [vmem:[%s0 + $0x98] sm:$0xff]
  %v35 = vld [vmem:[%s0 + $0xa0] sm:$0xff]
  %v36 = vld [vmem:[%s0 + $0xa8] sm:$0xff]
  %v37 = vld [vmem:[%s0 + $0xb0] sm:$0xff]
  %v38 = vld [vmem:[%s0 + $0xb8] sm:$0xff]
  %v39 = vld [vmem:[%s0 + $0xc0] sm:$0xff]
  %v40 = vld [vmem:[%s0 + $0xc8] sm:$0xff]
  %v41 = vld [vmem:[%s0 + $0xd0] sm:$0xff]
  %v42 = vld [vmem:[%s0 + $0xd8] sm:$0xff]
  %v43 = vld [vmem:[%s0 + $0xe0] sm:$0xff]
  %v44 = vld [vmem:[%s0 + $0xe8] sm:$0xff]
  %v45 = vld [vmem:[%s0 + $0xf0] sm:$0xff]
  %v46 = vld [vmem:[%s0 + $0xf8] sm:$0xff]
  %v47 = vld [vmem:[%s1] sm:$0xf]
  %v48 = vld [vmem:[%s1 + $0x4] sm:$0xf]
  %v49 = vld [vmem:[%s1 + $0x8] sm:$0xf]
  %v50 = vld [vmem:[%s1 + $0xc] sm:$0xf]
  %v51 = vld [vmem:[%s1 + $0x10] sm:$0xf]
  %v52 = vld [vmem:[%s1 + $0x14] sm:$0xf]
  %v53 = vld [vmem:[%s1 + $0x18] sm:$0xf]
  %v54 = vld [vmem:[%s1 + $0x1c] sm:$0xf]
  %v55 = vld [vmem:[%s1 + $0x20] sm:$0xf]
  %v56 = vld [vmem:[%s1 + $0x24] sm:$0xf]
  %v57 = vld [vmem:[%s1 + $0x28] sm:$0xf]
  %v58 = vld [vmem:[%s1 + $0x2c] sm:$0xf]
  %v59 = vld [vmem:[%s1 + $0x30] sm:$0xf]
  %v60 = vld [vmem:[%s1 + $0x34] sm:$0xf]
  %v61 = vld [vmem:[%s1 + $0x38] sm:$0xf]
  %v62 = vld [vmem:[%s1 + $0x3c] sm:$0xf]
  %v63 = vld [vmem:[%s1 + $0x40] sm:$0xf]
  %v64 = vld [vmem:[%s1 + $0x44] sm:$0xf]
  %v65 = vld [vmem:[%s1 + $0x48] sm:$0xf]
  %v66 = vld [vmem:[%s1 + $0x4c] sm:$0xf]
  %v67 = vld [vmem:[%s1 + $0x50] sm:$0xf]
  %v68 = vld [vmem:[%s1 + $0x54] sm:$0xf]
  %v69 = vld [vmem:[%s1 + $0x58] sm:$0xf]
  %v70 = vld [vmem:[%s1 + $0x5c] sm:$0xf]
  %v71 = vld [vmem:[%s1 + $0x60] sm:$0xf]
  %v72 = vld [vmem:[%s1 + $0x64] sm:$0xf]
  %v73 = vld [vmem:[%s1 + $0x68] sm:$0xf]
  %v74 = vld [vmem:[%s1 + $0x6c] sm:$0xf]
  %v75 = vld [vmem:[%s1 + $0x70] sm:$0xf]
  %v76 = vld [vmem:[%s1 + $0x74] sm:$0xf]
  %v77 = vld [vmem:[%s1 + $0x78] sm:$0xf]
  %v78 = vld [vmem:[%s1 + $0x7c] sm:$0xf]
  %v79 = vld [vmem:[%s1 + $0x80] sm:$0xf]
  %v80 = vld [vmem:[%s1 + $0x84] sm:$0xf]
  %v81 = vld [vmem:[%s1 + $0x88] sm:$0xf]
  %v82 = vld [vmem:[%s1 + $0x8c] sm:$0xf]
  %v83 = vld [vmem:[%s1 + $0x90] sm:$0xf]
  %v84 = vld [vmem:[%s1 + $0x94] sm:$0xf]
  %v85 = vld [vmem:[%s1 + $0x98] sm:$0xf]
  %v86 = vld [vmem:[%s1 + $0x9c] sm:$0xf]
  %v87 = vld [vmem:[%s1 + $0xa0] sm:$0xf]
  %v88 = vld [vmem:[%s1 + $0xa4] sm:$0xf]
  %v89 = vld [vmem:[%s1 + $0xa8] sm:$0xf]
  %v90 = vld [vmem:[%s1 + $0xac] sm:$0xf]
  %v91 = vld [vmem:[%s1 + $0xb0] sm:$0xf]
  %v92 = vld [vmem:[%s1 + $0xb4] sm:$0xf]
  %v93 = vld [vmem:[%s1 + $0xb8] sm:$0xf]
  %v94 = vld [vmem:[%s1 + $0xbc] sm:$0xf]
  %v95 = vld [vmem:[%s1 + $0xc0] sm:$0xf]
  %v96 = vld [vmem:[%s1 + $0xc4] sm:$0xf]
  %v97 = vld [vmem:[%s1 + $0xc8] sm:$0xf]
  %v98 = vld [vmem:[%s1 + $0xcc] sm:$0xf]
  %v99 = vld [vmem:[%s1 + $0xd0] sm:$0xf]
  %v100 = vld [vmem:[%s1 + $0xd4] sm:$0xf]
  %v101 = vld [vmem:[%s1 + $0xd8] sm:$0xf]
  %v102 = vld [vmem:[%s1 + $0xdc] sm:$0xf]
  %v103 = vld [vmem:[%s1 + $0xe0] sm:$0xf]
  %v104 = vld [vmem:[%s1 + $0xe4] sm:$0xf]
  %v105 = vld [vmem:[%s1 + $0xe8] sm:$0xf]
  %v106 = vld [vmem:[%s1 + $0xec] sm:$0xf]
  %v107 = vld [vmem:[%s1 + $0xf0] sm:$0xf]
  %v108 = vld [vmem:[%s1 + $0xf4] sm:$0xf]
  %v109 = vld [vmem:[%s1 + $0xf8] sm:$0xf]
  %v110 = vld [vmem:[%s1 + $0xfc] sm:$0xf]
  %v111 = vld [vmem:[%s1 + $0x100] sm:$0xf]
  %v112 = vld [vmem:[%s1 + $0x104] sm:$0xf]
  %v113 = vld [vmem:[%s1 + $0x108] sm:$0xf]
  %v114 = vld [vmem:[%s1 + $0x10c] sm:$0xf]
  %v115 = vld [vmem:[%s1 + $0x110] sm:$0xf]
  %v116 = vld [vmem:[%s1 + $0x114] sm:$0xf]
  %v117 = vld [vmem:[%s1 + $0x118] sm:$0xf]
  %v118 = vld [vmem:[%s1 + $0x11c] sm:$0xf]
  %v119 = vld [vmem:[%s1 + $0x120] sm:$0xf]
  %v120 = vld [vmem:[%s1 + $0x124] sm:$0xf]
  %v121 = vld [vmem:[%s1 + $0x128] sm:$0xf]
  %v122 = vld [vmem:[%s1 + $0x12c] sm:$0xf]
  %v123 = vld [vmem:[%s1 + $0x130] sm:$0xf]
  %v124 = vld [vmem:[%s1 + $0x134] sm:$0xf]
  %v125 = vld [vmem:[%s1 + $0x138] sm:$0xf]
  %v126 = vld [vmem:[%s1 + $0x13c] sm:$0xf]
  %v127 = vld [vmem:[%s1 + $0x140] sm:$0xf]
  %v128 = vld [vmem:[%s1 + $0x144] sm:$0xf]
  %v129 = vld [vmem:[%s1 + $0x148] sm:$0xf]
  %v130 = vld [vmem:[%s1 + $0x14c] sm:$0xf]
  %v131 = vld [vmem:[%s1 + $0x150] sm:$0xf]
  %v132 = vld [vmem:[%s1 + $0x154] sm:$0xf]
  %v133 = vld [vmem:[%s1 + $0x158] sm:$0xf]
  %v134 = vld [vmem:[%s1 + $0x15c] sm:$0xf]
  %v135 = vld [vmem:[%s1 + $0x160] sm:$0xf]
  %v136 = vld [vmem:[%s1 + $0x164] sm:$0xf]
  %v137 = vld [vmem:[%s1 + $0x168] sm:$0xf]
  %v138 = vld [vmem:[%s1 + $0x16c] sm:$0xf]
  %v139 = vld [vmem:[%s1 + $0x170] sm:$0xf]
  %v140 = vld [vmem:[%s1 + $0x174] sm:$0xf]
  %v141 = vld [vmem:[%s1 + $0x178] sm:$0xf]
  %v142 = vld [vmem:[%s1 + $0x17c] sm:$0xf]
  %v143 = vld [vmem:[%s1 + $0x180] sm:$0xf]
  %v144 = vld [vmem:[%s1 + $0x184] sm:$0xf]
  %v145 = vld [vmem:[%s1 + $0x188] sm:$0xf]
  %v146 = vld [vmem:[%s1 + $0x18c] sm:$0xf]
  %v147 = vld [vmem:[%s1 + $0x190] sm:$0xf]
  %v148 = vld [vmem:[%s1 + $0x194] sm:$0xf]
  %v149 = vld [vmem:[%s1 + $0x198] sm:$0xf]
  %v150 = vld [vmem:[%s1 + $0x19c] sm:$0xf]
  %v151 = vld [vmem:[%s1 + $0x1a0] sm:$0xf]
  %v152 = vld [vmem:[%s1 + $0x1a4] sm:$0xf]
  %v153 = vld [vmem:[%s1 + $0x1a8] sm:$0xf]
  %v154 = vld [vmem:[%s1 + $0x1ac] sm:$0xf]
  %v155 = vld [vmem:[%s1 + $0x1b0] sm:$0xf]
  %v156 = vld [vmem:[%s1 + $0x1b4] sm:$0xf]
  %v157 = vld [vmem:[%s1 + $0x1b8] sm:$0xf]
  %v158 = vld [vmem:[%s1 + $0x1bc] sm:$0xf]
  %v159 = vld [vmem:[%s1 + $0x1c0] sm:$0xf]
  %v160 = vld [vmem:[%s1 + $0x1c4] sm:$0xf]
  %v161 = vld [vmem:[%s1 + $0x1c8] sm:$0xf]
  %v162 = vld [vmem:[%s1 + $0x1cc] sm:$0xf]
  %v163 = vld [vmem:[%s1 + $0x1d0] sm:$0xf]
  %v164 = vld [vmem:[%s1 + $0x1d4] sm:$0xf]
  %v165 = vld [vmem:[%s1 + $0x1d8] sm:$0xf]
  %v166 = vld [vmem:[%s1 + $0x1dc] sm:$0xf]
  %v167 = vld [vmem:[%s1 + $0x1e0] sm:$0xf]
  %v168 = vld [vmem:[%s1 + $0x1e4] sm:$0xf]
  %v169 = vld [vmem:[%s1 + $0x1e8] sm:$0xf]
  %v170 = vld [vmem:[%s1 + $0x1ec] sm:$0xf]
  %v171 = vld [vmem:[%s1 + $0x1f0] sm:$0xf]
  %v172 = vld [vmem:[%s1 + $0x1f4] sm:$0xf]
  %v173 = vld [vmem:[%s1 + $0x1f8] sm:$0xf]
  %v174 = vld [vmem:[%s1 + $0x1fc] sm:$0xf]
  %v175 = vld [vmem:[%s1 + $0x200] sm:$0xf]
  %v176 = vld [vmem:[%s1 + $0x204] sm:$0xf]
  %v177 = vld [vmem:[%s1 + $0x208] sm:$0xf]
  %v178 = vld [vmem:[%s1 + $0x20c] sm:$0xf]
  %v179 = vld [vmem:[%s1 + $0x210] sm:$0xf]
  %v180 = vld [vmem:[%s1 + $0x214] sm:$0xf]
  %v181 = vld [vmem:[%s1 + $0x218] sm:$0xf]
  %v182 = vld [vmem:[%s1 + $0x21c] sm:$0xf]
  %v183 = vld [vmem:[%s1 + $0x220] sm:$0xf]
  %v184 = vld [vmem:[%s1 + $0x224] sm:$0xf]
  %v185 = vld [vmem:[%s1 + $0x228] sm:$0xf]
  %v186 = vld [vmem:[%s1 + $0x22c] sm:$0xf]
  %v187 = vld [vmem:[%s1 + $0x230] sm:$0xf]
  %v188 = vld [vmem:[%s1 + $0x234] sm:$0xf]
  %v189 = vld [vmem:[%s1 + $0x238] sm:$0xf]
  %v190 = vld [vmem:[%s1 + $0x23c] sm:$0xf]
  %v191 = vld [vmem:[%s1 + $0x240] sm:$0xf]
  %v192 = vld [vmem:[%s1 + $0x244] sm:$0xf]
  %v193 = vld [vmem:[%s1 + $0x248] sm:$0xf]
  %v194 = vld [vmem:[%s1 + $0x24c] sm:$0xf]
  %v195 = vld [vmem:[%s1 + $0x250] sm:$0xf]
  %v196 = vld [vmem:[%s1 + $0x254] sm:$0xf]
  %v197 = vld [vmem:[%s1 + $0x258] sm:$0xf]
  %v198 = vld [vmem:[%s1 + $0x25c] sm:$0xf]
  %v199 = vld [vmem:[%s1 + $0x260] sm:$0xf]
  %v200 = vld [vmem:[%s1 + $0x264] sm:$0xf]
  %v201 = vld [vmem:[%s1 + $0x268] sm:$0xf]
  %v202 = vld [vmem:[%s1 + $0x26c] sm:$0xf]
  %v203 = vld [vmem:[%s1 + $0x270] sm:$0xf]
  %v204 = vld [vmem:[%s1 + $0x274] sm:$0xf]
  %v205 = vld [vmem:[%s1 + $0x278] sm:$0xf]
  %v206 = vld [vmem:[%s1 + $0x27c] sm:$0xf]
  %v207 = vld [vmem:[%s1 + $0x280] sm:$0xf]
  %v208 = vld [vmem:[%s1 + $0x284] sm:$0xf]
  %v209 = vld [vmem:[%s1 + $0x288] sm:$0xf]
  %v210 = vld [vmem:[%s1 + $0x28c] sm:$0xf]
  %v211 = vld [vmem:[%s1 + $0x290] sm:$0xf]
  %v212 = vld [vmem:[%s1 + $0x294] sm:$0xf]
  %v213 = vld [vmem:[%s1 + $0x298] sm:$0xf]
  %v214 = vld [vmem:[%s1 + $0x29c] sm:$0xf]
  %v215 = vld [vmem:[%s1 + $0x2a0] sm:$0xf]
  %v216 = vld [vmem:[%s1 + $0x2a4] sm:$0xf]
  %v217 = vld [vmem:[%s1 + $0x2a8] sm:$0xf]
  %v218 = vld [vmem:[%s1 + $0x2ac] sm:$0xf]
  %v219 = vld [vmem:[%s1 + $0x2b0] sm:$0xf]
  %v220 = vld [vmem:[%s1 + $0x2b4] sm:$0xf]
  %v221 = vld [vmem:[%s1 + $0x2b8] sm:$0xf]
  %v222 = vld [vmem:[%s1 + $0x2bc] sm:$0xf]
  %v223 = vld [vmem:[%s1 + $0x2c0] sm:$0xf]
  %v224 = vld [vmem:[%s1 + $0x2c4] sm:$0xf]
  %v225 = vld [vmem:[%s1 + $0x2c8] sm:$0xf]
  %v226 = vld [vmem:[%s1 + $0x2cc] sm:$0xf]
  %v227 = vld [vmem:[%s1 + $0x2d0] sm:$0xf]
  %v228 = vld [vmem:[%s1 + $0x2d4] sm:$0xf]
  %v229 = vld [vmem:[%s1 + $0x2d8] sm:$0xf]
  %v230 = vld [vmem:[%s1 + $0x2dc] sm:$0xf]
  %v231 = vld [vmem:[%s1 + $0x2e0] sm:$0xf]
  %v232 = vld [vmem:[%s1 + $0x2e4] sm:$0xf]
  %v233 = vld [vmem:[%s1 + $0x2e8] sm:$0xf]
  %v234 = vld [vmem:[%s1 + $0x2ec] sm:$0xf]
  %v235 = vld [vmem:[%s1 + $0x2f0] sm:$0xf]
  %v236 = vld [vmem:[%s1 + $0x2f4] sm:$0xf]
  %v237 = vld [vmem:[%s1 + $0x2f8] sm:$0xf]
  %v238 = vld [vmem:[%s1 + $0x2fc] sm:$0xf]
  %v239 = vld [vmem:[%s1 + $0x300] sm:$0xf]
  %v240 = vld [vmem:[%s1 + $0x304] sm:$0xf]
  %v241 = vld [vmem:[%s1 + $0x308] sm:$0xf]
  %v242 = vld [vmem:[%s1 + $0x30c] sm:$0xf]
  %v243 = vld [vmem:[%s1 + $0x310] sm:$0xf]
  %v244 = vld [vmem:[%s1 + $0x314] sm:$0xf]
  %v245 = vld [vmem:[%s1 + $0x318] sm:$0xf]
  %v246 = vld [vmem:[%s1 + $0x31c] sm:$0xf]
  %v247 = vld [vmem:[%s1 + $0x320] sm:$0xf]
  %v248 = vld [vmem:[%s1 + $0x324] sm:$0xf]
  %v249 = vld [vmem:[%s1 + $0x328] sm:$0xf]
  %v250 = vld [vmem:[%s1 + $0x32c] sm:$0xf]
  %v251 = vld [vmem:[%s1 + $0x330] sm:$0xf]
  %v252 = vld [vmem:[%s1 + $0x334] sm:$0xf]
  %v253 = vld [vmem:[%s1 + $0x338] sm:$0xf]
  %v254 = vld [vmem:[%s1 + $0x33c] sm:$0xf]
  %v255 = vld [vmem:[%s1 + $0x340] sm:$0xf]
  %v256 = vld [vmem:[%s1 + $0x344] sm:$0xf]
  %v257 = vld [vmem:[%s1 + $0x348] sm:$0xf]
  %v258 = vld [vmem:[%s1 + $0x34c] sm:$0xf]
  %v259 = vld [vmem:[%s1 + $0x350] sm:$0xf]
  %v260 = vld [vmem:[%s1 + $0x354] sm:$0xf]
  %v261 = vld [vmem:[%s1 + $0x358] sm:$0xf]
  %v262 = vld [vmem:[%s1 + $0x35c] sm:$0xf]
  %v263 = vld [vmem:[%s1 + $0x360] sm:$0xf]
  %v264 = vld [vmem:[%s1 + $0x364] sm:$0xf]
  %v265 = vld [vmem:[%s1 + $0x368] sm:$0xf]
  %v266 = vld [vmem:[%s1 + $0x36c] sm:$0xf]
  %v267 = vld [vmem:[%s1 + $0x370] sm:$0xf]
  %v268 = vld [vmem:[%s1 + $0x374] sm:$0xf]
  %v269 = vld [vmem:[%s1 + $0x378] sm:$0xf]
  %v270 = vld [vmem:[%s1 + $0x37c] sm:$0xf]
  %v271 = vld [vmem:[%s1 + $0x380] sm:$0xf]
  %v272 = vld [vmem:[%s1 + $0x384] sm:$0xf]
  %v273 = vld [vmem:[%s1 + $0x388] sm:$0xf]
  %v274 = vld [vmem:[%s1 + $0x38c] sm:$0xf]
  %v275 = vld [vmem:[%s1 + $0x390] sm:$0xf]
  %v276 = vld [vmem:[%s1 + $0x394] sm:$0xf]
  %v277 = vld [vmem:[%s1 + $0x398] sm:$0xf]
  %v278 = vld [vmem:[%s1 + $0x39c] sm:$0xf]
  %v279 = vld [vmem:[%s1 + $0x3a0] sm:$0xf]
  %v280 = vld [vmem:[%s1 + $0x3a4] sm:$0xf]
  %v281 = vld [vmem:[%s1 + $0x3a8] sm:$0xf]
  %v282 = vld [vmem:[%s1 + $0x3ac] sm:$0xf]
  %v283 = vld [vmem:[%s1 + $0x3b0] sm:$0xf]
  %v284 = vld [vmem:[%s1 + $0x3b4] sm:$0xf]
  %v285 = vld [vmem:[%s1 + $0x3b8] sm:$0xf]
  %v286 = vld [vmem:[%s1 + $0x3bc] sm:$0xf]
  %v287 = vld [vmem:[%s1 + $0x3c0] sm:$0xf]
  %v288 = vld [vmem:[%s1 + $0x3c4] sm:$0xf]
  %v289 = vld [vmem:[%s1 + $0x3c8] sm:$0xf]
  %v290 = vld [vmem:[%s1 + $0x3cc] sm:$0xf]
  %v291 = vld [vmem:[%s1 + $0x3d0] sm:$0xf]
  %v292 = vld [vmem:[%s1 + $0x3d4] sm:$0xf]
  %v293 = vld [vmem:[%s1 + $0x3d8] sm:$0xf]
  %v294 = vld [vmem:[%s1 + $0x3dc] sm:$0xf]
  %v295 = vld [vmem:[%s1 + $0x3e0] sm:$0xf]
  %v296 = vld [vmem:[%s1 + $0x3e4] sm:$0xf]
  %v297 = vld [vmem:[%s1 + $0x3e8] sm:$0xf]
  %v298 = vld [vmem:[%s1 + $0x3ec] sm:$0xf]
  %v299 = vld [vmem:[%s1 + $0x3f0] sm:$0xf]
  %v300 = vld [vmem:[%s1 + $0x3f4] sm:$0xf]
  %v301 = vld [vmem:[%s1 + $0x3f8] sm:$0xf]
  %v302 = vld [vmem:[%s1 + $0x3fc] sm:$0xf]
  %v303 = vld [vmem:[%s1 + $0x400] sm:$0xf]
  %v304 = vld [vmem:[%s1 + $0x404] sm:$0xf]
  %v305 = vld [vmem:[%s1 + $0x408] sm:$0xf]
  %v306 = vld [vmem:[%s1 + $0x40c] sm:$0xf]
  %v307 = vld [vmem:[%s1 + $0x410] sm:$0xf]
  %v308 = vld [vmem:[%s1 + $0x414] sm:$0xf]
  %v309 = vld [vmem:[%s1 + $0x418] sm:$0xf]
  %v310 = vld [vmem:[%s1 + $0x41c] sm:$0xf]
  %v311 = vld [vmem:[%s1 + $0x420] sm:$0xf]
  %v312 = vld [vmem:[%s1 + $0x424] sm:$0xf]
  %v313 = vld [vmem:[%s1 + $0x428] sm:$0xf]
  %v314 = vld [vmem:[%s1 + $0x42c] sm:$0xf]
  %v315 = vld [vmem:[%s1 + $0x430] sm:$0xf]
  %v316 = vld [vmem:[%s1 + $0x434] sm:$0xf]
  %v317 = vld [vmem:[%s1 + $0x438] sm:$0xf]
  %v318 = vld [vmem:[%s1 + $0x43c] sm:$0xf]
  %v319 = vld [vmem:[%s1 + $0x440] sm:$0xf]
  %v320 = vld [vmem:[%s1 + $0x444] sm:$0xf]
  %v321 = vld [vmem:[%s1 + $0x448] sm:$0xf]
  %v322 = vld [vmem:[%s1 + $0x44c] sm:$0xf]
  %v323 = vld [vmem:[%s1 + $0x450] sm:$0xf]
  %v324 = vld [vmem:[%s1 + $0x454] sm:$0xf]
  %v325 = vld [vmem:[%s1 + $0x458] sm:$0xf]
  %v326 = vld [vmem:[%s1 + $0x45c] sm:$0xf]
  %v327 = vld [vmem:[%s1 + $0x460] sm:$0xf]
  %v328 = vld [vmem:[%s1 + $0x464] sm:$0xf]
  %v329 = vld [vmem:[%s1 + $0x468] sm:$0xf]
  %v330 = vld [vmem:[%s1 + $0x46c] sm:$0xf]
  %v331 = vld [vmem:[%s1 + $0x470] sm:$0xf]
  %v332 = vld [vmem:[%s1 + $0x474] sm:$0xf]
  %v333 = vld [vmem:[%s1 + $0x478] sm:$0xf]
  %v334 = vld [vmem:[%s1 + $0x47c] sm:$0xf]
  %v335 = vld [vmem:[%s1 + $0x480] sm:$0xf]
  %v336 = vld [vmem:[%s1 + $0x484] sm:$0xf]
  %v337 = vld [vmem:[%s1 + $0x488] sm:$0xf]
  %v338 = vld [vmem:[%s1 + $0x48c] sm:$0xf]
  %v339 = vld [vmem:[%s1 + $0x490] sm:$0xf]
  %v340 = vld [vmem:[%s1 + $0x494] sm:$0xf]
  %v341 = vld [vmem:[%s1 + $0x498] sm:$0xf]
  %v342 = vld [vmem:[%s1 + $0x49c] sm:$0xf]
  %v343 = vld [vmem:[%s1 + $0x4a0] sm:$0xf]
  %v344 = vld [vmem:[%s1 + $0x4a4] sm:$0xf]
  %v345 = vld [vmem:[%s1 + $0x4a8] sm:$0xf]
  %v346 = vld [vmem:[%s1 + $0x4ac] sm:$0xf]
  %v347 = vld [vmem:[%s1 + $0x4b0] sm:$0xf]
  %v348 = vld [vmem:[%s1 + $0x4b4] sm:$0xf]
  %v349 = vld [vmem:[%s1 + $0x4b8] sm:$0xf]
  %v350 = vld [vmem:[%s1 + $0x4bc] sm:$0xf]
  %v351 = vld [vmem:[%s1 + $0x4c0] sm:$0xf]
  %v352 = vld [vmem:[%s1 + $0x4c4] sm:$0xf]
  %v353 = vld [vmem:[%s1 + $0x4c8] sm:$0xf]
  %v354 = vld [vmem:[%s1 + $0x4cc] sm:$0xf]
  %v355 = vld [vmem:[%s1 + $0x4d0] sm:$0xf]
  %v356 = vld [vmem:[%s1 + $0x4d4] sm:$0xf]
  %v357 = vld [vmem:[%s1 + $0x4d8] sm:$0xf]
  %v358 = vld [vmem:[%s1 + $0x4dc] sm:$0xf]
  %v359 = vld [vmem:[%s1 + $0x4e0] sm:$0xf]
  %v360 = vld [vmem:[%s1 + $0x4e4] sm:$0xf]
  %v361 = vld [vmem:[%s1 + $0x4e8] sm:$0xf]
  %v362 = vld [vmem:[%s1 + $0x4ec] sm:$0xf]
  %v363 = vld [vmem:[%s1 + $0x4f0] sm:$0xf]
  %v364 = vld [vmem:[%s1 + $0x4f4] sm:$0xf]
  %v365 = vld [vmem:[%s1 + $0x4f8] sm:$0xf]
  %v366 = vld [vmem:[%s1 + $0x4fc] sm:$0xf]
  %v367 = vld [vmem:[%s1 + $0x500] sm:$0xf]
  %v368 = vld [vmem:[%s1 + $0x504] sm:$0xf]
  %v369 = vld [vmem:[%s1 + $0x508] sm:$0xf]
  %v370 = vld [vmem:[%s1 + $0x50c] sm:$0xf]
  %v371 = vld [vmem:[%s1 + $0x510] sm:$0xf]
  %v372 = vld [vmem:[%s1 + $0x514] sm:$0xf]
  %v373 = vld [vmem:[%s1 + $0x518] sm:$0xf]
  %v374 = vld [vmem:[%s1 + $0x51c] sm:$0xf]
  %v375 = vld [vmem:[%s1 + $0x520] sm:$0xf]
  %v376 = vld [vmem:[%s1 + $0x524] sm:$0xf]
  %v377 = vld [vmem:[%s1 + $0x528] sm:$0xf]
  %v378 = vld [vmem:[%s1 + $0x52c] sm:$0xf]
  %v379 = vld [vmem:[%s1 + $0x530] sm:$0xf]
  %v380 = vld [vmem:[%s1 + $0x534] sm:$0xf]
  %v381 = vld [vmem:[%s1 + $0x538] sm:$0xf]
  %v382 = vld [vmem:[%s1 + $0x53c] sm:$0xf]
  %v383 = vld [vmem:[%s1 + $0x540] sm:$0xf]
  %v384 = vld [vmem:[%s1 + $0x544] sm:$0xf]
  %v385 = vld [vmem:[%s1 + $0x548] sm:$0xf]
  %v386 = vld [vmem:[%s1 + $0x54c] sm:$0xf]
  %v387 = vld [vmem:[%s1 + $0x550] sm:$0xf]
  %v388 = vld [vmem:[%s1 + $0x554] sm:$0xf]
  %v389 = vld [vmem:[%s1 + $0x558] sm:$0xf]
  %v390 = vld [vmem:[%s1 + $0x55c] sm:$0xf]
  %v391 = vld [vmem:[%s1 + $0x560] sm:$0xf]
  %v392 = vld [vmem:[%s1 + $0x564] sm:$0xf]
  %v393 = vld [vmem:[%s1 + $0x568] sm:$0xf]
  %v394 = vld [vmem:[%s1 + $0x56c] sm:$0xf]
  %v395 = vld [vmem:[%s1 + $0x570] sm:$0xf]
  %v396 = vld [vmem:[%s1 + $0x574] sm:$0xf]
  %v397 = vld [vmem:[%s1 + $0x578] sm:$0xf]
  %v398 = vld [vmem:[%s1 + $0x57c] sm:$0xf]
  %v399 = vld [vmem:[%s1 + $0x580] sm:$0xf]
  %v400 = vld [vmem:[%s1 + $0x584] sm:$0xf]
  %v401 = vld [vmem:[%s1 + $0x588] sm:$0xf]
  %v402 = vld [vmem:[%s1 + $0x58c] sm:$0xf]
  %v403 = vld [vmem:[%s1 + $0x590] sm:$0xf]
  %v404 = vld [vmem:[%s1 + $0x594] sm:$0xf]
  %v405 = vld [vmem:[%s1 + $0x598] sm:$0xf]
  %v406 = vld [vmem:[%s1 + $0x59c] sm:$0xf]
  %v407 = vld [vmem:[%s1 + $0x5a0] sm:$0xf]
  %v408 = vld [vmem:[%s1 + $0x5a4] sm:$0xf]
  %v409 = vld [vmem:[%s1 + $0x5a8] sm:$0xf]
  %v410 = vld [vmem:[%s1 + $0x5ac] sm:$0xf]
  %v411 = vld [vmem:[%s1 + $0x5b0] sm:$0xf]
  %v412 = vld [vmem:[%s1 + $0x5b4] sm:$0xf]
  %v413 = vld [vmem:[%s1 + $0x5b8] sm:$0xf]
  %v414 = vld [vmem:[%s1 + $0x5bc] sm:$0xf]
  %v415 = vld [vmem:[%s1 + $0x5c0] sm:$0xf]
  %v416 = vld [vmem:[%s1 + $0x5c4] sm:$0xf]
  %v417 = vld [vmem:[%s1 + $0x5c8] sm:$0xf]
  %v418 = vld [vmem:[%s1 + $0x5cc] sm:$0xf]
  %v419 = vld [vmem:[%s1 + $0x5d0] sm:$0xf]
  %v420 = vld [vmem:[%s1 + $0x5d4] sm:$0xf]
  %v421 = vld [vmem:[%s1 + $0x5d8] sm:$0xf]
  %v422 = vld [vmem:[%s1 + $0x5dc] sm:$0xf]
  %v423 = vld [vmem:[%s1 + $0x5e0] sm:$0xf]
  %v424 = vld [vmem:[%s1 + $0x5e4] sm:$0xf]
  %v425 = vld [vmem:[%s1 + $0x5e8] sm:$0xf]
  %v426 = vld [vmem:[%s1 + $0x5ec] sm:$0xf]
  %v427 = vld [vmem:[%s1 + $0x5f0] sm:$0xf]
  %v428 = vld [vmem:[%s1 + $0x5f4] sm:$0xf]
  %v429 = vld [vmem:[%s1 + $0x5f8] sm:$0xf]
  %v430 = vld [vmem:[%s1 + $0x5fc] sm:$0xf]
  %v431 = vld [vmem:[%s1 + $0x600] sm:$0xf]
  %v432 = vld [vmem:[%s1 + $0x604] sm:$0xf]
  %v433 = vld [vmem:[%s1 + $0x608] sm:$0xf]
  %v434 = vld [vmem:[%s1 + $0x60c] sm:$0xf]
  %v435 = vld [vmem:[%s1 + $0x610] sm:$0xf]
  %v436 = vld [vmem:[%s1 + $0x614] sm:$0xf]
  %v437 = vld [vmem:[%s1 + $0x618] sm:$0xf]
  %v438 = vld [vmem:[%s1 + $0x61c] sm:$0xf]
  %v439 = vld [vmem:[%s1 + $0x620] sm:$0xf]
  %v440 = vld [vmem:[%s1 + $0x624] sm:$0xf]
  %v441 = vld [vmem:[%s1 + $0x628] sm:$0xf]
  %v442 = vld [vmem:[%s1 + $0x62c] sm:$0xf]
  %v443 = vld [vmem:[%s1 + $0x630] sm:$0xf]
  %v444 = vld [vmem:[%s1 + $0x634] sm:$0xf]
  %v445 = vld [vmem:[%s1 + $0x638] sm:$0xf]
  %v446 = vld [vmem:[%s1 + $0x63c] sm:$0xf]
  %v447 = vld [vmem:[%s1 + $0x640] sm:$0xf]
  %v448 = vld [vmem:[%s1 + $0x644] sm:$0xf]
  %v449 = vld [vmem:[%s1 + $0x648] sm:$0xf]
  %v450 = vld [vmem:[%s1 + $0x64c] sm:$0xf]
  %v451 = vld [vmem:[%s1 + $0x650] sm:$0xf]
  %v452 = vld [vmem:[%s1 + $0x654] sm:$0xf]
  %v453 = vld [vmem:[%s1 + $0x658] sm:$0xf]
  %v454 = vld [vmem:[%s1 + $0x65c] sm:$0xf]
  %v455 = vld [vmem:[%s1 + $0x660] sm:$0xf]
  %v456 = vld [vmem:[%s1 + $0x664] sm:$0xf]
  %v457 = vld [vmem:[%s1 + $0x668] sm:$0xf]
  %v458 = vld [vmem:[%s1 + $0x66c] sm:$0xf]
  %v459 = vld [vmem:[%s1 + $0x670] sm:$0xf]
  %v460 = vld [vmem:[%s1 + $0x674] sm:$0xf]
  %v461 = vld [vmem:[%s1 + $0x678] sm:$0xf]
  %v462 = vld [vmem:[%s1 + $0x67c] sm:$0xf]
  %v463 = vld [vmem:[%s1 + $0x680] sm:$0xf]
  %v464 = vld [vmem:[%s1 + $0x684] sm:$0xf]
  %v465 = vld [vmem:[%s1 + $0x688] sm:$0xf]
  %v466 = vld [vmem:[%s1 + $0x68c] sm:$0xf]
  %v467 = vld [vmem:[%s1 + $0x690] sm:$0xf]
  %v468 = vld [vmem:[%s1 + $0x694] sm:$0xf]
  %v469 = vld [vmem:[%s1 + $0x698] sm:$0xf]
  %v470 = vld [vmem:[%s1 + $0x69c] sm:$0xf]
  %v471 = vld [vmem:[%s1 + $0x6a0] sm:$0xf]
  %v472 = vld [vmem:[%s1 + $0x6a4] sm:$0xf]
  %v473 = vld [vmem:[%s1 + $0x6a8] sm:$0xf]
  %v474 = vld [vmem:[%s1 + $0x6ac] sm:$0xf]
  %v475 = vld [vmem:[%s1 + $0x6b0] sm:$0xf]
  %v476 = vld [vmem:[%s1 + $0x6b4] sm:$0xf]
  %v477 = vld [vmem:[%s1 + $0x6b8] sm:$0xf]
  %v478 = vld [vmem:[%s1 + $0x6bc] sm:$0xf]
  %v479 = vld [vmem:[%s1 + $0x6c0] sm:$0xf]
  %v480 = vld [vmem:[%s1 + $0x6c4] sm:$0xf]
  %v481 = vld [vmem:[%s1 + $0x6c8] sm:$0xf]
  %v482 = vld [vmem:[%s1 + $0x6cc] sm:$0xf]
  %v483 = vld [vmem:[%s1 + $0x6d0] sm:$0xf]
  %v484 = vld [vmem:[%s1 + $0x6d4] sm:$0xf]
  %v485 = vld [vmem:[%s1 + $0x6d8] sm:$0xf]
  %v486 = vld [vmem:[%s1 + $0x6dc] sm:$0xf]
  %v487 = vld [vmem:[%s1 + $0x6e0] sm:$0xf]
  %v488 = vld [vmem:[%s1 + $0x6e4] sm:$0xf]
  %v489 = vld [vmem:[%s1 + $0x6e8] sm:$0xf]
  %v490 = vld [vmem:[%s1 + $0x6ec] sm:$0xf]
  %v491 = vld [vmem:[%s1 + $0x6f0] sm:$0xf]
  %v492 = vld [vmem:[%s1 + $0x6f4] sm:$0xf]
  %v493 = vld [vmem:[%s1 + $0x6f8] sm:$0xf]
  %v494 = vld [vmem:[%s1 + $0x6fc] sm:$0xf]
  %v495 = vld [vmem:[%s1 + $0x700] sm:$0xf]
  %v496 = vld [vmem:[%s1 + $0x704] sm:$0xf]
  %v497 = vld [vmem:[%s1 + $0x708] sm:$0xf]
  %v498 = vld [vmem:[%s1 + $0x70c] sm:$0xf]
  %v499 = vld [vmem:[%s1 + $0x710] sm:$0xf]
  %v500 = vld [vmem:[%s1 + $0x714] sm:$0xf]
  %v501 = vld [vmem:[%s1 + $0x718] sm:$0xf]
  %v502 = vld [vmem:[%s1 + $0x71c] sm:$0xf]
  %v503 = vld [vmem:[%s1 + $0x720] sm:$0xf]
  %v504 = vld [vmem:[%s1 + $0x724] sm:$0xf]
  %v505 = vld [vmem:[%s1 + $0x728] sm:$0xf]
  %v506 = vld [vmem:[%s1 + $0x72c] sm:$0xf]
  %v507 = vld [vmem:[%s1 + $0x730] sm:$0xf]
  %v508 = vld [vmem:[%s1 + $0x734] sm:$0xf]
  %v509 = vld [vmem:[%s1 + $0x738] sm:$0xf]
  %v510 = vld [vmem:[%s1 + $0x73c] sm:$0xf]
  %v511 = vld [vmem:[%s1 + $0x740] sm:$0xf]
  %v512 = vld [vmem:[%s1 + $0x744] sm:$0xf]
  %v513 = vld [vmem:[%s1 + $0x748] sm:$0xf]
  %v514 = vld [vmem:[%s1 + $0x74c] sm:$0xf]
  %v515 = vld [vmem:[%s1 + $0x750] sm:$0xf]
  %v516 = vld [vmem:[%s1 + $0x754] sm:$0xf]
  %v517 = vld [vmem:[%s1 + $0x758] sm:$0xf]
  %v518 = vld [vmem:[%s1 + $0x75c] sm:$0xf]
  %v519 = vld [vmem:[%s1 + $0x760] sm:$0xf]
  %v520 = vld [vmem:[%s1 + $0x764] sm:$0xf]
  %v521 = vld [vmem:[%s1 + $0x768] sm:$0xf]
  %v522 = vld [vmem:[%s1 + $0x76c] sm:$0xf]
  %v523 = vld [vmem:[%s1 + $0x770] sm:$0xf]
  %v524 = vld [vmem:[%s1 + $0x774] sm:$0xf]
  %v525 = vld [vmem:[%s1 + $0x778] sm:$0xf]
  %v526 = vld [vmem:[%s1 + $0x77c] sm:$0xf]
  %v527 = vld [vmem:[%s1 + $0x780] sm:$0xf]
  %v528 = vld [vmem:[%s1 + $0x784] sm:$0xf]
  %v529 = vld [vmem:[%s1 + $0x788] sm:$0xf]
  %v530 = vld [vmem:[%s1 + $0x78c] sm:$0xf]
  %v531 = vld [vmem:[%s1 + $0x790] sm:$0xf]
  %v532 = vld [vmem:[%s1 + $0x794] sm:$0xf]
  %v533 = vld [vmem:[%s1 + $0x798] sm:$0xf]
  %v534 = vld [vmem:[%s1 + $0x79c] sm:$0xf]
  %v535 = vld [vmem:[%s1 + $0x7a0] sm:$0xf]
  %v536 = vld [vmem:[%s1 + $0x7a4] sm:$0xf]
  %v537 = vld [vmem:[%s1 + $0x7a8] sm:$0xf]
  %v538 = vld [vmem:[%s1 + $0x7ac] sm:$0xf]
  %v539 = vld [vmem:[%s1 + $0x7b0] sm:$0xf]
  %v540 = vld [vmem:[%s1 + $0x7b4] sm:$0xf]
  %v541 = vld [vmem:[%s1 + $0x7b8] sm:$0xf]
  %v542 = vld [vmem:[%s1 + $0x7bc] sm:$0xf]
  %v543 = vld [vmem:[%s1 + $0x7c0] sm:$0xf]
  %v544 = vld [vmem:[%s1 + $0x7c4] sm:$0xf]
  %v545 = vld [vmem:[%s1 + $0x7c8] sm:$0xf]
  %v546 = vld [vmem:[%s1 + $0x7cc] sm:$0xf]
  %v547 = vld [vmem:[%s1 + $0x7d0] sm:$0xf]
  %v548 = vld [vmem:[%s1 + $0x7d4] sm:$0xf]
  %v549 = vld [vmem:[%s1 + $0x7d8] sm:$0xf]
  %v550 = vld [vmem:[%s1 + $0x7dc] sm:$0xf]
  %v551 = vld [vmem:[%s1 + $0x7e0] sm:$0xf]
  %v552 = vld [vmem:[%s1 + $0x7e4] sm:$0xf]
  %v553 = vld [vmem:[%s1 + $0x7e8] sm:$0xf]
  %v554 = vld [vmem:[%s1 + $0x7ec] sm:$0xf]
  %v555 = vld [vmem:[%s1 + $0x7f0] sm:$0xf]
  %v556 = vld [vmem:[%s1 + $0x7f4] sm:$0xf]
  %v557 = vld [vmem:[%s1 + $0x7f8] sm:$0xf]
  %v558 = vld [vmem:[%s1 + $0x7fc] sm:$0xf]
  %v559 = vld [vmem:[%s2] sm:$0x1]
  %v561 = vlaneseq
  %v562 = vshrl.u32 %v561, 7
  %v563 = vsub.s32 0, %v562
  %v564 = vrot.slane %v559, %v563
  %v598 = vunpack.c.l.b16 %v15
  %v599 = vunpack.c.h.b16 %v15
  %v600 = vunpack.c.l.b16 %v16
  %v601 = vunpack.c.h.b16 %v16
  %v602 = vunpack.c.l.b16 %v17
  %v603 = vunpack.c.h.b16 %v17
  %v604 = vunpack.c.l.b16 %v18
  %v605 = vunpack.c.h.b16 %v18
  %v606 = vunpack.c.l.b16 %v19
  %v607 = vunpack.c.h.b16 %v19
  %v608 = vunpack.c.l.b16 %v20
  %v609 = vunpack.c.h.b16 %v20
  %v610 = vunpack.c.l.b16 %v21
  %v611 = vunpack.c.h.b16 %v21
  %v612 = vunpack.c.l.b16 %v22
  %v613 = vunpack.c.h.b16 %v22
  %v614 = vunpack.c.l.b16 %v23
  %v615 = vunpack.c.h.b16 %v23
  %v616 = vunpack.c.l.b16 %v24
  %v617 = vunpack.c.h.b16 %v24
  %v618 = vunpack.c.l.b16 %v25
  %v619 = vunpack.c.h.b16 %v25
  %v620 = vunpack.c.l.b16 %v26
  %v621 = vunpack.c.h.b16 %v26
  %v622 = vunpack.c.l.b16 %v27
  %v623 = vunpack.c.h.b16 %v27
  %v624 = vunpack.c.l.b16 %v28
  %v625 = vunpack.c.h.b16 %v28
  %v626 = vunpack.c.l.b16 %v29
  %v627 = vunpack.c.h.b16 %v29
  %v628 = vunpack.c.l.b16 %v30
  %v629 = vunpack.c.h.b16 %v30
  %v630 = vunpack.c.l.b16 %v31
  %v631 = vunpack.c.h.b16 %v31
  %v632 = vunpack.c.l.b16 %v32
  %v633 = vunpack.c.h.b16 %v32
  %v634 = vunpack.c.l.b16 %v33
  %v635 = vunpack.c.h.b16 %v33
  %v636 = vunpack.c.l.b16 %v34
  %v637 = vunpack.c.h.b16 %v34
  %v638 = vunpack.c.l.b16 %v35
  %v639 = vunpack.c.h.b16 %v35
  %v640 = vunpack.c.l.b16 %v36
  %v641 = vunpack.c.h.b16 %v36
  %v642 = vunpack.c.l.b16 %v37
  %v643 = vunpack.c.h.b16 %v37
  %v644 = vunpack.c.l.b16 %v38
  %v645 = vunpack.c.h.b16 %v38
  %v646 = vunpack.c.l.b16 %v39
  %v647 = vunpack.c.h.b16 %v39
  %v648 = vunpack.c.l.b16 %v40
  %v649 = vunpack.c.h.b16 %v40
  %v650 = vunpack.c.l.b16 %v41
  %v651 = vunpack.c.h.b16 %v41
  %v652 = vunpack.c.l.b16 %v42
  %v653 = vunpack.c.h.b16 %v42
  %v654 = vunpack.c.l.b16 %v43
  %v655 = vunpack.c.h.b16 %v43
  %v656 = vunpack.c.l.b16 %v44
  %v657 = vunpack.c.h.b16 %v44
  %v658 = vunpack.c.l.b16 %v45
  %v659 = vunpack.c.h.b16 %v45
  %v660 = vunpack.c.l.b16 %v46
  %v661 = vunpack.c.h.b16 %v46
  %v662 = vpack.c.b16 %v630, %v598
  %v663 = vpack.c.b16 %v631, %v599
  %v664 = vpack.c.b16 %v632, %v600
  %v665 = vpack.c.b16 %v633, %v601
  %v666 = vpack.c.b16 %v634, %v602
  %v667 = vpack.c.b16 %v635, %v603
  %v668 = vpack.c.b16 %v636, %v604
  %v669 = vpack.c.b16 %v637, %v605
  %v670 = vpack.c.b16 %v638, %v606
  %v671 = vpack.c.b16 %v639, %v607
  %v672 = vpack.c.b16 %v640, %v608
  %v673 = vpack.c.b16 %v641, %v609
  %v674 = vpack.c.b16 %v642, %v610
  %v675 = vpack.c.b16 %v643, %v611
  %v676 = vpack.c.b16 %v644, %v612
  %v677 = vpack.c.b16 %v645, %v613
  %v678 = vpack.c.b16 %v646, %v614
  %v679 = vpack.c.b16 %v647, %v615
  %v680 = vpack.c.b16 %v648, %v616
  %v681 = vpack.c.b16 %v649, %v617
  %v682 = vpack.c.b16 %v650, %v618
  %v683 = vpack.c.b16 %v651, %v619
  %v684 = vpack.c.b16 %v652, %v620
  %v685 = vpack.c.b16 %v653, %v621
  %v686 = vpack.c.b16 %v654, %v622
  %v687 = vpack.c.b16 %v655, %v623
  %v688 = vpack.c.b16 %v656, %v624
  %v689 = vpack.c.b16 %v657, %v625
  %v690 = vpack.c.b16 %v658, %v626
  %v691 = vpack.c.b16 %v659, %v627
  %v692 = vpack.c.b16 %v660, %v628
  %v693 = vpack.c.b16 %v661, %v629
  %v1238 = vunpack.c.l.b16 %v47
  %v1239 = vunpack.c.l.b16 %v48
  %v1240 = vunpack.c.l.b16 %v49
  %v1241 = vunpack.c.l.b16 %v50
  %v1242 = vunpack.c.l.b16 %v51
  %v1243 = vunpack.c.l.b16 %v52
  %v1244 = vunpack.c.l.b16 %v53
  %v1245 = vunpack.c.l.b16 %v54
  %v1246 = vunpack.c.l.b16 %v55
  %v1247 = vunpack.c.l.b16 %v56
  %v1248 = vunpack.c.l.b16 %v57
  %v1249 = vunpack.c.l.b16 %v58
  %v1250 = vunpack.c.l.b16 %v59
  %v1251 = vunpack.c.l.b16 %v60
  %v1252 = vunpack.c.l.b16 %v61
  %v1253 = vunpack.c.l.b16 %v62
  %v1254 = vunpack.c.l.b16 %v63
  %v1255 = vunpack.c.l.b16 %v64
  %v1256 = vunpack.c.l.b16 %v65
  %v1257 = vunpack.c.l.b16 %v66
  %v1258 = vunpack.c.l.b16 %v67
  %v1259 = vunpack.c.l.b16 %v68
  %v1260 = vunpack.c.l.b16 %v69
  %v1261 = vunpack.c.l.b16 %v70
  %v1262 = vunpack.c.l.b16 %v71
  %v1263 = vunpack.c.l.b16 %v72
  %v1264 = vunpack.c.l.b16 %v73
  %v1265 = vunpack.c.l.b16 %v74
  %v1266 = vunpack.c.l.b16 %v75
  %v1267 = vunpack.c.l.b16 %v76
  %v1268 = vunpack.c.l.b16 %v77
  %v1269 = vunpack.c.l.b16 %v78
  %v1270 = vunpack.c.l.b16 %v79
  %v1271 = vunpack.c.l.b16 %v80
  %v1272 = vunpack.c.l.b16 %v81
  %v1273 = vunpack.c.l.b16 %v82
  %v1274 = vunpack.c.l.b16 %v83
  %v1275 = vunpack.c.l.b16 %v84
  %v1276 = vunpack.c.l.b16 %v85
  %v1277 = vunpack.c.l.b16 %v86
  %v1278 = vunpack.c.l.b16 %v87
  %v1279 = vunpack.c.l.b16 %v88
  %v1280 = vunpack.c.l.b16 %v89
  %v1281 = vunpack.c.l.b16 %v90
  %v1282 = vunpack.c.l.b16 %v91
  %v1283 = vunpack.c.l.b16 %v92
  %v1284 = vunpack.c.l.b16 %v93
  %v1285 = vunpack.c.l.b16 %v94
  %v1286 = vunpack.c.l.b16 %v95
  %v1287 = vunpack.c.l.b16 %v96
  %v1288 = vunpack.c.l.b16 %v97
  %v1289 = vunpack.c.l.b16 %v98
  %v1290 = vunpack.c.l.b16 %v99
  %v1291 = vunpack.c.l.b16 %v100
  %v1292 = vunpack.c.l.b16 %v101
  %v1293 = vunpack.c.l.b16 %v102
  %v1294 = vunpack.c.l.b16 %v103
  %v1295 = vunpack.c.l.b16 %v104
  %v1296 = vunpack.c.l.b16 %v105
  %v1297 = vunpack.c.l.b16 %v106
  %v1298 = vunpack.c.l.b16 %v107
  %v1299 = vunpack.c.l.b16 %v108
  %v1300 = vunpack.c.l.b16 %v109
  %v1301 = vunpack.c.l.b16 %v110
  %v1302 = vunpack.c.l.b16 %v111
  %v1303 = vunpack.c.l.b16 %v112
  %v1304 = vunpack.c.l.b16 %v113
  %v1305 = vunpack.c.l.b16 %v114
  %v1306 = vunpack.c.l.b16 %v115
  %v1307 = vunpack.c.l.b16 %v116
  %v1308 = vunpack.c.l.b16 %v117
  %v1309 = vunpack.c.l.b16 %v118
  %v1310 = vunpack.c.l.b16 %v119
  %v1311 = vunpack.c.l.b16 %v120
  %v1312 = vunpack.c.l.b16 %v121
  %v1313 = vunpack.c.l.b16 %v122
  %v1314 = vunpack.c.l.b16 %v123
  %v1315 = vunpack.c.l.b16 %v124
  %v1316 = vunpack.c.l.b16 %v125
  %v1317 = vunpack.c.l.b16 %v126
  %v1318 = vunpack.c.l.b16 %v127
  %v1319 = vunpack.c.l.b16 %v128
  %v1320 = vunpack.c.l.b16 %v129
  %v1321 = vunpack.c.l.b16 %v130
  %v1322 = vunpack.c.l.b16 %v131
  %v1323 = vunpack.c.l.b16 %v132
  %v1324 = vunpack.c.l.b16 %v133
  %v1325 = vunpack.c.l.b16 %v134
  %v1326 = vunpack.c.l.b16 %v135
  %v1327 = vunpack.c.l.b16 %v136
  %v1328 = vunpack.c.l.b16 %v137
  %v1329 = vunpack.c.l.b16 %v138
  %v1330 = vunpack.c.l.b16 %v139
  %v1331 = vunpack.c.l.b16 %v140
  %v1332 = vunpack.c.l.b16 %v141
  %v1333 = vunpack.c.l.b16 %v142
  %v1334 = vunpack.c.l.b16 %v143
  %v1335 = vunpack.c.l.b16 %v144
  %v1336 = vunpack.c.l.b16 %v145
  %v1337 = vunpack.c.l.b16 %v146
  %v1338 = vunpack.c.l.b16 %v147
  %v1339 = vunpack.c.l.b16 %v148
  %v1340 = vunpack.c.l.b16 %v149
  %v1341 = vunpack.c.l.b16 %v150
  %v1342 = vunpack.c.l.b16 %v151
  %v1343 = vunpack.c.l.b16 %v152
  %v1344 = vunpack.c.l.b16 %v153
  %v1345 = vunpack.c.l.b16 %v154
  %v1346 = vunpack.c.l.b16 %v155
  %v1347 = vunpack.c.l.b16 %v156
  %v1348 = vunpack.c.l.b16 %v157
  %v1349 = vunpack.c.l.b16 %v158
  %v1350 = vunpack.c.l.b16 %v159
  %v1351 = vunpack.c.l.b16 %v160
  %v1352 = vunpack.c.l.b16 %v161
  %v1353 = vunpack.c.l.b16 %v162
  %v1354 = vunpack.c.l.b16 %v163
  %v1355 = vunpack.c.l.b16 %v164
  %v1356 = vunpack.c.l.b16 %v165
  %v1357 = vunpack.c.l.b16 %v166
  %v1358 = vunpack.c.l.b16 %v167
  %v1359 = vunpack.c.l.b16 %v168
  %v1360 = vunpack.c.l.b16 %v169
  %v1361 = vunpack.c.l.b16 %v170
  %v1362 = vunpack.c.l.b16 %v171
  %v1363 = vunpack.c.l.b16 %v172
  %v1364 = vunpack.c.l.b16 %v173
  %v1365 = vunpack.c.l.b16 %v174
  %v1366 = vunpack.c.l.b16 %v175
  %v1367 = vunpack.c.l.b16 %v176
  %v1368 = vunpack.c.l.b16 %v177
  %v1369 = vunpack.c.l.b16 %v178
  %v1370 = vunpack.c.l.b16 %v179
  %v1371 = vunpack.c.l.b16 %v180
  %v1372 = vunpack.c.l.b16 %v181
  %v1373 = vunpack.c.l.b16 %v182
  %v1374 = vunpack.c.l.b16 %v183
  %v1375 = vunpack.c.l.b16 %v184
  %v1376 = vunpack.c.l.b16 %v185
  %v1377 = vunpack.c.l.b16 %v186
  %v1378 = vunpack.c.l.b16 %v187
  %v1379 = vunpack.c.l.b16 %v188
  %v1380 = vunpack.c.l.b16 %v189
  %v1381 = vunpack.c.l.b16 %v190
  %v1382 = vunpack.c.l.b16 %v191
  %v1383 = vunpack.c.l.b16 %v192
  %v1384 = vunpack.c.l.b16 %v193
  %v1385 = vunpack.c.l.b16 %v194
  %v1386 = vunpack.c.l.b16 %v195
  %v1387 = vunpack.c.l.b16 %v196
  %v1388 = vunpack.c.l.b16 %v197
  %v1389 = vunpack.c.l.b16 %v198
  %v1390 = vunpack.c.l.b16 %v199
  %v1391 = vunpack.c.l.b16 %v200
  %v1392 = vunpack.c.l.b16 %v201
  %v1393 = vunpack.c.l.b16 %v202
  %v1394 = vunpack.c.l.b16 %v203
  %v1395 = vunpack.c.l.b16 %v204
  %v1396 = vunpack.c.l.b16 %v205
  %v1397 = vunpack.c.l.b16 %v206
  %v1398 = vunpack.c.l.b16 %v207
  %v1399 = vunpack.c.l.b16 %v208
  %v1400 = vunpack.c.l.b16 %v209
  %v1401 = vunpack.c.l.b16 %v210
  %v1402 = vunpack.c.l.b16 %v211
  %v1403 = vunpack.c.l.b16 %v212
  %v1404 = vunpack.c.l.b16 %v213
  %v1405 = vunpack.c.l.b16 %v214
  %v1406 = vunpack.c.l.b16 %v215
  %v1407 = vunpack.c.l.b16 %v216
  %v1408 = vunpack.c.l.b16 %v217
  %v1409 = vunpack.c.l.b16 %v218
  %v1410 = vunpack.c.l.b16 %v219
  %v1411 = vunpack.c.l.b16 %v220
  %v1412 = vunpack.c.l.b16 %v221
  %v1413 = vunpack.c.l.b16 %v222
  %v1414 = vunpack.c.l.b16 %v223
  %v1415 = vunpack.c.l.b16 %v224
  %v1416 = vunpack.c.l.b16 %v225
  %v1417 = vunpack.c.l.b16 %v226
  %v1418 = vunpack.c.l.b16 %v227
  %v1419 = vunpack.c.l.b16 %v228
  %v1420 = vunpack.c.l.b16 %v229
  %v1421 = vunpack.c.l.b16 %v230
  %v1422 = vunpack.c.l.b16 %v231
  %v1423 = vunpack.c.l.b16 %v232
  %v1424 = vunpack.c.l.b16 %v233
  %v1425 = vunpack.c.l.b16 %v234
  %v1426 = vunpack.c.l.b16 %v235
  %v1427 = vunpack.c.l.b16 %v236
  %v1428 = vunpack.c.l.b16 %v237
  %v1429 = vunpack.c.l.b16 %v238
  %v1430 = vunpack.c.l.b16 %v239
  %v1431 = vunpack.c.l.b16 %v240
  %v1432 = vunpack.c.l.b16 %v241
  %v1433 = vunpack.c.l.b16 %v242
  %v1434 = vunpack.c.l.b16 %v243
  %v1435 = vunpack.c.l.b16 %v244
  %v1436 = vunpack.c.l.b16 %v245
  %v1437 = vunpack.c.l.b16 %v246
  %v1438 = vunpack.c.l.b16 %v247
  %v1439 = vunpack.c.l.b16 %v248
  %v1440 = vunpack.c.l.b16 %v249
  %v1441 = vunpack.c.l.b16 %v250
  %v1442 = vunpack.c.l.b16 %v251
  %v1443 = vunpack.c.l.b16 %v252
  %v1444 = vunpack.c.l.b16 %v253
  %v1445 = vunpack.c.l.b16 %v254
  %v1446 = vunpack.c.l.b16 %v255
  %v1447 = vunpack.c.l.b16 %v256
  %v1448 = vunpack.c.l.b16 %v257
  %v1449 = vunpack.c.l.b16 %v258
  %v1450 = vunpack.c.l.b16 %v259
  %v1451 = vunpack.c.l.b16 %v260
  %v1452 = vunpack.c.l.b16 %v261
  %v1453 = vunpack.c.l.b16 %v262
  %v1454 = vunpack.c.l.b16 %v263
  %v1455 = vunpack.c.l.b16 %v264
  %v1456 = vunpack.c.l.b16 %v265
  %v1457 = vunpack.c.l.b16 %v266
  %v1458 = vunpack.c.l.b16 %v267
  %v1459 = vunpack.c.l.b16 %v268
  %v1460 = vunpack.c.l.b16 %v269
  %v1461 = vunpack.c.l.b16 %v270
  %v1462 = vunpack.c.l.b16 %v271
  %v1463 = vunpack.c.l.b16 %v272
  %v1464 = vunpack.c.l.b16 %v273
  %v1465 = vunpack.c.l.b16 %v274
  %v1466 = vunpack.c.l.b16 %v275
  %v1467 = vunpack.c.l.b16 %v276
  %v1468 = vunpack.c.l.b16 %v277
  %v1469 = vunpack.c.l.b16 %v278
  %v1470 = vunpack.c.l.b16 %v279
  %v1471 = vunpack.c.l.b16 %v280
  %v1472 = vunpack.c.l.b16 %v281
  %v1473 = vunpack.c.l.b16 %v282
  %v1474 = vunpack.c.l.b16 %v283
  %v1475 = vunpack.c.l.b16 %v284
  %v1476 = vunpack.c.l.b16 %v285
  %v1477 = vunpack.c.l.b16 %v286
  %v1478 = vunpack.c.l.b16 %v287
  %v1479 = vunpack.c.l.b16 %v288
  %v1480 = vunpack.c.l.b16 %v289
  %v1481 = vunpack.c.l.b16 %v290
  %v1482 = vunpack.c.l.b16 %v291
  %v1483 = vunpack.c.l.b16 %v292
  %v1484 = vunpack.c.l.b16 %v293
  %v1485 = vunpack.c.l.b16 %v294
  %v1486 = vunpack.c.l.b16 %v295
  %v1487 = vunpack.c.l.b16 %v296
  %v1488 = vunpack.c.l.b16 %v297
  %v1489 = vunpack.c.l.b16 %v298
  %v1490 = vunpack.c.l.b16 %v299
  %v1491 = vunpack.c.l.b16 %v300
  %v1492 = vunpack.c.l.b16 %v301
  %v1493 = vunpack.c.l.b16 %v302
  %v1494 = vunpack.c.l.b16 %v303
  %v1495 = vunpack.c.l.b16 %v304
  %v1496 = vunpack.c.l.b16 %v305
  %v1497 = vunpack.c.l.b16 %v306
  %v1498 = vunpack.c.l.b16 %v307
  %v1499 = vunpack.c.l.b16 %v308
  %v1500 = vunpack.c.l.b16 %v309
  %v1501 = vunpack.c.l.b16 %v310
  %v1502 = vunpack.c.l.b16 %v311
  %v1503 = vunpack.c.l.b16 %v312
  %v1504 = vunpack.c.l.b16 %v313
  %v1505 = vunpack.c.l.b16 %v314
  %v1506 = vunpack.c.l.b16 %v315
  %v1507 = vunpack.c.l.b16 %v316
  %v1508 = vunpack.c.l.b16 %v317
  %v1509 = vunpack.c.l.b16 %v318
  %v1510 = vunpack.c.l.b16 %v319
  %v1511 = vunpack.c.l.b16 %v320
  %v1512 = vunpack.c.l.b16 %v321
  %v1513 = vunpack.c.l.b16 %v322
  %v1514 = vunpack.c.l.b16 %v323
  %v1515 = vunpack.c.l.b16 %v324
  %v1516 = vunpack.c.l.b16 %v325
  %v1517 = vunpack.c.l.b16 %v326
  %v1518 = vunpack.c.l.b16 %v327
  %v1519 = vunpack.c.l.b16 %v328
  %v1520 = vunpack.c.l.b16 %v329
  %v1521 = vunpack.c.l.b16 %v330
  %v1522 = vunpack.c.l.b16 %v331
  %v1523 = vunpack.c.l.b16 %v332
  %v1524 = vunpack.c.l.b16 %v333
  %v1525 = vunpack.c.l.b16 %v334
  %v1526 = vunpack.c.l.b16 %v335
  %v1527 = vunpack.c.l.b16 %v336
  %v1528 = vunpack.c.l.b16 %v337
  %v1529 = vunpack.c.l.b16 %v338
  %v1530 = vunpack.c.l.b16 %v339
  %v1531 = vunpack.c.l.b16 %v340
  %v1532 = vunpack.c.l.b16 %v341
  %v1533 = vunpack.c.l.b16 %v342
  %v1534 = vunpack.c.l.b16 %v343
  %v1535 = vunpack.c.l.b16 %v344
  %v1536 = vunpack.c.l.b16 %v345
  %v1537 = vunpack.c.l.b16 %v346
  %v1538 = vunpack.c.l.b16 %v347
  %v1539 = vunpack.c.l.b16 %v348
  %v1540 = vunpack.c.l.b16 %v349
  %v1541 = vunpack.c.l.b16 %v350
  %v1542 = vunpack.c.l.b16 %v351
  %v1543 = vunpack.c.l.b16 %v352
  %v1544 = vunpack.c.l.b16 %v353
  %v1545 = vunpack.c.l.b16 %v354
  %v1546 = vunpack.c.l.b16 %v355
  %v1547 = vunpack.c.l.b16 %v356
  %v1548 = vunpack.c.l.b16 %v357
  %v1549 = vunpack.c.l.b16 %v358
  %v1550 = vunpack.c.l.b16 %v359
  %v1551 = vunpack.c.l.b16 %v360
  %v1552 = vunpack.c.l.b16 %v361
  %v1553 = vunpack.c.l.b16 %v362
  %v1554 = vunpack.c.l.b16 %v363
  %v1555 = vunpack.c.l.b16 %v364
  %v1556 = vunpack.c.l.b16 %v365
  %v1557 = vunpack.c.l.b16 %v366
  %v1558 = vunpack.c.l.b16 %v367
  %v1559 = vunpack.c.l.b16 %v368
  %v1560 = vunpack.c.l.b16 %v369
  %v1561 = vunpack.c.l.b16 %v370
  %v1562 = vunpack.c.l.b16 %v371
  %v1563 = vunpack.c.l.b16 %v372
  %v1564 = vunpack.c.l.b16 %v373
  %v1565 = vunpack.c.l.b16 %v374
  %v1566 = vunpack.c.l.b16 %v375
  %v1567 = vunpack.c.l.b16 %v376
  %v1568 = vunpack.c.l.b16 %v377
  %v1569 = vunpack.c.l.b16 %v378
  %v1570 = vunpack.c.l.b16 %v379
  %v1571 = vunpack.c.l.b16 %v380
  %v1572 = vunpack.c.l.b16 %v381
  %v1573 = vunpack.c.l.b16 %v382
  %v1574 = vunpack.c.l.b16 %v383
  %v1575 = vunpack.c.l.b16 %v384
  %v1576 = vunpack.c.l.b16 %v385
  %v1577 = vunpack.c.l.b16 %v386
  %v1578 = vunpack.c.l.b16 %v387
  %v1579 = vunpack.c.l.b16 %v388
  %v1580 = vunpack.c.l.b16 %v389
  %v1581 = vunpack.c.l.b16 %v390
  %v1582 = vunpack.c.l.b16 %v391
  %v1583 = vunpack.c.l.b16 %v392
  %v1584 = vunpack.c.l.b16 %v393
  %v1585 = vunpack.c.l.b16 %v394
  %v1586 = vunpack.c.l.b16 %v395
  %v1587 = vunpack.c.l.b16 %v396
  %v1588 = vunpack.c.l.b16 %v397
  %v1589 = vunpack.c.l.b16 %v398
  %v1590 = vunpack.c.l.b16 %v399
  %v1591 = vunpack.c.l.b16 %v400
  %v1592 = vunpack.c.l.b16 %v401
  %v1593 = vunpack.c.l.b16 %v402
  %v1594 = vunpack.c.l.b16 %v403
  %v1595 = vunpack.c.l.b16 %v404
  %v1596 = vunpack.c.l.b16 %v405
  %v1597 = vunpack.c.l.b16 %v406
  %v1598 = vunpack.c.l.b16 %v407
  %v1599 = vunpack.c.l.b16 %v408
  %v1600 = vunpack.c.l.b16 %v409
  %v1601 = vunpack.c.l.b16 %v410
  %v1602 = vunpack.c.l.b16 %v411
  %v1603 = vunpack.c.l.b16 %v412
  %v1604 = vunpack.c.l.b16 %v413
  %v1605 = vunpack.c.l.b16 %v414
  %v1606 = vunpack.c.l.b16 %v415
  %v1607 = vunpack.c.l.b16 %v416
  %v1608 = vunpack.c.l.b16 %v417
  %v1609 = vunpack.c.l.b16 %v418
  %v1610 = vunpack.c.l.b16 %v419
  %v1611 = vunpack.c.l.b16 %v420
  %v1612 = vunpack.c.l.b16 %v421
  %v1613 = vunpack.c.l.b16 %v422
  %v1614 = vunpack.c.l.b16 %v423
  %v1615 = vunpack.c.l.b16 %v424
  %v1616 = vunpack.c.l.b16 %v425
  %v1617 = vunpack.c.l.b16 %v426
  %v1618 = vunpack.c.l.b16 %v427
  %v1619 = vunpack.c.l.b16 %v428
  %v1620 = vunpack.c.l.b16 %v429
  %v1621 = vunpack.c.l.b16 %v430
  %v1622 = vunpack.c.l.b16 %v431
  %v1623 = vunpack.c.l.b16 %v432
  %v1624 = vunpack.c.l.b16 %v433
  %v1625 = vunpack.c.l.b16 %v434
  %v1626 = vunpack.c.l.b16 %v435
  %v1627 = vunpack.c.l.b16 %v436
  %v1628 = vunpack.c.l.b16 %v437
  %v1629 = vunpack.c.l.b16 %v438
  %v1630 = vunpack.c.l.b16 %v439
  %v1631 = vunpack.c.l.b16 %v440
  %v1632 = vunpack.c.l.b16 %v441
  %v1633 = vunpack.c.l.b16 %v442
  %v1634 = vunpack.c.l.b16 %v443
  %v1635 = vunpack.c.l.b16 %v444
  %v1636 = vunpack.c.l.b16 %v445
  %v1637 = vunpack.c.l.b16 %v446
  %v1638 = vunpack.c.l.b16 %v447
  %v1639 = vunpack.c.l.b16 %v448
  %v1640 = vunpack.c.l.b16 %v449
  %v1641 = vunpack.c.l.b16 %v450
  %v1642 = vunpack.c.l.b16 %v451
  %v1643 = vunpack.c.l.b16 %v452
  %v1644 = vunpack.c.l.b16 %v453
  %v1645 = vunpack.c.l.b16 %v454
  %v1646 = vunpack.c.l.b16 %v455
  %v1647 = vunpack.c.l.b16 %v456
  %v1648 = vunpack.c.l.b16 %v457
  %v1649 = vunpack.c.l.b16 %v458
  %v1650 = vunpack.c.l.b16 %v459
  %v1651 = vunpack.c.l.b16 %v460
  %v1652 = vunpack.c.l.b16 %v461
  %v1653 = vunpack.c.l.b16 %v462
  %v1654 = vunpack.c.l.b16 %v463
  %v1655 = vunpack.c.l.b16 %v464
  %v1656 = vunpack.c.l.b16 %v465
  %v1657 = vunpack.c.l.b16 %v466
  %v1658 = vunpack.c.l.b16 %v467
  %v1659 = vunpack.c.l.b16 %v468
  %v1660 = vunpack.c.l.b16 %v469
  %v1661 = vunpack.c.l.b16 %v470
  %v1662 = vunpack.c.l.b16 %v471
  %v1663 = vunpack.c.l.b16 %v472
  %v1664 = vunpack.c.l.b16 %v473
  %v1665 = vunpack.c.l.b16 %v474
  %v1666 = vunpack.c.l.b16 %v475
  %v1667 = vunpack.c.l.b16 %v476
  %v1668 = vunpack.c.l.b16 %v477
  %v1669 = vunpack.c.l.b16 %v478
  %v1670 = vunpack.c.l.b16 %v479
  %v1671 = vunpack.c.l.b16 %v480
  %v1672 = vunpack.c.l.b16 %v481
  %v1673 = vunpack.c.l.b16 %v482
  %v1674 = vunpack.c.l.b16 %v483
  %v1675 = vunpack.c.l.b16 %v484
  %v1676 = vunpack.c.l.b16 %v485
  %v1677 = vunpack.c.l.b16 %v486
  %v1678 = vunpack.c.l.b16 %v487
  %v1679 = vunpack.c.l.b16 %v488
  %v1680 = vunpack.c.l.b16 %v489
  %v1681 = vunpack.c.l.b16 %v490
  %v1682 = vunpack.c.l.b16 %v491
  %v1683 = vunpack.c.l.b16 %v492
  %v1684 = vunpack.c.l.b16 %v493
  %v1685 = vunpack.c.l.b16 %v494
  %v1686 = vunpack.c.l.b16 %v495
  %v1687 = vunpack.c.l.b16 %v496
  %v1688 = vunpack.c.l.b16 %v497
  %v1689 = vunpack.c.l.b16 %v498
  %v1690 = vunpack.c.l.b16 %v499
  %v1691 = vunpack.c.l.b16 %v500
  %v1692 = vunpack.c.l.b16 %v501
  %v1693 = vunpack.c.l.b16 %v502
  %v1694 = vunpack.c.l.b16 %v503
  %v1695 = vunpack.c.l.b16 %v504
  %v1696 = vunpack.c.l.b16 %v505
  %v1697 = vunpack.c.l.b16 %v506
  %v1698 = vunpack.c.l.b16 %v507
  %v1699 = vunpack.c.l.b16 %v508
  %v1700 = vunpack.c.l.b16 %v509
  %v1701 = vunpack.c.l.b16 %v510
  %v1702 = vunpack.c.l.b16 %v511
  %v1703 = vunpack.c.l.b16 %v512
  %v1704 = vunpack.c.l.b16 %v513
  %v1705 = vunpack.c.l.b16 %v514
  %v1706 = vunpack.c.l.b16 %v515
  %v1707 = vunpack.c.l.b16 %v516
  %v1708 = vunpack.c.l.b16 %v517
  %v1709 = vunpack.c.l.b16 %v518
  %v1710 = vunpack.c.l.b16 %v519
  %v1711 = vunpack.c.l.b16 %v520
  %v1712 = vunpack.c.l.b16 %v521
  %v1713 = vunpack.c.l.b16 %v522
  %v1714 = vunpack.c.l.b16 %v523
  %v1715 = vunpack.c.l.b16 %v524
  %v1716 = vunpack.c.l.b16 %v525
  %v1717 = vunpack.c.l.b16 %v526
  %v1718 = vunpack.c.l.b16 %v527
  %v1719 = vunpack.c.l.b16 %v528
  %v1720 = vunpack.c.l.b16 %v529
  %v1721 = vunpack.c.l.b16 %v530
  %v1722 = vunpack.c.l.b16 %v531
  %v1723 = vunpack.c.l.b16 %v532
  %v1724 = vunpack.c.l.b16 %v533
  %v1725 = vunpack.c.l.b16 %v534
  %v1726 = vunpack.c.l.b16 %v535
  %v1727 = vunpack.c.l.b16 %v536
  %v1728 = vunpack.c.l.b16 %v537
  %v1729 = vunpack.c.l.b16 %v538
  %v1730 = vunpack.c.l.b16 %v539
  %v1731 = vunpack.c.l.b16 %v540
  %v1732 = vunpack.c.l.b16 %v541
  %v1733 = vunpack.c.l.b16 %v542
  %v1734 = vunpack.c.l.b16 %v543
  %v1735 = vunpack.c.l.b16 %v544
  %v1736 = vunpack.c.l.b16 %v545
  %v1737 = vunpack.c.l.b16 %v546
  %v1738 = vunpack.c.l.b16 %v547
  %v1739 = vunpack.c.l.b16 %v548
  %v1740 = vunpack.c.l.b16 %v549
  %v1741 = vunpack.c.l.b16 %v550
  %v1742 = vunpack.c.l.b16 %v551
  %v1743 = vunpack.c.l.b16 %v552
  %v1744 = vunpack.c.l.b16 %v553
  %v1745 = vunpack.c.l.b16 %v554
  %v1746 = vunpack.c.l.b16 %v555
  %v1747 = vunpack.c.l.b16 %v556
  %v1748 = vunpack.c.l.b16 %v557
  %v1749 = vunpack.c.l.b16 %v558
  %v1750 = vpack.c.b16 %v1239, %v1238
  %v1751 = vpack.c.b16 %v1241, %v1240
  %v1752 = vpack.c.b16 %v1243, %v1242
  %v1753 = vpack.c.b16 %v1245, %v1244
  %v1754 = vpack.c.b16 %v1247, %v1246
  %v1755 = vpack.c.b16 %v1249, %v1248
  %v1756 = vpack.c.b16 %v1251, %v1250
  %v1757 = vpack.c.b16 %v1253, %v1252
  %v1758 = vpack.c.b16 %v1255, %v1254
  %v1759 = vpack.c.b16 %v1257, %v1256
  %v1760 = vpack.c.b16 %v1259, %v1258
  %v1761 = vpack.c.b16 %v1261, %v1260
  %v1762 = vpack.c.b16 %v1263, %v1262
  %v1763 = vpack.c.b16 %v1265, %v1264
  %v1764 = vpack.c.b16 %v1267, %v1266
  %v1765 = vpack.c.b16 %v1269, %v1268
  %v1766 = vpack.c.b16 %v1271, %v1270
  %v1767 = vpack.c.b16 %v1273, %v1272
  %v1768 = vpack.c.b16 %v1275, %v1274
  %v1769 = vpack.c.b16 %v1277, %v1276
  %v1770 = vpack.c.b16 %v1279, %v1278
  %v1771 = vpack.c.b16 %v1281, %v1280
  %v1772 = vpack.c.b16 %v1283, %v1282
  %v1773 = vpack.c.b16 %v1285, %v1284
  %v1774 = vpack.c.b16 %v1287, %v1286
  %v1775 = vpack.c.b16 %v1289, %v1288
  %v1776 = vpack.c.b16 %v1291, %v1290
  %v1777 = vpack.c.b16 %v1293, %v1292
  %v1778 = vpack.c.b16 %v1295, %v1294
  %v1779 = vpack.c.b16 %v1297, %v1296
  %v1780 = vpack.c.b16 %v1299, %v1298
  %v1781 = vpack.c.b16 %v1301, %v1300
  %v1782 = vpack.c.b16 %v1303, %v1302
  %v1783 = vpack.c.b16 %v1305, %v1304
  %v1784 = vpack.c.b16 %v1307, %v1306
  %v1785 = vpack.c.b16 %v1309, %v1308
  %v1786 = vpack.c.b16 %v1311, %v1310
  %v1787 = vpack.c.b16 %v1313, %v1312
  %v1788 = vpack.c.b16 %v1315, %v1314
  %v1789 = vpack.c.b16 %v1317, %v1316
  %v1790 = vpack.c.b16 %v1319, %v1318
  %v1791 = vpack.c.b16 %v1321, %v1320
  %v1792 = vpack.c.b16 %v1323, %v1322
  %v1793 = vpack.c.b16 %v1325, %v1324
  %v1794 = vpack.c.b16 %v1327, %v1326
  %v1795 = vpack.c.b16 %v1329, %v1328
  %v1796 = vpack.c.b16 %v1331, %v1330
  %v1797 = vpack.c.b16 %v1333, %v1332
  %v1798 = vpack.c.b16 %v1335, %v1334
  %v1799 = vpack.c.b16 %v1337, %v1336
  %v1800 = vpack.c.b16 %v1339, %v1338
  %v1801 = vpack.c.b16 %v1341, %v1340
  %v1802 = vpack.c.b16 %v1343, %v1342
  %v1803 = vpack.c.b16 %v1345, %v1344
  %v1804 = vpack.c.b16 %v1347, %v1346
  %v1805 = vpack.c.b16 %v1349, %v1348
  %v1806 = vpack.c.b16 %v1351, %v1350
  %v1807 = vpack.c.b16 %v1353, %v1352
  %v1808 = vpack.c.b16 %v1355, %v1354
  %v1809 = vpack.c.b16 %v1357, %v1356
  %v1810 = vpack.c.b16 %v1359, %v1358
  %v1811 = vpack.c.b16 %v1361, %v1360
  %v1812 = vpack.c.b16 %v1363, %v1362
  %v1813 = vpack.c.b16 %v1365, %v1364
  %v1814 = vpack.c.b16 %v1367, %v1366
  %v1815 = vpack.c.b16 %v1369, %v1368
  %v1816 = vpack.c.b16 %v1371, %v1370
  %v1817 = vpack.c.b16 %v1373, %v1372
  %v1818 = vpack.c.b16 %v1375, %v1374
  %v1819 = vpack.c.b16 %v1377, %v1376
  %v1820 = vpack.c.b16 %v1379, %v1378
  %v1821 = vpack.c.b16 %v1381, %v1380
  %v1822 = vpack.c.b16 %v1383, %v1382
  %v1823 = vpack.c.b16 %v1385, %v1384
  %v1824 = vpack.c.b16 %v1387, %v1386
  %v1825 = vpack.c.b16 %v1389, %v1388
  %v1826 = vpack.c.b16 %v1391, %v1390
  %v1827 = vpack.c.b16 %v1393, %v1392
  %v1828 = vpack.c.b16 %v1395, %v1394
  %v1829 = vpack.c.b16 %v1397, %v1396
  %v1830 = vpack.c.b16 %v1399, %v1398
  %v1831 = vpack.c.b16 %v1401, %v1400
  %v1832 = vpack.c.b16 %v1403, %v1402
  %v1833 = vpack.c.b16 %v1405, %v1404
  %v1834 = vpack.c.b16 %v1407, %v1406
  %v1835 = vpack.c.b16 %v1409, %v1408
  %v1836 = vpack.c.b16 %v1411, %v1410
  %v1837 = vpack.c.b16 %v1413, %v1412
  %v1838 = vpack.c.b16 %v1415, %v1414
  %v1839 = vpack.c.b16 %v1417, %v1416
  %v1840 = vpack.c.b16 %v1419, %v1418
  %v1841 = vpack.c.b16 %v1421, %v1420
  %v1842 = vpack.c.b16 %v1423, %v1422
  %v1843 = vpack.c.b16 %v1425, %v1424
  %v1844 = vpack.c.b16 %v1427, %v1426
  %v1845 = vpack.c.b16 %v1429, %v1428
  %v1846 = vpack.c.b16 %v1431, %v1430
  %v1847 = vpack.c.b16 %v1433, %v1432
  %v1848 = vpack.c.b16 %v1435, %v1434
  %v1849 = vpack.c.b16 %v1437, %v1436
  %v1850 = vpack.c.b16 %v1439, %v1438
  %v1851 = vpack.c.b16 %v1441, %v1440
  %v1852 = vpack.c.b16 %v1443, %v1442
  %v1853 = vpack.c.b16 %v1445, %v1444
  %v1854 = vpack.c.b16 %v1447, %v1446
  %v1855 = vpack.c.b16 %v1449, %v1448
  %v1856 = vpack.c.b16 %v1451, %v1450
  %v1857 = vpack.c.b16 %v1453, %v1452
  %v1858 = vpack.c.b16 %v1455, %v1454
  %v1859 = vpack.c.b16 %v1457, %v1456
  %v1860 = vpack.c.b16 %v1459, %v1458
  %v1861 = vpack.c.b16 %v1461, %v1460
  %v1862 = vpack.c.b16 %v1463, %v1462
  %v1863 = vpack.c.b16 %v1465, %v1464
  %v1864 = vpack.c.b16 %v1467, %v1466
  %v1865 = vpack.c.b16 %v1469, %v1468
  %v1866 = vpack.c.b16 %v1471, %v1470
  %v1867 = vpack.c.b16 %v1473, %v1472
  %v1868 = vpack.c.b16 %v1475, %v1474
  %v1869 = vpack.c.b16 %v1477, %v1476
  %v1870 = vpack.c.b16 %v1479, %v1478
  %v1871 = vpack.c.b16 %v1481, %v1480
  %v1872 = vpack.c.b16 %v1483, %v1482
  %v1873 = vpack.c.b16 %v1485, %v1484
  %v1874 = vpack.c.b16 %v1487, %v1486
  %v1875 = vpack.c.b16 %v1489, %v1488
  %v1876 = vpack.c.b16 %v1491, %v1490
  %v1877 = vpack.c.b16 %v1493, %v1492
  %v1878 = vpack.c.b16 %v1495, %v1494
  %v1879 = vpack.c.b16 %v1497, %v1496
  %v1880 = vpack.c.b16 %v1499, %v1498
  %v1881 = vpack.c.b16 %v1501, %v1500
  %v1882 = vpack.c.b16 %v1503, %v1502
  %v1883 = vpack.c.b16 %v1505, %v1504
  %v1884 = vpack.c.b16 %v1507, %v1506
  %v1885 = vpack.c.b16 %v1509, %v1508
  %v1886 = vpack.c.b16 %v1511, %v1510
  %v1887 = vpack.c.b16 %v1513, %v1512
  %v1888 = vpack.c.b16 %v1515, %v1514
  %v1889 = vpack.c.b16 %v1517, %v1516
  %v1890 = vpack.c.b16 %v1519, %v1518
  %v1891 = vpack.c.b16 %v1521, %v1520
  %v1892 = vpack.c.b16 %v1523, %v1522
  %v1893 = vpack.c.b16 %v1525, %v1524
  %v1894 = vpack.c.b16 %v1527, %v1526
  %v1895 = vpack.c.b16 %v1529, %v1528
  %v1896 = vpack.c.b16 %v1531, %v1530
  %v1897 = vpack.c.b16 %v1533, %v1532
  %v1898 = vpack.c.b16 %v1535, %v1534
  %v1899 = vpack.c.b16 %v1537, %v1536
  %v1900 = vpack.c.b16 %v1539, %v1538
  %v1901 = vpack.c.b16 %v1541, %v1540
  %v1902 = vpack.c.b16 %v1543, %v1542
  %v1903 = vpack.c.b16 %v1545, %v1544
  %v1904 = vpack.c.b16 %v1547, %v1546
  %v1905 = vpack.c.b16 %v1549, %v1548
  %v1906 = vpack.c.b16 %v1551, %v1550
  %v1907 = vpack.c.b16 %v1553, %v1552
  %v1908 = vpack.c.b16 %v1555, %v1554
  %v1909 = vpack.c.b16 %v1557, %v1556
  %v1910 = vpack.c.b16 %v1559, %v1558
  %v1911 = vpack.c.b16 %v1561, %v1560
  %v1912 = vpack.c.b16 %v1563, %v1562
  %v1913 = vpack.c.b16 %v1565, %v1564
  %v1914 = vpack.c.b16 %v1567, %v1566
  %v1915 = vpack.c.b16 %v1569, %v1568
  %v1916 = vpack.c.b16 %v1571, %v1570
  %v1917 = vpack.c.b16 %v1573, %v1572
  %v1918 = vpack.c.b16 %v1575, %v1574
  %v1919 = vpack.c.b16 %v1577, %v1576
  %v1920 = vpack.c.b16 %v1579, %v1578
  %v1921 = vpack.c.b16 %v1581, %v1580
  %v1922 = vpack.c.b16 %v1583, %v1582
  %v1923 = vpack.c.b16 %v1585, %v1584
  %v1924 = vpack.c.b16 %v1587, %v1586
  %v1925 = vpack.c.b16 %v1589, %v1588
  %v1926 = vpack.c.b16 %v1591, %v1590
  %v1927 = vpack.c.b16 %v1593, %v1592
  %v1928 = vpack.c.b16 %v1595, %v1594
  %v1929 = vpack.c.b16 %v1597, %v1596
  %v1930 = vpack.c.b16 %v1599, %v1598
  %v1931 = vpack.c.b16 %v1601, %v1600
  %v1932 = vpack.c.b16 %v1603, %v1602
  %v1933 = vpack.c.b16 %v1605, %v1604
  %v1934 = vpack.c.b16 %v1607, %v1606
  %v1935 = vpack.c.b16 %v1609, %v1608
  %v1936 = vpack.c.b16 %v1611, %v1610
  %v1937 = vpack.c.b16 %v1613, %v1612
  %v1938 = vpack.c.b16 %v1615, %v1614
  %v1939 = vpack.c.b16 %v1617, %v1616
  %v1940 = vpack.c.b16 %v1619, %v1618
  %v1941 = vpack.c.b16 %v1621, %v1620
  %v1942 = vpack.c.b16 %v1623, %v1622
  %v1943 = vpack.c.b16 %v1625, %v1624
  %v1944 = vpack.c.b16 %v1627, %v1626
  %v1945 = vpack.c.b16 %v1629, %v1628
  %v1946 = vpack.c.b16 %v1631, %v1630
  %v1947 = vpack.c.b16 %v1633, %v1632
  %v1948 = vpack.c.b16 %v1635, %v1634
  %v1949 = vpack.c.b16 %v1637, %v1636
  %v1950 = vpack.c.b16 %v1639, %v1638
  %v1951 = vpack.c.b16 %v1641, %v1640
  %v1952 = vpack.c.b16 %v1643, %v1642
  %v1953 = vpack.c.b16 %v1645, %v1644
  %v1954 = vpack.c.b16 %v1647, %v1646
  %v1955 = vpack.c.b16 %v1649, %v1648
  %v1956 = vpack.c.b16 %v1651, %v1650
  %v1957 = vpack.c.b16 %v1653, %v1652
  %v1958 = vpack.c.b16 %v1655, %v1654
  %v1959 = vpack.c.b16 %v1657, %v1656
  %v1960 = vpack.c.b16 %v1659, %v1658
  %v1961 = vpack.c.b16 %v1661, %v1660
  %v1962 = vpack.c.b16 %v1663, %v1662
  %v1963 = vpack.c.b16 %v1665, %v1664
  %v1964 = vpack.c.b16 %v1667, %v1666
  %v1965 = vpack.c.b16 %v1669, %v1668
  %v1966 = vpack.c.b16 %v1671, %v1670
  %v1967 = vpack.c.b16 %v1673, %v1672
  %v1968 = vpack.c.b16 %v1675, %v1674
  %v1969 = vpack.c.b16 %v1677, %v1676
  %v1970 = vpack.c.b16 %v1679, %v1678
  %v1971 = vpack.c.b16 %v1681, %v1680
  %v1972 = vpack.c.b16 %v1683, %v1682
  %v1973 = vpack.c.b16 %v1685, %v1684
  %v1974 = vpack.c.b16 %v1687, %v1686
  %v1975 = vpack.c.b16 %v1689, %v1688
  %v1976 = vpack.c.b16 %v1691, %v1690
  %v1977 = vpack.c.b16 %v1693, %v1692
  %v1978 = vpack.c.b16 %v1695, %v1694
  %v1979 = vpack.c.b16 %v1697, %v1696
  %v1980 = vpack.c.b16 %v1699, %v1698
  %v1981 = vpack.c.b16 %v1701, %v1700
  %v1982 = vpack.c.b16 %v1703, %v1702
  %v1983 = vpack.c.b16 %v1705, %v1704
  %v1984 = vpack.c.b16 %v1707, %v1706
  %v1985 = vpack.c.b16 %v1709, %v1708
  %v1986 = vpack.c.b16 %v1711, %v1710
  %v1987 = vpack.c.b16 %v1713, %v1712
  %v1988 = vpack.c.b16 %v1715, %v1714
  %v1989 = vpack.c.b16 %v1717, %v1716
  %v1990 = vpack.c.b16 %v1719, %v1718
  %v1991 = vpack.c.b16 %v1721, %v1720
  %v1992 = vpack.c.b16 %v1723, %v1722
  %v1993 = vpack.c.b16 %v1725, %v1724
  %v1994 = vpack.c.b16 %v1727, %v1726
  %v1995 = vpack.c.b16 %v1729, %v1728
  %v1996 = vpack.c.b16 %v1731, %v1730
  %v1997 = vpack.c.b16 %v1733, %v1732
  %v1998 = vpack.c.b16 %v1735, %v1734
  %v1999 = vpack.c.b16 %v1737, %v1736
  %v2000 = vpack.c.b16 %v1739, %v1738
  %v2001 = vpack.c.b16 %v1741, %v1740
  %v2002 = vpack.c.b16 %v1743, %v1742
  %v2003 = vpack.c.b16 %v1745, %v1744
  %v2004 = vpack.c.b16 %v1747, %v1746
  %v2005 = vpack.c.b16 %v1749, %v1748
  %2262 = vmatprep.subr.bf16.mxu0 0
  %2263 = vmatpush1.bf16.msra.mxu0 %v1757
  %2264 = vmatprep.subr.bf16.mxu0 0
  %2265 = vmatpush1.bf16.msra.mxu0 %v1756
  %2266 = vmatprep.subr.bf16.mxu0 0
  %2267 = vmatpush1.bf16.msra.mxu0 %v1755
  %2268 = vmatprep.subr.bf16.mxu0 0
  %2269 = vmatpush1.bf16.msra.mxu0 %v1754
  %2270 = vmatprep.subr.bf16.mxu0 0
  %2271 = vmatpush1.bf16.msra.mxu0 %v1753
  %2272 = vmatprep.subr.bf16.mxu0 0
  %2273 = vmatpush1.bf16.msra.mxu0 %v1752
  %2274 = vmatprep.subr.bf16.mxu0 0
  %2275 = vmatpush1.bf16.msra.mxu0 %v1751
  %2276 = vmatprep.subr.bf16.mxu0 0
  %2277 = vmatpush1.bf16.msra.mxu0 %v1750
  %2278 = vmatprep.subr.bf16.mxu0 0
  %2279 = vmatpush2.bf16.msra.mxu0 %v1765
  %2280 = vmatprep.subr.bf16.mxu0 0
  %2281 = vmatpush2.bf16.msra.mxu0 %v1764
  %2282 = vmatprep.subr.bf16.mxu0 0
  %2283 = vmatpush2.bf16.msra.mxu0 %v1763
  %2284 = vmatprep.subr.bf16.mxu0 0
  %2285 = vmatpush2.bf16.msra.mxu0 %v1762
  %2286 = vmatprep.subr.bf16.mxu0 0
  %2287 = vmatpush2.bf16.msra.mxu0 %v1761
  %2288 = vmatprep.subr.bf16.mxu0 0
  %2289 = vmatpush2.bf16.msra.mxu0 %v1760
  %2290 = vmatprep.subr.bf16.mxu0 0
  %2291 = vmatpush2.bf16.msra.mxu0 %v1759
  %2292 = vmatprep.subr.bf16.mxu0 0
  %2293 = vmatpush2.bf16.msra.mxu0 %v1758
  %2294 = vmatprep.mubr.bf16.mxu0 %v663
  %2295 = vmatmul.mubr.bf16.gmra.mxu0 %v662
  %v2296 = vpop.f32.mrf.mxu0
  %v2297 = vadd.f32 %v564, %v2296
  %v2298 = vpop.f32.mrf.mxu0
  %v2299 = vpop.f32.mrf.mxu0
  %v2300 = vadd.f32 %v564, %v2299
  %v2301 = vpop.f32.mrf.mxu0
  %2302 = vdwg.mxu0
  %2303 = vmatprep.subr.bf16.mxu0 0
  %2304 = vmatpush1.bf16.msra.mxu0 %v1773
  %2305 = vmatprep.subr.bf16.mxu0 0
  %2306 = vmatpush1.bf16.msra.mxu0 %v1772
  %2307 = vmatprep.subr.bf16.mxu0 0
  %2308 = vmatpush1.bf16.msra.mxu0 %v1771
  %2309 = vmatprep.subr.bf16.mxu0 0
  %2310 = vmatpush1.bf16.msra.mxu0 %v1770
  %2311 = vmatprep.subr.bf16.mxu0 0
  %2312 = vmatpush1.bf16.msra.mxu0 %v1769
  %2313 = vmatprep.subr.bf16.mxu0 0
  %2314 = vmatpush1.bf16.msra.mxu0 %v1768
  %2315 = vmatprep.subr.bf16.mxu0 0
  %2316 = vmatpush1.bf16.msra.mxu0 %v1767
  %2317 = vmatprep.subr.bf16.mxu0 0
  %2318 = vmatpush1.bf16.msra.mxu0 %v1766
  %2319 = vmatprep.subr.bf16.mxu0 0
  %2320 = vmatpush2.bf16.msra.mxu0 %v1781
  %2321 = vmatprep.subr.bf16.mxu0 0
  %2322 = vmatpush2.bf16.msra.mxu0 %v1780
  %2323 = vmatprep.subr.bf16.mxu0 0
  %2324 = vmatpush2.bf16.msra.mxu0 %v1779
  %2325 = vmatprep.subr.bf16.mxu0 0
  %2326 = vmatpush2.bf16.msra.mxu0 %v1778
  %2327 = vmatprep.subr.bf16.mxu0 0
  %2328 = vmatpush2.bf16.msra.mxu0 %v1777
  %2329 = vmatprep.subr.bf16.mxu0 0
  %2330 = vmatpush2.bf16.msra.mxu0 %v1776
  %2331 = vmatprep.subr.bf16.mxu0 0
  %2332 = vmatpush2.bf16.msra.mxu0 %v1775
  %2333 = vmatprep.subr.bf16.mxu0 0
  %2334 = vmatpush2.bf16.msra.mxu0 %v1774
  %2335 = vmatprep.mubr.bf16.mxu0 %v665
  %2336 = vmatmul.mubr.bf16.gmra.mxu0 %v664
  %v2337 = vpop.f32.mrf.mxu0
  %v2338 = vadd.f32 %v2297, %v2337
  %v2339 = vpop.f32.mrf.mxu0
  %v2340 = vpop.f32.mrf.mxu0
  %v2341 = vadd.f32 %v2300, %v2340
  %v2342 = vpop.f32.mrf.mxu0
  %2343 = vdwg.mxu0
  %2344 = vmatprep.subr.bf16.mxu0 0
  %2345 = vmatpush1.bf16.msra.mxu0 %v1789
  %2346 = vmatprep.subr.bf16.mxu0 0
  %2347 = vmatpush1.bf16.msra.mxu0 %v1788
  %2348 = vmatprep.subr.bf16.mxu0 0
  %2349 = vmatpush1.bf16.msra.mxu0 %v1787
  %2350 = vmatprep.subr.bf16.mxu0 0
  %2351 = vmatpush1.bf16.msra.mxu0 %v1786
  %2352 = vmatprep.subr.bf16.mxu0 0
  %2353 = vmatpush1.bf16.msra.mxu0 %v1785
  %2354 = vmatprep.subr.bf16.mxu0 0
  %2355 = vmatpush1.bf16.msra.mxu0 %v1784
  %2356 = vmatprep.subr.bf16.mxu0 0
  %2357 = vmatpush1.bf16.msra.mxu0 %v1783
  %2358 = vmatprep.subr.bf16.mxu0 0
  %2359 = vmatpush1.bf16.msra.mxu0 %v1782
  %2360 = vmatprep.subr.bf16.mxu0 0
  %2361 = vmatpush2.bf16.msra.mxu0 %v1797
  %2362 = vmatprep.subr.bf16.mxu0 0
  %2363 = vmatpush2.bf16.msra.mxu0 %v1796
  %2364 = vmatprep.subr.bf16.mxu0 0
  %2365 = vmatpush2.bf16.msra.mxu0 %v1795
  %2366 = vmatprep.subr.bf16.mxu0 0
  %2367 = vmatpush2.bf16.msra.mxu0 %v1794
  %2368 = vmatprep.subr.bf16.mxu0 0
  %2369 = vmatpush2.bf16.msra.mxu0 %v1793
  %2370 = vmatprep.subr.bf16.mxu0 0
  %2371 = vmatpush2.bf16.msra.mxu0 %v1792
  %2372 = vmatprep.subr.bf16.mxu0 0
  %2373 = vmatpush2.bf16.msra.mxu0 %v1791
  %2374 = vmatprep.subr.bf16.mxu0 0
  %2375 = vmatpush2.bf16.msra.mxu0 %v1790
  %2376 = vmatprep.mubr.bf16.mxu0 %v667
  %2377 = vmatmul.mubr.bf16.gmra.mxu0 %v666
  %v2378 = vpop.f32.mrf.mxu0
  %v2379 = vadd.f32 %v2338, %v2378
  %v2380 = vpop.f32.mrf.mxu0
  %v2381 = vpop.f32.mrf.mxu0
  %v2382 = vadd.f32 %v2341, %v2381
  %v2383 = vpop.f32.mrf.mxu0
  %2384 = vdwg.mxu0
  %2385 = vmatprep.subr.bf16.mxu0 0
  %2386 = vmatpush1.bf16.msra.mxu0 %v1805
  %2387 = vmatprep.subr.bf16.mxu0 0
  %2388 = vmatpush1.bf16.msra.mxu0 %v1804
  %2389 = vmatprep.subr.bf16.mxu0 0
  %2390 = vmatpush1.bf16.msra.mxu0 %v1803
  %2391 = vmatprep.subr.bf16.mxu0 0
  %2392 = vmatpush1.bf16.msra.mxu0 %v1802
  %2393 = vmatprep.subr.bf16.mxu0 0
  %2394 = vmatpush1.bf16.msra.mxu0 %v1801
  %2395 = vmatprep.subr.bf16.mxu0 0
  %2396 = vmatpush1.bf16.msra.mxu0 %v1800
  %2397 = vmatprep.subr.bf16.mxu0 0
  %2398 = vmatpush1.bf16.msra.mxu0 %v1799
  %2399 = vmatprep.subr.bf16.mxu0 0
  %2400 = vmatpush1.bf16.msra.mxu0 %v1798
  %2401 = vmatprep.subr.bf16.mxu0 0
  %2402 = vmatpush2.bf16.msra.mxu0 %v1813
  %2403 = vmatprep.subr.bf16.mxu0 0
  %2404 = vmatpush2.bf16.msra.mxu0 %v1812
  %2405 = vmatprep.subr.bf16.mxu0 0
  %2406 = vmatpush2.bf16.msra.mxu0 %v1811
  %2407 = vmatprep.subr.bf16.mxu0 0
  %2408 = vmatpush2.bf16.msra.mxu0 %v1810
  %2409 = vmatprep.subr.bf16.mxu0 0
  %2410 = vmatpush2.bf16.msra.mxu0 %v1809
  %2411 = vmatprep.subr.bf16.mxu0 0
  %2412 = vmatpush2.bf16.msra.mxu0 %v1808
  %2413 = vmatprep.subr.bf16.mxu0 0
  %2414 = vmatpush2.bf16.msra.mxu0 %v1807
  %2415 = vmatprep.subr.bf16.mxu0 0
  %2416 = vmatpush2.bf16.msra.mxu0 %v1806
  %2417 = vmatprep.mubr.bf16.mxu0 %v669
  %2418 = vmatmul.mubr.bf16.gmra.mxu0 %v668
  %v2419 = vpop.f32.mrf.mxu0
  %v2420 = vadd.f32 %v2379, %v2419
  %v2421 = vpop.f32.mrf.mxu0
  %v2422 = vpop.f32.mrf.mxu0
  %v2423 = vadd.f32 %v2382, %v2422
  %v2424 = vpop.f32.mrf.mxu0
  %2425 = vdwg.mxu0
  %2426 = vmatprep.subr.bf16.mxu0 0
  %2427 = vmatpush1.bf16.msra.mxu0 %v1821
  %2428 = vmatprep.subr.bf16.mxu0 0
  %2429 = vmatpush1.bf16.msra.mxu0 %v1820
  %2430 = vmatprep.subr.bf16.mxu0 0
  %2431 = vmatpush1.bf16.msra.mxu0 %v1819
  %2432 = vmatprep.subr.bf16.mxu0 0
  %2433 = vmatpush1.bf16.msra.mxu0 %v1818
  %2434 = vmatprep.subr.bf16.mxu0 0
  %2435 = vmatpush1.bf16.msra.mxu0 %v1817
  %2436 = vmatprep.subr.bf16.mxu0 0
  %2437 = vmatpush1.bf16.msra.mxu0 %v1816
  %2438 = vmatprep.subr.bf16.mxu0 0
  %2439 = vmatpush1.bf16.msra.mxu0 %v1815
  %2440 = vmatprep.subr.bf16.mxu0 0
  %2441 = vmatpush1.bf16.msra.mxu0 %v1814
  %2442 = vmatprep.subr.bf16.mxu0 0
  %2443 = vmatpush2.bf16.msra.mxu0 %v1829
  %2444 = vmatprep.subr.bf16.mxu0 0
  %2445 = vmatpush2.bf16.msra.mxu0 %v1828
  %2446 = vmatprep.subr.bf16.mxu0 0
  %2447 = vmatpush2.bf16.msra.mxu0 %v1827
  %2448 = vmatprep.subr.bf16.mxu0 0
  %2449 = vmatpush2.bf16.msra.mxu0 %v1826
  %2450 = vmatprep.subr.bf16.mxu0 0
  %2451 = vmatpush2.bf16.msra.mxu0 %v1825
  %2452 = vmatprep.subr.bf16.mxu0 0
  %2453 = vmatpush2.bf16.msra.mxu0 %v1824
  %2454 = vmatprep.subr.bf16.mxu0 0
  %2455 = vmatpush2.bf16.msra.mxu0 %v1823
  %2456 = vmatprep.subr.bf16.mxu0 0
  %2457 = vmatpush2.bf16.msra.mxu0 %v1822
  %2458 = vmatprep.mubr.bf16.mxu0 %v671
  %2459 = vmatmul.mubr.bf16.gmra.mxu0 %v670
  %v2460 = vpop.f32.mrf.mxu0
  %v2461 = vadd.f32 %v2420, %v2460
  %v2462 = vpop.f32.mrf.mxu0
  %v2463 = vpop.f32.mrf.mxu0
  %v2464 = vadd.f32 %v2423, %v2463
  %v2465 = vpop.f32.mrf.mxu0
  %2466 = vdwg.mxu0
  %2467 = vmatprep.subr.bf16.mxu0 0
  %2468 = vmatpush1.bf16.msra.mxu0 %v1837
  %2469 = vmatprep.subr.bf16.mxu0 0
  %2470 = vmatpush1.bf16.msra.mxu0 %v1836
  %2471 = vmatprep.subr.bf16.mxu0 0
  %2472 = vmatpush1.bf16.msra.mxu0 %v1835
  %2473 = vmatprep.subr.bf16.mxu0 0
  %2474 = vmatpush1.bf16.msra.mxu0 %v1834
  %2475 = vmatprep.subr.bf16.mxu0 0
  %2476 = vmatpush1.bf16.msra.mxu0 %v1833
  %2477 = vmatprep.subr.bf16.mxu0 0
  %2478 = vmatpush1.bf16.msra.mxu0 %v1832
  %2479 = vmatprep.subr.bf16.mxu0 0
  %2480 = vmatpush1.bf16.msra.mxu0 %v1831
  %2481 = vmatprep.subr.bf16.mxu0 0
  %2482 = vmatpush1.bf16.msra.mxu0 %v1830
  %2483 = vmatprep.subr.bf16.mxu0 0
  %2484 = vmatpush2.bf16.msra.mxu0 %v1845
  %2485 = vmatprep.subr.bf16.mxu0 0
  %2486 = vmatpush2.bf16.msra.mxu0 %v1844
  %2487 = vmatprep.subr.bf16.mxu0 0
  %2488 = vmatpush2.bf16.msra.mxu0 %v1843
  %2489 = vmatprep.subr.bf16.mxu0 0
  %2490 = vmatpush2.bf16.msra.mxu0 %v1842
  %2491 = vmatprep.subr.bf16.mxu0 0
  %2492 = vmatpush2.bf16.msra.mxu0 %v1841
  %2493 = vmatprep.subr.bf16.mxu0 0
  %2494 = vmatpush2.bf16.msra.mxu0 %v1840
  %2495 = vmatprep.subr.bf16.mxu0 0
  %2496 = vmatpush2.bf16.msra.mxu0 %v1839
  %2497 = vmatprep.subr.bf16.mxu0 0
  %2498 = vmatpush2.bf16.msra.mxu0 %v1838
  %2499 = vmatprep.mubr.bf16.mxu0 %v673
  %2500 = vmatmul.mubr.bf16.gmra.mxu0 %v672
  %v2501 = vpop.f32.mrf.mxu0
  %v2502 = vadd.f32 %v2461, %v2501
  %v2503 = vpop.f32.mrf.mxu0
  %v2504 = vpop.f32.mrf.mxu0
  %v2505 = vadd.f32 %v2464, %v2504
  %v2506 = vpop.f32.mrf.mxu0
  %2507 = vdwg.mxu0
  %2508 = vmatprep.subr.bf16.mxu0 0
  %2509 = vmatpush1.bf16.msra.mxu0 %v1853
  %2510 = vmatprep.subr.bf16.mxu0 0
  %2511 = vmatpush1.bf16.msra.mxu0 %v1852
  %2512 = vmatprep.subr.bf16.mxu0 0
  %2513 = vmatpush1.bf16.msra.mxu0 %v1851
  %2514 = vmatprep.subr.bf16.mxu0 0
  %2515 = vmatpush1.bf16.msra.mxu0 %v1850
  %2516 = vmatprep.subr.bf16.mxu0 0
  %2517 = vmatpush1.bf16.msra.mxu0 %v1849
  %2518 = vmatprep.subr.bf16.mxu0 0
  %2519 = vmatpush1.bf16.msra.mxu0 %v1848
  %2520 = vmatprep.subr.bf16.mxu0 0
  %2521 = vmatpush1.bf16.msra.mxu0 %v1847
  %2522 = vmatprep.subr.bf16.mxu0 0
  %2523 = vmatpush1.bf16.msra.mxu0 %v1846
  %2524 = vmatprep.subr.bf16.mxu0 0
  %2525 = vmatpush2.bf16.msra.mxu0 %v1861
  %2526 = vmatprep.subr.bf16.mxu0 0
  %2527 = vmatpush2.bf16.msra.mxu0 %v1860
  %2528 = vmatprep.subr.bf16.mxu0 0
  %2529 = vmatpush2.bf16.msra.mxu0 %v1859
  %2530 = vmatprep.subr.bf16.mxu0 0
  %2531 = vmatpush2.bf16.msra.mxu0 %v1858
  %2532 = vmatprep.subr.bf16.mxu0 0
  %2533 = vmatpush2.bf16.msra.mxu0 %v1857
  %2534 = vmatprep.subr.bf16.mxu0 0
  %2535 = vmatpush2.bf16.msra.mxu0 %v1856
  %2536 = vmatprep.subr.bf16.mxu0 0
  %2537 = vmatpush2.bf16.msra.mxu0 %v1855
  %2538 = vmatprep.subr.bf16.mxu0 0
  %2539 = vmatpush2.bf16.msra.mxu0 %v1854
  %2540 = vmatprep.mubr.bf16.mxu0 %v675
  %2541 = vmatmul.mubr.bf16.gmra.mxu0 %v674
  %v2542 = vpop.f32.mrf.mxu0
  %v2543 = vadd.f32 %v2502, %v2542
  %v2544 = vpop.f32.mrf.mxu0
  %v2545 = vpop.f32.mrf.mxu0
  %v2546 = vadd.f32 %v2505, %v2545
  %v2547 = vpop.f32.mrf.mxu0
  %2548 = vdwg.mxu0
  %2549 = vmatprep.subr.bf16.mxu0 0
  %2550 = vmatpush1.bf16.msra.mxu0 %v1869
  %2551 = vmatprep.subr.bf16.mxu0 0
  %2552 = vmatpush1.bf16.msra.mxu0 %v1868
  %2553 = vmatprep.subr.bf16.mxu0 0
  %2554 = vmatpush1.bf16.msra.mxu0 %v1867
  %2555 = vmatprep.subr.bf16.mxu0 0
  %2556 = vmatpush1.bf16.msra.mxu0 %v1866
  %2557 = vmatprep.subr.bf16.mxu0 0
  %2558 = vmatpush1.bf16.msra.mxu0 %v1865
  %2559 = vmatprep.subr.bf16.mxu0 0
  %2560 = vmatpush1.bf16.msra.mxu0 %v1864
  %2561 = vmatprep.subr.bf16.mxu0 0
  %2562 = vmatpush1.bf16.msra.mxu0 %v1863
  %2563 = vmatprep.subr.bf16.mxu0 0
  %2564 = vmatpush1.bf16.msra.mxu0 %v1862
  %2565 = vmatprep.subr.bf16.mxu0 0
  %2566 = vmatpush2.bf16.msra.mxu0 %v1877
  %2567 = vmatprep.subr.bf16.mxu0 0
  %2568 = vmatpush2.bf16.msra.mxu0 %v1876
  %2569 = vmatprep.subr.bf16.mxu0 0
  %2570 = vmatpush2.bf16.msra.mxu0 %v1875
  %2571 = vmatprep.subr.bf16.mxu0 0
  %2572 = vmatpush2.bf16.msra.mxu0 %v1874
  %2573 = vmatprep.subr.bf16.mxu0 0
  %2574 = vmatpush2.bf16.msra.mxu0 %v1873
  %2575 = vmatprep.subr.bf16.mxu0 0
  %2576 = vmatpush2.bf16.msra.mxu0 %v1872
  %2577 = vmatprep.subr.bf16.mxu0 0
  %2578 = vmatpush2.bf16.msra.mxu0 %v1871
  %2579 = vmatprep.subr.bf16.mxu0 0
  %2580 = vmatpush2.bf16.msra.mxu0 %v1870
  %2581 = vmatprep.mubr.bf16.mxu0 %v677
  %2582 = vmatmul.mubr.bf16.gmra.mxu0 %v676
  %v2583 = vpop.f32.mrf.mxu0
  %v2584 = vadd.f32 %v2543, %v2583
  %v2585 = vpop.f32.mrf.mxu0
  %v2586 = vpop.f32.mrf.mxu0
  %v2587 = vadd.f32 %v2546, %v2586
  %v2588 = vpop.f32.mrf.mxu0
  %2589 = vdwg.mxu0
  %2590 = vmatprep.subr.bf16.mxu0 0
  %2591 = vmatpush1.bf16.msra.mxu0 %v1885
  %2592 = vmatprep.subr.bf16.mxu0 0
  %2593 = vmatpush1.bf16.msra.mxu0 %v1884
  %2594 = vmatprep.subr.bf16.mxu0 0
  %2595 = vmatpush1.bf16.msra.mxu0 %v1883
  %2596 = vmatprep.subr.bf16.mxu0 0
  %2597 = vmatpush1.bf16.msra.mxu0 %v1882
  %2598 = vmatprep.subr.bf16.mxu0 0
  %2599 = vmatpush1.bf16.msra.mxu0 %v1881
  %2600 = vmatprep.subr.bf16.mxu0 0
  %2601 = vmatpush1.bf16.msra.mxu0 %v1880
  %2602 = vmatprep.subr.bf16.mxu0 0
  %2603 = vmatpush1.bf16.msra.mxu0 %v1879
  %2604 = vmatprep.subr.bf16.mxu0 0
  %2605 = vmatpush1.bf16.msra.mxu0 %v1878
  %2606 = vmatprep.subr.bf16.mxu0 0
  %2607 = vmatpush2.bf16.msra.mxu0 %v1893
  %2608 = vmatprep.subr.bf16.mxu0 0
  %2609 = vmatpush2.bf16.msra.mxu0 %v1892
  %2610 = vmatprep.subr.bf16.mxu0 0
  %2611 = vmatpush2.bf16.msra.mxu0 %v1891
  %2612 = vmatprep.subr.bf16.mxu0 0
  %2613 = vmatpush2.bf16.msra.mxu0 %v1890
  %2614 = vmatprep.subr.bf16.mxu0 0
  %2615 = vmatpush2.bf16.msra.mxu0 %v1889
  %2616 = vmatprep.subr.bf16.mxu0 0
  %2617 = vmatpush2.bf16.msra.mxu0 %v1888
  %2618 = vmatprep.subr.bf16.mxu0 0
  %2619 = vmatpush2.bf16.msra.mxu0 %v1887
  %2620 = vmatprep.subr.bf16.mxu0 0
  %2621 = vmatpush2.bf16.msra.mxu0 %v1886
  %2622 = vmatprep.mubr.bf16.mxu0 %v679
  %2623 = vmatmul.mubr.bf16.gmra.mxu0 %v678
  %v2624 = vpop.f32.mrf.mxu0
  %v2625 = vadd.f32 %v2584, %v2624
  %v2626 = vpop.f32.mrf.mxu0
  %v2627 = vpop.f32.mrf.mxu0
  %v2628 = vadd.f32 %v2587, %v2627
  %v2629 = vpop.f32.mrf.mxu0
  %2630 = vdwg.mxu0
  %2631 = vmatprep.subr.bf16.mxu0 0
  %2632 = vmatpush1.bf16.msra.mxu0 %v1901
  %2633 = vmatprep.subr.bf16.mxu0 0
  %2634 = vmatpush1.bf16.msra.mxu0 %v1900
  %2635 = vmatprep.subr.bf16.mxu0 0
  %2636 = vmatpush1.bf16.msra.mxu0 %v1899
  %2637 = vmatprep.subr.bf16.mxu0 0
  %2638 = vmatpush1.bf16.msra.mxu0 %v1898
  %2639 = vmatprep.subr.bf16.mxu0 0
  %2640 = vmatpush1.bf16.msra.mxu0 %v1897
  %2641 = vmatprep.subr.bf16.mxu0 0
  %2642 = vmatpush1.bf16.msra.mxu0 %v1896
  %2643 = vmatprep.subr.bf16.mxu0 0
  %2644 = vmatpush1.bf16.msra.mxu0 %v1895
  %2645 = vmatprep.subr.bf16.mxu0 0
  %2646 = vmatpush1.bf16.msra.mxu0 %v1894
  %2647 = vmatprep.subr.bf16.mxu0 0
  %2648 = vmatpush2.bf16.msra.mxu0 %v1909
  %2649 = vmatprep.subr.bf16.mxu0 0
  %2650 = vmatpush2.bf16.msra.mxu0 %v1908
  %2651 = vmatprep.subr.bf16.mxu0 0
  %2652 = vmatpush2.bf16.msra.mxu0 %v1907
  %2653 = vmatprep.subr.bf16.mxu0 0
  %2654 = vmatpush2.bf16.msra.mxu0 %v1906
  %2655 = vmatprep.subr.bf16.mxu0 0
  %2656 = vmatpush2.bf16.msra.mxu0 %v1905
  %2657 = vmatprep.subr.bf16.mxu0 0
  %2658 = vmatpush2.bf16.msra.mxu0 %v1904
  %2659 = vmatprep.subr.bf16.mxu0 0
  %2660 = vmatpush2.bf16.msra.mxu0 %v1903
  %2661 = vmatprep.subr.bf16.mxu0 0
  %2662 = vmatpush2.bf16.msra.mxu0 %v1902
  %2663 = vmatprep.mubr.bf16.mxu0 %v681
  %2664 = vmatmul.mubr.bf16.gmra.mxu0 %v680
  %v2665 = vpop.f32.mrf.mxu0
  %v2666 = vadd.f32 %v2625, %v2665
  %v2667 = vpop.f32.mrf.mxu0
  %v2668 = vpop.f32.mrf.mxu0
  %v2669 = vadd.f32 %v2628, %v2668
  %v2670 = vpop.f32.mrf.mxu0
  %2671 = vdwg.mxu0
  %2672 = vmatprep.subr.bf16.mxu0 0
  %2673 = vmatpush1.bf16.msra.mxu0 %v1917
  %2674 = vmatprep.subr.bf16.mxu0 0
  %2675 = vmatpush1.bf16.msra.mxu0 %v1916
  %2676 = vmatprep.subr.bf16.mxu0 0
  %2677 = vmatpush1.bf16.msra.mxu0 %v1915
  %2678 = vmatprep.subr.bf16.mxu0 0
  %2679 = vmatpush1.bf16.msra.mxu0 %v1914
  %2680 = vmatprep.subr.bf16.mxu0 0
  %2681 = vmatpush1.bf16.msra.mxu0 %v1913
  %2682 = vmatprep.subr.bf16.mxu0 0
  %2683 = vmatpush1.bf16.msra.mxu0 %v1912
  %2684 = vmatprep.subr.bf16.mxu0 0
  %2685 = vmatpush1.bf16.msra.mxu0 %v1911
  %2686 = vmatprep.subr.bf16.mxu0 0
  %2687 = vmatpush1.bf16.msra.mxu0 %v1910
  %2688 = vmatprep.subr.bf16.mxu0 0
  %2689 = vmatpush2.bf16.msra.mxu0 %v1925
  %2690 = vmatprep.subr.bf16.mxu0 0
  %2691 = vmatpush2.bf16.msra.mxu0 %v1924
  %2692 = vmatprep.subr.bf16.mxu0 0
  %2693 = vmatpush2.bf16.msra.mxu0 %v1923
  %2694 = vmatprep.subr.bf16.mxu0 0
  %2695 = vmatpush2.bf16.msra.mxu0 %v1922
  %2696 = vmatprep.subr.bf16.mxu0 0
  %2697 = vmatpush2.bf16.msra.mxu0 %v1921
  %2698 = vmatprep.subr.bf16.mxu0 0
  %2699 = vmatpush2.bf16.msra.mxu0 %v1920
  %2700 = vmatprep.subr.bf16.mxu0 0
  %2701 = vmatpush2.bf16.msra.mxu0 %v1919
  %2702 = vmatprep.subr.bf16.mxu0 0
  %2703 = vmatpush2.bf16.msra.mxu0 %v1918
  %2704 = vmatprep.mubr.bf16.mxu0 %v683
  %2705 = vmatmul.mubr.bf16.gmra.mxu0 %v682
  %v2706 = vpop.f32.mrf.mxu0
  %v2707 = vadd.f32 %v2666, %v2706
  %v2708 = vpop.f32.mrf.mxu0
  %v2709 = vpop.f32.mrf.mxu0
  %v2710 = vadd.f32 %v2669, %v2709
  %v2711 = vpop.f32.mrf.mxu0
  %2712 = vdwg.mxu0
  %2713 = vmatprep.subr.bf16.mxu0 0
  %2714 = vmatpush1.bf16.msra.mxu0 %v1933
  %2715 = vmatprep.subr.bf16.mxu0 0
  %2716 = vmatpush1.bf16.msra.mxu0 %v1932
  %2717 = vmatprep.subr.bf16.mxu0 0
  %2718 = vmatpush1.bf16.msra.mxu0 %v1931
  %2719 = vmatprep.subr.bf16.mxu0 0
  %2720 = vmatpush1.bf16.msra.mxu0 %v1930
  %2721 = vmatprep.subr.bf16.mxu0 0
  %2722 = vmatpush1.bf16.msra.mxu0 %v1929
  %2723 = vmatprep.subr.bf16.mxu0 0
  %2724 = vmatpush1.bf16.msra.mxu0 %v1928
  %2725 = vmatprep.subr.bf16.mxu0 0
  %2726 = vmatpush1.bf16.msra.mxu0 %v1927
  %2727 = vmatprep.subr.bf16.mxu0 0
  %2728 = vmatpush1.bf16.msra.mxu0 %v1926
  %2729 = vmatprep.subr.bf16.mxu0 0
  %2730 = vmatpush2.bf16.msra.mxu0 %v1941
  %2731 = vmatprep.subr.bf16.mxu0 0
  %2732 = vmatpush2.bf16.msra.mxu0 %v1940
  %2733 = vmatprep.subr.bf16.mxu0 0
  %2734 = vmatpush2.bf16.msra.mxu0 %v1939
  %2735 = vmatprep.subr.bf16.mxu0 0
  %2736 = vmatpush2.bf16.msra.mxu0 %v1938
  %2737 = vmatprep.subr.bf16.mxu0 0
  %2738 = vmatpush2.bf16.msra.mxu0 %v1937
  %2739 = vmatprep.subr.bf16.mxu0 0
  %2740 = vmatpush2.bf16.msra.mxu0 %v1936
  %2741 = vmatprep.subr.bf16.mxu0 0
  %2742 = vmatpush2.bf16.msra.mxu0 %v1935
  %2743 = vmatprep.subr.bf16.mxu0 0
  %2744 = vmatpush2.bf16.msra.mxu0 %v1934
  %2745 = vmatprep.mubr.bf16.mxu0 %v685
  %2746 = vmatmul.mubr.bf16.gmra.mxu0 %v684
  %v2747 = vpop.f32.mrf.mxu0
  %v2748 = vadd.f32 %v2707, %v2747
  %v2749 = vpop.f32.mrf.mxu0
  %v2750 = vpop.f32.mrf.mxu0
  %v2751 = vadd.f32 %v2710, %v2750
  %v2752 = vpop.f32.mrf.mxu0
  %2753 = vdwg.mxu0
  %2754 = vmatprep.subr.bf16.mxu0 0
  %2755 = vmatpush1.bf16.msra.mxu0 %v1949
  %2756 = vmatprep.subr.bf16.mxu0 0
  %2757 = vmatpush1.bf16.msra.mxu0 %v1948
  %2758 = vmatprep.subr.bf16.mxu0 0
  %2759 = vmatpush1.bf16.msra.mxu0 %v1947
  %2760 = vmatprep.subr.bf16.mxu0 0
  %2761 = vmatpush1.bf16.msra.mxu0 %v1946
  %2762 = vmatprep.subr.bf16.mxu0 0
  %2763 = vmatpush1.bf16.msra.mxu0 %v1945
  %2764 = vmatprep.subr.bf16.mxu0 0
  %2765 = vmatpush1.bf16.msra.mxu0 %v1944
  %2766 = vmatprep.subr.bf16.mxu0 0
  %2767 = vmatpush1.bf16.msra.mxu0 %v1943
  %2768 = vmatprep.subr.bf16.mxu0 0
  %2769 = vmatpush1.bf16.msra.mxu0 %v1942
  %2770 = vmatprep.subr.bf16.mxu0 0
  %2771 = vmatpush2.bf16.msra.mxu0 %v1957
  %2772 = vmatprep.subr.bf16.mxu0 0
  %2773 = vmatpush2.bf16.msra.mxu0 %v1956
  %2774 = vmatprep.subr.bf16.mxu0 0
  %2775 = vmatpush2.bf16.msra.mxu0 %v1955
  %2776 = vmatprep.subr.bf16.mxu0 0
  %2777 = vmatpush2.bf16.msra.mxu0 %v1954
  %2778 = vmatprep.subr.bf16.mxu0 0
  %2779 = vmatpush2.bf16.msra.mxu0 %v1953
  %2780 = vmatprep.subr.bf16.mxu0 0
  %2781 = vmatpush2.bf16.msra.mxu0 %v1952
  %2782 = vmatprep.subr.bf16.mxu0 0
  %2783 = vmatpush2.bf16.msra.mxu0 %v1951
  %2784 = vmatprep.subr.bf16.mxu0 0
  %2785 = vmatpush2.bf16.msra.mxu0 %v1950
  %2786 = vmatprep.mubr.bf16.mxu0 %v687
  %2787 = vmatmul.mubr.bf16.gmra.mxu0 %v686
  %v2788 = vpop.f32.mrf.mxu0
  %v2789 = vadd.f32 %v2748, %v2788
  %v2790 = vpop.f32.mrf.mxu0
  %v2791 = vpop.f32.mrf.mxu0
  %v2792 = vadd.f32 %v2751, %v2791
  %v2793 = vpop.f32.mrf.mxu0
  %2794 = vdwg.mxu0
  %2795 = vmatprep.subr.bf16.mxu0 0
  %2796 = vmatpush1.bf16.msra.mxu0 %v1965
  %2797 = vmatprep.subr.bf16.mxu0 0
  %2798 = vmatpush1.bf16.msra.mxu0 %v1964
  %2799 = vmatprep.subr.bf16.mxu0 0
  %2800 = vmatpush1.bf16.msra.mxu0 %v1963
  %2801 = vmatprep.subr.bf16.mxu0 0
  %2802 = vmatpush1.bf16.msra.mxu0 %v1962
  %2803 = vmatprep.subr.bf16.mxu0 0
  %2804 = vmatpush1.bf16.msra.mxu0 %v1961
  %2805 = vmatprep.subr.bf16.mxu0 0
  %2806 = vmatpush1.bf16.msra.mxu0 %v1960
  %2807 = vmatprep.subr.bf16.mxu0 0
  %2808 = vmatpush1.bf16.msra.mxu0 %v1959
  %2809 = vmatprep.subr.bf16.mxu0 0
  %2810 = vmatpush1.bf16.msra.mxu0 %v1958
  %2811 = vmatprep.subr.bf16.mxu0 0
  %2812 = vmatpush2.bf16.msra.mxu0 %v1973
  %2813 = vmatprep.subr.bf16.mxu0 0
  %2814 = vmatpush2.bf16.msra.mxu0 %v1972
  %2815 = vmatprep.subr.bf16.mxu0 0
  %2816 = vmatpush2.bf16.msra.mxu0 %v1971
  %2817 = vmatprep.subr.bf16.mxu0 0
  %2818 = vmatpush2.bf16.msra.mxu0 %v1970
  %2819 = vmatprep.subr.bf16.mxu0 0
  %2820 = vmatpush2.bf16.msra.mxu0 %v1969
  %2821 = vmatprep.subr.bf16.mxu0 0
  %2822 = vmatpush2.bf16.msra.mxu0 %v1968
  %2823 = vmatprep.subr.bf16.mxu0 0
  %2824 = vmatpush2.bf16.msra.mxu0 %v1967
  %2825 = vmatprep.subr.bf16.mxu0 0
  %2826 = vmatpush2.bf16.msra.mxu0 %v1966
  %2827 = vmatprep.mubr.bf16.mxu0 %v689
  %2828 = vmatmul.mubr.bf16.gmra.mxu0 %v688
  %v2829 = vpop.f32.mrf.mxu0
  %v2830 = vadd.f32 %v2789, %v2829
  %v2831 = vpop.f32.mrf.mxu0
  %v2832 = vpop.f32.mrf.mxu0
  %v2833 = vadd.f32 %v2792, %v2832
  %v2834 = vpop.f32.mrf.mxu0
  %2835 = vdwg.mxu0
  %2836 = vmatprep.subr.bf16.mxu0 0
  %2837 = vmatpush1.bf16.msra.mxu0 %v1981
  %2838 = vmatprep.subr.bf16.mxu0 0
  %2839 = vmatpush1.bf16.msra.mxu0 %v1980
  %2840 = vmatprep.subr.bf16.mxu0 0
  %2841 = vmatpush1.bf16.msra.mxu0 %v1979
  %2842 = vmatprep.subr.bf16.mxu0 0
  %2843 = vmatpush1.bf16.msra.mxu0 %v1978
  %2844 = vmatprep.subr.bf16.mxu0 0
  %2845 = vmatpush1.bf16.msra.mxu0 %v1977
  %2846 = vmatprep.subr.bf16.mxu0 0
  %2847 = vmatpush1.bf16.msra.mxu0 %v1976
  %2848 = vmatprep.subr.bf16.mxu0 0
  %2849 = vmatpush1.bf16.msra.mxu0 %v1975
  %2850 = vmatprep.subr.bf16.mxu0 0
  %2851 = vmatpush1.bf16.msra.mxu0 %v1974
  %2852 = vmatprep.subr.bf16.mxu0 0
  %2853 = vmatpush2.bf16.msra.mxu0 %v1989
  %2854 = vmatprep.subr.bf16.mxu0 0
  %2855 = vmatpush2.bf16.msra.mxu0 %v1988
  %2856 = vmatprep.subr.bf16.mxu0 0
  %2857 = vmatpush2.bf16.msra.mxu0 %v1987
  %2858 = vmatprep.subr.bf16.mxu0 0
  %2859 = vmatpush2.bf16.msra.mxu0 %v1986
  %2860 = vmatprep.subr.bf16.mxu0 0
  %2861 = vmatpush2.bf16.msra.mxu0 %v1985
  %2862 = vmatprep.subr.bf16.mxu0 0
  %2863 = vmatpush2.bf16.msra.mxu0 %v1984
  %2864 = vmatprep.subr.bf16.mxu0 0
  %2865 = vmatpush2.bf16.msra.mxu0 %v1983
  %2866 = vmatprep.subr.bf16.mxu0 0
  %2867 = vmatpush2.bf16.msra.mxu0 %v1982
  %2868 = vmatprep.mubr.bf16.mxu0 %v691
  %2869 = vmatmul.mubr.bf16.gmra.mxu0 %v690
  %v2870 = vpop.f32.mrf.mxu0
  %v2871 = vadd.f32 %v2830, %v2870
  %v2872 = vpop.f32.mrf.mxu0
  %v2873 = vpop.f32.mrf.mxu0
  %v2874 = vadd.f32 %v2833, %v2873
  %v2875 = vpop.f32.mrf.mxu0
  %2876 = vdwg.mxu0
  %2877 = vmatprep.subr.bf16.mxu0 0
  %2878 = vmatpush1.bf16.msra.mxu0 %v1997
  %2879 = vmatprep.subr.bf16.mxu0 0
  %2880 = vmatpush1.bf16.msra.mxu0 %v1996
  %2881 = vmatprep.subr.bf16.mxu0 0
  %2882 = vmatpush1.bf16.msra.mxu0 %v1995
  %2883 = vmatprep.subr.bf16.mxu0 0
  %2884 = vmatpush1.bf16.msra.mxu0 %v1994
  %2885 = vmatprep.subr.bf16.mxu0 0
  %2886 = vmatpush1.bf16.msra.mxu0 %v1993
  %2887 = vmatprep.subr.bf16.mxu0 0
  %2888 = vmatpush1.bf16.msra.mxu0 %v1992
  %2889 = vmatprep.subr.bf16.mxu0 0
  %2890 = vmatpush1.bf16.msra.mxu0 %v1991
  %2891 = vmatprep.subr.bf16.mxu0 0
  %2892 = vmatpush1.bf16.msra.mxu0 %v1990
  %2893 = vmatprep.subr.bf16.mxu0 0
  %2894 = vmatpush2.bf16.msra.mxu0 %v2005
  %2895 = vmatprep.subr.bf16.mxu0 0
  %2896 = vmatpush2.bf16.msra.mxu0 %v2004
  %2897 = vmatprep.subr.bf16.mxu0 0
  %2898 = vmatpush2.bf16.msra.mxu0 %v2003
  %2899 = vmatprep.subr.bf16.mxu0 0
  %2900 = vmatpush2.bf16.msra.mxu0 %v2002
  %2901 = vmatprep.subr.bf16.mxu0 0
  %2902 = vmatpush2.bf16.msra.mxu0 %v2001
  %2903 = vmatprep.subr.bf16.mxu0 0
  %2904 = vmatpush2.bf16.msra.mxu0 %v2000
  %2905 = vmatprep.subr.bf16.mxu0 0
  %2906 = vmatpush2.bf16.msra.mxu0 %v1999
  %2907 = vmatprep.subr.bf16.mxu0 0
  %2908 = vmatpush2.bf16.msra.mxu0 %v1998
  %2909 = vmatprep.mubr.bf16.mxu0 %v693
  %2910 = vmatmul.mubr.bf16.gmra.mxu0 %v692
  %v2911 = vpop.f32.mrf.mxu0
  %v2912 = vadd.f32 %v2871, %v2911
  %v2913 = vpop.f32.mrf.mxu0
  %v2914 = vpop.f32.mrf.mxu0
  %v2915 = vadd.f32 %v2874, %v2914
  %v2916 = vpop.f32.mrf.mxu0
  %2917 = vdwg.mxu0
  %v2918 = vsub.f32 0.0, %v2912
  %v2919 = vsub.f32 0.0, %v2915
  %v2920 = vmul.f32 %v2918, 1.442695
  %v2921 = vpow.pop %v2920
  %v2922 = vmul.f32 %v2919, 1.442695
  %v2923 = vpow.pop %v2922
  %v2924 = vadd.f32 %v2921, 1.0
  %v2925 = vadd.f32 %v2923, 1.0
  %v2926 = vrcp.pop %v2924
  %v2927 = vrcp.pop %v2925
  %v2928 = vmax.f32 %v2926, 0.0
  %v2929 = vmax.f32 %v2927, 0.0
  %v2930 = vmin.f32 %v2928, 1.0
  %v2931 = vmin.f32 %v2929, 1.0
  %vm2932 = vcmask 64512
  %2933 = vst.msk [vmem:[%s3] sm:$0xff] %vm2932, %v2930
  %2934 = vst.msk [vmem:[%s3 + $0x8] sm:$0xff] %vm2932, %v2931
  // Predicated region
  $region14: #{discriminator_forward.9} parent=0 // pred_check
    _
  $region15: #{discriminator_forward.9} parent=0 // pred_check_branch
    %2936 = sbr.rel (0) target = $region17
  $region16: #{discriminator_forward.9} parent=0 // pred_region
    _
  $region17: #{discriminator_forward.9} parent=0 // pred_fallthru
    _
  // Predicated region
  $region18: #{discriminator_forward.9} parent=0 // pred_check
    _
  $region19: #{discriminator_forward.9} parent=0 // pred_check_branch
    %2938 = sbr.rel (0) target = $region21
  $region20: #{discriminator_forward.9} parent=0 // pred_region
    _
  $region21: #{discriminator_forward.9} parent=0 // pred_fallthru
    _

</llo_original>
